<compile_context>
chip_gen: v7x
topology: tpu7x:2x2x1
jax: 0.10.0
libtpu: 0.0.40
codegen_flags: <defaults>
</compile_context>

<pallas_src>
import functools
import math

import jax
import jax.numpy as jnp
from jax import lax
from jax.experimental import pallas as pl
from jax.experimental.pallas import tpu as pltpu


LN_EPS = 1e-12
NEG_VAL = -10000.0


# -----------------------------------------------------------------------------
# Fused multi-head attention + output projection + residual + LayerNorm kernel.
# One grid step == one batch element; all heads are handled inside the kernel.
# -----------------------------------------------------------------------------
def _mha_ln_kernel(xq_ref, xkv_ref, m_ref,
                   wq_ref, bq_ref, wkv_ref, bkv_ref, wo_ref, bo_ref,
                   g_ref, b_ref, o_ref, *, n_head, scale, eps):
    xq = xq_ref[0]                       # (Lq, D) f32
    xkv = xkv_ref[0]                     # (Lk, D) f32
    m = m_ref[0]                         # (Lq, Lk) int32, {0,1}

    D = xq.shape[-1]
    Dh = D // n_head

    # Q projection (1 matmul) and fused K/V projection (1 matmul), bf16 on MXU.
    q = jnp.dot(xq.astype(jnp.bfloat16), wq_ref[...],
                preferred_element_type=jnp.float32) + bq_ref[...]
    kv = jnp.dot(xkv.astype(jnp.bfloat16), wkv_ref[...],
                 preferred_element_type=jnp.float32) + bkv_ref[...]
    k = kv[:, :D]
    v = kv[:, D:]

    q_bf = q.astype(jnp.bfloat16)
    k_bf = k.astype(jnp.bfloat16)
    v_bf = v.astype(jnp.bfloat16)
    wo = wo_ref[...]                     # (D, D) f32; sliced on 8-row tiles below

    attn_out = jnp.zeros(xq.shape, jnp.float32)
    for h in range(n_head):              # n_head is small & static -> unrolled
        lo, hi = h * Dh, (h + 1) * Dh
        qh = q_bf[:, lo:hi]              # (Lq, Dh)
        kh = k_bf[:, lo:hi]              # (Lk, Dh)
        vh = v_bf[:, lo:hi]              # (Lk, Dh)

        s = lax.dot_general(qh, kh, (((1,), (1,)), ((), ())),
                            preferred_element_type=jnp.float32) * scale
        s = jnp.where(m != 0, s, jnp.float32(NEG_VAL))     # masked_fill(mask==0)
        s = s - jnp.max(s, axis=-1, keepdims=True)
        e = jnp.exp(s)
        p = e * pl.reciprocal(jnp.sum(e, axis=-1, keepdims=True), approx=True)
        ctx = jnp.dot(p.astype(jnp.bfloat16), vh,
                      preferred_element_type=jnp.float32)  # (Lq, Dh)

        # Output projection decomposes over heads:
        #   concat_h(ctx_h) @ Wo == sum_h ctx_h @ Wo[h*Dh:(h+1)*Dh, :]
        attn_out = attn_out + jnp.dot(
            ctx.astype(jnp.bfloat16),
            wo[lo:hi, :].astype(jnp.bfloat16),
            preferred_element_type=jnp.float32)
    attn_out = attn_out + bo_ref[...]

    # Residual + LayerNorm (f32, unbiased=False variance, eps=1e-12).
    x = xq + attn_out
    mean = jnp.mean(x, axis=-1, keepdims=True)
    var = jnp.mean((x - mean) ** 2, axis=-1, keepdims=True)
    xn = (x - mean) * lax.rsqrt(var + eps)
    o_ref[0] = xn * g_ref[...] + b_ref[...]


def pallas_mha_ln(x_q, x_kv, mask, p, ln_g, ln_b, n_head, eps=LN_EPS):
    """x_q: (B, Lq, D), x_kv: (B, Lk, D), mask: (B, Lq, Lk) int32 -> (B, Lq, D)."""
    B, Lq, D = x_q.shape
    Lk = x_kv.shape[1]
    scale = 1.0 / math.sqrt(D // n_head)
    kern = functools.partial(_mha_ln_kernel, n_head=n_head, scale=scale, eps=eps)

    def full(shape):
        return pl.BlockSpec(shape, lambda bb: tuple(0 for _ in shape))

    return pl.pallas_call(
        kern,
        out_shape=jax.ShapeDtypeStruct((B, Lq, D), jnp.float32),
        grid=(B,),
        in_specs=[
            pl.BlockSpec((1, Lq, D), lambda bb: (bb, 0, 0)),
            pl.BlockSpec((1, Lk, D), lambda bb: (bb, 0, 0)),
            pl.BlockSpec((1, Lq, Lk), lambda bb: (bb, 0, 0)),
            full((D, D)),        # wq   (bf16)
            full((1, D)),        # bq
            full((D, 2 * D)),    # wkv  (bf16)
            full((1, 2 * D)),    # bkv
            full((D, D)),        # wo   (f32, row-sliced per head in-kernel)
            full((1, D)),        # bo
            full((1, D)),        # ln gamma
            full((1, D)),        # ln beta
        ],
        out_specs=pl.BlockSpec((1, Lq, D), lambda bb: (bb, 0, 0)),
        compiler_params=pltpu.CompilerParams(dimension_semantics=("parallel",)),
    )(x_q, x_kv, mask, p["wq"], p["bq"], p["wkv"], p["bkv"], p["wo"], p["bo"],
      ln_g, ln_b)


# -----------------------------------------------------------------------------
# Fused position-wise FFN + residual + LayerNorm kernel.
# -----------------------------------------------------------------------------
def _ffn_ln_kernel(x_ref, w1_ref, b1_ref, w2_ref, b2_ref, g_ref, b_ref, o_ref,
                   *, eps):
    x = x_ref[0]                                          # (L, D) f32
    h = jnp.dot(x.astype(jnp.bfloat16), w1_ref[...],
                preferred_element_type=jnp.float32) + b1_ref[...]
    h = jnp.maximum(h, 0.0)
    y = jnp.dot(h.astype(jnp.bfloat16), w2_ref[...],
                preferred_element_type=jnp.float32) + b2_ref[...]
    z = x + y
    mean = jnp.mean(z, axis=-1, keepdims=True)
    var = jnp.mean((z - mean) ** 2, axis=-1, keepdims=True)
    zn = (z - mean) * lax.rsqrt(var + eps)
    o_ref[0] = zn * g_ref[...] + b_ref[...]


def pallas_ffn_ln(x, w1, b1, w2, b2, ln_g, ln_b, eps=LN_EPS):
    B, L, D = x.shape
    H = w1.shape[1]
    kern = functools.partial(_ffn_ln_kernel, eps=eps)

    def full(shape):
        return pl.BlockSpec(shape, lambda bb: tuple(0 for _ in shape))

    return pl.pallas_call(
        kern,
        out_shape=jax.ShapeDtypeStruct((B, L, D), jnp.float32),
        grid=(B,),
        in_specs=[
            pl.BlockSpec((1, L, D), lambda bb: (bb, 0, 0)),
            full((D, H)),        # w1 (bf16)
            full((1, H)),        # b1
            full((H, D)),        # w2 (bf16)
            full((1, D)),        # b2
            full((1, D)),        # ln gamma
            full((1, D)),        # ln beta
        ],
        out_specs=pl.BlockSpec((1, L, D), lambda bb: (bb, 0, 0)),
        compiler_params=pltpu.CompilerParams(dimension_semantics=("parallel",)),
    )(x, w1, b1, w2, b2, ln_g, ln_b)


# -----------------------------------------------------------------------------
# Final vocabulary projection kernel (all positions, once).
# -----------------------------------------------------------------------------
def _proj_kernel(x_ref, w_ref, b_ref, o_ref):
    o_ref[0] = jnp.dot(x_ref[0].astype(jnp.bfloat16), w_ref[...],
                       preferred_element_type=jnp.float32) + b_ref[...]


def pallas_proj(x, w, b):
    B, L, D = x.shape
    V = w.shape[1]
    return pl.pallas_call(
        _proj_kernel,
        out_shape=jax.ShapeDtypeStruct((B, L, V), jnp.float32),
        grid=(B,),
        in_specs=[
            pl.BlockSpec((1, L, D), lambda bb: (bb, 0, 0)),
            pl.BlockSpec((D, V), lambda bb: (0, 0)),
            pl.BlockSpec((1, V), lambda bb: (0, 0)),
        ],
        out_specs=pl.BlockSpec((1, L, V), lambda bb: (bb, 0, 0)),
        compiler_params=pltpu.CompilerParams(dimension_semantics=("parallel",)),
    )(x, w, b)


# -----------------------------------------------------------------------------
# Model glue (plain JAX around the kernels)
# -----------------------------------------------------------------------------
def encoder_layer(x, mask, p, n_head):
    x = pallas_mha_ln(x, x, mask, p["attn"], p["ln1_g"], p["ln1_b"], n_head)
    x = pallas_ffn_ln(x, p["ffn_w1"], p["ffn_b1"], p["ffn_w2"], p["ffn_b2"],
                      p["ln2_g"], p["ln2_b"])
    return x


def decoder_layer(x, enc, trg_mask, src_mask, p, n_head):
    x = pallas_mha_ln(x, x, trg_mask, p["self_attn"], p["ln1_g"], p["ln1_b"], n_head)
    x = pallas_mha_ln(x, enc, src_mask, p["cross_attn"], p["ln2_g"], p["ln2_b"], n_head)
    x = pallas_ffn_ln(x, p["ffn_w1"], p["ffn_b1"], p["ffn_w2"], p["ffn_b2"],
                      p["ln3_g"], p["ln3_b"])
    return x


def embed(tokens, table, pos_enc):
    L = tokens.shape[1]
    return table[tokens] + pos_enc[:L][None, :, :]


def make_pad_mask(q_tok, k_tok, pad_idx):
    # (B, Lq, Lk) bool — reference always compares against src_pad_idx.
    return (k_tok != pad_idx)[:, None, :] & (q_tok != pad_idx)[:, :, None]


def transformer_forward(src, trg, params, cfg):
    n_head = cfg["n_head"]
    pad = cfg["src_pad_idx"]
    T = cfg["tar_len"]

    # ---------------- encoder ----------------
    src_mask = make_pad_mask(src, src, pad).astype(jnp.int32)
    x = embed(src, params["enc_emb"], params["pos_enc"])
    for lp in params["enc_layers"]:
        x = encoder_layer(x, src_mask, lp, n_head)
    enc_src = x

    # ------------- decoder: single pass with causal mask -------------
    # Teacher forcing (is_train=True): output[:, t, :] of the reference per-step
    # loop equals the full-length causally-masked decoder output at position t.
    trg = trg[:, :T]
    causal = jnp.tril(jnp.ones((T, T), dtype=jnp.bool_))
    trg_mask = (make_pad_mask(trg, trg, pad) & causal[None]).astype(jnp.int32)
    src_trg_mask = make_pad_mask(trg, src, pad).astype(jnp.int32)

    d = embed(trg, params["dec_emb"], params["pos_enc"])
    for lp in params["dec_layers"]:
        d = decoder_layer(d, enc_src, trg_mask, src_trg_mask, lp, n_head)

    return pallas_proj(d, params["out_w"], params["out_b"])   # (B, T, dec_voc)


# -----------------------------------------------------------------------------
# Deterministic parameter init (matmul weights stored in bf16 for the MXU).
# -----------------------------------------------------------------------------
def init_params(key, enc_voc, dec_voc, d_model, ffn_hidden, n_layers, max_len):
    keys = iter(jax.random.split(key, 512))

    def nrm(shape, scale=0.02):
        return scale * jax.random.normal(next(keys), shape, dtype=jnp.float32)

    def zeros(shape):
        return jnp.zeros(shape, jnp.float32)

    def ones(shape):
        return jnp.ones(shape, jnp.float32)

    def init_attn(d):
        wk = nrm((d, d))
        wv = nrm((d, d))
        return {
            "wq": nrm((d, d)).astype(jnp.bfloat16),
            "bq": zeros((1, d)),
            "wkv": jnp.concatenate([wk, wv], axis=1).astype(jnp.bfloat16),
            "bkv": zeros((1, 2 * d)),
            "wo": nrm((d, d)),            # f32 (row-sliced per head in-kernel)
            "bo": zeros((1, d)),
        }

    def init_enc_layer(d, h):
        return {
            "attn": init_attn(d),
            "ln1_g": ones((1, d)), "ln1_b": zeros((1, d)),
            "ffn_w1": nrm((d, h)).astype(jnp.bfloat16), "ffn_b1": zeros((1, h)),
            "ffn_w2": nrm((h, d)).astype(jnp.bfloat16), "ffn_b2": zeros((1, d)),
            "ln2_g": ones((1, d)), "ln2_b": zeros((1, d)),
        }

    def init_dec_layer(d, h):
        return {
            "self_attn": init_attn(d),
            "ln1_g": ones((1, d)), "ln1_b": zeros((1, d)),
            "cross_attn": init_attn(d),
            "ln2_g": ones((1, d)), "ln2_b": zeros((1, d)),
            "ffn_w1": nrm((d, h)).astype(jnp.bfloat16), "ffn_b1": zeros((1, h)),
            "ffn_w2": nrm((h, d)).astype(jnp.bfloat16), "ffn_b2": zeros((1, d)),
            "ln3_g": ones((1, d)), "ln3_b": zeros((1, d)),
        }

    # sinusoidal positional encoding
    pos = jnp.arange(max_len, dtype=jnp.float32)[:, None]
    two_i = jnp.arange(0, d_model, 2, dtype=jnp.float32)
    angles = pos / jnp.power(10000.0, two_i / d_model)
    pos_enc = jnp.zeros((max_len, d_model), jnp.float32)
    pos_enc = pos_enc.at[:, 0::2].set(jnp.sin(angles))
    pos_enc = pos_enc.at[:, 1::2].set(jnp.cos(angles))

    return {
        "enc_emb": nrm((enc_voc, d_model)),
        "dec_emb": nrm((dec_voc, d_model)),
        "pos_enc": pos_enc,
        "enc_layers": [init_enc_layer(d_model, ffn_hidden) for _ in range(n_layers)],
        "dec_layers": [init_dec_layer(d_model, ffn_hidden) for _ in range(n_layers)],
        "out_w": nrm((d_model, dec_voc)).astype(jnp.bfloat16),
        "out_b": zeros((1, dec_voc)),
    }


# -----------------------------------------------------------------------------
if __name__ == "__main__":
    B, SRC_LEN, TRG_LEN = 2, 8, 11           # TRG_LEN == hard-coded tar_len = 11
    cfg = {
        "src_pad_idx": 0,
        "n_head": 4,
        "tar_len": 11,
        "d_model": 32,
        "ffn_hidden": 64,
        "n_layers": 1,
        "enc_voc_size": 50,
        "dec_voc_size": 48,
        "max_len": 64,
    }

    key = jax.random.PRNGKey(0)
    k_src, k_trg, k_par = jax.random.split(key, 3)
    src = jax.random.randint(k_src, (B, SRC_LEN), 0, cfg["enc_voc_size"], dtype=jnp.int32)
    trg = jax.random.randint(k_trg, (B, TRG_LEN), 0, cfg["dec_voc_size"], dtype=jnp.int32)

    params = init_params(
        k_par,
        cfg["enc_voc_size"],
        cfg["dec_voc_size"],
        cfg["d_model"],
        cfg["ffn_hidden"],
        cfg["n_layers"],
        cfg["max_len"],
    )

    fwd = jax.jit(lambda s, t, p: transformer_forward(s, t, p, cfg))
    out = fwd(src, trg, params)
    out = jax.block_until_ready(out)
    assert out.shape == (B, cfg["tar_len"], cfg["dec_voc_size"]), out.shape
    assert bool(jnp.all(jnp.isfinite(out)))
    print("KERNEL_OK")
</pallas_src>

<mosaic_0001>
module attributes {stable_mosaic.version = 11 : i64} {
  func.func @_mha_ln_kernel(%arg0: i32, %arg1: memref<1x11x32xf32, #tpu.memory_space<vmem>>, %arg2: memref<1x11x32xf32, #tpu.memory_space<vmem>>, %arg3: memref<1x11x11xi32, #tpu.memory_space<vmem>>, %arg4: memref<32x32xbf16, #tpu.memory_space<vmem>>, %arg5: memref<1x32xf32, #tpu.memory_space<vmem>>, %arg6: memref<32x64xbf16, #tpu.memory_space<vmem>>, %arg7: memref<1x64xf32, #tpu.memory_space<vmem>>, %arg8: memref<32x32xf32, #tpu.memory_space<vmem>>, %arg9: memref<1x32xf32, #tpu.memory_space<vmem>>, %arg10: memref<1x32xf32, #tpu.memory_space<vmem>>, %arg11: memref<1x32xf32, #tpu.memory_space<vmem>>, %arg12: memref<1x11x32xf32, #tpu.memory_space<vmem>>) attributes {dimension_semantics = [#tpu.dimension_semantics<parallel>], iteration_bounds = array<i64: 2>, scalar_prefetch = 0 : i64, scratch_operands = 0 : i64, tpu.core_type = #tpu.core_type<tc>, window_params = [{transform_indices = @transform_0, window_bounds = array<i64: 1, 11, 32>}, {transform_indices = @transform_1, window_bounds = array<i64: 1, 11, 32>}, {transform_indices = @transform_2, window_bounds = array<i64: 1, 11, 11>}, {pipeline_mode = #tpu.pipeline_mode<synchronous>, transform_indices = @transform_3, window_bounds = array<i64: 32, 32>}, {pipeline_mode = #tpu.pipeline_mode<synchronous>, transform_indices = @transform_4, window_bounds = array<i64: 1, 32>}, {pipeline_mode = #tpu.pipeline_mode<synchronous>, transform_indices = @transform_5, window_bounds = array<i64: 32, 64>}, {pipeline_mode = #tpu.pipeline_mode<synchronous>, transform_indices = @transform_6, window_bounds = array<i64: 1, 64>}, {pipeline_mode = #tpu.pipeline_mode<synchronous>, transform_indices = @transform_7, window_bounds = array<i64: 32, 32>}, {pipeline_mode = #tpu.pipeline_mode<synchronous>, transform_indices = @transform_8, window_bounds = array<i64: 1, 32>}, {pipeline_mode = #tpu.pipeline_mode<synchronous>, transform_indices = @transform_9, window_bounds = array<i64: 1, 32>}, {pipeline_mode = #tpu.pipeline_mode<synchronous>, transform_indices = @transform_10, window_bounds = array<i64: 1, 32>}, {transform_indices = @transform_11, window_bounds = array<i64: 1, 11, 32>}]} {
    %c0 = arith.constant 0 : index
    %c0_0 = arith.constant 0 : index
    %c0_1 = arith.constant 0 : index
    %0 = vector.load %arg1[%c0, %c0_0, %c0_1] : memref<1x11x32xf32, #tpu.memory_space<vmem>>, vector<1x11x32xf32>
    %1 = vector.shape_cast %0 : vector<1x11x32xf32> to vector<11x32xf32>
    %c0_2 = arith.constant 0 : index
    %c0_3 = arith.constant 0 : index
    %c0_4 = arith.constant 0 : index
    %2 = vector.load %arg2[%c0_2, %c0_3, %c0_4] : memref<1x11x32xf32, #tpu.memory_space<vmem>>, vector<1x11x32xf32>
    %3 = vector.shape_cast %2 : vector<1x11x32xf32> to vector<11x32xf32>
    %c0_5 = arith.constant 0 : index
    %c0_6 = arith.constant 0 : index
    %c0_7 = arith.constant 0 : index
    %4 = vector.load %arg3[%c0_5, %c0_6, %c0_7] : memref<1x11x11xi32, #tpu.memory_space<vmem>>, vector<1x11x11xi32>
    %5 = vector.shape_cast %4 : vector<1x11x11xi32> to vector<11x11xi32>
    %6 = arith.truncf %1 : vector<11x32xf32> to vector<11x32xbf16>
    %c0_8 = arith.constant 0 : index
    %c0_9 = arith.constant 0 : index
    %7 = vector.load %arg4[%c0_8, %c0_9] : memref<32x32xbf16, #tpu.memory_space<vmem>>, vector<32x32xbf16>
    %cst = arith.constant dense<0.000000e+00> : vector<11x32xf32>
    %8 = tpu.matmul %6, %7, %cst {dimension_numbers = #tpu.dot_dimension_numbers<[1], [0], [0], [1], [0, 0, 1, 1], [], []>} : vector<11x32xbf16>, vector<32x32xbf16>, vector<11x32xf32> -> vector<11x32xf32>
    %c0_10 = arith.constant 0 : index
    %c0_11 = arith.constant 0 : index
    %9 = vector.load %arg5[%c0_10, %c0_11] : memref<1x32xf32, #tpu.memory_space<vmem>>, vector<1x32xf32>
    %10 = vector.broadcast %9 : vector<1x32xf32> to vector<11x32xf32>
    %11 = arith.addf %8, %10 : vector<11x32xf32>
    %12 = arith.truncf %3 : vector<11x32xf32> to vector<11x32xbf16>
    %c0_12 = arith.constant 0 : index
    %c0_13 = arith.constant 0 : index
    %13 = vector.load %arg6[%c0_12, %c0_13] : memref<32x64xbf16, #tpu.memory_space<vmem>>, vector<32x64xbf16>
    %cst_14 = arith.constant dense<0.000000e+00> : vector<11x64xf32>
    %14 = tpu.matmul %12, %13, %cst_14 {dimension_numbers = #tpu.dot_dimension_numbers<[1], [0], [0], [1], [0, 0, 1, 1], [], []>} : vector<11x32xbf16>, vector<32x64xbf16>, vector<11x64xf32> -> vector<11x64xf32>
    %c0_15 = arith.constant 0 : index
    %c0_16 = arith.constant 0 : index
    %15 = vector.load %arg7[%c0_15, %c0_16] : memref<1x64xf32, #tpu.memory_space<vmem>>, vector<1x64xf32>
    %16 = vector.broadcast %15 : vector<1x64xf32> to vector<11x64xf32>
    %17 = arith.addf %14, %16 : vector<11x64xf32>
    %18 = vector.extract_strided_slice %17 {offsets = [0, 0], sizes = [11, 32], strides = [1, 1]} : vector<11x64xf32> to vector<11x32xf32>
    %19 = vector.extract_strided_slice %17 {offsets = [0, 32], sizes = [11, 32], strides = [1, 1]} : vector<11x64xf32> to vector<11x32xf32>
    %20 = arith.truncf %11 : vector<11x32xf32> to vector<11x32xbf16>
    %21 = arith.truncf %18 : vector<11x32xf32> to vector<11x32xbf16>
    %22 = arith.truncf %19 : vector<11x32xf32> to vector<11x32xbf16>
    %c0_17 = arith.constant 0 : index
    %c0_18 = arith.constant 0 : index
    %23 = vector.load %arg8[%c0_17, %c0_18] : memref<32x32xf32, #tpu.memory_space<vmem>>, vector<32x32xf32>
    %cst_19 = arith.constant 0.000000e+00 : f32
    %24 = vector.broadcast %cst_19 : f32 to vector<11x32xf32>
    %25 = vector.extract_strided_slice %20 {offsets = [0, 0], sizes = [11, 8], strides = [1, 1]} : vector<11x32xbf16> to vector<11x8xbf16>
    %26 = vector.extract_strided_slice %21 {offsets = [0, 0], sizes = [11, 8], strides = [1, 1]} : vector<11x32xbf16> to vector<11x8xbf16>
    %27 = vector.extract_strided_slice %22 {offsets = [0, 0], sizes = [11, 8], strides = [1, 1]} : vector<11x32xbf16> to vector<11x8xbf16>
    %cst_20 = arith.constant dense<0.000000e+00> : vector<11x11xf32>
    %28 = tpu.matmul %25, %26, %cst_20 {dimension_numbers = #tpu.dot_dimension_numbers<[1], [1], [0], [0], [0, 0, 1, 0], [], []>} : vector<11x8xbf16>, vector<11x8xbf16>, vector<11x11xf32> -> vector<11x11xf32>
    %cst_21 = arith.constant 0.353553385 : f32
    %29 = vector.broadcast %cst_21 : f32 to vector<11x11xf32>
    %30 = arith.mulf %28, %29 : vector<11x11xf32>
    %c0_i32 = arith.constant 0 : i32
    %31 = vector.broadcast %c0_i32 : i32 to vector<11x11xi32>
    %32 = arith.cmpi ne, %5, %31 : vector<11x11xi32>
    %cst_22 = arith.constant -1.000000e+04 : f32
    %33 = vector.broadcast %cst_22 : f32 to vector<11x11xf32>
    %34 = arith.select %32, %30, %33 : vector<11x11xi1>, vector<11x11xf32>
    %cst_23 = arith.constant dense<0xFF800000> : vector<11xf32>
    %35 = vector.multi_reduction <maximumf>, %34, %cst_23 [1] : vector<11x11xf32> to vector<11xf32>
    %36 = vector.shape_cast %35 : vector<11xf32> to vector<11x1xf32>
    %37 = vector.broadcast %36 : vector<11x1xf32> to vector<11x11xf32>
    %38 = arith.subf %34, %37 : vector<11x11xf32>
    %39 = math.exp %38 : vector<11x11xf32>
    %cst_24 = arith.constant dense<0.000000e+00> : vector<11xf32>
    %40 = vector.multi_reduction <add>, %39, %cst_24 [1] : vector<11x11xf32> to vector<11xf32>
    %41 = vector.shape_cast %40 : vector<11xf32> to vector<11x1xf32>
    %42 = tpu.reciprocal %41 {approx = true} : vector<11x1xf32> -> vector<11x1xf32>
    %43 = vector.broadcast %42 : vector<11x1xf32> to vector<11x11xf32>
    %44 = arith.mulf %39, %43 : vector<11x11xf32>
    %45 = arith.truncf %44 : vector<11x11xf32> to vector<11x11xbf16>
    %cst_25 = arith.constant dense<0.000000e+00> : vector<11x8xf32>
    %46 = tpu.matmul %45, %27, %cst_25 {dimension_numbers = #tpu.dot_dimension_numbers<[1], [0], [0], [1], [0, 0, 1, 1], [], []>} : vector<11x11xbf16>, vector<11x8xbf16>, vector<11x8xf32> -> vector<11x8xf32>
    %47 = arith.truncf %46 : vector<11x8xf32> to vector<11x8xbf16>
    %48 = vector.extract_strided_slice %23 {offsets = [0, 0], sizes = [8, 32], strides = [1, 1]} : vector<32x32xf32> to vector<8x32xf32>
    %49 = arith.truncf %48 : vector<8x32xf32> to vector<8x32xbf16>
    %cst_26 = arith.constant dense<0.000000e+00> : vector<11x32xf32>
    %50 = tpu.matmul %47, %49, %cst_26 {dimension_numbers = #tpu.dot_dimension_numbers<[1], [0], [0], [1], [0, 0, 1, 1], [], []>} : vector<11x8xbf16>, vector<8x32xbf16>, vector<11x32xf32> -> vector<11x32xf32>
    %51 = arith.addf %24, %50 : vector<11x32xf32>
    %52 = vector.extract_strided_slice %20 {offsets = [0, 8], sizes = [11, 8], strides = [1, 1]} : vector<11x32xbf16> to vector<11x8xbf16>
    %53 = vector.extract_strided_slice %21 {offsets = [0, 8], sizes = [11, 8], strides = [1, 1]} : vector<11x32xbf16> to vector<11x8xbf16>
    %54 = vector.extract_strided_slice %22 {offsets = [0, 8], sizes = [11, 8], strides = [1, 1]} : vector<11x32xbf16> to vector<11x8xbf16>
    %cst_27 = arith.constant dense<0.000000e+00> : vector<11x11xf32>
    %55 = tpu.matmul %52, %53, %cst_27 {dimension_numbers = #tpu.dot_dimension_numbers<[1], [1], [0], [0], [0, 0, 1, 0], [], []>} : vector<11x8xbf16>, vector<11x8xbf16>, vector<11x11xf32> -> vector<11x11xf32>
    %cst_28 = arith.constant 0.353553385 : f32
    %56 = vector.broadcast %cst_28 : f32 to vector<11x11xf32>
    %57 = arith.mulf %55, %56 : vector<11x11xf32>
    %c0_i32_29 = arith.constant 0 : i32
    %58 = vector.broadcast %c0_i32_29 : i32 to vector<11x11xi32>
    %59 = arith.cmpi ne, %5, %58 : vector<11x11xi32>
    %cst_30 = arith.constant -1.000000e+04 : f32
    %60 = vector.broadcast %cst_30 : f32 to vector<11x11xf32>
    %61 = arith.select %59, %57, %60 : vector<11x11xi1>, vector<11x11xf32>
    %cst_31 = arith.constant dense<0xFF800000> : vector<11xf32>
    %62 = vector.multi_reduction <maximumf>, %61, %cst_31 [1] : vector<11x11xf32> to vector<11xf32>
    %63 = vector.shape_cast %62 : vector<11xf32> to vector<11x1xf32>
    %64 = vector.broadcast %63 : vector<11x1xf32> to vector<11x11xf32>
    %65 = arith.subf %61, %64 : vector<11x11xf32>
    %66 = math.exp %65 : vector<11x11xf32>
    %cst_32 = arith.constant dense<0.000000e+00> : vector<11xf32>
    %67 = vector.multi_reduction <add>, %66, %cst_32 [1] : vector<11x11xf32> to vector<11xf32>
    %68 = vector.shape_cast %67 : vector<11xf32> to vector<11x1xf32>
    %69 = tpu.reciprocal %68 {approx = true} : vector<11x1xf32> -> vector<11x1xf32>
    %70 = vector.broadcast %69 : vector<11x1xf32> to vector<11x11xf32>
    %71 = arith.mulf %66, %70 : vector<11x11xf32>
    %72 = arith.truncf %71 : vector<11x11xf32> to vector<11x11xbf16>
    %cst_33 = arith.constant dense<0.000000e+00> : vector<11x8xf32>
    %73 = tpu.matmul %72, %54, %cst_33 {dimension_numbers = #tpu.dot_dimension_numbers<[1], [0], [0], [1], [0, 0, 1, 1], [], []>} : vector<11x11xbf16>, vector<11x8xbf16>, vector<11x8xf32> -> vector<11x8xf32>
    %74 = arith.truncf %73 : vector<11x8xf32> to vector<11x8xbf16>
    %75 = vector.extract_strided_slice %23 {offsets = [8, 0], sizes = [8, 32], strides = [1, 1]} : vector<32x32xf32> to vector<8x32xf32>
    %76 = arith.truncf %75 : vector<8x32xf32> to vector<8x32xbf16>
    %cst_34 = arith.constant dense<0.000000e+00> : vector<11x32xf32>
    %77 = tpu.matmul %74, %76, %cst_34 {dimension_numbers = #tpu.dot_dimension_numbers<[1], [0], [0], [1], [0, 0, 1, 1], [], []>} : vector<11x8xbf16>, vector<8x32xbf16>, vector<11x32xf32> -> vector<11x32xf32>
    %78 = arith.addf %51, %77 : vector<11x32xf32>
    %79 = vector.extract_strided_slice %20 {offsets = [0, 16], sizes = [11, 8], strides = [1, 1]} : vector<11x32xbf16> to vector<11x8xbf16>
    %80 = vector.extract_strided_slice %21 {offsets = [0, 16], sizes = [11, 8], strides = [1, 1]} : vector<11x32xbf16> to vector<11x8xbf16>
    %81 = vector.extract_strided_slice %22 {offsets = [0, 16], sizes = [11, 8], strides = [1, 1]} : vector<11x32xbf16> to vector<11x8xbf16>
    %cst_35 = arith.constant dense<0.000000e+00> : vector<11x11xf32>
    %82 = tpu.matmul %79, %80, %cst_35 {dimension_numbers = #tpu.dot_dimension_numbers<[1], [1], [0], [0], [0, 0, 1, 0], [], []>} : vector<11x8xbf16>, vector<11x8xbf16>, vector<11x11xf32> -> vector<11x11xf32>
    %cst_36 = arith.constant 0.353553385 : f32
    %83 = vector.broadcast %cst_36 : f32 to vector<11x11xf32>
    %84 = arith.mulf %82, %83 : vector<11x11xf32>
    %c0_i32_37 = arith.constant 0 : i32
    %85 = vector.broadcast %c0_i32_37 : i32 to vector<11x11xi32>
    %86 = arith.cmpi ne, %5, %85 : vector<11x11xi32>
    %cst_38 = arith.constant -1.000000e+04 : f32
    %87 = vector.broadcast %cst_38 : f32 to vector<11x11xf32>
    %88 = arith.select %86, %84, %87 : vector<11x11xi1>, vector<11x11xf32>
    %cst_39 = arith.constant dense<0xFF800000> : vector<11xf32>
    %89 = vector.multi_reduction <maximumf>, %88, %cst_39 [1] : vector<11x11xf32> to vector<11xf32>
    %90 = vector.shape_cast %89 : vector<11xf32> to vector<11x1xf32>
    %91 = vector.broadcast %90 : vector<11x1xf32> to vector<11x11xf32>
    %92 = arith.subf %88, %91 : vector<11x11xf32>
    %93 = math.exp %92 : vector<11x11xf32>
    %cst_40 = arith.constant dense<0.000000e+00> : vector<11xf32>
    %94 = vector.multi_reduction <add>, %93, %cst_40 [1] : vector<11x11xf32> to vector<11xf32>
    %95 = vector.shape_cast %94 : vector<11xf32> to vector<11x1xf32>
    %96 = tpu.reciprocal %95 {approx = true} : vector<11x1xf32> -> vector<11x1xf32>
    %97 = vector.broadcast %96 : vector<11x1xf32> to vector<11x11xf32>
    %98 = arith.mulf %93, %97 : vector<11x11xf32>
    %99 = arith.truncf %98 : vector<11x11xf32> to vector<11x11xbf16>
    %cst_41 = arith.constant dense<0.000000e+00> : vector<11x8xf32>
    %100 = tpu.matmul %99, %81, %cst_41 {dimension_numbers = #tpu.dot_dimension_numbers<[1], [0], [0], [1], [0, 0, 1, 1], [], []>} : vector<11x11xbf16>, vector<11x8xbf16>, vector<11x8xf32> -> vector<11x8xf32>
    %101 = arith.truncf %100 : vector<11x8xf32> to vector<11x8xbf16>
    %102 = vector.extract_strided_slice %23 {offsets = [16, 0], sizes = [8, 32], strides = [1, 1]} : vector<32x32xf32> to vector<8x32xf32>
    %103 = arith.truncf %102 : vector<8x32xf32> to vector<8x32xbf16>
    %cst_42 = arith.constant dense<0.000000e+00> : vector<11x32xf32>
    %104 = tpu.matmul %101, %103, %cst_42 {dimension_numbers = #tpu.dot_dimension_numbers<[1], [0], [0], [1], [0, 0, 1, 1], [], []>} : vector<11x8xbf16>, vector<8x32xbf16>, vector<11x32xf32> -> vector<11x32xf32>
    %105 = arith.addf %78, %104 : vector<11x32xf32>
    %106 = vector.extract_strided_slice %20 {offsets = [0, 24], sizes = [11, 8], strides = [1, 1]} : vector<11x32xbf16> to vector<11x8xbf16>
    %107 = vector.extract_strided_slice %21 {offsets = [0, 24], sizes = [11, 8], strides = [1, 1]} : vector<11x32xbf16> to vector<11x8xbf16>
    %108 = vector.extract_strided_slice %22 {offsets = [0, 24], sizes = [11, 8], strides = [1, 1]} : vector<11x32xbf16> to vector<11x8xbf16>
    %cst_43 = arith.constant dense<0.000000e+00> : vector<11x11xf32>
    %109 = tpu.matmul %106, %107, %cst_43 {dimension_numbers = #tpu.dot_dimension_numbers<[1], [1], [0], [0], [0, 0, 1, 0], [], []>} : vector<11x8xbf16>, vector<11x8xbf16>, vector<11x11xf32> -> vector<11x11xf32>
    %cst_44 = arith.constant 0.353553385 : f32
    %110 = vector.broadcast %cst_44 : f32 to vector<11x11xf32>
    %111 = arith.mulf %109, %110 : vector<11x11xf32>
    %c0_i32_45 = arith.constant 0 : i32
    %112 = vector.broadcast %c0_i32_45 : i32 to vector<11x11xi32>
    %113 = arith.cmpi ne, %5, %112 : vector<11x11xi32>
    %cst_46 = arith.constant -1.000000e+04 : f32
    %114 = vector.broadcast %cst_46 : f32 to vector<11x11xf32>
    %115 = arith.select %113, %111, %114 : vector<11x11xi1>, vector<11x11xf32>
    %cst_47 = arith.constant dense<0xFF800000> : vector<11xf32>
    %116 = vector.multi_reduction <maximumf>, %115, %cst_47 [1] : vector<11x11xf32> to vector<11xf32>
    %117 = vector.shape_cast %116 : vector<11xf32> to vector<11x1xf32>
    %118 = vector.broadcast %117 : vector<11x1xf32> to vector<11x11xf32>
    %119 = arith.subf %115, %118 : vector<11x11xf32>
    %120 = math.exp %119 : vector<11x11xf32>
    %cst_48 = arith.constant dense<0.000000e+00> : vector<11xf32>
    %121 = vector.multi_reduction <add>, %120, %cst_48 [1] : vector<11x11xf32> to vector<11xf32>
    %122 = vector.shape_cast %121 : vector<11xf32> to vector<11x1xf32>
    %123 = tpu.reciprocal %122 {approx = true} : vector<11x1xf32> -> vector<11x1xf32>
    %124 = vector.broadcast %123 : vector<11x1xf32> to vector<11x11xf32>
    %125 = arith.mulf %120, %124 : vector<11x11xf32>
    %126 = arith.truncf %125 : vector<11x11xf32> to vector<11x11xbf16>
    %cst_49 = arith.constant dense<0.000000e+00> : vector<11x8xf32>
    %127 = tpu.matmul %126, %108, %cst_49 {dimension_numbers = #tpu.dot_dimension_numbers<[1], [0], [0], [1], [0, 0, 1, 1], [], []>} : vector<11x11xbf16>, vector<11x8xbf16>, vector<11x8xf32> -> vector<11x8xf32>
    %128 = arith.truncf %127 : vector<11x8xf32> to vector<11x8xbf16>
    %129 = vector.extract_strided_slice %23 {offsets = [24, 0], sizes = [8, 32], strides = [1, 1]} : vector<32x32xf32> to vector<8x32xf32>
    %130 = arith.truncf %129 : vector<8x32xf32> to vector<8x32xbf16>
    %cst_50 = arith.constant dense<0.000000e+00> : vector<11x32xf32>
    %131 = tpu.matmul %128, %130, %cst_50 {dimension_numbers = #tpu.dot_dimension_numbers<[1], [0], [0], [1], [0, 0, 1, 1], [], []>} : vector<11x8xbf16>, vector<8x32xbf16>, vector<11x32xf32> -> vector<11x32xf32>
    %132 = arith.addf %105, %131 : vector<11x32xf32>
    %c0_51 = arith.constant 0 : index
    %c0_52 = arith.constant 0 : index
    %133 = vector.load %arg9[%c0_51, %c0_52] : memref<1x32xf32, #tpu.memory_space<vmem>>, vector<1x32xf32>
    %134 = vector.broadcast %133 : vector<1x32xf32> to vector<11x32xf32>
    %135 = arith.addf %132, %134 : vector<11x32xf32>
    %136 = arith.addf %1, %135 : vector<11x32xf32>
    %cst_53 = arith.constant dense<0.000000e+00> : vector<11xf32>
    %137 = vector.multi_reduction <add>, %136, %cst_53 [1] : vector<11x32xf32> to vector<11xf32>
    %138 = vector.shape_cast %137 : vector<11xf32> to vector<11x1xf32>
    %cst_54 = arith.constant 3.200000e+01 : f32
    %139 = vector.broadcast %cst_54 : f32 to vector<11x1xf32>
    %140 = arith.divf %138, %139 : vector<11x1xf32>
    %141 = vector.broadcast %140 : vector<11x1xf32> to vector<11x32xf32>
    %142 = arith.subf %136, %141 : vector<11x32xf32>
    %143 = arith.mulf %142, %142 : vector<11x32xf32>
    %cst_55 = arith.constant dense<0.000000e+00> : vector<11xf32>
    %144 = vector.multi_reduction <add>, %143, %cst_55 [1] : vector<11x32xf32> to vector<11xf32>
    %145 = vector.shape_cast %144 : vector<11xf32> to vector<11x1xf32>
    %cst_56 = arith.constant 3.200000e+01 : f32
    %146 = vector.broadcast %cst_56 : f32 to vector<11x1xf32>
    %147 = arith.divf %145, %146 : vector<11x1xf32>
    %148 = vector.broadcast %140 : vector<11x1xf32> to vector<11x32xf32>
    %149 = arith.subf %136, %148 : vector<11x32xf32>
    %cst_57 = arith.constant 9.99999996E-13 : f32
    %150 = vector.broadcast %cst_57 : f32 to vector<11x1xf32>
    %151 = arith.addf %147, %150 : vector<11x1xf32>
    %152 = math.rsqrt %151 : vector<11x1xf32>
    %153 = vector.broadcast %152 : vector<11x1xf32> to vector<11x32xf32>
    %154 = arith.mulf %149, %153 : vector<11x32xf32>
    %c0_58 = arith.constant 0 : index
    %c0_59 = arith.constant 0 : index
    %155 = vector.load %arg10[%c0_58, %c0_59] : memref<1x32xf32, #tpu.memory_space<vmem>>, vector<1x32xf32>
    %156 = vector.broadcast %155 : vector<1x32xf32> to vector<11x32xf32>
    %157 = arith.mulf %154, %156 : vector<11x32xf32>
    %c0_60 = arith.constant 0 : index
    %c0_61 = arith.constant 0 : index
    %158 = vector.load %arg11[%c0_60, %c0_61] : memref<1x32xf32, #tpu.memory_space<vmem>>, vector<1x32xf32>
    %159 = vector.broadcast %158 : vector<1x32xf32> to vector<11x32xf32>
    %160 = arith.addf %157, %159 : vector<11x32xf32>
    %c0_62 = arith.constant 0 : index
    %c0_63 = arith.constant 0 : index
    %c0_64 = arith.constant 0 : index
    %161 = vector.load %arg12[%c0_62, %c0_63, %c0_64] : memref<1x11x32xf32, #tpu.memory_space<vmem>>, vector<1x11x32xf32>
    %162 = vector.shape_cast %161 : vector<1x11x32xf32> to vector<11x32xf32>
    %163 = vector.shape_cast %160 : vector<11x32xf32> to vector<1x11x32xf32>
    tpu.vector_store %arg12[%c0_62, %c0_63, %c0_64], %163 {strides = array<i32>} : memref<1x11x32xf32, #tpu.memory_space<vmem>>, vector<1x11x32xf32>,
    return
  }
  func.func @transform_0(%arg0: i32) -> (i32, i32, i32) {
    %c0_i32 = arith.constant 0 : i32
    %c0_i32_0 = arith.constant 0 : i32
    %c0_i32_1 = arith.constant 0 : i32
    return %arg0, %c0_i32, %c0_i32_0 : i32, i32, i32
  }
  func.func @transform_1(%arg0: i32) -> (i32, i32, i32) {
    %c0_i32 = arith.constant 0 : i32
    %c0_i32_0 = arith.constant 0 : i32
    %c0_i32_1 = arith.constant 0 : i32
    return %arg0, %c0_i32, %c0_i32_0 : i32, i32, i32
  }
  func.func @transform_2(%arg0: i32) -> (i32, i32, i32) {
    %c0_i32 = arith.constant 0 : i32
    %c0_i32_0 = arith.constant 0 : i32
    %c0_i32_1 = arith.constant 0 : i32
    return %arg0, %c0_i32, %c0_i32_0 : i32, i32, i32
  }
  func.func @transform_3(%arg0: i32) -> (i32, i32) {
    %c0_i32 = arith.constant 0 : i32
    %c0_i32_0 = arith.constant 0 : i32
    %c0_i32_1 = arith.constant 0 : i32
    return %c0_i32, %c0_i32_0 : i32, i32
  }
  func.func @transform_4(%arg0: i32) -> (i32, i32) {
    %c0_i32 = arith.constant 0 : i32
    %c0_i32_0 = arith.constant 0 : i32
    %c0_i32_1 = arith.constant 0 : i32
    return %c0_i32, %c0_i32_0 : i32, i32
  }
  func.func @transform_5(%arg0: i32) -> (i32, i32) {
    %c0_i32 = arith.constant 0 : i32
    %c0_i32_0 = arith.constant 0 : i32
    %c0_i32_1 = arith.constant 0 : i32
    return %c0_i32, %c0_i32_0 : i32, i32
  }
  func.func @transform_6(%arg0: i32) -> (i32, i32) {
    %c0_i32 = arith.constant 0 : i32
    %c0_i32_0 = arith.constant 0 : i32
    %c0_i32_1 = arith.constant 0 : i32
    return %c0_i32, %c0_i32_0 : i32, i32
  }
  func.func @transform_7(%arg0: i32) -> (i32, i32) {
    %c0_i32 = arith.constant 0 : i32
    %c0_i32_0 = arith.constant 0 : i32
    %c0_i32_1 = arith.constant 0 : i32
    return %c0_i32, %c0_i32_0 : i32, i32
  }
  func.func @transform_8(%arg0: i32) -> (i32, i32) {
    %c0_i32 = arith.constant 0 : i32
    %c0_i32_0 = arith.constant 0 : i32
    %c0_i32_1 = arith.constant 0 : i32
    return %c0_i32, %c0_i32_0 : i32, i32
  }
  func.func @transform_9(%arg0: i32) -> (i32, i32) {
    %c0_i32 = arith.constant 0 : i32
    %c0_i32_0 = arith.constant 0 : i32
    %c0_i32_1 = arith.constant 0 : i32
    return %c0_i32, %c0_i32_0 : i32, i32
  }
  func.func @transform_10(%arg0: i32) -> (i32, i32) {
    %c0_i32 = arith.constant 0 : i32
    %c0_i32_0 = arith.constant 0 : i32
    %c0_i32_1 = arith.constant 0 : i32
    return %c0_i32, %c0_i32_0 : i32, i32
  }
  func.func @transform_11(%arg0: i32) -> (i32, i32, i32) {
    %c0_i32 = arith.constant 0 : i32
    %c0_i32_0 = arith.constant 0 : i32
    %c0_i32_1 = arith.constant 0 : i32
    return %arg0, %c0_i32, %c0_i32_0 : i32, i32, i32
  }
}

module attributes {stable_mosaic.version = 11 : i64} {
  func.func @_ffn_ln_kernel(%arg0: i32, %arg1: memref<1x8x32xf32, #tpu.memory_space<vmem>>, %arg2: memref<32x64xbf16, #tpu.memory_space<vmem>>, %arg3: memref<1x64xf32, #tpu.memory_space<vmem>>, %arg4: memref<64x32xbf16, #tpu.memory_space<vmem>>, %arg5: memref<1x32xf32, #tpu.memory_space<vmem>>, %arg6: memref<1x32xf32, #tpu.memory_space<vmem>>, %arg7: memref<1x32xf32, #tpu.memory_space<vmem>>, %arg8: memref<1x8x32xf32, #tpu.memory_space<vmem>>) attributes {dimension_semantics = [#tpu.dimension_semantics<parallel>], iteration_bounds = array<i64: 2>, scalar_prefetch = 0 : i64, scratch_operands = 0 : i64, tpu.core_type = #tpu.core_type<tc>, window_params = [{transform_indices = @transform_0, window_bounds = array<i64: 1, 8, 32>}, {pipeline_mode = #tpu.pipeline_mode<synchronous>, transform_indices = @transform_1, window_bounds = array<i64: 32, 64>}, {pipeline_mode = #tpu.pipeline_mode<synchronous>, transform_indices = @transform_2, window_bounds = array<i64: 1, 64>}, {pipeline_mode = #tpu.pipeline_mode<synchronous>, transform_indices = @transform_3, window_bounds = array<i64: 64, 32>}, {pipeline_mode = #tpu.pipeline_mode<synchronous>, transform_indices = @transform_4, window_bounds = array<i64: 1, 32>}, {pipeline_mode = #tpu.pipeline_mode<synchronous>, transform_indices = @transform_5, window_bounds = array<i64: 1, 32>}, {pipeline_mode = #tpu.pipeline_mode<synchronous>, transform_indices = @transform_6, window_bounds = array<i64: 1, 32>}, {transform_indices = @transform_7, window_bounds = array<i64: 1, 8, 32>}]} {
    %c0 = arith.constant 0 : index
    %c0_0 = arith.constant 0 : index
    %c0_1 = arith.constant 0 : index
    %0 = vector.load %arg1[%c0, %c0_0, %c0_1] : memref<1x8x32xf32, #tpu.memory_space<vmem>>, vector<1x8x32xf32>
    %1 = vector.shape_cast %0 : vector<1x8x32xf32> to vector<8x32xf32>
    %2 = arith.truncf %1 : vector<8x32xf32> to vector<8x32xbf16>
    %c0_2 = arith.constant 0 : index
    %c0_3 = arith.constant 0 : index
    %3 = vector.load %arg2[%c0_2, %c0_3] : memref<32x64xbf16, #tpu.memory_space<vmem>>, vector<32x64xbf16>
    %cst = arith.constant dense<0.000000e+00> : vector<8x64xf32>
    %4 = tpu.matmul %2, %3, %cst {dimension_numbers = #tpu.dot_dimension_numbers<[1], [0], [0], [1], [0, 0, 1, 1], [], []>} : vector<8x32xbf16>, vector<32x64xbf16>, vector<8x64xf32> -> vector<8x64xf32>
    %c0_4 = arith.constant 0 : index
    %c0_5 = arith.constant 0 : index
    %5 = vector.load %arg3[%c0_4, %c0_5] : memref<1x64xf32, #tpu.memory_space<vmem>>, vector<1x64xf32>
    %6 = vector.broadcast %5 : vector<1x64xf32> to vector<8x64xf32>
    %7 = arith.addf %4, %6 : vector<8x64xf32>
    %cst_6 = arith.constant 0.000000e+00 : f32
    %8 = vector.broadcast %cst_6 : f32 to vector<8x64xf32>
    %9 = arith.maximumf %7, %8 : vector<8x64xf32>
    %10 = arith.truncf %9 : vector<8x64xf32> to vector<8x64xbf16>
    %c0_7 = arith.constant 0 : index
    %c0_8 = arith.constant 0 : index
    %11 = vector.load %arg4[%c0_7, %c0_8] : memref<64x32xbf16, #tpu.memory_space<vmem>>, vector<64x32xbf16>
    %cst_9 = arith.constant dense<0.000000e+00> : vector<8x32xf32>
    %12 = tpu.matmul %10, %11, %cst_9 {dimension_numbers = #tpu.dot_dimension_numbers<[1], [0], [0], [1], [0, 0, 1, 1], [], []>} : vector<8x64xbf16>, vector<64x32xbf16>, vector<8x32xf32> -> vector<8x32xf32>
    %c0_10 = arith.constant 0 : index
    %c0_11 = arith.constant 0 : index
    %13 = vector.load %arg5[%c0_10, %c0_11] : memref<1x32xf32, #tpu.memory_space<vmem>>, vector<1x32xf32>
    %14 = vector.broadcast %13 : vector<1x32xf32> to vector<8x32xf32>
    %15 = arith.addf %12, %14 : vector<8x32xf32>
    %16 = arith.addf %1, %15 : vector<8x32xf32>
    %cst_12 = arith.constant dense<0.000000e+00> : vector<8xf32>
    %17 = vector.multi_reduction <add>, %16, %cst_12 [1] : vector<8x32xf32> to vector<8xf32>
    %18 = vector.shape_cast %17 : vector<8xf32> to vector<8x1xf32>
    %cst_13 = arith.constant 3.200000e+01 : f32
    %19 = vector.broadcast %cst_13 : f32 to vector<8x1xf32>
    %20 = arith.divf %18, %19 : vector<8x1xf32>
    %21 = vector.broadcast %20 : vector<8x1xf32> to vector<8x32xf32>
    %22 = arith.subf %16, %21 : vector<8x32xf32>
    %23 = arith.mulf %22, %22 : vector<8x32xf32>
    %cst_14 = arith.constant dense<0.000000e+00> : vector<8xf32>
    %24 = vector.multi_reduction <add>, %23, %cst_14 [1] : vector<8x32xf32> to vector<8xf32>
    %25 = vector.shape_cast %24 : vector<8xf32> to vector<8x1xf32>
    %cst_15 = arith.constant 3.200000e+01 : f32
    %26 = vector.broadcast %cst_15 : f32 to vector<8x1xf32>
    %27 = arith.divf %25, %26 : vector<8x1xf32>
    %28 = vector.broadcast %20 : vector<8x1xf32> to vector<8x32xf32>
    %29 = arith.subf %16, %28 : vector<8x32xf32>
    %cst_16 = arith.constant 9.99999996E-13 : f32
    %30 = vector.broadcast %cst_16 : f32 to vector<8x1xf32>
    %31 = arith.addf %27, %30 : vector<8x1xf32>
    %32 = math.rsqrt %31 : vector<8x1xf32>
    %33 = vector.broadcast %32 : vector<8x1xf32> to vector<8x32xf32>
    %34 = arith.mulf %29, %33 : vector<8x32xf32>
    %c0_17 = arith.constant 0 : index
    %c0_18 = arith.constant 0 : index
    %35 = vector.load %arg6[%c0_17, %c0_18] : memref<1x32xf32, #tpu.memory_space<vmem>>, vector<1x32xf32>
    %36 = vector.broadcast %35 : vector<1x32xf32> to vector<8x32xf32>
    %37 = arith.mulf %34, %36 : vector<8x32xf32>
    %c0_19 = arith.constant 0 : index
    %c0_20 = arith.constant 0 : index
    %38 = vector.load %arg7[%c0_19, %c0_20] : memref<1x32xf32, #tpu.memory_space<vmem>>, vector<1x32xf32>
    %39 = vector.broadcast %38 : vector<1x32xf32> to vector<8x32xf32>
    %40 = arith.addf %37, %39 : vector<8x32xf32>
    %c0_21 = arith.constant 0 : index
    %c0_22 = arith.constant 0 : index
    %c0_23 = arith.constant 0 : index
    %41 = vector.load %arg8[%c0_21, %c0_22, %c0_23] : memref<1x8x32xf32, #tpu.memory_space<vmem>>, vector<1x8x32xf32>
    %42 = vector.shape_cast %41 : vector<1x8x32xf32> to vector<8x32xf32>
    %43 = vector.shape_cast %40 : vector<8x32xf32> to vector<1x8x32xf32>
    tpu.vector_store %arg8[%c0_21, %c0_22, %c0_23], %43 {strides = array<i32>} : memref<1x8x32xf32, #tpu.memory_space<vmem>>, vector<1x8x32xf32>,
    return
  }
  func.func @transform_0(%arg0: i32) -> (i32, i32, i32) {
    %c0_i32 = arith.constant 0 : i32
    %c0_i32_0 = arith.constant 0 : i32
    %c0_i32_1 = arith.constant 0 : i32
    return %arg0, %c0_i32, %c0_i32_0 : i32, i32, i32
  }
  func.func @transform_1(%arg0: i32) -> (i32, i32) {
    %c0_i32 = arith.constant 0 : i32
    %c0_i32_0 = arith.constant 0 : i32
    %c0_i32_1 = arith.constant 0 : i32
    return %c0_i32, %c0_i32_0 : i32, i32
  }
  func.func @transform_2(%arg0: i32) -> (i32, i32) {
    %c0_i32 = arith.constant 0 : i32
    %c0_i32_0 = arith.constant 0 : i32
    %c0_i32_1 = arith.constant 0 : i32
    return %c0_i32, %c0_i32_0 : i32, i32
  }
  func.func @transform_3(%arg0: i32) -> (i32, i32) {
    %c0_i32 = arith.constant 0 : i32
    %c0_i32_0 = arith.constant 0 : i32
    %c0_i32_1 = arith.constant 0 : i32
    return %c0_i32, %c0_i32_0 : i32, i32
  }
  func.func @transform_4(%arg0: i32) -> (i32, i32) {
    %c0_i32 = arith.constant 0 : i32
    %c0_i32_0 = arith.constant 0 : i32
    %c0_i32_1 = arith.constant 0 : i32
    return %c0_i32, %c0_i32_0 : i32, i32
  }
  func.func @transform_5(%arg0: i32) -> (i32, i32) {
    %c0_i32 = arith.constant 0 : i32
    %c0_i32_0 = arith.constant 0 : i32
    %c0_i32_1 = arith.constant 0 : i32
    return %c0_i32, %c0_i32_0 : i32, i32
  }
  func.func @transform_6(%arg0: i32) -> (i32, i32) {
    %c0_i32 = arith.constant 0 : i32
    %c0_i32_0 = arith.constant 0 : i32
    %c0_i32_1 = arith.constant 0 : i32
    return %c0_i32, %c0_i32_0 : i32, i32
  }
  func.func @transform_7(%arg0: i32) -> (i32, i32, i32) {
    %c0_i32 = arith.constant 0 : i32
    %c0_i32_0 = arith.constant 0 : i32
    %c0_i32_1 = arith.constant 0 : i32
    return %arg0, %c0_i32, %c0_i32_0 : i32, i32, i32
  }
}

module attributes {stable_mosaic.version = 11 : i64} {
  func.func @_mha_ln_kernel(%arg0: i32, %arg1: memref<1x8x32xf32, #tpu.memory_space<vmem>>, %arg2: memref<1x8x32xf32, #tpu.memory_space<vmem>>, %arg3: memref<1x8x8xi32, #tpu.memory_space<vmem>>, %arg4: memref<32x32xbf16, #tpu.memory_space<vmem>>, %arg5: memref<1x32xf32, #tpu.memory_space<vmem>>, %arg6: memref<32x64xbf16, #tpu.memory_space<vmem>>, %arg7: memref<1x64xf32, #tpu.memory_space<vmem>>, %arg8: memref<32x32xf32, #tpu.memory_space<vmem>>, %arg9: memref<1x32xf32, #tpu.memory_space<vmem>>, %arg10: memref<1x32xf32, #tpu.memory_space<vmem>>, %arg11: memref<1x32xf32, #tpu.memory_space<vmem>>, %arg12: memref<1x8x32xf32, #tpu.memory_space<vmem>>) attributes {dimension_semantics = [#tpu.dimension_semantics<parallel>], iteration_bounds = array<i64: 2>, scalar_prefetch = 0 : i64, scratch_operands = 0 : i64, tpu.core_type = #tpu.core_type<tc>, window_params = [{transform_indices = @transform_0, window_bounds = array<i64: 1, 8, 32>}, {transform_indices = @transform_1, window_bounds = array<i64: 1, 8, 32>}, {transform_indices = @transform_2, window_bounds = array<i64: 1, 8, 8>}, {pipeline_mode = #tpu.pipeline_mode<synchronous>, transform_indices = @transform_3, window_bounds = array<i64: 32, 32>}, {pipeline_mode = #tpu.pipeline_mode<synchronous>, transform_indices = @transform_4, window_bounds = array<i64: 1, 32>}, {pipeline_mode = #tpu.pipeline_mode<synchronous>, transform_indices = @transform_5, window_bounds = array<i64: 32, 64>}, {pipeline_mode = #tpu.pipeline_mode<synchronous>, transform_indices = @transform_6, window_bounds = array<i64: 1, 64>}, {pipeline_mode = #tpu.pipeline_mode<synchronous>, transform_indices = @transform_7, window_bounds = array<i64: 32, 32>}, {pipeline_mode = #tpu.pipeline_mode<synchronous>, transform_indices = @transform_8, window_bounds = array<i64: 1, 32>}, {pipeline_mode = #tpu.pipeline_mode<synchronous>, transform_indices = @transform_9, window_bounds = array<i64: 1, 32>}, {pipeline_mode = #tpu.pipeline_mode<synchronous>, transform_indices = @transform_10, window_bounds = array<i64: 1, 32>}, {transform_indices = @transform_11, window_bounds = array<i64: 1, 8, 32>}]} {
    %c0 = arith.constant 0 : index
    %c0_0 = arith.constant 0 : index
    %c0_1 = arith.constant 0 : index
    %0 = vector.load %arg1[%c0, %c0_0, %c0_1] : memref<1x8x32xf32, #tpu.memory_space<vmem>>, vector<1x8x32xf32>
    %1 = vector.shape_cast %0 : vector<1x8x32xf32> to vector<8x32xf32>
    %c0_2 = arith.constant 0 : index
    %c0_3 = arith.constant 0 : index
    %c0_4 = arith.constant 0 : index
    %2 = vector.load %arg2[%c0_2, %c0_3, %c0_4] : memref<1x8x32xf32, #tpu.memory_space<vmem>>, vector<1x8x32xf32>
    %3 = vector.shape_cast %2 : vector<1x8x32xf32> to vector<8x32xf32>
    %c0_5 = arith.constant 0 : index
    %c0_6 = arith.constant 0 : index
    %c0_7 = arith.constant 0 : index
    %4 = vector.load %arg3[%c0_5, %c0_6, %c0_7] : memref<1x8x8xi32, #tpu.memory_space<vmem>>, vector<1x8x8xi32>
    %5 = vector.shape_cast %4 : vector<1x8x8xi32> to vector<8x8xi32>
    %6 = arith.truncf %1 : vector<8x32xf32> to vector<8x32xbf16>
    %c0_8 = arith.constant 0 : index
    %c0_9 = arith.constant 0 : index
    %7 = vector.load %arg4[%c0_8, %c0_9] : memref<32x32xbf16, #tpu.memory_space<vmem>>, vector<32x32xbf16>
    %cst = arith.constant dense<0.000000e+00> : vector<8x32xf32>
    %8 = tpu.matmul %6, %7, %cst {dimension_numbers = #tpu.dot_dimension_numbers<[1], [0], [0], [1], [0, 0, 1, 1], [], []>} : vector<8x32xbf16>, vector<32x32xbf16>, vector<8x32xf32> -> vector<8x32xf32>
    %c0_10 = arith.constant 0 : index
    %c0_11 = arith.constant 0 : index
    %9 = vector.load %arg5[%c0_10, %c0_11] : memref<1x32xf32, #tpu.memory_space<vmem>>, vector<1x32xf32>
    %10 = vector.broadcast %9 : vector<1x32xf32> to vector<8x32xf32>
    %11 = arith.addf %8, %10 : vector<8x32xf32>
    %12 = arith.truncf %3 : vector<8x32xf32> to vector<8x32xbf16>
    %c0_12 = arith.constant 0 : index
    %c0_13 = arith.constant 0 : index
    %13 = vector.load %arg6[%c0_12, %c0_13] : memref<32x64xbf16, #tpu.memory_space<vmem>>, vector<32x64xbf16>
    %cst_14 = arith.constant dense<0.000000e+00> : vector<8x64xf32>
    %14 = tpu.matmul %12, %13, %cst_14 {dimension_numbers = #tpu.dot_dimension_numbers<[1], [0], [0], [1], [0, 0, 1, 1], [], []>} : vector<8x32xbf16>, vector<32x64xbf16>, vector<8x64xf32> -> vector<8x64xf32>
    %c0_15 = arith.constant 0 : index
    %c0_16 = arith.constant 0 : index
    %15 = vector.load %arg7[%c0_15, %c0_16] : memref<1x64xf32, #tpu.memory_space<vmem>>, vector<1x64xf32>
    %16 = vector.broadcast %15 : vector<1x64xf32> to vector<8x64xf32>
    %17 = arith.addf %14, %16 : vector<8x64xf32>
    %18 = vector.extract_strided_slice %17 {offsets = [0, 0], sizes = [8, 32], strides = [1, 1]} : vector<8x64xf32> to vector<8x32xf32>
    %19 = vector.extract_strided_slice %17 {offsets = [0, 32], sizes = [8, 32], strides = [1, 1]} : vector<8x64xf32> to vector<8x32xf32>
    %20 = arith.truncf %11 : vector<8x32xf32> to vector<8x32xbf16>
    %21 = arith.truncf %18 : vector<8x32xf32> to vector<8x32xbf16>
    %22 = arith.truncf %19 : vector<8x32xf32> to vector<8x32xbf16>
    %c0_17 = arith.constant 0 : index
    %c0_18 = arith.constant 0 : index
    %23 = vector.load %arg8[%c0_17, %c0_18] : memref<32x32xf32, #tpu.memory_space<vmem>>, vector<32x32xf32>
    %cst_19 = arith.constant 0.000000e+00 : f32
    %24 = vector.broadcast %cst_19 : f32 to vector<8x32xf32>
    %25 = vector.extract_strided_slice %20 {offsets = [0, 0], sizes = [8, 8], strides = [1, 1]} : vector<8x32xbf16> to vector<8x8xbf16>
    %26 = vector.extract_strided_slice %21 {offsets = [0, 0], sizes = [8, 8], strides = [1, 1]} : vector<8x32xbf16> to vector<8x8xbf16>
    %27 = vector.extract_strided_slice %22 {offsets = [0, 0], sizes = [8, 8], strides = [1, 1]} : vector<8x32xbf16> to vector<8x8xbf16>
    %cst_20 = arith.constant dense<0.000000e+00> : vector<8x8xf32>
    %28 = tpu.matmul %25, %26, %cst_20 {dimension_numbers = #tpu.dot_dimension_numbers<[1], [1], [0], [0], [0, 0, 1, 0], [], []>} : vector<8x8xbf16>, vector<8x8xbf16>, vector<8x8xf32> -> vector<8x8xf32>
    %cst_21 = arith.constant 0.353553385 : f32
    %29 = vector.broadcast %cst_21 : f32 to vector<8x8xf32>
    %30 = arith.mulf %28, %29 : vector<8x8xf32>
    %c0_i32 = arith.constant 0 : i32
    %31 = vector.broadcast %c0_i32 : i32 to vector<8x8xi32>
    %32 = arith.cmpi ne, %5, %31 : vector<8x8xi32>
    %cst_22 = arith.constant -1.000000e+04 : f32
    %33 = vector.broadcast %cst_22 : f32 to vector<8x8xf32>
    %34 = arith.select %32, %30, %33 : vector<8x8xi1>, vector<8x8xf32>
    %cst_23 = arith.constant dense<0xFF800000> : vector<8xf32>
    %35 = vector.multi_reduction <maximumf>, %34, %cst_23 [1] : vector<8x8xf32> to vector<8xf32>
    %36 = vector.shape_cast %35 : vector<8xf32> to vector<8x1xf32>
    %37 = vector.broadcast %36 : vector<8x1xf32> to vector<8x8xf32>
    %38 = arith.subf %34, %37 : vector<8x8xf32>
    %39 = math.exp %38 : vector<8x8xf32>
    %cst_24 = arith.constant dense<0.000000e+00> : vector<8xf32>
    %40 = vector.multi_reduction <add>, %39, %cst_24 [1] : vector<8x8xf32> to vector<8xf32>
    %41 = vector.shape_cast %40 : vector<8xf32> to vector<8x1xf32>
    %42 = tpu.reciprocal %41 {approx = true} : vector<8x1xf32> -> vector<8x1xf32>
    %43 = vector.broadcast %42 : vector<8x1xf32> to vector<8x8xf32>
    %44 = arith.mulf %39, %43 : vector<8x8xf32>
    %45 = arith.truncf %44 : vector<8x8xf32> to vector<8x8xbf16>
    %cst_25 = arith.constant dense<0.000000e+00> : vector<8x8xf32>
    %46 = tpu.matmul %45, %27, %cst_25 {dimension_numbers = #tpu.dot_dimension_numbers<[1], [0], [0], [1], [0, 0, 1, 1], [], []>} : vector<8x8xbf16>, vector<8x8xbf16>, vector<8x8xf32> -> vector<8x8xf32>
    %47 = arith.truncf %46 : vector<8x8xf32> to vector<8x8xbf16>
    %48 = vector.extract_strided_slice %23 {offsets = [0, 0], sizes = [8, 32], strides = [1, 1]} : vector<32x32xf32> to vector<8x32xf32>
    %49 = arith.truncf %48 : vector<8x32xf32> to vector<8x32xbf16>
    %cst_26 = arith.constant dense<0.000000e+00> : vector<8x32xf32>
    %50 = tpu.matmul %47, %49, %cst_26 {dimension_numbers = #tpu.dot_dimension_numbers<[1], [0], [0], [1], [0, 0, 1, 1], [], []>} : vector<8x8xbf16>, vector<8x32xbf16>, vector<8x32xf32> -> vector<8x32xf32>
    %51 = arith.addf %24, %50 : vector<8x32xf32>
    %52 = vector.extract_strided_slice %20 {offsets = [0, 8], sizes = [8, 8], strides = [1, 1]} : vector<8x32xbf16> to vector<8x8xbf16>
    %53 = vector.extract_strided_slice %21 {offsets = [0, 8], sizes = [8, 8], strides = [1, 1]} : vector<8x32xbf16> to vector<8x8xbf16>
    %54 = vector.extract_strided_slice %22 {offsets = [0, 8], sizes = [8, 8], strides = [1, 1]} : vector<8x32xbf16> to vector<8x8xbf16>
    %cst_27 = arith.constant dense<0.000000e+00> : vector<8x8xf32>
    %55 = tpu.matmul %52, %53, %cst_27 {dimension_numbers = #tpu.dot_dimension_numbers<[1], [1], [0], [0], [0, 0, 1, 0], [], []>} : vector<8x8xbf16>, vector<8x8xbf16>, vector<8x8xf32> -> vector<8x8xf32>
    %cst_28 = arith.constant 0.353553385 : f32
    %56 = vector.broadcast %cst_28 : f32 to vector<8x8xf32>
    %57 = arith.mulf %55, %56 : vector<8x8xf32>
    %c0_i32_29 = arith.constant 0 : i32
    %58 = vector.broadcast %c0_i32_29 : i32 to vector<8x8xi32>
    %59 = arith.cmpi ne, %5, %58 : vector<8x8xi32>
    %cst_30 = arith.constant -1.000000e+04 : f32
    %60 = vector.broadcast %cst_30 : f32 to vector<8x8xf32>
    %61 = arith.select %59, %57, %60 : vector<8x8xi1>, vector<8x8xf32>
    %cst_31 = arith.constant dense<0xFF800000> : vector<8xf32>
    %62 = vector.multi_reduction <maximumf>, %61, %cst_31 [1] : vector<8x8xf32> to vector<8xf32>
    %63 = vector.shape_cast %62 : vector<8xf32> to vector<8x1xf32>
    %64 = vector.broadcast %63 : vector<8x1xf32> to vector<8x8xf32>
    %65 = arith.subf %61, %64 : vector<8x8xf32>
    %66 = math.exp %65 : vector<8x8xf32>
    %cst_32 = arith.constant dense<0.000000e+00> : vector<8xf32>
    %67 = vector.multi_reduction <add>, %66, %cst_32 [1] : vector<8x8xf32> to vector<8xf32>
    %68 = vector.shape_cast %67 : vector<8xf32> to vector<8x1xf32>
    %69 = tpu.reciprocal %68 {approx = true} : vector<8x1xf32> -> vector<8x1xf32>
    %70 = vector.broadcast %69 : vector<8x1xf32> to vector<8x8xf32>
    %71 = arith.mulf %66, %70 : vector<8x8xf32>
    %72 = arith.truncf %71 : vector<8x8xf32> to vector<8x8xbf16>
    %cst_33 = arith.constant dense<0.000000e+00> : vector<8x8xf32>
    %73 = tpu.matmul %72, %54, %cst_33 {dimension_numbers = #tpu.dot_dimension_numbers<[1], [0], [0], [1], [0, 0, 1, 1], [], []>} : vector<8x8xbf16>, vector<8x8xbf16>, vector<8x8xf32> -> vector<8x8xf32>
    %74 = arith.truncf %73 : vector<8x8xf32> to vector<8x8xbf16>
    %75 = vector.extract_strided_slice %23 {offsets = [8, 0], sizes = [8, 32], strides = [1, 1]} : vector<32x32xf32> to vector<8x32xf32>
    %76 = arith.truncf %75 : vector<8x32xf32> to vector<8x32xbf16>
    %cst_34 = arith.constant dense<0.000000e+00> : vector<8x32xf32>
    %77 = tpu.matmul %74, %76, %cst_34 {dimension_numbers = #tpu.dot_dimension_numbers<[1], [0], [0], [1], [0, 0, 1, 1], [], []>} : vector<8x8xbf16>, vector<8x32xbf16>, vector<8x32xf32> -> vector<8x32xf32>
    %78 = arith.addf %51, %77 : vector<8x32xf32>
    %79 = vector.extract_strided_slice %20 {offsets = [0, 16], sizes = [8, 8], strides = [1, 1]} : vector<8x32xbf16> to vector<8x8xbf16>
    %80 = vector.extract_strided_slice %21 {offsets = [0, 16], sizes = [8, 8], strides = [1, 1]} : vector<8x32xbf16> to vector<8x8xbf16>
    %81 = vector.extract_strided_slice %22 {offsets = [0, 16], sizes = [8, 8], strides = [1, 1]} : vector<8x32xbf16> to vector<8x8xbf16>
    %cst_35 = arith.constant dense<0.000000e+00> : vector<8x8xf32>
    %82 = tpu.matmul %79, %80, %cst_35 {dimension_numbers = #tpu.dot_dimension_numbers<[1], [1], [0], [0], [0, 0, 1, 0], [], []>} : vector<8x8xbf16>, vector<8x8xbf16>, vector<8x8xf32> -> vector<8x8xf32>
    %cst_36 = arith.constant 0.353553385 : f32
    %83 = vector.broadcast %cst_36 : f32 to vector<8x8xf32>
    %84 = arith.mulf %82, %83 : vector<8x8xf32>
    %c0_i32_37 = arith.constant 0 : i32
    %85 = vector.broadcast %c0_i32_37 : i32 to vector<8x8xi32>
    %86 = arith.cmpi ne, %5, %85 : vector<8x8xi32>
    %cst_38 = arith.constant -1.000000e+04 : f32
    %87 = vector.broadcast %cst_38 : f32 to vector<8x8xf32>
    %88 = arith.select %86, %84, %87 : vector<8x8xi1>, vector<8x8xf32>
    %cst_39 = arith.constant dense<0xFF800000> : vector<8xf32>
    %89 = vector.multi_reduction <maximumf>, %88, %cst_39 [1] : vector<8x8xf32> to vector<8xf32>
    %90 = vector.shape_cast %89 : vector<8xf32> to vector<8x1xf32>
    %91 = vector.broadcast %90 : vector<8x1xf32> to vector<8x8xf32>
    %92 = arith.subf %88, %91 : vector<8x8xf32>
    %93 = math.exp %92 : vector<8x8xf32>
    %cst_40 = arith.constant dense<0.000000e+00> : vector<8xf32>
    %94 = vector.multi_reduction <add>, %93, %cst_40 [1] : vector<8x8xf32> to vector<8xf32>
    %95 = vector.shape_cast %94 : vector<8xf32> to vector<8x1xf32>
    %96 = tpu.reciprocal %95 {approx = true} : vector<8x1xf32> -> vector<8x1xf32>
    %97 = vector.broadcast %96 : vector<8x1xf32> to vector<8x8xf32>
    %98 = arith.mulf %93, %97 : vector<8x8xf32>
    %99 = arith.truncf %98 : vector<8x8xf32> to vector<8x8xbf16>
    %cst_41 = arith.constant dense<0.000000e+00> : vector<8x8xf32>
    %100 = tpu.matmul %99, %81, %cst_41 {dimension_numbers = #tpu.dot_dimension_numbers<[1], [0], [0], [1], [0, 0, 1, 1], [], []>} : vector<8x8xbf16>, vector<8x8xbf16>, vector<8x8xf32> -> vector<8x8xf32>
    %101 = arith.truncf %100 : vector<8x8xf32> to vector<8x8xbf16>
    %102 = vector.extract_strided_slice %23 {offsets = [16, 0], sizes = [8, 32], strides = [1, 1]} : vector<32x32xf32> to vector<8x32xf32>
    %103 = arith.truncf %102 : vector<8x32xf32> to vector<8x32xbf16>
    %cst_42 = arith.constant dense<0.000000e+00> : vector<8x32xf32>
    %104 = tpu.matmul %101, %103, %cst_42 {dimension_numbers = #tpu.dot_dimension_numbers<[1], [0], [0], [1], [0, 0, 1, 1], [], []>} : vector<8x8xbf16>, vector<8x32xbf16>, vector<8x32xf32> -> vector<8x32xf32>
    %105 = arith.addf %78, %104 : vector<8x32xf32>
    %106 = vector.extract_strided_slice %20 {offsets = [0, 24], sizes = [8, 8], strides = [1, 1]} : vector<8x32xbf16> to vector<8x8xbf16>
    %107 = vector.extract_strided_slice %21 {offsets = [0, 24], sizes = [8, 8], strides = [1, 1]} : vector<8x32xbf16> to vector<8x8xbf16>
    %108 = vector.extract_strided_slice %22 {offsets = [0, 24], sizes = [8, 8], strides = [1, 1]} : vector<8x32xbf16> to vector<8x8xbf16>
    %cst_43 = arith.constant dense<0.000000e+00> : vector<8x8xf32>
    %109 = tpu.matmul %106, %107, %cst_43 {dimension_numbers = #tpu.dot_dimension_numbers<[1], [1], [0], [0], [0, 0, 1, 0], [], []>} : vector<8x8xbf16>, vector<8x8xbf16>, vector<8x8xf32> -> vector<8x8xf32>
    %cst_44 = arith.constant 0.353553385 : f32
    %110 = vector.broadcast %cst_44 : f32 to vector<8x8xf32>
    %111 = arith.mulf %109, %110 : vector<8x8xf32>
    %c0_i32_45 = arith.constant 0 : i32
    %112 = vector.broadcast %c0_i32_45 : i32 to vector<8x8xi32>
    %113 = arith.cmpi ne, %5, %112 : vector<8x8xi32>
    %cst_46 = arith.constant -1.000000e+04 : f32
    %114 = vector.broadcast %cst_46 : f32 to vector<8x8xf32>
    %115 = arith.select %113, %111, %114 : vector<8x8xi1>, vector<8x8xf32>
    %cst_47 = arith.constant dense<0xFF800000> : vector<8xf32>
    %116 = vector.multi_reduction <maximumf>, %115, %cst_47 [1] : vector<8x8xf32> to vector<8xf32>
    %117 = vector.shape_cast %116 : vector<8xf32> to vector<8x1xf32>
    %118 = vector.broadcast %117 : vector<8x1xf32> to vector<8x8xf32>
    %119 = arith.subf %115, %118 : vector<8x8xf32>
    %120 = math.exp %119 : vector<8x8xf32>
    %cst_48 = arith.constant dense<0.000000e+00> : vector<8xf32>
    %121 = vector.multi_reduction <add>, %120, %cst_48 [1] : vector<8x8xf32> to vector<8xf32>
    %122 = vector.shape_cast %121 : vector<8xf32> to vector<8x1xf32>
    %123 = tpu.reciprocal %122 {approx = true} : vector<8x1xf32> -> vector<8x1xf32>
    %124 = vector.broadcast %123 : vector<8x1xf32> to vector<8x8xf32>
    %125 = arith.mulf %120, %124 : vector<8x8xf32>
    %126 = arith.truncf %125 : vector<8x8xf32> to vector<8x8xbf16>
    %cst_49 = arith.constant dense<0.000000e+00> : vector<8x8xf32>
    %127 = tpu.matmul %126, %108, %cst_49 {dimension_numbers = #tpu.dot_dimension_numbers<[1], [0], [0], [1], [0, 0, 1, 1], [], []>} : vector<8x8xbf16>, vector<8x8xbf16>, vector<8x8xf32> -> vector<8x8xf32>
    %128 = arith.truncf %127 : vector<8x8xf32> to vector<8x8xbf16>
    %129 = vector.extract_strided_slice %23 {offsets = [24, 0], sizes = [8, 32], strides = [1, 1]} : vector<32x32xf32> to vector<8x32xf32>
    %130 = arith.truncf %129 : vector<8x32xf32> to vector<8x32xbf16>
    %cst_50 = arith.constant dense<0.000000e+00> : vector<8x32xf32>
    %131 = tpu.matmul %128, %130, %cst_50 {dimension_numbers = #tpu.dot_dimension_numbers<[1], [0], [0], [1], [0, 0, 1, 1], [], []>} : vector<8x8xbf16>, vector<8x32xbf16>, vector<8x32xf32> -> vector<8x32xf32>
    %132 = arith.addf %105, %131 : vector<8x32xf32>
    %c0_51 = arith.constant 0 : index
    %c0_52 = arith.constant 0 : index
    %133 = vector.load %arg9[%c0_51, %c0_52] : memref<1x32xf32, #tpu.memory_space<vmem>>, vector<1x32xf32>
    %134 = vector.broadcast %133 : vector<1x32xf32> to vector<8x32xf32>
    %135 = arith.addf %132, %134 : vector<8x32xf32>
    %136 = arith.addf %1, %135 : vector<8x32xf32>
    %cst_53 = arith.constant dense<0.000000e+00> : vector<8xf32>
    %137 = vector.multi_reduction <add>, %136, %cst_53 [1] : vector<8x32xf32> to vector<8xf32>
    %138 = vector.shape_cast %137 : vector<8xf32> to vector<8x1xf32>
    %cst_54 = arith.constant 3.200000e+01 : f32
    %139 = vector.broadcast %cst_54 : f32 to vector<8x1xf32>
    %140 = arith.divf %138, %139 : vector<8x1xf32>
    %141 = vector.broadcast %140 : vector<8x1xf32> to vector<8x32xf32>
    %142 = arith.subf %136, %141 : vector<8x32xf32>
    %143 = arith.mulf %142, %142 : vector<8x32xf32>
    %cst_55 = arith.constant dense<0.000000e+00> : vector<8xf32>
    %144 = vector.multi_reduction <add>, %143, %cst_55 [1] : vector<8x32xf32> to vector<8xf32>
    %145 = vector.shape_cast %144 : vector<8xf32> to vector<8x1xf32>
    %cst_56 = arith.constant 3.200000e+01 : f32
    %146 = vector.broadcast %cst_56 : f32 to vector<8x1xf32>
    %147 = arith.divf %145, %146 : vector<8x1xf32>
    %148 = vector.broadcast %140 : vector<8x1xf32> to vector<8x32xf32>
    %149 = arith.subf %136, %148 : vector<8x32xf32>
    %cst_57 = arith.constant 9.99999996E-13 : f32
    %150 = vector.broadcast %cst_57 : f32 to vector<8x1xf32>
    %151 = arith.addf %147, %150 : vector<8x1xf32>
    %152 = math.rsqrt %151 : vector<8x1xf32>
    %153 = vector.broadcast %152 : vector<8x1xf32> to vector<8x32xf32>
    %154 = arith.mulf %149, %153 : vector<8x32xf32>
    %c0_58 = arith.constant 0 : index
    %c0_59 = arith.constant 0 : index
    %155 = vector.load %arg10[%c0_58, %c0_59] : memref<1x32xf32, #tpu.memory_space<vmem>>, vector<1x32xf32>
    %156 = vector.broadcast %155 : vector<1x32xf32> to vector<8x32xf32>
    %157 = arith.mulf %154, %156 : vector<8x32xf32>
    %c0_60 = arith.constant 0 : index
    %c0_61 = arith.constant 0 : index
    %158 = vector.load %arg11[%c0_60, %c0_61] : memref<1x32xf32, #tpu.memory_space<vmem>>, vector<1x32xf32>
    %159 = vector.broadcast %158 : vector<1x32xf32> to vector<8x32xf32>
    %160 = arith.addf %157, %159 : vector<8x32xf32>
    %c0_62 = arith.constant 0 : index
    %c0_63 = arith.constant 0 : index
    %c0_64 = arith.constant 0 : index
    %161 = vector.load %arg12[%c0_62, %c0_63, %c0_64] : memref<1x8x32xf32, #tpu.memory_space<vmem>>, vector<1x8x32xf32>
    %162 = vector.shape_cast %161 : vector<1x8x32xf32> to vector<8x32xf32>
    %163 = vector.shape_cast %160 : vector<8x32xf32> to vector<1x8x32xf32>
    tpu.vector_store %arg12[%c0_62, %c0_63, %c0_64], %163 {strides = array<i32>} : memref<1x8x32xf32, #tpu.memory_space<vmem>>, vector<1x8x32xf32>,
    return
  }
  func.func @transform_0(%arg0: i32) -> (i32, i32, i32) {
    %c0_i32 = arith.constant 0 : i32
    %c0_i32_0 = arith.constant 0 : i32
    %c0_i32_1 = arith.constant 0 : i32
    return %arg0, %c0_i32, %c0_i32_0 : i32, i32, i32
  }
  func.func @transform_1(%arg0: i32) -> (i32, i32, i32) {
    %c0_i32 = arith.constant 0 : i32
    %c0_i32_0 = arith.constant 0 : i32
    %c0_i32_1 = arith.constant 0 : i32
    return %arg0, %c0_i32, %c0_i32_0 : i32, i32, i32
  }
  func.func @transform_2(%arg0: i32) -> (i32, i32, i32) {
    %c0_i32 = arith.constant 0 : i32
    %c0_i32_0 = arith.constant 0 : i32
    %c0_i32_1 = arith.constant 0 : i32
    return %arg0, %c0_i32, %c0_i32_0 : i32, i32, i32
  }
  func.func @transform_3(%arg0: i32) -> (i32, i32) {
    %c0_i32 = arith.constant 0 : i32
    %c0_i32_0 = arith.constant 0 : i32
    %c0_i32_1 = arith.constant 0 : i32
    return %c0_i32, %c0_i32_0 : i32, i32
  }
  func.func @transform_4(%arg0: i32) -> (i32, i32) {
    %c0_i32 = arith.constant 0 : i32
    %c0_i32_0 = arith.constant 0 : i32
    %c0_i32_1 = arith.constant 0 : i32
    return %c0_i32, %c0_i32_0 : i32, i32
  }
  func.func @transform_5(%arg0: i32) -> (i32, i32) {
    %c0_i32 = arith.constant 0 : i32
    %c0_i32_0 = arith.constant 0 : i32
    %c0_i32_1 = arith.constant 0 : i32
    return %c0_i32, %c0_i32_0 : i32, i32
  }
  func.func @transform_6(%arg0: i32) -> (i32, i32) {
    %c0_i32 = arith.constant 0 : i32
    %c0_i32_0 = arith.constant 0 : i32
    %c0_i32_1 = arith.constant 0 : i32
    return %c0_i32, %c0_i32_0 : i32, i32
  }
  func.func @transform_7(%arg0: i32) -> (i32, i32) {
    %c0_i32 = arith.constant 0 : i32
    %c0_i32_0 = arith.constant 0 : i32
    %c0_i32_1 = arith.constant 0 : i32
    return %c0_i32, %c0_i32_0 : i32, i32
  }
  func.func @transform_8(%arg0: i32) -> (i32, i32) {
    %c0_i32 = arith.constant 0 : i32
    %c0_i32_0 = arith.constant 0 : i32
    %c0_i32_1 = arith.constant 0 : i32
    return %c0_i32, %c0_i32_0 : i32, i32
  }
  func.func @transform_9(%arg0: i32) -> (i32, i32) {
    %c0_i32 = arith.constant 0 : i32
    %c0_i32_0 = arith.constant 0 : i32
    %c0_i32_1 = arith.constant 0 : i32
    return %c0_i32, %c0_i32_0 : i32, i32
  }
  func.func @transform_10(%arg0: i32) -> (i32, i32) {
    %c0_i32 = arith.constant 0 : i32
    %c0_i32_0 = arith.constant 0 : i32
    %c0_i32_1 = arith.constant 0 : i32
    return %c0_i32, %c0_i32_0 : i32, i32
  }
  func.func @transform_11(%arg0: i32) -> (i32, i32, i32) {
    %c0_i32 = arith.constant 0 : i32
    %c0_i32_0 = arith.constant 0 : i32
    %c0_i32_1 = arith.constant 0 : i32
    return %arg0, %c0_i32, %c0_i32_0 : i32, i32, i32
  }
}

module attributes {stable_mosaic.version = 11 : i64} {
  func.func @_mha_ln_kernel(%arg0: i32, %arg1: memref<1x11x32xf32, #tpu.memory_space<vmem>>, %arg2: memref<1x8x32xf32, #tpu.memory_space<vmem>>, %arg3: memref<1x11x8xi32, #tpu.memory_space<vmem>>, %arg4: memref<32x32xbf16, #tpu.memory_space<vmem>>, %arg5: memref<1x32xf32, #tpu.memory_space<vmem>>, %arg6: memref<32x64xbf16, #tpu.memory_space<vmem>>, %arg7: memref<1x64xf32, #tpu.memory_space<vmem>>, %arg8: memref<32x32xf32, #tpu.memory_space<vmem>>, %arg9: memref<1x32xf32, #tpu.memory_space<vmem>>, %arg10: memref<1x32xf32, #tpu.memory_space<vmem>>, %arg11: memref<1x32xf32, #tpu.memory_space<vmem>>, %arg12: memref<1x11x32xf32, #tpu.memory_space<vmem>>) attributes {dimension_semantics = [#tpu.dimension_semantics<parallel>], iteration_bounds = array<i64: 2>, scalar_prefetch = 0 : i64, scratch_operands = 0 : i64, tpu.core_type = #tpu.core_type<tc>, window_params = [{transform_indices = @transform_0, window_bounds = array<i64: 1, 11, 32>}, {transform_indices = @transform_1, window_bounds = array<i64: 1, 8, 32>}, {transform_indices = @transform_2, window_bounds = array<i64: 1, 11, 8>}, {pipeline_mode = #tpu.pipeline_mode<synchronous>, transform_indices = @transform_3, window_bounds = array<i64: 32, 32>}, {pipeline_mode = #tpu.pipeline_mode<synchronous>, transform_indices = @transform_4, window_bounds = array<i64: 1, 32>}, {pipeline_mode = #tpu.pipeline_mode<synchronous>, transform_indices = @transform_5, window_bounds = array<i64: 32, 64>}, {pipeline_mode = #tpu.pipeline_mode<synchronous>, transform_indices = @transform_6, window_bounds = array<i64: 1, 64>}, {pipeline_mode = #tpu.pipeline_mode<synchronous>, transform_indices = @transform_7, window_bounds = array<i64: 32, 32>}, {pipeline_mode = #tpu.pipeline_mode<synchronous>, transform_indices = @transform_8, window_bounds = array<i64: 1, 32>}, {pipeline_mode = #tpu.pipeline_mode<synchronous>, transform_indices = @transform_9, window_bounds = array<i64: 1, 32>}, {pipeline_mode = #tpu.pipeline_mode<synchronous>, transform_indices = @transform_10, window_bounds = array<i64: 1, 32>}, {transform_indices = @transform_11, window_bounds = array<i64: 1, 11, 32>}]} {
    %c0 = arith.constant 0 : index
    %c0_0 = arith.constant 0 : index
    %c0_1 = arith.constant 0 : index
    %0 = vector.load %arg1[%c0, %c0_0, %c0_1] : memref<1x11x32xf32, #tpu.memory_space<vmem>>, vector<1x11x32xf32>
    %1 = vector.shape_cast %0 : vector<1x11x32xf32> to vector<11x32xf32>
    %c0_2 = arith.constant 0 : index
    %c0_3 = arith.constant 0 : index
    %c0_4 = arith.constant 0 : index
    %2 = vector.load %arg2[%c0_2, %c0_3, %c0_4] : memref<1x8x32xf32, #tpu.memory_space<vmem>>, vector<1x8x32xf32>
    %3 = vector.shape_cast %2 : vector<1x8x32xf32> to vector<8x32xf32>
    %c0_5 = arith.constant 0 : index
    %c0_6 = arith.constant 0 : index
    %c0_7 = arith.constant 0 : index
    %4 = vector.load %arg3[%c0_5, %c0_6, %c0_7] : memref<1x11x8xi32, #tpu.memory_space<vmem>>, vector<1x11x8xi32>
    %5 = vector.shape_cast %4 : vector<1x11x8xi32> to vector<11x8xi32>
    %6 = arith.truncf %1 : vector<11x32xf32> to vector<11x32xbf16>
    %c0_8 = arith.constant 0 : index
    %c0_9 = arith.constant 0 : index
    %7 = vector.load %arg4[%c0_8, %c0_9] : memref<32x32xbf16, #tpu.memory_space<vmem>>, vector<32x32xbf16>
    %cst = arith.constant dense<0.000000e+00> : vector<11x32xf32>
    %8 = tpu.matmul %6, %7, %cst {dimension_numbers = #tpu.dot_dimension_numbers<[1], [0], [0], [1], [0, 0, 1, 1], [], []>} : vector<11x32xbf16>, vector<32x32xbf16>, vector<11x32xf32> -> vector<11x32xf32>
    %c0_10 = arith.constant 0 : index
    %c0_11 = arith.constant 0 : index
    %9 = vector.load %arg5[%c0_10, %c0_11] : memref<1x32xf32, #tpu.memory_space<vmem>>, vector<1x32xf32>
    %10 = vector.broadcast %9 : vector<1x32xf32> to vector<11x32xf32>
    %11 = arith.addf %8, %10 : vector<11x32xf32>
    %12 = arith.truncf %3 : vector<8x32xf32> to vector<8x32xbf16>
    %c0_12 = arith.constant 0 : index
    %c0_13 = arith.constant 0 : index
    %13 = vector.load %arg6[%c0_12, %c0_13] : memref<32x64xbf16, #tpu.memory_space<vmem>>, vector<32x64xbf16>
    %cst_14 = arith.constant dense<0.000000e+00> : vector<8x64xf32>
    %14 = tpu.matmul %12, %13, %cst_14 {dimension_numbers = #tpu.dot_dimension_numbers<[1], [0], [0], [1], [0, 0, 1, 1], [], []>} : vector<8x32xbf16>, vector<32x64xbf16>, vector<8x64xf32> -> vector<8x64xf32>
    %c0_15 = arith.constant 0 : index
    %c0_16 = arith.constant 0 : index
    %15 = vector.load %arg7[%c0_15, %c0_16] : memref<1x64xf32, #tpu.memory_space<vmem>>, vector<1x64xf32>
    %16 = vector.broadcast %15 : vector<1x64xf32> to vector<8x64xf32>
    %17 = arith.addf %14, %16 : vector<8x64xf32>
    %18 = vector.extract_strided_slice %17 {offsets = [0, 0], sizes = [8, 32], strides = [1, 1]} : vector<8x64xf32> to vector<8x32xf32>
    %19 = vector.extract_strided_slice %17 {offsets = [0, 32], sizes = [8, 32], strides = [1, 1]} : vector<8x64xf32> to vector<8x32xf32>
    %20 = arith.truncf %11 : vector<11x32xf32> to vector<11x32xbf16>
    %21 = arith.truncf %18 : vector<8x32xf32> to vector<8x32xbf16>
    %22 = arith.truncf %19 : vector<8x32xf32> to vector<8x32xbf16>
    %c0_17 = arith.constant 0 : index
    %c0_18 = arith.constant 0 : index
    %23 = vector.load %arg8[%c0_17, %c0_18] : memref<32x32xf32, #tpu.memory_space<vmem>>, vector<32x32xf32>
    %cst_19 = arith.constant 0.000000e+00 : f32
    %24 = vector.broadcast %cst_19 : f32 to vector<11x32xf32>
    %25 = vector.extract_strided_slice %20 {offsets = [0, 0], sizes = [11, 8], strides = [1, 1]} : vector<11x32xbf16> to vector<11x8xbf16>
    %26 = vector.extract_strided_slice %21 {offsets = [0, 0], sizes = [8, 8], strides = [1, 1]} : vector<8x32xbf16> to vector<8x8xbf16>
    %27 = vector.extract_strided_slice %22 {offsets = [0, 0], sizes = [8, 8], strides = [1, 1]} : vector<8x32xbf16> to vector<8x8xbf16>
    %cst_20 = arith.constant dense<0.000000e+00> : vector<11x8xf32>
    %28 = tpu.matmul %25, %26, %cst_20 {dimension_numbers = #tpu.dot_dimension_numbers<[1], [1], [0], [0], [0, 0, 1, 0], [], []>} : vector<11x8xbf16>, vector<8x8xbf16>, vector<11x8xf32> -> vector<11x8xf32>
    %cst_21 = arith.constant 0.353553385 : f32
    %29 = vector.broadcast %cst_21 : f32 to vector<11x8xf32>
    %30 = arith.mulf %28, %29 : vector<11x8xf32>
    %c0_i32 = arith.constant 0 : i32
    %31 = vector.broadcast %c0_i32 : i32 to vector<11x8xi32>
    %32 = arith.cmpi ne, %5, %31 : vector<11x8xi32>
    %cst_22 = arith.constant -1.000000e+04 : f32
    %33 = vector.broadcast %cst_22 : f32 to vector<11x8xf32>
    %34 = arith.select %32, %30, %33 : vector<11x8xi1>, vector<11x8xf32>
    %cst_23 = arith.constant dense<0xFF800000> : vector<11xf32>
    %35 = vector.multi_reduction <maximumf>, %34, %cst_23 [1] : vector<11x8xf32> to vector<11xf32>
    %36 = vector.shape_cast %35 : vector<11xf32> to vector<11x1xf32>
    %37 = vector.broadcast %36 : vector<11x1xf32> to vector<11x8xf32>
    %38 = arith.subf %34, %37 : vector<11x8xf32>
    %39 = math.exp %38 : vector<11x8xf32>
    %cst_24 = arith.constant dense<0.000000e+00> : vector<11xf32>
    %40 = vector.multi_reduction <add>, %39, %cst_24 [1] : vector<11x8xf32> to vector<11xf32>
    %41 = vector.shape_cast %40 : vector<11xf32> to vector<11x1xf32>
    %42 = tpu.reciprocal %41 {approx = true} : vector<11x1xf32> -> vector<11x1xf32>
    %43 = vector.broadcast %42 : vector<11x1xf32> to vector<11x8xf32>
    %44 = arith.mulf %39, %43 : vector<11x8xf32>
    %45 = arith.truncf %44 : vector<11x8xf32> to vector<11x8xbf16>
    %cst_25 = arith.constant dense<0.000000e+00> : vector<11x8xf32>
    %46 = tpu.matmul %45, %27, %cst_25 {dimension_numbers = #tpu.dot_dimension_numbers<[1], [0], [0], [1], [0, 0, 1, 1], [], []>} : vector<11x8xbf16>, vector<8x8xbf16>, vector<11x8xf32> -> vector<11x8xf32>
    %47 = arith.truncf %46 : vector<11x8xf32> to vector<11x8xbf16>
    %48 = vector.extract_strided_slice %23 {offsets = [0, 0], sizes = [8, 32], strides = [1, 1]} : vector<32x32xf32> to vector<8x32xf32>
    %49 = arith.truncf %48 : vector<8x32xf32> to vector<8x32xbf16>
    %cst_26 = arith.constant dense<0.000000e+00> : vector<11x32xf32>
    %50 = tpu.matmul %47, %49, %cst_26 {dimension_numbers = #tpu.dot_dimension_numbers<[1], [0], [0], [1], [0, 0, 1, 1], [], []>} : vector<11x8xbf16>, vector<8x32xbf16>, vector<11x32xf32> -> vector<11x32xf32>
    %51 = arith.addf %24, %50 : vector<11x32xf32>
    %52 = vector.extract_strided_slice %20 {offsets = [0, 8], sizes = [11, 8], strides = [1, 1]} : vector<11x32xbf16> to vector<11x8xbf16>
    %53 = vector.extract_strided_slice %21 {offsets = [0, 8], sizes = [8, 8], strides = [1, 1]} : vector<8x32xbf16> to vector<8x8xbf16>
    %54 = vector.extract_strided_slice %22 {offsets = [0, 8], sizes = [8, 8], strides = [1, 1]} : vector<8x32xbf16> to vector<8x8xbf16>
    %cst_27 = arith.constant dense<0.000000e+00> : vector<11x8xf32>
    %55 = tpu.matmul %52, %53, %cst_27 {dimension_numbers = #tpu.dot_dimension_numbers<[1], [1], [0], [0], [0, 0, 1, 0], [], []>} : vector<11x8xbf16>, vector<8x8xbf16>, vector<11x8xf32> -> vector<11x8xf32>
    %cst_28 = arith.constant 0.353553385 : f32
    %56 = vector.broadcast %cst_28 : f32 to vector<11x8xf32>
    %57 = arith.mulf %55, %56 : vector<11x8xf32>
    %c0_i32_29 = arith.constant 0 : i32
    %58 = vector.broadcast %c0_i32_29 : i32 to vector<11x8xi32>
    %59 = arith.cmpi ne, %5, %58 : vector<11x8xi32>
    %cst_30 = arith.constant -1.000000e+04 : f32
    %60 = vector.broadcast %cst_30 : f32 to vector<11x8xf32>
    %61 = arith.select %59, %57, %60 : vector<11x8xi1>, vector<11x8xf32>
    %cst_31 = arith.constant dense<0xFF800000> : vector<11xf32>
    %62 = vector.multi_reduction <maximumf>, %61, %cst_31 [1] : vector<11x8xf32> to vector<11xf32>
    %63 = vector.shape_cast %62 : vector<11xf32> to vector<11x1xf32>
    %64 = vector.broadcast %63 : vector<11x1xf32> to vector<11x8xf32>
    %65 = arith.subf %61, %64 : vector<11x8xf32>
    %66 = math.exp %65 : vector<11x8xf32>
    %cst_32 = arith.constant dense<0.000000e+00> : vector<11xf32>
    %67 = vector.multi_reduction <add>, %66, %cst_32 [1] : vector<11x8xf32> to vector<11xf32>
    %68 = vector.shape_cast %67 : vector<11xf32> to vector<11x1xf32>
    %69 = tpu.reciprocal %68 {approx = true} : vector<11x1xf32> -> vector<11x1xf32>
    %70 = vector.broadcast %69 : vector<11x1xf32> to vector<11x8xf32>
    %71 = arith.mulf %66, %70 : vector<11x8xf32>
    %72 = arith.truncf %71 : vector<11x8xf32> to vector<11x8xbf16>
    %cst_33 = arith.constant dense<0.000000e+00> : vector<11x8xf32>
    %73 = tpu.matmul %72, %54, %cst_33 {dimension_numbers = #tpu.dot_dimension_numbers<[1], [0], [0], [1], [0, 0, 1, 1], [], []>} : vector<11x8xbf16>, vector<8x8xbf16>, vector<11x8xf32> -> vector<11x8xf32>
    %74 = arith.truncf %73 : vector<11x8xf32> to vector<11x8xbf16>
    %75 = vector.extract_strided_slice %23 {offsets = [8, 0], sizes = [8, 32], strides = [1, 1]} : vector<32x32xf32> to vector<8x32xf32>
    %76 = arith.truncf %75 : vector<8x32xf32> to vector<8x32xbf16>
    %cst_34 = arith.constant dense<0.000000e+00> : vector<11x32xf32>
    %77 = tpu.matmul %74, %76, %cst_34 {dimension_numbers = #tpu.dot_dimension_numbers<[1], [0], [0], [1], [0, 0, 1, 1], [], []>} : vector<11x8xbf16>, vector<8x32xbf16>, vector<11x32xf32> -> vector<11x32xf32>
    %78 = arith.addf %51, %77 : vector<11x32xf32>
    %79 = vector.extract_strided_slice %20 {offsets = [0, 16], sizes = [11, 8], strides = [1, 1]} : vector<11x32xbf16> to vector<11x8xbf16>
    %80 = vector.extract_strided_slice %21 {offsets = [0, 16], sizes = [8, 8], strides = [1, 1]} : vector<8x32xbf16> to vector<8x8xbf16>
    %81 = vector.extract_strided_slice %22 {offsets = [0, 16], sizes = [8, 8], strides = [1, 1]} : vector<8x32xbf16> to vector<8x8xbf16>
    %cst_35 = arith.constant dense<0.000000e+00> : vector<11x8xf32>
    %82 = tpu.matmul %79, %80, %cst_35 {dimension_numbers = #tpu.dot_dimension_numbers<[1], [1], [0], [0], [0, 0, 1, 0], [], []>} : vector<11x8xbf16>, vector<8x8xbf16>, vector<11x8xf32> -> vector<11x8xf32>
    %cst_36 = arith.constant 0.353553385 : f32
    %83 = vector.broadcast %cst_36 : f32 to vector<11x8xf32>
    %84 = arith.mulf %82, %83 : vector<11x8xf32>
    %c0_i32_37 = arith.constant 0 : i32
    %85 = vector.broadcast %c0_i32_37 : i32 to vector<11x8xi32>
    %86 = arith.cmpi ne, %5, %85 : vector<11x8xi32>
    %cst_38 = arith.constant -1.000000e+04 : f32
    %87 = vector.broadcast %cst_38 : f32 to vector<11x8xf32>
    %88 = arith.select %86, %84, %87 : vector<11x8xi1>, vector<11x8xf32>
    %cst_39 = arith.constant dense<0xFF800000> : vector<11xf32>
    %89 = vector.multi_reduction <maximumf>, %88, %cst_39 [1] : vector<11x8xf32> to vector<11xf32>
    %90 = vector.shape_cast %89 : vector<11xf32> to vector<11x1xf32>
    %91 = vector.broadcast %90 : vector<11x1xf32> to vector<11x8xf32>
    %92 = arith.subf %88, %91 : vector<11x8xf32>
    %93 = math.exp %92 : vector<11x8xf32>
    %cst_40 = arith.constant dense<0.000000e+00> : vector<11xf32>
    %94 = vector.multi_reduction <add>, %93, %cst_40 [1] : vector<11x8xf32> to vector<11xf32>
    %95 = vector.shape_cast %94 : vector<11xf32> to vector<11x1xf32>
    %96 = tpu.reciprocal %95 {approx = true} : vector<11x1xf32> -> vector<11x1xf32>
    %97 = vector.broadcast %96 : vector<11x1xf32> to vector<11x8xf32>
    %98 = arith.mulf %93, %97 : vector<11x8xf32>
    %99 = arith.truncf %98 : vector<11x8xf32> to vector<11x8xbf16>
    %cst_41 = arith.constant dense<0.000000e+00> : vector<11x8xf32>
    %100 = tpu.matmul %99, %81, %cst_41 {dimension_numbers = #tpu.dot_dimension_numbers<[1], [0], [0], [1], [0, 0, 1, 1], [], []>} : vector<11x8xbf16>, vector<8x8xbf16>, vector<11x8xf32> -> vector<11x8xf32>
    %101 = arith.truncf %100 : vector<11x8xf32> to vector<11x8xbf16>
    %102 = vector.extract_strided_slice %23 {offsets = [16, 0], sizes = [8, 32], strides = [1, 1]} : vector<32x32xf32> to vector<8x32xf32>
    %103 = arith.truncf %102 : vector<8x32xf32> to vector<8x32xbf16>
    %cst_42 = arith.constant dense<0.000000e+00> : vector<11x32xf32>
    %104 = tpu.matmul %101, %103, %cst_42 {dimension_numbers = #tpu.dot_dimension_numbers<[1], [0], [0], [1], [0, 0, 1, 1], [], []>} : vector<11x8xbf16>, vector<8x32xbf16>, vector<11x32xf32> -> vector<11x32xf32>
    %105 = arith.addf %78, %104 : vector<11x32xf32>
    %106 = vector.extract_strided_slice %20 {offsets = [0, 24], sizes = [11, 8], strides = [1, 1]} : vector<11x32xbf16> to vector<11x8xbf16>
    %107 = vector.extract_strided_slice %21 {offsets = [0, 24], sizes = [8, 8], strides = [1, 1]} : vector<8x32xbf16> to vector<8x8xbf16>
    %108 = vector.extract_strided_slice %22 {offsets = [0, 24], sizes = [8, 8], strides = [1, 1]} : vector<8x32xbf16> to vector<8x8xbf16>
    %cst_43 = arith.constant dense<0.000000e+00> : vector<11x8xf32>
    %109 = tpu.matmul %106, %107, %cst_43 {dimension_numbers = #tpu.dot_dimension_numbers<[1], [1], [0], [0], [0, 0, 1, 0], [], []>} : vector<11x8xbf16>, vector<8x8xbf16>, vector<11x8xf32> -> vector<11x8xf32>
    %cst_44 = arith.constant 0.353553385 : f32
    %110 = vector.broadcast %cst_44 : f32 to vector<11x8xf32>
    %111 = arith.mulf %109, %110 : vector<11x8xf32>
    %c0_i32_45 = arith.constant 0 : i32
    %112 = vector.broadcast %c0_i32_45 : i32 to vector<11x8xi32>
    %113 = arith.cmpi ne, %5, %112 : vector<11x8xi32>
    %cst_46 = arith.constant -1.000000e+04 : f32
    %114 = vector.broadcast %cst_46 : f32 to vector<11x8xf32>
    %115 = arith.select %113, %111, %114 : vector<11x8xi1>, vector<11x8xf32>
    %cst_47 = arith.constant dense<0xFF800000> : vector<11xf32>
    %116 = vector.multi_reduction <maximumf>, %115, %cst_47 [1] : vector<11x8xf32> to vector<11xf32>
    %117 = vector.shape_cast %116 : vector<11xf32> to vector<11x1xf32>
    %118 = vector.broadcast %117 : vector<11x1xf32> to vector<11x8xf32>
    %119 = arith.subf %115, %118 : vector<11x8xf32>
    %120 = math.exp %119 : vector<11x8xf32>
    %cst_48 = arith.constant dense<0.000000e+00> : vector<11xf32>
    %121 = vector.multi_reduction <add>, %120, %cst_48 [1] : vector<11x8xf32> to vector<11xf32>
    %122 = vector.shape_cast %121 : vector<11xf32> to vector<11x1xf32>
    %123 = tpu.reciprocal %122 {approx = true} : vector<11x1xf32> -> vector<11x1xf32>
    %124 = vector.broadcast %123 : vector<11x1xf32> to vector<11x8xf32>
    %125 = arith.mulf %120, %124 : vector<11x8xf32>
    %126 = arith.truncf %125 : vector<11x8xf32> to vector<11x8xbf16>
    %cst_49 = arith.constant dense<0.000000e+00> : vector<11x8xf32>
    %127 = tpu.matmul %126, %108, %cst_49 {dimension_numbers = #tpu.dot_dimension_numbers<[1], [0], [0], [1], [0, 0, 1, 1], [], []>} : vector<11x8xbf16>, vector<8x8xbf16>, vector<11x8xf32> -> vector<11x8xf32>
    %128 = arith.truncf %127 : vector<11x8xf32> to vector<11x8xbf16>
    %129 = vector.extract_strided_slice %23 {offsets = [24, 0], sizes = [8, 32], strides = [1, 1]} : vector<32x32xf32> to vector<8x32xf32>
    %130 = arith.truncf %129 : vector<8x32xf32> to vector<8x32xbf16>
    %cst_50 = arith.constant dense<0.000000e+00> : vector<11x32xf32>
    %131 = tpu.matmul %128, %130, %cst_50 {dimension_numbers = #tpu.dot_dimension_numbers<[1], [0], [0], [1], [0, 0, 1, 1], [], []>} : vector<11x8xbf16>, vector<8x32xbf16>, vector<11x32xf32> -> vector<11x32xf32>
    %132 = arith.addf %105, %131 : vector<11x32xf32>
    %c0_51 = arith.constant 0 : index
    %c0_52 = arith.constant 0 : index
    %133 = vector.load %arg9[%c0_51, %c0_52] : memref<1x32xf32, #tpu.memory_space<vmem>>, vector<1x32xf32>
    %134 = vector.broadcast %133 : vector<1x32xf32> to vector<11x32xf32>
    %135 = arith.addf %132, %134 : vector<11x32xf32>
    %136 = arith.addf %1, %135 : vector<11x32xf32>
    %cst_53 = arith.constant dense<0.000000e+00> : vector<11xf32>
    %137 = vector.multi_reduction <add>, %136, %cst_53 [1] : vector<11x32xf32> to vector<11xf32>
    %138 = vector.shape_cast %137 : vector<11xf32> to vector<11x1xf32>
    %cst_54 = arith.constant 3.200000e+01 : f32
    %139 = vector.broadcast %cst_54 : f32 to vector<11x1xf32>
    %140 = arith.divf %138, %139 : vector<11x1xf32>
    %141 = vector.broadcast %140 : vector<11x1xf32> to vector<11x32xf32>
    %142 = arith.subf %136, %141 : vector<11x32xf32>
    %143 = arith.mulf %142, %142 : vector<11x32xf32>
    %cst_55 = arith.constant dense<0.000000e+00> : vector<11xf32>
    %144 = vector.multi_reduction <add>, %143, %cst_55 [1] : vector<11x32xf32> to vector<11xf32>
    %145 = vector.shape_cast %144 : vector<11xf32> to vector<11x1xf32>
    %cst_56 = arith.constant 3.200000e+01 : f32
    %146 = vector.broadcast %cst_56 : f32 to vector<11x1xf32>
    %147 = arith.divf %145, %146 : vector<11x1xf32>
    %148 = vector.broadcast %140 : vector<11x1xf32> to vector<11x32xf32>
    %149 = arith.subf %136, %148 : vector<11x32xf32>
    %cst_57 = arith.constant 9.99999996E-13 : f32
    %150 = vector.broadcast %cst_57 : f32 to vector<11x1xf32>
    %151 = arith.addf %147, %150 : vector<11x1xf32>
    %152 = math.rsqrt %151 : vector<11x1xf32>
    %153 = vector.broadcast %152 : vector<11x1xf32> to vector<11x32xf32>
    %154 = arith.mulf %149, %153 : vector<11x32xf32>
    %c0_58 = arith.constant 0 : index
    %c0_59 = arith.constant 0 : index
    %155 = vector.load %arg10[%c0_58, %c0_59] : memref<1x32xf32, #tpu.memory_space<vmem>>, vector<1x32xf32>
    %156 = vector.broadcast %155 : vector<1x32xf32> to vector<11x32xf32>
    %157 = arith.mulf %154, %156 : vector<11x32xf32>
    %c0_60 = arith.constant 0 : index
    %c0_61 = arith.constant 0 : index
    %158 = vector.load %arg11[%c0_60, %c0_61] : memref<1x32xf32, #tpu.memory_space<vmem>>, vector<1x32xf32>
    %159 = vector.broadcast %158 : vector<1x32xf32> to vector<11x32xf32>
    %160 = arith.addf %157, %159 : vector<11x32xf32>
    %c0_62 = arith.constant 0 : index
    %c0_63 = arith.constant 0 : index
    %c0_64 = arith.constant 0 : index
    %161 = vector.load %arg12[%c0_62, %c0_63, %c0_64] : memref<1x11x32xf32, #tpu.memory_space<vmem>>, vector<1x11x32xf32>
    %162 = vector.shape_cast %161 : vector<1x11x32xf32> to vector<11x32xf32>
    %163 = vector.shape_cast %160 : vector<11x32xf32> to vector<1x11x32xf32>
    tpu.vector_store %arg12[%c0_62, %c0_63, %c0_64], %163 {strides = array<i32>} : memref<1x11x32xf32, #tpu.memory_space<vmem>>, vector<1x11x32xf32>,
    return
  }
  func.func @transform_0(%arg0: i32) -> (i32, i32, i32) {
    %c0_i32 = arith.constant 0 : i32
    %c0_i32_0 = arith.constant 0 : i32
    %c0_i32_1 = arith.constant 0 : i32
    return %arg0, %c0_i32, %c0_i32_0 : i32, i32, i32
  }
  func.func @transform_1(%arg0: i32) -> (i32, i32, i32) {
    %c0_i32 = arith.constant 0 : i32
    %c0_i32_0 = arith.constant 0 : i32
    %c0_i32_1 = arith.constant 0 : i32
    return %arg0, %c0_i32, %c0_i32_0 : i32, i32, i32
  }
  func.func @transform_2(%arg0: i32) -> (i32, i32, i32) {
    %c0_i32 = arith.constant 0 : i32
    %c0_i32_0 = arith.constant 0 : i32
    %c0_i32_1 = arith.constant 0 : i32
    return %arg0, %c0_i32, %c0_i32_0 : i32, i32, i32
  }
  func.func @transform_3(%arg0: i32) -> (i32, i32) {
    %c0_i32 = arith.constant 0 : i32
    %c0_i32_0 = arith.constant 0 : i32
    %c0_i32_1 = arith.constant 0 : i32
    return %c0_i32, %c0_i32_0 : i32, i32
  }
  func.func @transform_4(%arg0: i32) -> (i32, i32) {
    %c0_i32 = arith.constant 0 : i32
    %c0_i32_0 = arith.constant 0 : i32
    %c0_i32_1 = arith.constant 0 : i32
    return %c0_i32, %c0_i32_0 : i32, i32
  }
  func.func @transform_5(%arg0: i32) -> (i32, i32) {
    %c0_i32 = arith.constant 0 : i32
    %c0_i32_0 = arith.constant 0 : i32
    %c0_i32_1 = arith.constant 0 : i32
    return %c0_i32, %c0_i32_0 : i32, i32
  }
  func.func @transform_6(%arg0: i32) -> (i32, i32) {
    %c0_i32 = arith.constant 0 : i32
    %c0_i32_0 = arith.constant 0 : i32
    %c0_i32_1 = arith.constant 0 : i32
    return %c0_i32, %c0_i32_0 : i32, i32
  }
  func.func @transform_7(%arg0: i32) -> (i32, i32) {
    %c0_i32 = arith.constant 0 : i32
    %c0_i32_0 = arith.constant 0 : i32
    %c0_i32_1 = arith.constant 0 : i32
    return %c0_i32, %c0_i32_0 : i32, i32
  }
  func.func @transform_8(%arg0: i32) -> (i32, i32) {
    %c0_i32 = arith.constant 0 : i32
    %c0_i32_0 = arith.constant 0 : i32
    %c0_i32_1 = arith.constant 0 : i32
    return %c0_i32, %c0_i32_0 : i32, i32
  }
  func.func @transform_9(%arg0: i32) -> (i32, i32) {
    %c0_i32 = arith.constant 0 : i32
    %c0_i32_0 = arith.constant 0 : i32
    %c0_i32_1 = arith.constant 0 : i32
    return %c0_i32, %c0_i32_0 : i32, i32
  }
  func.func @transform_10(%arg0: i32) -> (i32, i32) {
    %c0_i32 = arith.constant 0 : i32
    %c0_i32_0 = arith.constant 0 : i32
    %c0_i32_1 = arith.constant 0 : i32
    return %c0_i32, %c0_i32_0 : i32, i32
  }
  func.func @transform_11(%arg0: i32) -> (i32, i32, i32) {
    %c0_i32 = arith.constant 0 : i32
    %c0_i32_0 = arith.constant 0 : i32
    %c0_i32_1 = arith.constant 0 : i32
    return %arg0, %c0_i32, %c0_i32_0 : i32, i32, i32
  }
}

module attributes {stable_mosaic.version = 11 : i64} {
  func.func @_ffn_ln_kernel(%arg0: i32, %arg1: memref<1x11x32xf32, #tpu.memory_space<vmem>>, %arg2: memref<32x64xbf16, #tpu.memory_space<vmem>>, %arg3: memref<1x64xf32, #tpu.memory_space<vmem>>, %arg4: memref<64x32xbf16, #tpu.memory_space<vmem>>, %arg5: memref<1x32xf32, #tpu.memory_space<vmem>>, %arg6: memref<1x32xf32, #tpu.memory_space<vmem>>, %arg7: memref<1x32xf32, #tpu.memory_space<vmem>>, %arg8: memref<1x11x32xf32, #tpu.memory_space<vmem>>) attributes {dimension_semantics = [#tpu.dimension_semantics<parallel>], iteration_bounds = array<i64: 2>, scalar_prefetch = 0 : i64, scratch_operands = 0 : i64, tpu.core_type = #tpu.core_type<tc>, window_params = [{transform_indices = @transform_0, window_bounds = array<i64: 1, 11, 32>}, {pipeline_mode = #tpu.pipeline_mode<synchronous>, transform_indices = @transform_1, window_bounds = array<i64: 32, 64>}, {pipeline_mode = #tpu.pipeline_mode<synchronous>, transform_indices = @transform_2, window_bounds = array<i64: 1, 64>}, {pipeline_mode = #tpu.pipeline_mode<synchronous>, transform_indices = @transform_3, window_bounds = array<i64: 64, 32>}, {pipeline_mode = #tpu.pipeline_mode<synchronous>, transform_indices = @transform_4, window_bounds = array<i64: 1, 32>}, {pipeline_mode = #tpu.pipeline_mode<synchronous>, transform_indices = @transform_5, window_bounds = array<i64: 1, 32>}, {pipeline_mode = #tpu.pipeline_mode<synchronous>, transform_indices = @transform_6, window_bounds = array<i64: 1, 32>}, {transform_indices = @transform_7, window_bounds = array<i64: 1, 11, 32>}]} {
    %c0 = arith.constant 0 : index
    %c0_0 = arith.constant 0 : index
    %c0_1 = arith.constant 0 : index
    %0 = vector.load %arg1[%c0, %c0_0, %c0_1] : memref<1x11x32xf32, #tpu.memory_space<vmem>>, vector<1x11x32xf32>
    %1 = vector.shape_cast %0 : vector<1x11x32xf32> to vector<11x32xf32>
    %2 = arith.truncf %1 : vector<11x32xf32> to vector<11x32xbf16>
    %c0_2 = arith.constant 0 : index
    %c0_3 = arith.constant 0 : index
    %3 = vector.load %arg2[%c0_2, %c0_3] : memref<32x64xbf16, #tpu.memory_space<vmem>>, vector<32x64xbf16>
    %cst = arith.constant dense<0.000000e+00> : vector<11x64xf32>
    %4 = tpu.matmul %2, %3, %cst {dimension_numbers = #tpu.dot_dimension_numbers<[1], [0], [0], [1], [0, 0, 1, 1], [], []>} : vector<11x32xbf16>, vector<32x64xbf16>, vector<11x64xf32> -> vector<11x64xf32>
    %c0_4 = arith.constant 0 : index
    %c0_5 = arith.constant 0 : index
    %5 = vector.load %arg3[%c0_4, %c0_5] : memref<1x64xf32, #tpu.memory_space<vmem>>, vector<1x64xf32>
    %6 = vector.broadcast %5 : vector<1x64xf32> to vector<11x64xf32>
    %7 = arith.addf %4, %6 : vector<11x64xf32>
    %cst_6 = arith.constant 0.000000e+00 : f32
    %8 = vector.broadcast %cst_6 : f32 to vector<11x64xf32>
    %9 = arith.maximumf %7, %8 : vector<11x64xf32>
    %10 = arith.truncf %9 : vector<11x64xf32> to vector<11x64xbf16>
    %c0_7 = arith.constant 0 : index
    %c0_8 = arith.constant 0 : index
    %11 = vector.load %arg4[%c0_7, %c0_8] : memref<64x32xbf16, #tpu.memory_space<vmem>>, vector<64x32xbf16>
    %cst_9 = arith.constant dense<0.000000e+00> : vector<11x32xf32>
    %12 = tpu.matmul %10, %11, %cst_9 {dimension_numbers = #tpu.dot_dimension_numbers<[1], [0], [0], [1], [0, 0, 1, 1], [], []>} : vector<11x64xbf16>, vector<64x32xbf16>, vector<11x32xf32> -> vector<11x32xf32>
    %c0_10 = arith.constant 0 : index
    %c0_11 = arith.constant 0 : index
    %13 = vector.load %arg5[%c0_10, %c0_11] : memref<1x32xf32, #tpu.memory_space<vmem>>, vector<1x32xf32>
    %14 = vector.broadcast %13 : vector<1x32xf32> to vector<11x32xf32>
    %15 = arith.addf %12, %14 : vector<11x32xf32>
    %16 = arith.addf %1, %15 : vector<11x32xf32>
    %cst_12 = arith.constant dense<0.000000e+00> : vector<11xf32>
    %17 = vector.multi_reduction <add>, %16, %cst_12 [1] : vector<11x32xf32> to vector<11xf32>
    %18 = vector.shape_cast %17 : vector<11xf32> to vector<11x1xf32>
    %cst_13 = arith.constant 3.200000e+01 : f32
    %19 = vector.broadcast %cst_13 : f32 to vector<11x1xf32>
    %20 = arith.divf %18, %19 : vector<11x1xf32>
    %21 = vector.broadcast %20 : vector<11x1xf32> to vector<11x32xf32>
    %22 = arith.subf %16, %21 : vector<11x32xf32>
    %23 = arith.mulf %22, %22 : vector<11x32xf32>
    %cst_14 = arith.constant dense<0.000000e+00> : vector<11xf32>
    %24 = vector.multi_reduction <add>, %23, %cst_14 [1] : vector<11x32xf32> to vector<11xf32>
    %25 = vector.shape_cast %24 : vector<11xf32> to vector<11x1xf32>
    %cst_15 = arith.constant 3.200000e+01 : f32
    %26 = vector.broadcast %cst_15 : f32 to vector<11x1xf32>
    %27 = arith.divf %25, %26 : vector<11x1xf32>
    %28 = vector.broadcast %20 : vector<11x1xf32> to vector<11x32xf32>
    %29 = arith.subf %16, %28 : vector<11x32xf32>
    %cst_16 = arith.constant 9.99999996E-13 : f32
    %30 = vector.broadcast %cst_16 : f32 to vector<11x1xf32>
    %31 = arith.addf %27, %30 : vector<11x1xf32>
    %32 = math.rsqrt %31 : vector<11x1xf32>
    %33 = vector.broadcast %32 : vector<11x1xf32> to vector<11x32xf32>
    %34 = arith.mulf %29, %33 : vector<11x32xf32>
    %c0_17 = arith.constant 0 : index
    %c0_18 = arith.constant 0 : index
    %35 = vector.load %arg6[%c0_17, %c0_18] : memref<1x32xf32, #tpu.memory_space<vmem>>, vector<1x32xf32>
    %36 = vector.broadcast %35 : vector<1x32xf32> to vector<11x32xf32>
    %37 = arith.mulf %34, %36 : vector<11x32xf32>
    %c0_19 = arith.constant 0 : index
    %c0_20 = arith.constant 0 : index
    %38 = vector.load %arg7[%c0_19, %c0_20] : memref<1x32xf32, #tpu.memory_space<vmem>>, vector<1x32xf32>
    %39 = vector.broadcast %38 : vector<1x32xf32> to vector<11x32xf32>
    %40 = arith.addf %37, %39 : vector<11x32xf32>
    %c0_21 = arith.constant 0 : index
    %c0_22 = arith.constant 0 : index
    %c0_23 = arith.constant 0 : index
    %41 = vector.load %arg8[%c0_21, %c0_22, %c0_23] : memref<1x11x32xf32, #tpu.memory_space<vmem>>, vector<1x11x32xf32>
    %42 = vector.shape_cast %41 : vector<1x11x32xf32> to vector<11x32xf32>
    %43 = vector.shape_cast %40 : vector<11x32xf32> to vector<1x11x32xf32>
    tpu.vector_store %arg8[%c0_21, %c0_22, %c0_23], %43 {strides = array<i32>} : memref<1x11x32xf32, #tpu.memory_space<vmem>>, vector<1x11x32xf32>,
    return
  }
  func.func @transform_0(%arg0: i32) -> (i32, i32, i32) {
    %c0_i32 = arith.constant 0 : i32
    %c0_i32_0 = arith.constant 0 : i32
    %c0_i32_1 = arith.constant 0 : i32
    return %arg0, %c0_i32, %c0_i32_0 : i32, i32, i32
  }
  func.func @transform_1(%arg0: i32) -> (i32, i32) {
    %c0_i32 = arith.constant 0 : i32
    %c0_i32_0 = arith.constant 0 : i32
    %c0_i32_1 = arith.constant 0 : i32
    return %c0_i32, %c0_i32_0 : i32, i32
  }
  func.func @transform_2(%arg0: i32) -> (i32, i32) {
    %c0_i32 = arith.constant 0 : i32
    %c0_i32_0 = arith.constant 0 : i32
    %c0_i32_1 = arith.constant 0 : i32
    return %c0_i32, %c0_i32_0 : i32, i32
  }
  func.func @transform_3(%arg0: i32) -> (i32, i32) {
    %c0_i32 = arith.constant 0 : i32
    %c0_i32_0 = arith.constant 0 : i32
    %c0_i32_1 = arith.constant 0 : i32
    return %c0_i32, %c0_i32_0 : i32, i32
  }
  func.func @transform_4(%arg0: i32) -> (i32, i32) {
    %c0_i32 = arith.constant 0 : i32
    %c0_i32_0 = arith.constant 0 : i32
    %c0_i32_1 = arith.constant 0 : i32
    return %c0_i32, %c0_i32_0 : i32, i32
  }
  func.func @transform_5(%arg0: i32) -> (i32, i32) {
    %c0_i32 = arith.constant 0 : i32
    %c0_i32_0 = arith.constant 0 : i32
    %c0_i32_1 = arith.constant 0 : i32
    return %c0_i32, %c0_i32_0 : i32, i32
  }
  func.func @transform_6(%arg0: i32) -> (i32, i32) {
    %c0_i32 = arith.constant 0 : i32
    %c0_i32_0 = arith.constant 0 : i32
    %c0_i32_1 = arith.constant 0 : i32
    return %c0_i32, %c0_i32_0 : i32, i32
  }
  func.func @transform_7(%arg0: i32) -> (i32, i32, i32) {
    %c0_i32 = arith.constant 0 : i32
    %c0_i32_0 = arith.constant 0 : i32
    %c0_i32_1 = arith.constant 0 : i32
    return %arg0, %c0_i32, %c0_i32_0 : i32, i32, i32
  }
}

module attributes {stable_mosaic.version = 11 : i64} {
  func.func @_proj_kernel(%arg0: i32, %arg1: memref<1x11x32xf32, #tpu.memory_space<vmem>>, %arg2: memref<32x48xbf16, #tpu.memory_space<vmem>>, %arg3: memref<1x48xf32, #tpu.memory_space<vmem>>, %arg4: memref<1x11x48xf32, #tpu.memory_space<vmem>>) attributes {dimension_semantics = [#tpu.dimension_semantics<parallel>], iteration_bounds = array<i64: 2>, scalar_prefetch = 0 : i64, scratch_operands = 0 : i64, tpu.core_type = #tpu.core_type<tc>, window_params = [{transform_indices = @transform_0, window_bounds = array<i64: 1, 11, 32>}, {pipeline_mode = #tpu.pipeline_mode<synchronous>, transform_indices = @transform_1, window_bounds = array<i64: 32, 48>}, {pipeline_mode = #tpu.pipeline_mode<synchronous>, transform_indices = @transform_2, window_bounds = array<i64: 1, 48>}, {transform_indices = @transform_3, window_bounds = array<i64: 1, 11, 48>}]} {
    %c0 = arith.constant 0 : index
    %c0_0 = arith.constant 0 : index
    %c0_1 = arith.constant 0 : index
    %0 = vector.load %arg1[%c0, %c0_0, %c0_1] : memref<1x11x32xf32, #tpu.memory_space<vmem>>, vector<1x11x32xf32>
    %1 = vector.shape_cast %0 : vector<1x11x32xf32> to vector<11x32xf32>
    %2 = arith.truncf %1 : vector<11x32xf32> to vector<11x32xbf16>
    %c0_2 = arith.constant 0 : index
    %c0_3 = arith.constant 0 : index
    %3 = vector.load %arg2[%c0_2, %c0_3] : memref<32x48xbf16, #tpu.memory_space<vmem>>, vector<32x48xbf16>
    %cst = arith.constant dense<0.000000e+00> : vector<11x48xf32>
    %4 = tpu.matmul %2, %3, %cst {dimension_numbers = #tpu.dot_dimension_numbers<[1], [0], [0], [1], [0, 0, 1, 1], [], []>} : vector<11x32xbf16>, vector<32x48xbf16>, vector<11x48xf32> -> vector<11x48xf32>
    %c0_4 = arith.constant 0 : index
    %c0_5 = arith.constant 0 : index
    %5 = vector.load %arg3[%c0_4, %c0_5] : memref<1x48xf32, #tpu.memory_space<vmem>>, vector<1x48xf32>
    %6 = vector.broadcast %5 : vector<1x48xf32> to vector<11x48xf32>
    %7 = arith.addf %4, %6 : vector<11x48xf32>
    %c0_6 = arith.constant 0 : index
    %c0_7 = arith.constant 0 : index
    %c0_8 = arith.constant 0 : index
    %8 = vector.load %arg4[%c0_6, %c0_7, %c0_8] : memref<1x11x48xf32, #tpu.memory_space<vmem>>, vector<1x11x48xf32>
    %9 = vector.shape_cast %8 : vector<1x11x48xf32> to vector<11x48xf32>
    %10 = vector.shape_cast %7 : vector<11x48xf32> to vector<1x11x48xf32>
    tpu.vector_store %arg4[%c0_6, %c0_7, %c0_8], %10 {strides = array<i32>} : memref<1x11x48xf32, #tpu.memory_space<vmem>>, vector<1x11x48xf32>,
    return
  }
  func.func @transform_0(%arg0: i32) -> (i32, i32, i32) {
    %c0_i32 = arith.constant 0 : i32
    %c0_i32_0 = arith.constant 0 : i32
    %c0_i32_1 = arith.constant 0 : i32
    return %arg0, %c0_i32, %c0_i32_0 : i32, i32, i32
  }
  func.func @transform_1(%arg0: i32) -> (i32, i32) {
    %c0_i32 = arith.constant 0 : i32
    %c0_i32_0 = arith.constant 0 : i32
    %c0_i32_1 = arith.constant 0 : i32
    return %c0_i32, %c0_i32_0 : i32, i32
  }
  func.func @transform_2(%arg0: i32) -> (i32, i32) {
    %c0_i32 = arith.constant 0 : i32
    %c0_i32_0 = arith.constant 0 : i32
    %c0_i32_1 = arith.constant 0 : i32
    return %c0_i32, %c0_i32_0 : i32, i32
  }
  func.func @transform_3(%arg0: i32) -> (i32, i32, i32) {
    %c0_i32 = arith.constant 0 : i32
    %c0_i32_0 = arith.constant 0 : i32
    %c0_i32_1 = arith.constant 0 : i32
    return %arg0, %c0_i32, %c0_i32_0 : i32, i32, i32
  }
}

</mosaic_0001>

<llo_original>
// kernel: _lambda_.7
$region0: #{_lambda_.7}
  #allocation0 [shape = 'u32[]', space=smem, size = 0x4, offset = 0x4, fixed_abs, tag = 'smem constant byte address 0x4 - core index']
  #allocation1 [shape = 'u32[144,128]{1,0:T(1,128)}', space=vmem, size = 0x12000, scoped, tag = 'internal scratch']
  %s0 = inlined_call_operand.vmem [shape: f32[2,8,32], index: 0, kind: input, shape index: {}]
  %s1 = inlined_call_operand.vmem [shape: bf16[32,64], index: 1, kind: input, shape index: {}]
  %s2 = inlined_call_operand.vmem [shape: f32[1,64], index: 2, kind: input, shape index: {}]
  %s3 = inlined_call_operand.vmem [shape: bf16[64,32], index: 3, kind: input, shape index: {}]
  %s4 = inlined_call_operand.vmem [shape: f32[1,32], index: 4, kind: input, shape index: {}]
  %s5 = inlined_call_operand.vmem [shape: f32[1,32], index: 5, kind: input, shape index: {}]
  %s6 = inlined_call_operand.vmem [shape: f32[1,32], index: 6, kind: input, shape index: {}]
  %s7 = inlined_call_operand.vmem [shape: f32[2,8,32], index: 7, kind: output, shape index: {}]
  %s8 = sld [smem:[#allocation0]]
  $region61: #{_lambda_.7} parent=0
    _
  %s10 = ssub.s32 1, %s8
  %s11 = scalar_select 0, %s10, %s8
  loop: start=0, step=1, limit=4
  $region2: #{_lambda_.7} parent=0 // loop_pre_header
    _
  $region3: #{_lambda_.7} parent=0 // loop_header
    %s13 = sphi 0, %s17
    %p14 = scmp.ge.s32.totalorder %s13, 4
    %s23 = sphi 0, %s25
    %s26 = sphi 0, %s23
    %s27 = sphi 0, %s26
    %s43 = sphi 0, %s27
    %s47 = sphi 0, %s47
    %s49 = sphi 0, %s47
    %s50 = sphi 0, %s49
    %s64 = sphi 0, %s50
    %s68 = sphi 0, %s68
    %s70 = sphi 0, %s68
    %s71 = sphi 0, %s70
    %s85 = sphi 0, %s71
    %s89 = sphi 0, %s89
    %s91 = sphi 0, %s89
    %s92 = sphi 0, %s91
    %s106 = sphi 0, %s92
    %s110 = sphi 0, %s110
    %s112 = sphi 0, %s110
    %s113 = sphi 0, %s112
    %s127 = sphi 0, %s113
    %s131 = sphi 0, %s131
    %s133 = sphi 0, %s131
    %s134 = sphi 0, %s133
    %s148 = sphi 0, %s134
    %s152 = sphi 0, %s152
    %s154 = sphi 0, %s152
    %s155 = sphi 0, %s154
    %s169 = sphi 0, %s155
    %s175 = sphi 0, %s177
    %s178 = sphi 0, %s175
    %s179 = sphi 0, %s178
    %s195 = sphi 0, %s179
  $region4: #{_lambda_.7} parent=0 // loop_header_branch
    %16 = sbr.rel (%p14) target = $region8
  $region5: #{_lambda_.7} parent=0 // loop_body
    %s18 = ssub.s32 %s13, 1
    %s19 = ssub.s32 %s13, 2
    %s20 = sadd.s32 %s13, 1
    %s21 = ssub.s32 %s13, %s20
    %p22 = scmp.eq.s32.totalorder %s21, 0
    %s24 = sadd.s32 %s23, 1
    %s25 = scalar_select %p22, %s23, %s24
    %p28 = pneg %p22
    %p29 = scmp.eq.s32.totalorder %s13, 1
    %p30 = por %p28, %p29
    %p31 = scmp.ne.s32.totalorder %s23, %s26
    %p32 = scmp.eq.s32.totalorder %s13, 0
    %p33 = por %p31, %p32
    %p34 = scmp.ne.s32.totalorder %s23, %s26
    %p35 = scmp.eq.s32.totalorder %s18, 1
    %p36 = por %p34, %p35
    %p37 = scmp.ne.s32.totalorder %s26, %s27
    %p38 = scmp.eq.s32.totalorder %s18, 0
    %p39 = por %p37, %p38
    %p40 = scmp.ne.s32.totalorder %s26, %s27
    %p41 = scmp.eq.s32.totalorder %s19, 1
    %p42 = por %p40, %p41
    %p44 = scmp.ne.s32.totalorder %s27, %s43
    %p45 = scmp.eq.s32.totalorder %s19, 0
    %p46 = por %p44, %p45
    %s48 = sadd.s32 %s47, 1
    %p51 = scmp.eq.s32.totalorder %s13, 1
    %p52 = scmp.ne.s32.totalorder %s47, %s49
    %p53 = scmp.eq.s32.totalorder %s13, 0
    %p54 = por %p52, %p53
    %p55 = scmp.ne.s32.totalorder %s47, %s49
    %p56 = scmp.eq.s32.totalorder %s18, 1
    %p57 = por %p55, %p56
    %p58 = scmp.ne.s32.totalorder %s49, %s50
    %p59 = scmp.eq.s32.totalorder %s18, 0
    %p60 = por %p58, %p59
    %p61 = scmp.ne.s32.totalorder %s49, %s50
    %p62 = scmp.eq.s32.totalorder %s19, 1
    %p63 = por %p61, %p62
    %p65 = scmp.ne.s32.totalorder %s50, %s64
    %p66 = scmp.eq.s32.totalorder %s19, 0
    %p67 = por %p65, %p66
    %s69 = sadd.s32 %s68, 1
    %p72 = scmp.eq.s32.totalorder %s13, 1
    %p73 = scmp.ne.s32.totalorder %s68, %s70
    %p74 = scmp.eq.s32.totalorder %s13, 0
    %p75 = por %p73, %p74
    %p76 = scmp.ne.s32.totalorder %s68, %s70
    %p77 = scmp.eq.s32.totalorder %s18, 1
    %p78 = por %p76, %p77
    %p79 = scmp.ne.s32.totalorder %s70, %s71
    %p80 = scmp.eq.s32.totalorder %s18, 0
    %p81 = por %p79, %p80
    %p82 = scmp.ne.s32.totalorder %s70, %s71
    %p83 = scmp.eq.s32.totalorder %s19, 1
    %p84 = por %p82, %p83
    %p86 = scmp.ne.s32.totalorder %s71, %s85
    %p87 = scmp.eq.s32.totalorder %s19, 0
    %p88 = por %p86, %p87
    %s90 = sadd.s32 %s89, 1
    %p93 = scmp.eq.s32.totalorder %s13, 1
    %p94 = scmp.ne.s32.totalorder %s89, %s91
    %p95 = scmp.eq.s32.totalorder %s13, 0
    %p96 = por %p94, %p95
    %p97 = scmp.ne.s32.totalorder %s89, %s91
    %p98 = scmp.eq.s32.totalorder %s18, 1
    %p99 = por %p97, %p98
    %p100 = scmp.ne.s32.totalorder %s91, %s92
    %p101 = scmp.eq.s32.totalorder %s18, 0
    %p102 = por %p100, %p101
    %p103 = scmp.ne.s32.totalorder %s91, %s92
    %p104 = scmp.eq.s32.totalorder %s19, 1
    %p105 = por %p103, %p104
    %p107 = scmp.ne.s32.totalorder %s92, %s106
    %p108 = scmp.eq.s32.totalorder %s19, 0
    %p109 = por %p107, %p108
    %s111 = sadd.s32 %s110, 1
    %p114 = scmp.eq.s32.totalorder %s13, 1
    %p115 = scmp.ne.s32.totalorder %s110, %s112
    %p116 = scmp.eq.s32.totalorder %s13, 0
    %p117 = por %p115, %p116
    %p118 = scmp.ne.s32.totalorder %s110, %s112
    %p119 = scmp.eq.s32.totalorder %s18, 1
    %p120 = por %p118, %p119
    %p121 = scmp.ne.s32.totalorder %s112, %s113
    %p122 = scmp.eq.s32.totalorder %s18, 0
    %p123 = por %p121, %p122
    %p124 = scmp.ne.s32.totalorder %s112, %s113
    %p125 = scmp.eq.s32.totalorder %s19, 1
    %p126 = por %p124, %p125
    %p128 = scmp.ne.s32.totalorder %s113, %s127
    %p129 = scmp.eq.s32.totalorder %s19, 0
    %p130 = por %p128, %p129
    %s132 = sadd.s32 %s131, 1
    %p135 = scmp.eq.s32.totalorder %s13, 1
    %p136 = scmp.ne.s32.totalorder %s131, %s133
    %p137 = scmp.eq.s32.totalorder %s13, 0
    %p138 = por %p136, %p137
    %p139 = scmp.ne.s32.totalorder %s131, %s133
    %p140 = scmp.eq.s32.totalorder %s18, 1
    %p141 = por %p139, %p140
    %p142 = scmp.ne.s32.totalorder %s133, %s134
    %p143 = scmp.eq.s32.totalorder %s18, 0
    %p144 = por %p142, %p143
    %p145 = scmp.ne.s32.totalorder %s133, %s134
    %p146 = scmp.eq.s32.totalorder %s19, 1
    %p147 = por %p145, %p146
    %p149 = scmp.ne.s32.totalorder %s134, %s148
    %p150 = scmp.eq.s32.totalorder %s19, 0
    %p151 = por %p149, %p150
    %s153 = sadd.s32 %s152, 1
    %p156 = scmp.eq.s32.totalorder %s13, 1
    %p157 = scmp.ne.s32.totalorder %s152, %s154
    %p158 = scmp.eq.s32.totalorder %s13, 0
    %p159 = por %p157, %p158
    %p160 = scmp.ne.s32.totalorder %s152, %s154
    %p161 = scmp.eq.s32.totalorder %s18, 1
    %p162 = por %p160, %p161
    %p163 = scmp.ne.s32.totalorder %s154, %s155
    %p164 = scmp.eq.s32.totalorder %s18, 0
    %p165 = por %p163, %p164
    %p166 = scmp.ne.s32.totalorder %s154, %s155
    %p167 = scmp.eq.s32.totalorder %s19, 1
    %p168 = por %p166, %p167
    %p170 = scmp.ne.s32.totalorder %s155, %s169
    %p171 = scmp.eq.s32.totalorder %s19, 0
    %p172 = por %p170, %p171
    %s173 = ssub.s32 %s13, %s20
    %p174 = scmp.eq.s32.totalorder %s173, 0
    %s176 = sadd.s32 %s175, 1
    %s177 = scalar_select %p174, %s175, %s176
    %p180 = pneg %p174
    %p181 = scmp.eq.s32.totalorder %s13, 1
    %p182 = por %p180, %p181
    %p183 = scmp.ne.s32.totalorder %s175, %s178
    %p184 = scmp.eq.s32.totalorder %s13, 0
    %p185 = por %p183, %p184
    %p186 = scmp.ne.s32.totalorder %s175, %s178
    %p187 = scmp.eq.s32.totalorder %s18, 1
    %p188 = por %p186, %p187
    %p189 = scmp.ne.s32.totalorder %s178, %s179
    %p190 = scmp.eq.s32.totalorder %s18, 0
    %p191 = por %p189, %p190
    %p192 = scmp.ne.s32.totalorder %s178, %s179
    %p193 = scmp.eq.s32.totalorder %s19, 1
    %p194 = por %p192, %p193
    %p196 = scmp.ne.s32.totalorder %s179, %s195
    %p197 = scmp.eq.s32.totalorder %s19, 0
    %p198 = por %p196, %p197
    %p199 = scmp.le.s32.totalorder 1, %s13
    %p200 = scmp.lt.s32.totalorder %s13, 3
    %p201 = pnand %p199, %p200
    %p202 = pneg %p201
    // Predicated region
    $region9: #{_lambda_.7} parent=5 // pred_check
      _
    $region10: #{_lambda_.7} parent=5 // pred_check_branch
      %204 = sbr.rel (%p201) target = $region12
    $region11: #{_lambda_.7} parent=5 // pred_region
      %s205 = ssub.s32 %s13, 1
      // Predicated region
      $region13: #{_lambda_.7} parent=11 // pred_check
        %p206 = pneg %p60
      $region14: #{_lambda_.7} parent=11 // pred_check_branch
        %208 = sbr.rel (%p206) target = $region16
      $region15: #{_lambda_.7} parent=11 // pred_region
        _
      $region16: #{_lambda_.7} parent=11 // pred_fallthru
        _
      // Predicated region
      $region17: #{_lambda_.7} parent=11 // pred_check
        %p209 = pneg %p81
      $region18: #{_lambda_.7} parent=11 // pred_check_branch
        %211 = sbr.rel (%p209) target = $region20
      $region19: #{_lambda_.7} parent=11 // pred_region
        _
      $region20: #{_lambda_.7} parent=11 // pred_fallthru
        _
      // Predicated region
      $region21: #{_lambda_.7} parent=11 // pred_check
        %p212 = pneg %p102
      $region22: #{_lambda_.7} parent=11 // pred_check_branch
        %214 = sbr.rel (%p212) target = $region24
      $region23: #{_lambda_.7} parent=11 // pred_region
        _
      $region24: #{_lambda_.7} parent=11 // pred_fallthru
        _
      // Predicated region
      $region25: #{_lambda_.7} parent=11 // pred_check
        %p215 = pneg %p123
      $region26: #{_lambda_.7} parent=11 // pred_check_branch
        %217 = sbr.rel (%p215) target = $region28
      $region27: #{_lambda_.7} parent=11 // pred_region
        _
      $region28: #{_lambda_.7} parent=11 // pred_fallthru
        _
      // Predicated region
      $region29: #{_lambda_.7} parent=11 // pred_check
        %p218 = pneg %p144
      $region30: #{_lambda_.7} parent=11 // pred_check_branch
        %220 = sbr.rel (%p218) target = $region32
      $region31: #{_lambda_.7} parent=11 // pred_region
        _
      $region32: #{_lambda_.7} parent=11 // pred_fallthru
        _
      // Predicated region
      $region33: #{_lambda_.7} parent=11 // pred_check
        %p221 = pneg %p165
      $region34: #{_lambda_.7} parent=11 // pred_check_branch
        %223 = sbr.rel (%p221) target = $region36
      $region35: #{_lambda_.7} parent=11 // pred_region
        _
      $region36: #{_lambda_.7} parent=11 // pred_fallthru
        _
    $region12: #{_lambda_.7} parent=5 // pred_fallthru
      _
    %p224 = scmp.lt.s32.totalorder %s13, 2
    // Predicated region
    $region37: #{_lambda_.7} parent=5 // pred_check
      %p225 = pneg %p224
    $region38: #{_lambda_.7} parent=5 // pred_check_branch
      %227 = sbr.rel (%p225) target = $region40
    $region39: #{_lambda_.7} parent=5 // pred_region
      // Predicated region
      $region41: #{_lambda_.7} parent=39 // pred_check
        %p228 = pneg %p33
      $region42: #{_lambda_.7} parent=39 // pred_check_branch
        %230 = sbr.rel (%p228) target = $region44
      $region43: #{_lambda_.7} parent=39 // pred_region
        %p231 = scmp.lt.s32.totalorder %s13, 1
        %s232 = scalar_select %p231, %s13, 1
        %s233 = smul.addr %s232, 8
        %s234 = scalar_lea.vmem %s0, %s233
      $region44: #{_lambda_.7} parent=39 // pred_fallthru
        _
    $region40: #{_lambda_.7} parent=5 // pred_fallthru
      _
    %p235 = scmp.le.s32.totalorder 1, %s13
    %p236 = scmp.lt.s32.totalorder %s13, 3
    %p237 = pnand %p235, %p236
    %p238 = pneg %p237
    // Predicated region
    $region45: #{_lambda_.7} parent=5 // pred_check
      _
    $region46: #{_lambda_.7} parent=5 // pred_check_branch
      %240 = sbr.rel (%p237) target = $region48
    $region47: #{_lambda_.7} parent=5 // pred_region
      %s241 = ssub.s32 %s13, 1
      %p242 = scmp.lt.s32.totalorder %s18, 1
      %s243 = scalar_select %p242, %s18, 1
      %s244 = smul.addr %s243, 8
      %s245 = scalar_lea.vmem %s0, %s244
      %p246 = pneg %p39
      %p247 = pneg %p36
      %p248 = pneg %p60
      %p249 = pneg %p57
      %p250 = pneg %p81
      %p251 = pneg %p78
      %p252 = pneg %p102
      %p253 = pneg %p99
      %p254 = pneg %p123
      %p255 = pneg %p120
      %p256 = pneg %p144
      %p257 = pneg %p141
      %p258 = pneg %p165
      %p259 = pneg %p162
      %p260 = pneg %p191
      %p261 = pneg %p188
      %p262 = scmp.lt.s32.totalorder %s18, 1
      %s263 = scalar_select %p262, %s18, 1
      %s264 = smul.addr %s263, 8
      %s265 = scalar_lea.vmem %s7, %s264
      %p266 = scmp.lt.s32.totalorder %s18, 1
      %s267 = scalar_select %p266, %s18, 1
      %s268 = smul.addr %s267, 8
      %s269 = scalar_lea.vmem %s0, %s268
      %p270 = scmp.lt.s32.totalorder %s18, 1
      %s271 = scalar_select %p270, %s18, 1
      %s272 = smul.addr %s271, 8
      %s273 = scalar_lea.vmem %s7, %s272
      %v275 = vld [vmem:[%s269] sm:$0xff]
      %v276 = vpack.c.bf16 %v275, %v275
      %v277 = vld [vmem:[%s1] sm:$0xf]
      %v278 = vld [vmem:[%s1 + $0x4] sm:$0xf]
      %v279 = vld [vmem:[%s1 + $0x8] sm:$0xf]
      %v280 = vld [vmem:[%s1 + $0xc] sm:$0xf]
      %v281 = vld [vmem:[%s2] sm:$0x1]
      %v283 = vlaneseq
      %v284 = vshrl.u32 %v283, 7
      %v285 = vsub.s32 0, %v284
      %v286 = vrot.slane %v281, %v285
      %v292 = vunpack.c.l.b16 %v277
      %v293 = vunpack.c.l.b16 %v278
      %v294 = vunpack.c.l.b16 %v279
      %v295 = vunpack.c.l.b16 %v280
      %v296 = vpack.c.b16 %v293, %v292
      %v297 = vpack.c.b16 %v295, %v294
      %vm300 = vcmask 261120
      %v302 = vsel %vm300, %v276, 0
      %304 = vmatprep.subr.bf16.mxu0 0
      %305 = vmatpush1.bf16.msra.mxu0 %v296
      %306 = vmatprep.subr.bf16.mxu0 0
      %307 = vmatpush1.bf16.msra.mxu0 %v297
      %308 = vmatprep.subr.bf16.mxu0 0
      %309 = vmatpush1.bf16.msra.mxu0 0
      %310 = vmatprep.subr.bf16.mxu0 0
      %311 = vmatpush1.bf16.msra.mxu0 0
      %312 = vmatprep.subr.bf16.mxu0 0
      %313 = vmatpush1.bf16.msra.mxu0 0
      %314 = vmatprep.subr.bf16.mxu0 0
      %315 = vmatpush1.bf16.msra.mxu0 0
      %316 = vmatprep.subr.bf16.mxu0 0
      %317 = vmatpush1.bf16.msra.mxu0 0
      %318 = vmatprep.subr.bf16.mxu0 0
      %319 = vmatpush1.bf16.msra.mxu0 0
      %320 = vmatprep.subr.bf16.mxu0 0
      %321 = vmatpush1.bf16.msra.mxu0 0
      %322 = vmatprep.subr.bf16.mxu0 0
      %323 = vmatpush1.bf16.msra.mxu0 0
      %324 = vmatprep.subr.bf16.mxu0 0
      %325 = vmatpush1.bf16.msra.mxu0 0
      %326 = vmatprep.subr.bf16.mxu0 0
      %327 = vmatpush1.bf16.msra.mxu0 0
      %328 = vmatprep.subr.bf16.mxu0 0
      %329 = vmatpush1.bf16.msra.mxu0 0
      %330 = vmatprep.subr.bf16.mxu0 0
      %331 = vmatpush1.bf16.msra.mxu0 0
      %332 = vmatprep.subr.bf16.mxu0 0
      %333 = vmatpush1.bf16.msra.mxu0 0
      %334 = vmatprep.subr.bf16.mxu0 0
      %335 = vmatpush1.bf16.msra.mxu0 0
      %336 = vmatprep.mubr.bf16.mxu0 0
      %337 = vmatmul.mubr.bf16.gmra.mrb[0].mxu0 %v302
      %v338 = vpop.f32.mrb[0].mxu0
      %v339 = vadd.f32 %v286, %v338
      %v340 = vpop.f32.mrb[0].mxu0
      %v341 = vpop.f32.mrb[0].mxu0
      %v342 = vpop.f32.mrb[0].mxu0
      %343 = vdwg.mxu0
      %v344 = vmax.f32 %v339, 0.0
      %v345 = vpack.c.bf16 %v344, %v344
      %v346 = vld [vmem:[%s3] sm:$0xf]
      %v347 = vld [vmem:[%s3 + $0x4] sm:$0xf]
      %v348 = vld [vmem:[%s3 + $0x8] sm:$0xf]
      %v349 = vld [vmem:[%s3 + $0xc] sm:$0xf]
      %v350 = vld [vmem:[%s3 + $0x10] sm:$0xf]
      %v351 = vld [vmem:[%s3 + $0x14] sm:$0xf]
      %v352 = vld [vmem:[%s3 + $0x18] sm:$0xf]
      %v353 = vld [vmem:[%s3 + $0x1c] sm:$0xf]
      %v354 = vld [vmem:[%s4] sm:$0x1]
      %v356 = vlaneseq
      %v357 = vshrl.u32 %v356, 7
      %v358 = vsub.s32 0, %v357
      %v359 = vrot.slane %v354, %v358
      %v369 = vunpack.c.l.b16 %v346
      %v370 = vunpack.c.l.b16 %v347
      %v371 = vunpack.c.l.b16 %v348
      %v372 = vunpack.c.l.b16 %v349
      %v373 = vunpack.c.l.b16 %v350
      %v374 = vunpack.c.l.b16 %v351
      %v375 = vunpack.c.l.b16 %v352
      %v376 = vunpack.c.l.b16 %v353
      %v377 = vpack.c.b16 %v370, %v369
      %v378 = vpack.c.b16 %v372, %v371
      %v379 = vpack.c.b16 %v374, %v373
      %v380 = vpack.c.b16 %v376, %v375
      %vm385 = vcmask 523264
      %v387 = vsel %vm385, %v345, 0
      %389 = vmatprep.subr.bf16.mxu0 0
      %390 = vmatpush1.bf16.msra.mxu0 %v377
      %391 = vmatprep.subr.bf16.mxu0 0
      %392 = vmatpush1.bf16.msra.mxu0 %v378
      %393 = vmatprep.subr.bf16.mxu0 0
      %394 = vmatpush1.bf16.msra.mxu0 %v379
      %395 = vmatprep.subr.bf16.mxu0 0
      %396 = vmatpush1.bf16.msra.mxu0 %v380
      %397 = vmatprep.subr.bf16.mxu0 0
      %398 = vmatpush1.bf16.msra.mxu0 0
      %399 = vmatprep.subr.bf16.mxu0 0
      %400 = vmatpush1.bf16.msra.mxu0 0
      %401 = vmatprep.subr.bf16.mxu0 0
      %402 = vmatpush1.bf16.msra.mxu0 0
      %403 = vmatprep.subr.bf16.mxu0 0
      %404 = vmatpush1.bf16.msra.mxu0 0
      %405 = vmatprep.subr.bf16.mxu0 0
      %406 = vmatpush1.bf16.msra.mxu0 0
      %407 = vmatprep.subr.bf16.mxu0 0
      %408 = vmatpush1.bf16.msra.mxu0 0
      %409 = vmatprep.subr.bf16.mxu0 0
      %410 = vmatpush1.bf16.msra.mxu0 0
      %411 = vmatprep.subr.bf16.mxu0 0
      %412 = vmatpush1.bf16.msra.mxu0 0
      %413 = vmatprep.subr.bf16.mxu0 0
      %414 = vmatpush1.bf16.msra.mxu0 0
      %415 = vmatprep.subr.bf16.mxu0 0
      %416 = vmatpush1.bf16.msra.mxu0 0
      %417 = vmatprep.subr.bf16.mxu0 0
      %418 = vmatpush1.bf16.msra.mxu0 0
      %419 = vmatprep.subr.bf16.mxu0 0
      %420 = vmatpush1.bf16.msra.mxu0 0
      %421 = vmatprep.mubr.bf16.mxu0 0
      %422 = vmatmul.mubr.bf16.gmra.mrb[0].mxu0 %v387
      %v423 = vpop.f32.mrb[0].mxu0
      %v424 = vadd.f32 %v359, %v423
      %v425 = vpop.f32.mrb[0].mxu0
      %v426 = vpop.f32.mrb[0].mxu0
      %v427 = vpop.f32.mrb[0].mxu0
      %428 = vdwg.mxu0
      %v429 = vadd.f32 %v275, %v424
      %v430 = vsel %vm300, %v429, 0.0
      %431 = vadd.xlane.f32.xlu0 %v430
      %v432 = vpop.xlane.xlu0 %431
      %v433 = vrcp.pop 32.0
      %v434 = vmul.f32 %v432, %v433
      %v435 = vsub.f32 %v429, %v434
      %v436 = vmul.f32 %v435, %v435
      %v437 = vsel %vm300, %v436, 0.0
      %438 = vadd.xlane.f32.xlu0 %v437
      %v439 = vpop.xlane.xlu0 %438
      %v440 = vmul.f32 %v439, %v433
      %v441 = vadd.f32 %v440, 1e-12
      %v442 = vrsqrt.pop %v441
      %v443 = vmul.f32 %v435, %v442
      %v444 = vld [vmem:[%s5] sm:$0x1]
      %v446 = vlaneseq
      %v447 = vshrl.u32 %v446, 7
      %v448 = vsub.s32 0, %v447
      %v449 = vrot.slane %v444, %v448
      %v451 = vmul.f32 %v443, %v449
      %v452 = vld [vmem:[%s6] sm:$0x1]
      %v454 = vlaneseq
      %v455 = vshrl.u32 %v454, 7
      %v456 = vsub.s32 0, %v455
      %v457 = vrot.slane %v452, %v456
      %v459 = vadd.f32 %v451, %v457
      %460 = vst.msk [vmem:[%s273] sm:$0xff] %vm300, %v459
      %p461 = scmp.lt.s32.totalorder %s18, 1
      %s462 = scalar_select %p461, %s18, 1
      %s463 = smul.addr %s462, 8
      %s464 = scalar_lea.vmem %s7, %s463
      // Predicated region
      $region49: #{_lambda_.7} parent=47 // pred_check
        %p465 = pneg %p188
      $region50: #{_lambda_.7} parent=47 // pred_check_branch
        %467 = sbr.rel (%p465) target = $region52
      $region51: #{_lambda_.7} parent=47 // pred_region
        _
      $region52: #{_lambda_.7} parent=47 // pred_fallthru
        _
    $region48: #{_lambda_.7} parent=5 // pred_fallthru
      _
    %p468 = scmp.le.s32.totalorder 2, %s13
    // Predicated region
    $region53: #{_lambda_.7} parent=5 // pred_check
      %p469 = pneg %p468
    $region54: #{_lambda_.7} parent=5 // pred_check_branch
      %471 = sbr.rel (%p469) target = $region56
    $region55: #{_lambda_.7} parent=5 // pred_region
      %s472 = ssub.s32 %s13, 2
      // Predicated region
      $region57: #{_lambda_.7} parent=55 // pred_check
        %p473 = pneg %p194
      $region58: #{_lambda_.7} parent=55 // pred_check_branch
        %475 = sbr.rel (%p473) target = $region60
      $region59: #{_lambda_.7} parent=55 // pred_region
        %p476 = scmp.lt.s32.totalorder %s19, 1
        %s477 = scalar_select %p476, %s19, 1
        %s478 = smul.addr %s477, 8
        %s479 = scalar_lea.vmem %s7, %s478
      $region60: #{_lambda_.7} parent=55 // pred_fallthru
        _
    $region56: #{_lambda_.7} parent=5 // pred_fallthru
      _
  $region6: #{_lambda_.7} parent=0 // loop_footer
    %s17 = sadd.s32 1, %s13
  $region7: #{_lambda_.7} parent=0 // loop_footer_branch
    %12 = sbr.rel target = $region3
  $region8: #{_lambda_.7} parent=0 // loop_exit
    _

// kernel: _lambda_.8
$region0: #{_lambda_.8}
  #allocation0 [shape = 'u32[]', space=smem, size = 0x4, offset = 0x4, fixed_abs, tag = 'smem constant byte address 0x4 - core index']
  #allocation1 [shape = 'u32[144,128]{1,0:T(1,128)}', space=vmem, size = 0x12000, scoped, tag = 'internal scratch']
  %s0 = inlined_call_operand.vmem [shape: f32[2,11,32], index: 0, kind: input, shape index: {}, may-alias: {0,1}]
  %s1 = inlined_call_operand.vmem [shape: f32[2,11,32], index: 1, kind: input, shape index: {}, may-alias: {0,1}]
  %s2 = inlined_call_operand.vmem [shape: s32[2,11,11], index: 2, kind: input, shape index: {}]
  %s3 = inlined_call_operand.vmem [shape: bf16[32,32], index: 3, kind: input, shape index: {}]
  %s4 = inlined_call_operand.vmem [shape: f32[1,32], index: 4, kind: input, shape index: {}]
  %s5 = inlined_call_operand.vmem [shape: bf16[32,64], index: 5, kind: input, shape index: {}]
  %s6 = inlined_call_operand.vmem [shape: f32[1,64], index: 6, kind: input, shape index: {}]
  %s7 = inlined_call_operand.vmem [shape: f32[32,32], index: 7, kind: input, shape index: {}]
  %s8 = inlined_call_operand.vmem [shape: f32[1,32], index: 8, kind: input, shape index: {}]
  %s9 = inlined_call_operand.vmem [shape: f32[1,32], index: 9, kind: input, shape index: {}]
  %s10 = inlined_call_operand.vmem [shape: f32[1,32], index: 10, kind: input, shape index: {}]
  %s11 = inlined_call_operand.vmem [shape: f32[2,11,32], index: 11, kind: output, shape index: {}]
  %s12 = sld [smem:[#allocation0]]
  $region77: #{_lambda_.8} parent=0
    _
  %s14 = ssub.s32 1, %s12
  %s15 = scalar_select 0, %s14, %s12
  loop: start=0, step=1, limit=4
  $region2: #{_lambda_.8} parent=0 // loop_pre_header
    _
  $region3: #{_lambda_.8} parent=0 // loop_header
    %s17 = sphi 0, %s21
    %p18 = scmp.ge.s32.totalorder %s17, 4
    %s27 = sphi 0, %s29
    %s30 = sphi 0, %s27
    %s31 = sphi 0, %s30
    %s47 = sphi 0, %s31
    %s53 = sphi 0, %s55
    %s56 = sphi 0, %s53
    %s57 = sphi 0, %s56
    %s73 = sphi 0, %s57
    %s79 = sphi 0, %s81
    %s82 = sphi 0, %s79
    %s83 = sphi 0, %s82
    %s99 = sphi 0, %s83
    %s103 = sphi 0, %s103
    %s105 = sphi 0, %s103
    %s106 = sphi 0, %s105
    %s120 = sphi 0, %s106
    %s124 = sphi 0, %s124
    %s126 = sphi 0, %s124
    %s127 = sphi 0, %s126
    %s141 = sphi 0, %s127
    %s145 = sphi 0, %s145
    %s147 = sphi 0, %s145
    %s148 = sphi 0, %s147
    %s162 = sphi 0, %s148
    %s166 = sphi 0, %s166
    %s168 = sphi 0, %s166
    %s169 = sphi 0, %s168
    %s183 = sphi 0, %s169
    %s187 = sphi 0, %s187
    %s189 = sphi 0, %s187
    %s190 = sphi 0, %s189
    %s204 = sphi 0, %s190
    %s208 = sphi 0, %s208
    %s210 = sphi 0, %s208
    %s211 = sphi 0, %s210
    %s225 = sphi 0, %s211
    %s229 = sphi 0, %s229
    %s231 = sphi 0, %s229
    %s232 = sphi 0, %s231
    %s246 = sphi 0, %s232
    %s250 = sphi 0, %s250
    %s252 = sphi 0, %s250
    %s253 = sphi 0, %s252
    %s267 = sphi 0, %s253
    %s273 = sphi 0, %s275
    %s276 = sphi 0, %s273
    %s277 = sphi 0, %s276
    %s293 = sphi 0, %s277
  $region4: #{_lambda_.8} parent=0 // loop_header_branch
    %20 = sbr.rel (%p18) target = $region8
  $region5: #{_lambda_.8} parent=0 // loop_body
    %s22 = ssub.s32 %s17, 1
    %s23 = ssub.s32 %s17, 2
    %s24 = sadd.s32 %s17, 1
    %s25 = ssub.s32 %s17, %s24
    %p26 = scmp.eq.s32.totalorder %s25, 0
    %s28 = sadd.s32 %s27, 1
    %s29 = scalar_select %p26, %s27, %s28
    %p32 = pneg %p26
    %p33 = scmp.eq.s32.totalorder %s17, 1
    %p34 = por %p32, %p33
    %p35 = scmp.ne.s32.totalorder %s27, %s30
    %p36 = scmp.eq.s32.totalorder %s17, 0
    %p37 = por %p35, %p36
    %p38 = scmp.ne.s32.totalorder %s27, %s30
    %p39 = scmp.eq.s32.totalorder %s22, 1
    %p40 = por %p38, %p39
    %p41 = scmp.ne.s32.totalorder %s30, %s31
    %p42 = scmp.eq.s32.totalorder %s22, 0
    %p43 = por %p41, %p42
    %p44 = scmp.ne.s32.totalorder %s30, %s31
    %p45 = scmp.eq.s32.totalorder %s23, 1
    %p46 = por %p44, %p45
    %p48 = scmp.ne.s32.totalorder %s31, %s47
    %p49 = scmp.eq.s32.totalorder %s23, 0
    %p50 = por %p48, %p49
    %s51 = ssub.s32 %s17, %s24
    %p52 = scmp.eq.s32.totalorder %s51, 0
    %s54 = sadd.s32 %s53, 1
    %s55 = scalar_select %p52, %s53, %s54
    %p58 = pneg %p52
    %p59 = scmp.eq.s32.totalorder %s17, 1
    %p60 = por %p58, %p59
    %p61 = scmp.ne.s32.totalorder %s53, %s56
    %p62 = scmp.eq.s32.totalorder %s17, 0
    %p63 = por %p61, %p62
    %p64 = scmp.ne.s32.totalorder %s53, %s56
    %p65 = scmp.eq.s32.totalorder %s22, 1
    %p66 = por %p64, %p65
    %p67 = scmp.ne.s32.totalorder %s56, %s57
    %p68 = scmp.eq.s32.totalorder %s22, 0
    %p69 = por %p67, %p68
    %p70 = scmp.ne.s32.totalorder %s56, %s57
    %p71 = scmp.eq.s32.totalorder %s23, 1
    %p72 = por %p70, %p71
    %p74 = scmp.ne.s32.totalorder %s57, %s73
    %p75 = scmp.eq.s32.totalorder %s23, 0
    %p76 = por %p74, %p75
    %s77 = ssub.s32 %s17, %s24
    %p78 = scmp.eq.s32.totalorder %s77, 0
    %s80 = sadd.s32 %s79, 1
    %s81 = scalar_select %p78, %s79, %s80
    %p84 = pneg %p78
    %p85 = scmp.eq.s32.totalorder %s17, 1
    %p86 = por %p84, %p85
    %p87 = scmp.ne.s32.totalorder %s79, %s82
    %p88 = scmp.eq.s32.totalorder %s17, 0
    %p89 = por %p87, %p88
    %p90 = scmp.ne.s32.totalorder %s79, %s82
    %p91 = scmp.eq.s32.totalorder %s22, 1
    %p92 = por %p90, %p91
    %p93 = scmp.ne.s32.totalorder %s82, %s83
    %p94 = scmp.eq.s32.totalorder %s22, 0
    %p95 = por %p93, %p94
    %p96 = scmp.ne.s32.totalorder %s82, %s83
    %p97 = scmp.eq.s32.totalorder %s23, 1
    %p98 = por %p96, %p97
    %p100 = scmp.ne.s32.totalorder %s83, %s99
    %p101 = scmp.eq.s32.totalorder %s23, 0
    %p102 = por %p100, %p101
    %s104 = sadd.s32 %s103, 1
    %p107 = scmp.eq.s32.totalorder %s17, 1
    %p108 = scmp.ne.s32.totalorder %s103, %s105
    %p109 = scmp.eq.s32.totalorder %s17, 0
    %p110 = por %p108, %p109
    %p111 = scmp.ne.s32.totalorder %s103, %s105
    %p112 = scmp.eq.s32.totalorder %s22, 1
    %p113 = por %p111, %p112
    %p114 = scmp.ne.s32.totalorder %s105, %s106
    %p115 = scmp.eq.s32.totalorder %s22, 0
    %p116 = por %p114, %p115
    %p117 = scmp.ne.s32.totalorder %s105, %s106
    %p118 = scmp.eq.s32.totalorder %s23, 1
    %p119 = por %p117, %p118
    %p121 = scmp.ne.s32.totalorder %s106, %s120
    %p122 = scmp.eq.s32.totalorder %s23, 0
    %p123 = por %p121, %p122
    %s125 = sadd.s32 %s124, 1
    %p128 = scmp.eq.s32.totalorder %s17, 1
    %p129 = scmp.ne.s32.totalorder %s124, %s126
    %p130 = scmp.eq.s32.totalorder %s17, 0
    %p131 = por %p129, %p130
    %p132 = scmp.ne.s32.totalorder %s124, %s126
    %p133 = scmp.eq.s32.totalorder %s22, 1
    %p134 = por %p132, %p133
    %p135 = scmp.ne.s32.totalorder %s126, %s127
    %p136 = scmp.eq.s32.totalorder %s22, 0
    %p137 = por %p135, %p136
    %p138 = scmp.ne.s32.totalorder %s126, %s127
    %p139 = scmp.eq.s32.totalorder %s23, 1
    %p140 = por %p138, %p139
    %p142 = scmp.ne.s32.totalorder %s127, %s141
    %p143 = scmp.eq.s32.totalorder %s23, 0
    %p144 = por %p142, %p143
    %s146 = sadd.s32 %s145, 1
    %p149 = scmp.eq.s32.totalorder %s17, 1
    %p150 = scmp.ne.s32.totalorder %s145, %s147
    %p151 = scmp.eq.s32.totalorder %s17, 0
    %p152 = por %p150, %p151
    %p153 = scmp.ne.s32.totalorder %s145, %s147
    %p154 = scmp.eq.s32.totalorder %s22, 1
    %p155 = por %p153, %p154
    %p156 = scmp.ne.s32.totalorder %s147, %s148
    %p157 = scmp.eq.s32.totalorder %s22, 0
    %p158 = por %p156, %p157
    %p159 = scmp.ne.s32.totalorder %s147, %s148
    %p160 = scmp.eq.s32.totalorder %s23, 1
    %p161 = por %p159, %p160
    %p163 = scmp.ne.s32.totalorder %s148, %s162
    %p164 = scmp.eq.s32.totalorder %s23, 0
    %p165 = por %p163, %p164
    %s167 = sadd.s32 %s166, 1
    %p170 = scmp.eq.s32.totalorder %s17, 1
    %p171 = scmp.ne.s32.totalorder %s166, %s168
    %p172 = scmp.eq.s32.totalorder %s17, 0
    %p173 = por %p171, %p172
    %p174 = scmp.ne.s32.totalorder %s166, %s168
    %p175 = scmp.eq.s32.totalorder %s22, 1
    %p176 = por %p174, %p175
    %p177 = scmp.ne.s32.totalorder %s168, %s169
    %p178 = scmp.eq.s32.totalorder %s22, 0
    %p179 = por %p177, %p178
    %p180 = scmp.ne.s32.totalorder %s168, %s169
    %p181 = scmp.eq.s32.totalorder %s23, 1
    %p182 = por %p180, %p181
    %p184 = scmp.ne.s32.totalorder %s169, %s183
    %p185 = scmp.eq.s32.totalorder %s23, 0
    %p186 = por %p184, %p185
    %s188 = sadd.s32 %s187, 1
    %p191 = scmp.eq.s32.totalorder %s17, 1
    %p192 = scmp.ne.s32.totalorder %s187, %s189
    %p193 = scmp.eq.s32.totalorder %s17, 0
    %p194 = por %p192, %p193
    %p195 = scmp.ne.s32.totalorder %s187, %s189
    %p196 = scmp.eq.s32.totalorder %s22, 1
    %p197 = por %p195, %p196
    %p198 = scmp.ne.s32.totalorder %s189, %s190
    %p199 = scmp.eq.s32.totalorder %s22, 0
    %p200 = por %p198, %p199
    %p201 = scmp.ne.s32.totalorder %s189, %s190
    %p202 = scmp.eq.s32.totalorder %s23, 1
    %p203 = por %p201, %p202
    %p205 = scmp.ne.s32.totalorder %s190, %s204
    %p206 = scmp.eq.s32.totalorder %s23, 0
    %p207 = por %p205, %p206
    %s209 = sadd.s32 %s208, 1
    %p212 = scmp.eq.s32.totalorder %s17, 1
    %p213 = scmp.ne.s32.totalorder %s208, %s210
    %p214 = scmp.eq.s32.totalorder %s17, 0
    %p215 = por %p213, %p214
    %p216 = scmp.ne.s32.totalorder %s208, %s210
    %p217 = scmp.eq.s32.totalorder %s22, 1
    %p218 = por %p216, %p217
    %p219 = scmp.ne.s32.totalorder %s210, %s211
    %p220 = scmp.eq.s32.totalorder %s22, 0
    %p221 = por %p219, %p220
    %p222 = scmp.ne.s32.totalorder %s210, %s211
    %p223 = scmp.eq.s32.totalorder %s23, 1
    %p224 = por %p222, %p223
    %p226 = scmp.ne.s32.totalorder %s211, %s225
    %p227 = scmp.eq.s32.totalorder %s23, 0
    %p228 = por %p226, %p227
    %s230 = sadd.s32 %s229, 1
    %p233 = scmp.eq.s32.totalorder %s17, 1
    %p234 = scmp.ne.s32.totalorder %s229, %s231
    %p235 = scmp.eq.s32.totalorder %s17, 0
    %p236 = por %p234, %p235
    %p237 = scmp.ne.s32.totalorder %s229, %s231
    %p238 = scmp.eq.s32.totalorder %s22, 1
    %p239 = por %p237, %p238
    %p240 = scmp.ne.s32.totalorder %s231, %s232
    %p241 = scmp.eq.s32.totalorder %s22, 0
    %p242 = por %p240, %p241
    %p243 = scmp.ne.s32.totalorder %s231, %s232
    %p244 = scmp.eq.s32.totalorder %s23, 1
    %p245 = por %p243, %p244
    %p247 = scmp.ne.s32.totalorder %s232, %s246
    %p248 = scmp.eq.s32.totalorder %s23, 0
    %p249 = por %p247, %p248
    %s251 = sadd.s32 %s250, 1
    %p254 = scmp.eq.s32.totalorder %s17, 1
    %p255 = scmp.ne.s32.totalorder %s250, %s252
    %p256 = scmp.eq.s32.totalorder %s17, 0
    %p257 = por %p255, %p256
    %p258 = scmp.ne.s32.totalorder %s250, %s252
    %p259 = scmp.eq.s32.totalorder %s22, 1
    %p260 = por %p258, %p259
    %p261 = scmp.ne.s32.totalorder %s252, %s253
    %p262 = scmp.eq.s32.totalorder %s22, 0
    %p263 = por %p261, %p262
    %p264 = scmp.ne.s32.totalorder %s252, %s253
    %p265 = scmp.eq.s32.totalorder %s23, 1
    %p266 = por %p264, %p265
    %p268 = scmp.ne.s32.totalorder %s253, %s267
    %p269 = scmp.eq.s32.totalorder %s23, 0
    %p270 = por %p268, %p269
    %s271 = ssub.s32 %s17, %s24
    %p272 = scmp.eq.s32.totalorder %s271, 0
    %s274 = sadd.s32 %s273, 1
    %s275 = scalar_select %p272, %s273, %s274
    %p278 = pneg %p272
    %p279 = scmp.eq.s32.totalorder %s17, 1
    %p280 = por %p278, %p279
    %p281 = scmp.ne.s32.totalorder %s273, %s276
    %p282 = scmp.eq.s32.totalorder %s17, 0
    %p283 = por %p281, %p282
    %p284 = scmp.ne.s32.totalorder %s273, %s276
    %p285 = scmp.eq.s32.totalorder %s22, 1
    %p286 = por %p284, %p285
    %p287 = scmp.ne.s32.totalorder %s276, %s277
    %p288 = scmp.eq.s32.totalorder %s22, 0
    %p289 = por %p287, %p288
    %p290 = scmp.ne.s32.totalorder %s276, %s277
    %p291 = scmp.eq.s32.totalorder %s23, 1
    %p292 = por %p290, %p291
    %p294 = scmp.ne.s32.totalorder %s277, %s293
    %p295 = scmp.eq.s32.totalorder %s23, 0
    %p296 = por %p294, %p295
    %p297 = scmp.le.s32.totalorder 1, %s17
    %p298 = scmp.lt.s32.totalorder %s17, 3
    %p299 = pnand %p297, %p298
    %p300 = pneg %p299
    // Predicated region
    $region9: #{_lambda_.8} parent=5 // pred_check
      _
    $region10: #{_lambda_.8} parent=5 // pred_check_branch
      %302 = sbr.rel (%p299) target = $region12
    $region11: #{_lambda_.8} parent=5 // pred_region
      %s303 = ssub.s32 %s17, 1
      // Predicated region
      $region13: #{_lambda_.8} parent=11 // pred_check
        %p304 = pneg %p116
      $region14: #{_lambda_.8} parent=11 // pred_check_branch
        %306 = sbr.rel (%p304) target = $region16
      $region15: #{_lambda_.8} parent=11 // pred_region
        _
      $region16: #{_lambda_.8} parent=11 // pred_fallthru
        _
      // Predicated region
      $region17: #{_lambda_.8} parent=11 // pred_check
        %p307 = pneg %p137
      $region18: #{_lambda_.8} parent=11 // pred_check_branch
        %309 = sbr.rel (%p307) target = $region20
      $region19: #{_lambda_.8} parent=11 // pred_region
        _
      $region20: #{_lambda_.8} parent=11 // pred_fallthru
        _
      // Predicated region
      $region21: #{_lambda_.8} parent=11 // pred_check
        %p310 = pneg %p158
      $region22: #{_lambda_.8} parent=11 // pred_check_branch
        %312 = sbr.rel (%p310) target = $region24
      $region23: #{_lambda_.8} parent=11 // pred_region
        _
      $region24: #{_lambda_.8} parent=11 // pred_fallthru
        _
      // Predicated region
      $region25: #{_lambda_.8} parent=11 // pred_check
        %p313 = pneg %p179
      $region26: #{_lambda_.8} parent=11 // pred_check_branch
        %315 = sbr.rel (%p313) target = $region28
      $region27: #{_lambda_.8} parent=11 // pred_region
        _
      $region28: #{_lambda_.8} parent=11 // pred_fallthru
        _
      // Predicated region
      $region29: #{_lambda_.8} parent=11 // pred_check
        %p316 = pneg %p200
      $region30: #{_lambda_.8} parent=11 // pred_check_branch
        %318 = sbr.rel (%p316) target = $region32
      $region31: #{_lambda_.8} parent=11 // pred_region
        _
      $region32: #{_lambda_.8} parent=11 // pred_fallthru
        _
      // Predicated region
      $region33: #{_lambda_.8} parent=11 // pred_check
        %p319 = pneg %p221
      $region34: #{_lambda_.8} parent=11 // pred_check_branch
        %321 = sbr.rel (%p319) target = $region36
      $region35: #{_lambda_.8} parent=11 // pred_region
        _
      $region36: #{_lambda_.8} parent=11 // pred_fallthru
        _
      // Predicated region
      $region37: #{_lambda_.8} parent=11 // pred_check
        %p322 = pneg %p242
      $region38: #{_lambda_.8} parent=11 // pred_check_branch
        %324 = sbr.rel (%p322) target = $region40
      $region39: #{_lambda_.8} parent=11 // pred_region
        _
      $region40: #{_lambda_.8} parent=11 // pred_fallthru
        _
      // Predicated region
      $region41: #{_lambda_.8} parent=11 // pred_check
        %p325 = pneg %p263
      $region42: #{_lambda_.8} parent=11 // pred_check_branch
        %327 = sbr.rel (%p325) target = $region44
      $region43: #{_lambda_.8} parent=11 // pred_region
        _
      $region44: #{_lambda_.8} parent=11 // pred_fallthru
        _
    $region12: #{_lambda_.8} parent=5 // pred_fallthru
      _
    %p328 = scmp.lt.s32.totalorder %s17, 2
    // Predicated region
    $region45: #{_lambda_.8} parent=5 // pred_check
      %p329 = pneg %p328
    $region46: #{_lambda_.8} parent=5 // pred_check_branch
      %331 = sbr.rel (%p329) target = $region48
    $region47: #{_lambda_.8} parent=5 // pred_region
      // Predicated region
      $region49: #{_lambda_.8} parent=47 // pred_check
        %p332 = pneg %p37
      $region50: #{_lambda_.8} parent=47 // pred_check_branch
        %334 = sbr.rel (%p332) target = $region52
      $region51: #{_lambda_.8} parent=47 // pred_region
        %p335 = scmp.lt.s32.totalorder %s17, 1
        %s336 = scalar_select %p335, %s17, 1
        %s337 = smul.addr %s336, 2
        %s338 = smul.addr %s337, 8
        %s339 = scalar_lea.vmem %s0, %s338
      $region52: #{_lambda_.8} parent=47 // pred_fallthru
        _
      // Predicated region
      $region53: #{_lambda_.8} parent=47 // pred_check
        %p340 = pneg %p63
      $region54: #{_lambda_.8} parent=47 // pred_check_branch
        %342 = sbr.rel (%p340) target = $region56
      $region55: #{_lambda_.8} parent=47 // pred_region
        %p343 = scmp.lt.s32.totalorder %s17, 1
        %s344 = scalar_select %p343, %s17, 1
        %s345 = smul.addr %s344, 2
        %s346 = smul.addr %s345, 8
        %s347 = scalar_lea.vmem %s1, %s346
      $region56: #{_lambda_.8} parent=47 // pred_fallthru
        _
      // Predicated region
      $region57: #{_lambda_.8} parent=47 // pred_check
        %p348 = pneg %p89
      $region58: #{_lambda_.8} parent=47 // pred_check_branch
        %350 = sbr.rel (%p348) target = $region60
      $region59: #{_lambda_.8} parent=47 // pred_region
        %p351 = scmp.lt.s32.totalorder %s17, 1
        %s352 = scalar_select %p351, %s17, 1
        %s353 = smul.addr %s352, 2
        %s354 = smul.addr %s353, 8
        %s355 = scalar_lea.vmem %s2, %s354
      $region60: #{_lambda_.8} parent=47 // pred_fallthru
        _
    $region48: #{_lambda_.8} parent=5 // pred_fallthru
      _
    %p356 = scmp.le.s32.totalorder 1, %s17
    %p357 = scmp.lt.s32.totalorder %s17, 3
    %p358 = pnand %p356, %p357
    %p359 = pneg %p358
    // Predicated region
    $region61: #{_lambda_.8} parent=5 // pred_check
      _
    $region62: #{_lambda_.8} parent=5 // pred_check_branch
      %361 = sbr.rel (%p358) target = $region64
    $region63: #{_lambda_.8} parent=5 // pred_region
      %s362 = ssub.s32 %s17, 1
      %p363 = scmp.lt.s32.totalorder %s22, 1
      %s364 = scalar_select %p363, %s22, 1
      %s365 = smul.addr %s364, 2
      %s366 = smul.addr %s365, 8
      %s367 = scalar_lea.vmem %s0, %s366
      %p368 = pneg %p43
      %p369 = pneg %p40
      %p370 = scmp.lt.s32.totalorder %s22, 1
      %s371 = scalar_select %p370, %s22, 1
      %s372 = smul.addr %s371, 2
      %s373 = smul.addr %s372, 8
      %s374 = scalar_lea.vmem %s1, %s373
      %p375 = pneg %p69
      %p376 = pneg %p66
      %p377 = scmp.lt.s32.totalorder %s22, 1
      %s378 = scalar_select %p377, %s22, 1
      %s379 = smul.addr %s378, 2
      %s380 = smul.addr %s379, 8
      %s381 = scalar_lea.vmem %s2, %s380
      %p382 = pneg %p95
      %p383 = pneg %p92
      %p384 = pneg %p116
      %p385 = pneg %p113
      %p386 = pneg %p137
      %p387 = pneg %p134
      %p388 = pneg %p158
      %p389 = pneg %p155
      %p390 = pneg %p179
      %p391 = pneg %p176
      %p392 = pneg %p200
      %p393 = pneg %p197
      %p394 = pneg %p221
      %p395 = pneg %p218
      %p396 = pneg %p242
      %p397 = pneg %p239
      %p398 = pneg %p263
      %p399 = pneg %p260
      %p400 = pneg %p289
      %p401 = pneg %p286
      %p402 = scmp.lt.s32.totalorder %s22, 1
      %s403 = scalar_select %p402, %s22, 1
      %s404 = smul.addr %s403, 2
      %s405 = smul.addr %s404, 8
      %s406 = scalar_lea.vmem %s11, %s405
      %p407 = scmp.lt.s32.totalorder %s22, 1
      %s408 = scalar_select %p407, %s22, 1
      %s409 = smul.addr %s408, 2
      %s410 = smul.addr %s409, 8
      %s411 = scalar_lea.vmem %s0, %s410
      %p412 = scmp.lt.s32.totalorder %s22, 1
      %s413 = scalar_select %p412, %s22, 1
      %s414 = smul.addr %s413, 2
      %s415 = smul.addr %s414, 8
      %s416 = scalar_lea.vmem %s1, %s415
      %p417 = scmp.lt.s32.totalorder %s22, 1
      %s418 = scalar_select %p417, %s22, 1
      %s419 = smul.addr %s418, 2
      %s420 = smul.addr %s419, 8
      %s421 = scalar_lea.vmem %s2, %s420
      %p422 = scmp.lt.s32.totalorder %s22, 1
      %s423 = scalar_select %p422, %s22, 1
      %s424 = smul.addr %s423, 2
      %s425 = smul.addr %s424, 8
      %s426 = scalar_lea.vmem %s11, %s425
      %v428 = vld [vmem:[%s411] sm:$0xff]
      %v429 = vld [vmem:[%s411 + $0x8] sm:$0x7]
      %v430 = vld [vmem:[%s416] sm:$0xff]
      %v431 = vld [vmem:[%s416 + $0x8] sm:$0x7]
      %v432 = vld [vmem:[%s421] sm:$0xff]
      %v433 = vld [vmem:[%s421 + $0x8] sm:$0x7]
      %v434 = vpack.c.bf16 %v429, %v428
      %v435 = vld [vmem:[%s3] sm:$0xf]
      %v436 = vld [vmem:[%s3 + $0x4] sm:$0xf]
      %v437 = vld [vmem:[%s3 + $0x8] sm:$0xf]
      %v438 = vld [vmem:[%s3 + $0xc] sm:$0xf]
      %v439 = vld [vmem:[%s4] sm:$0x1]
      %v441 = vlaneseq
      %v442 = vshrl.u32 %v441, 7
      %v443 = vsub.s32 0, %v442
      %v444 = vrot.slane %v439, %v443
      %v450 = vunpack.c.l.b16 %v435
      %v451 = vunpack.c.l.b16 %v436
      %v452 = vunpack.c.l.b16 %v437
      %v453 = vunpack.c.l.b16 %v438
      %v454 = vpack.c.b16 %v451, %v450
      %v455 = vpack.c.b16 %v453, %v452
      %vm458 = vcmask 261120
      %v460 = vsel %vm458, %v434, 0
      %462 = vmatprep.subr.bf16.mxu0 0
      %463 = vmatpush1.bf16.msra.mxu0 %v454
      %464 = vmatprep.subr.bf16.mxu0 0
      %465 = vmatpush1.bf16.msra.mxu0 %v455
      %466 = vmatprep.subr.bf16.mxu0 0
      %467 = vmatpush1.bf16.msra.mxu0 0
      %468 = vmatprep.subr.bf16.mxu0 0
      %469 = vmatpush1.bf16.msra.mxu0 0
      %470 = vmatprep.subr.bf16.mxu0 0
      %471 = vmatpush1.bf16.msra.mxu0 0
      %472 = vmatprep.subr.bf16.mxu0 0
      %473 = vmatpush1.bf16.msra.mxu0 0
      %474 = vmatprep.subr.bf16.mxu0 0
      %475 = vmatpush1.bf16.msra.mxu0 0
      %476 = vmatprep.subr.bf16.mxu0 0
      %477 = vmatpush1.bf16.msra.mxu0 0
      %478 = vmatprep.subr.bf16.mxu0 0
      %479 = vmatpush1.bf16.msra.mxu0 0
      %480 = vmatprep.subr.bf16.mxu0 0
      %481 = vmatpush1.bf16.msra.mxu0 0
      %482 = vmatprep.subr.bf16.mxu0 0
      %483 = vmatpush1.bf16.msra.mxu0 0
      %484 = vmatprep.subr.bf16.mxu0 0
      %485 = vmatpush1.bf16.msra.mxu0 0
      %486 = vmatprep.subr.bf16.mxu0 0
      %487 = vmatpush1.bf16.msra.mxu0 0
      %488 = vmatprep.subr.bf16.mxu0 0
      %489 = vmatpush1.bf16.msra.mxu0 0
      %490 = vmatprep.subr.bf16.mxu0 0
      %491 = vmatpush1.bf16.msra.mxu0 0
      %492 = vmatprep.subr.bf16.mxu0 0
      %493 = vmatpush1.bf16.msra.mxu0 0
      %494 = vmatprep.mubr.bf16.mxu0 0
      %495 = vmatmul.mubr.bf16.gmra.mrb[0].mxu0 %v460
      %v496 = vpop.f32.mrb[0].mxu0
      %v497 = vadd.f32 %v444, %v496
      %v498 = vpop.f32.mrb[0].mxu0
      %v499 = vpop.f32.mrb[0].mxu0
      %v500 = vadd.f32 %v444, %v499
      %v501 = vpop.f32.mrb[0].mxu0
      %502 = vdwg.mxu0
      %v503 = vpack.c.bf16 %v431, %v430
      %v504 = vld [vmem:[%s5] sm:$0xf]
      %v505 = vld [vmem:[%s5 + $0x4] sm:$0xf]
      %v506 = vld [vmem:[%s5 + $0x8] sm:$0xf]
      %v507 = vld [vmem:[%s5 + $0xc] sm:$0xf]
      %v508 = vld [vmem:[%s6] sm:$0x1]
      %v510 = vlaneseq
      %v511 = vshrl.u32 %v510, 7
      %v512 = vsub.s32 0, %v511
      %v513 = vrot.slane %v508, %v512
      %v519 = vunpack.c.l.b16 %v504
      %v520 = vunpack.c.l.b16 %v505
      %v521 = vunpack.c.l.b16 %v506
      %v522 = vunpack.c.l.b16 %v507
      %v523 = vpack.c.b16 %v520, %v519
      %v524 = vpack.c.b16 %v522, %v521
      %v528 = vsel %vm458, %v503, 0
      %530 = vmatprep.subr.bf16.mxu0 0
      %531 = vmatpush1.bf16.msra.mxu0 %v523
      %532 = vmatprep.subr.bf16.mxu0 0
      %533 = vmatpush1.bf16.msra.mxu0 %v524
      %534 = vmatprep.subr.bf16.mxu0 0
      %535 = vmatpush1.bf16.msra.mxu0 0
      %536 = vmatprep.subr.bf16.mxu0 0
      %537 = vmatpush1.bf16.msra.mxu0 0
      %538 = vmatprep.subr.bf16.mxu0 0
      %539 = vmatpush1.bf16.msra.mxu0 0
      %540 = vmatprep.subr.bf16.mxu0 0
      %541 = vmatpush1.bf16.msra.mxu0 0
      %542 = vmatprep.subr.bf16.mxu0 0
      %543 = vmatpush1.bf16.msra.mxu0 0
      %544 = vmatprep.subr.bf16.mxu0 0
      %545 = vmatpush1.bf16.msra.mxu0 0
      %546 = vmatprep.subr.bf16.mxu0 0
      %547 = vmatpush1.bf16.msra.mxu0 0
      %548 = vmatprep.subr.bf16.mxu0 0
      %549 = vmatpush1.bf16.msra.mxu0 0
      %550 = vmatprep.subr.bf16.mxu0 0
      %551 = vmatpush1.bf16.msra.mxu0 0
      %552 = vmatprep.subr.bf16.mxu0 0
      %553 = vmatpush1.bf16.msra.mxu0 0
      %554 = vmatprep.subr.bf16.mxu0 0
      %555 = vmatpush1.bf16.msra.mxu0 0
      %556 = vmatprep.subr.bf16.mxu0 0
      %557 = vmatpush1.bf16.msra.mxu0 0
      %558 = vmatprep.subr.bf16.mxu0 0
      %559 = vmatpush1.bf16.msra.mxu0 0
      %560 = vmatprep.subr.bf16.mxu0 0
      %561 = vmatpush1.bf16.msra.mxu0 0
      %562 = vmatprep.mubr.bf16.mxu0 0
      %563 = vmatmul.mubr.bf16.gmra.mrb[0].mxu0 %v528
      %v564 = vpop.f32.mrb[0].mxu0
      %v565 = vadd.f32 %v513, %v564
      %v566 = vpop.f32.mrb[0].mxu0
      %v567 = vpop.f32.mrb[0].mxu0
      %v568 = vadd.f32 %v513, %v567
      %v569 = vpop.f32.mrb[0].mxu0
      %570 = vdwg.mxu0
      %v571 = vpack.c.bf16 %v500, %v497
      %v572 = vpack.c.bf16 %v568, %v565
      %v573 = vld [vmem:[%s7] sm:$0xff]
      %v574 = vld [vmem:[%s7 + $0x8] sm:$0xff]
      %v575 = vld [vmem:[%s7 + $0x10] sm:$0xff]
      %v576 = vld [vmem:[%s7 + $0x18] sm:$0xff]
      %vm577 = vcmask 64512
      %v579 = vsel %vm577, %v571, 0
      %v582 = vsel %vm577, %v572, 0
      %584 = vmatprep.subr.bf16.mxu0 0
      %585 = vmatpush1.bf16.xpose.msra.mxu0 %v582
      %586 = vmatprep.subr.bf16.mxu0 0
      %587 = vmatpush1.bf16.xpose.msra.mxu0 0
      %588 = vmatprep.subr.bf16.mxu0 0
      %589 = vmatpush1.bf16.xpose.msra.mxu0 0
      %590 = vmatprep.subr.bf16.mxu0 0
      %591 = vmatpush1.bf16.xpose.msra.mxu0 0
      %592 = vmatprep.subr.bf16.mxu0 0
      %593 = vmatpush1.bf16.xpose.msra.mxu0 0
      %594 = vmatprep.subr.bf16.mxu0 0
      %595 = vmatpush1.bf16.xpose.msra.mxu0 0
      %596 = vmatprep.subr.bf16.mxu0 0
      %597 = vmatpush1.bf16.xpose.msra.mxu0 0
      %598 = vmatprep.subr.bf16.mxu0 0
      %599 = vmatpush1.bf16.xpose.msra.mxu0 0
      %600 = vmatprep.subr.bf16.mxu0 0
      %601 = vmatpush1.bf16.xpose.msra.mxu0 0
      %602 = vmatprep.subr.bf16.mxu0 0
      %603 = vmatpush1.bf16.xpose.msra.mxu0 0
      %604 = vmatprep.subr.bf16.mxu0 0
      %605 = vmatpush1.bf16.xpose.msra.mxu0 0
      %606 = vmatprep.subr.bf16.mxu0 0
      %607 = vmatpush1.bf16.xpose.msra.mxu0 0
      %608 = vmatprep.subr.bf16.mxu0 0
      %609 = vmatpush1.bf16.xpose.msra.mxu0 0
      %610 = vmatprep.subr.bf16.mxu0 0
      %611 = vmatpush1.bf16.xpose.msra.mxu0 0
      %612 = vmatprep.subr.bf16.mxu0 0
      %613 = vmatpush1.bf16.xpose.msra.mxu0 0
      %614 = vmatprep.subr.bf16.mxu0 0
      %615 = vmatpush1.bf16.xpose.msra.mxu0 0
      %616 = vmatprep.mubr.bf16.mxu0 0
      %617 = vmatmul.mubr.bf16.gmra.mrb[0].mxu0 %v579
      %v618 = vpop.f32.mrb[0].mxu0
      %v619 = vadd.f32 0.0, %v618
      %v620 = vpop.f32.mrb[0].mxu0
      %v621 = vpop.f32.mrb[0].mxu0
      %v622 = vadd.f32 0.0, %v621
      %v623 = vpop.f32.mrb[0].mxu0
      %624 = vdwg.mxu0
      %v625 = vmul.f32 %v619, 0.35355338
      %v626 = vmul.f32 %v622, 0.35355338
      %vm627 = vcmp.ne.s32.totalorder %v432, 0
      %vm628 = vcmp.ne.s32.totalorder %v433, 0
      %v629 = vsel %vm627, %v625, -10000.0
      %v630 = vsel %vm628, %v626, -10000.0
      %vm631 = vcmask 89088
      %v632 = vsel %vm631, %v629, -inf
      %633 = vmax.xlane.f32.xlu0 %v632
      %v634 = vpop.xlane.xlu0 %633
      %vm635 = vcmask 83968
      %v636 = vsel %vm635, %v630, -inf
      %637 = vmax.xlane.f32.xlu0 %v636
      %v638 = vpop.xlane.xlu0 %637
      %v639 = vsub.f32 %v629, %v634
      %v640 = vsub.f32 %v630, %v638
      %v641 = vmul.f32 %v639, 1.442695
      %v642 = vpow.pop %v641
      %v643 = vmul.f32 %v640, 1.442695
      %v644 = vpow.pop %v643
      %v645 = vsel %vm631, %v642, 0.0
      %646 = vadd.xlane.f32.xlu0 %v645
      %v647 = vpop.xlane.xlu0 %646
      %v648 = vsel %vm635, %v644, 0.0
      %649 = vadd.xlane.f32.xlu0 %v648
      %v650 = vpop.xlane.xlu0 %649
      %v651 = vrcp.pop %v647
      %v652 = vrcp.pop %v650
      %v653 = vmul.f32 %v642, %v651
      %v654 = vmul.f32 %v644, %v652
      %v655 = vpack.c.bf16 %v654, %v653
      %657 = vrot.lane.b32.xlu0 %v572, 96
      %v658 = vpop.permute.xlu0 %657
      %v660 = vsel %vm631, %v655, 0
      %vm662 = vcmask 1044480
      %vm663 = vcmask 1045504
      %v664 = vsel %vm662, 4294967295, 65535
      %v665 = vsel %vm663, %v664, 0
      %v667 = vand.u32 %v658, %v665
      %669 = vmatprep.subr.bf16.mxu0 0
      %670 = vmatpush1.bf16.msra.mxu0 %v667
      %671 = vmatprep.subr.bf16.mxu0 0
      %672 = vmatpush1.bf16.msra.mxu0 0
      %673 = vmatprep.subr.bf16.mxu0 0
      %674 = vmatpush1.bf16.msra.mxu0 0
      %675 = vmatprep.subr.bf16.mxu0 0
      %676 = vmatpush1.bf16.msra.mxu0 0
      %677 = vmatprep.subr.bf16.mxu0 0
      %678 = vmatpush1.bf16.msra.mxu0 0
      %679 = vmatprep.subr.bf16.mxu0 0
      %680 = vmatpush1.bf16.msra.mxu0 0
      %681 = vmatprep.subr.bf16.mxu0 0
      %682 = vmatpush1.bf16.msra.mxu0 0
      %683 = vmatprep.subr.bf16.mxu0 0
      %684 = vmatpush1.bf16.msra.mxu0 0
      %685 = vmatprep.subr.bf16.mxu0 0
      %686 = vmatpush1.bf16.msra.mxu0 0
      %687 = vmatprep.subr.bf16.mxu0 0
      %688 = vmatpush1.bf16.msra.mxu0 0
      %689 = vmatprep.subr.bf16.mxu0 0
      %690 = vmatpush1.bf16.msra.mxu0 0
      %691 = vmatprep.subr.bf16.mxu0 0
      %692 = vmatpush1.bf16.msra.mxu0 0
      %693 = vmatprep.subr.bf16.mxu0 0
      %694 = vmatpush1.bf16.msra.mxu0 0
      %695 = vmatprep.subr.bf16.mxu0 0
      %696 = vmatpush1.bf16.msra.mxu0 0
      %697 = vmatprep.subr.bf16.mxu0 0
      %698 = vmatpush1.bf16.msra.mxu0 0
      %699 = vmatprep.subr.bf16.mxu0 0
      %700 = vmatpush1.bf16.msra.mxu0 0
      %701 = vmatprep.mubr.bf16.mxu0 0
      %702 = vmatmul.mubr.bf16.gmra.mrb[0].mxu0 %v660
      %v703 = vpop.f32.mrb[0].mxu0
      %v704 = vadd.f32 0.0, %v703
      %v705 = vpop.f32.mrb[0].mxu0
      %v706 = vpop.f32.mrb[0].mxu0
      %v707 = vadd.f32 0.0, %v706
      %v708 = vpop.f32.mrb[0].mxu0
      %709 = vdwg.mxu0
      %v710 = vpack.c.bf16 %v707, %v704
      %v711 = vpack.c.bf16 %v573, %v573
      %713 = vrot.lane.b32.xlu0 %v571, 120
      %v714 = vpop.permute.xlu0 %713
      %715 = vrot.lane.b32.xlu0 %v572, 120
      %v716 = vpop.permute.xlu0 %715
      %v718 = vsel %vm577, %v714, 0
      %v721 = vsel %vm577, %v716, 0
      %723 = vmatprep.subr.bf16.mxu0 0
      %724 = vmatpush1.bf16.xpose.msra.mxu0 %v721
      %725 = vmatprep.subr.bf16.mxu0 0
      %726 = vmatpush1.bf16.xpose.msra.mxu0 0
      %727 = vmatprep.subr.bf16.mxu0 0
      %728 = vmatpush1.bf16.xpose.msra.mxu0 0
      %729 = vmatprep.subr.bf16.mxu0 0
      %730 = vmatpush1.bf16.xpose.msra.mxu0 0
      %731 = vmatprep.subr.bf16.mxu0 0
      %732 = vmatpush1.bf16.xpose.msra.mxu0 0
      %733 = vmatprep.subr.bf16.mxu0 0
      %734 = vmatpush1.bf16.xpose.msra.mxu0 0
      %735 = vmatprep.subr.bf16.mxu0 0
      %736 = vmatpush1.bf16.xpose.msra.mxu0 0
      %737 = vmatprep.subr.bf16.mxu0 0
      %738 = vmatpush1.bf16.xpose.msra.mxu0 0
      %739 = vmatprep.subr.bf16.mxu0 0
      %740 = vmatpush1.bf16.xpose.msra.mxu0 0
      %741 = vmatprep.subr.bf16.mxu0 0
      %742 = vmatpush1.bf16.xpose.msra.mxu0 0
      %743 = vmatprep.subr.bf16.mxu0 0
      %744 = vmatpush1.bf16.xpose.msra.mxu0 0
      %745 = vmatprep.subr.bf16.mxu0 0
      %746 = vmatpush1.bf16.xpose.msra.mxu0 0
      %747 = vmatprep.subr.bf16.mxu0 0
      %748 = vmatpush1.bf16.xpose.msra.mxu0 0
      %749 = vmatprep.subr.bf16.mxu0 0
      %750 = vmatpush1.bf16.xpose.msra.mxu0 0
      %751 = vmatprep.subr.bf16.mxu0 0
      %752 = vmatpush1.bf16.xpose.msra.mxu0 0
      %753 = vmatprep.subr.bf16.mxu0 0
      %754 = vmatpush1.bf16.xpose.msra.mxu0 0
      %755 = vmatprep.mubr.bf16.mxu0 0
      %756 = vmatmul.mubr.bf16.gmra.mrb[0].mxu0 %v718
      %v757 = vpop.f32.mrb[0].mxu0
      %v758 = vadd.f32 0.0, %v757
      %v759 = vpop.f32.mrb[0].mxu0
      %v760 = vpop.f32.mrb[0].mxu0
      %v761 = vadd.f32 0.0, %v760
      %v762 = vpop.f32.mrb[0].mxu0
      %763 = vdwg.mxu0
      %v764 = vmul.f32 %v758, 0.35355338
      %v765 = vmul.f32 %v761, 0.35355338
      %v766 = vsel %vm627, %v764, -10000.0
      %v767 = vsel %vm628, %v765, -10000.0
      %v768 = vsel %vm631, %v766, -inf
      %769 = vmax.xlane.f32.xlu0 %v768
      %v770 = vpop.xlane.xlu0 %769
      %v771 = vsel %vm635, %v767, -inf
      %772 = vmax.xlane.f32.xlu0 %v771
      %v773 = vpop.xlane.xlu0 %772
      %v774 = vsub.f32 %v766, %v770
      %v775 = vsub.f32 %v767, %v773
      %v776 = vmul.f32 %v774, 1.442695
      %v777 = vpow.pop %v776
      %v778 = vmul.f32 %v775, 1.442695
      %v779 = vpow.pop %v778
      %v780 = vsel %vm631, %v777, 0.0
      %781 = vadd.xlane.f32.xlu0 %v780
      %v782 = vpop.xlane.xlu0 %781
      %v783 = vsel %vm635, %v779, 0.0
      %784 = vadd.xlane.f32.xlu0 %v783
      %v785 = vpop.xlane.xlu0 %784
      %v786 = vrcp.pop %v782
      %v787 = vrcp.pop %v785
      %v788 = vmul.f32 %v777, %v786
      %v789 = vmul.f32 %v779, %v787
      %v790 = vpack.c.bf16 %v789, %v788
      %791 = vrot.lane.b32.xlu0 %v572, 88
      %v792 = vpop.permute.xlu0 %791
      %v794 = vsel %vm631, %v790, 0
      %v797 = vand.u32 %v792, %v665
      %799 = vmatprep.subr.bf16.mxu0 0
      %800 = vmatpush1.bf16.msra.mxu0 %v797
      %801 = vmatprep.subr.bf16.mxu0 0
      %802 = vmatpush1.bf16.msra.mxu0 0
      %803 = vmatprep.subr.bf16.mxu0 0
      %804 = vmatpush1.bf16.msra.mxu0 0
      %805 = vmatprep.subr.bf16.mxu0 0
      %806 = vmatpush1.bf16.msra.mxu0 0
      %807 = vmatprep.subr.bf16.mxu0 0
      %808 = vmatpush1.bf16.msra.mxu0 0
      %809 = vmatprep.subr.bf16.mxu0 0
      %810 = vmatpush1.bf16.msra.mxu0 0
      %811 = vmatprep.subr.bf16.mxu0 0
      %812 = vmatpush1.bf16.msra.mxu0 0
      %813 = vmatprep.subr.bf16.mxu0 0
      %814 = vmatpush1.bf16.msra.mxu0 0
      %815 = vmatprep.subr.bf16.mxu0 0
      %816 = vmatpush1.bf16.msra.mxu0 0
      %817 = vmatprep.subr.bf16.mxu0 0
      %818 = vmatpush1.bf16.msra.mxu0 0
      %819 = vmatprep.subr.bf16.mxu0 0
      %820 = vmatpush1.bf16.msra.mxu0 0
      %821 = vmatprep.subr.bf16.mxu0 0
      %822 = vmatpush1.bf16.msra.mxu0 0
      %823 = vmatprep.subr.bf16.mxu0 0
      %824 = vmatpush1.bf16.msra.mxu0 0
      %825 = vmatprep.subr.bf16.mxu0 0
      %826 = vmatpush1.bf16.msra.mxu0 0
      %827 = vmatprep.subr.bf16.mxu0 0
      %828 = vmatpush1.bf16.msra.mxu0 0
      %829 = vmatprep.subr.bf16.mxu0 0
      %830 = vmatpush1.bf16.msra.mxu0 0
      %831 = vmatprep.mubr.bf16.mxu0 0
      %832 = vmatmul.mubr.bf16.gmra.mrb[0].mxu0 %v794
      %v833 = vpop.f32.mrb[0].mxu0
      %v834 = vadd.f32 0.0, %v833
      %v835 = vpop.f32.mrb[0].mxu0
      %v836 = vpop.f32.mrb[0].mxu0
      %v837 = vadd.f32 0.0, %v836
      %v838 = vpop.f32.mrb[0].mxu0
      %839 = vdwg.mxu0
      %v840 = vpack.c.bf16 %v837, %v834
      %v841 = vpack.c.bf16 %v574, %v574
      %v843 = vsel %vm577, %v840, 0
      %vm845 = vcmask 1043456
      %v847 = vsel %vm845, %v841, 0
      %849 = vmatprep.subr.bf16.mxu0 0
      %850 = vmatpush1.bf16.msra.mxu0 %v847
      %851 = vmatprep.subr.bf16.mxu0 0
      %852 = vmatpush1.bf16.msra.mxu0 0
      %853 = vmatprep.subr.bf16.mxu0 0
      %854 = vmatpush1.bf16.msra.mxu0 0
      %855 = vmatprep.subr.bf16.mxu0 0
      %856 = vmatpush1.bf16.msra.mxu0 0
      %857 = vmatprep.subr.bf16.mxu0 0
      %858 = vmatpush1.bf16.msra.mxu0 0
      %859 = vmatprep.subr.bf16.mxu0 0
      %860 = vmatpush1.bf16.msra.mxu0 0
      %861 = vmatprep.subr.bf16.mxu0 0
      %862 = vmatpush1.bf16.msra.mxu0 0
      %863 = vmatprep.subr.bf16.mxu0 0
      %864 = vmatpush1.bf16.msra.mxu0 0
      %865 = vmatprep.subr.bf16.mxu0 0
      %866 = vmatpush1.bf16.msra.mxu0 0
      %867 = vmatprep.subr.bf16.mxu0 0
      %868 = vmatpush1.bf16.msra.mxu0 0
      %869 = vmatprep.subr.bf16.mxu0 0
      %870 = vmatpush1.bf16.msra.mxu0 0
      %871 = vmatprep.subr.bf16.mxu0 0
      %872 = vmatpush1.bf16.msra.mxu0 0
      %873 = vmatprep.subr.bf16.mxu0 0
      %874 = vmatpush1.bf16.msra.mxu0 0
      %875 = vmatprep.subr.bf16.mxu0 0
      %876 = vmatpush1.bf16.msra.mxu0 0
      %877 = vmatprep.subr.bf16.mxu0 0
      %878 = vmatpush1.bf16.msra.mxu0 0
      %879 = vmatprep.subr.bf16.mxu0 0
      %880 = vmatpush1.bf16.msra.mxu0 0
      %881 = vmatprep.mubr.bf16.mxu0 0
      %882 = vmatmul.mubr.bf16.gmra.mrb[0].mxu0 %v843
      %v883 = vpop.f32.mrb[0].mxu0
      %v884 = vadd.f32 0.0, %v883
      %v885 = vpop.f32.mrb[0].mxu0
      %v886 = vpop.f32.mrb[0].mxu0
      %v887 = vadd.f32 0.0, %v886
      %v888 = vpop.f32.mrb[0].mxu0
      %889 = vdwg.mxu0
      %v891 = vsel %vm577, %v710, 0
      %v894 = vsel %vm845, %v711, 0
      %896 = vmatprep.subr.bf16.mxu0 0
      %897 = vmatpush1.bf16.msra.mxu0 %v894
      %898 = vmatprep.subr.bf16.mxu0 0
      %899 = vmatpush1.bf16.msra.mxu0 0
      %900 = vmatprep.subr.bf16.mxu0 0
      %901 = vmatpush1.bf16.msra.mxu0 0
      %902 = vmatprep.subr.bf16.mxu0 0
      %903 = vmatpush1.bf16.msra.mxu0 0
      %904 = vmatprep.subr.bf16.mxu0 0
      %905 = vmatpush1.bf16.msra.mxu0 0
      %906 = vmatprep.subr.bf16.mxu0 0
      %907 = vmatpush1.bf16.msra.mxu0 0
      %908 = vmatprep.subr.bf16.mxu0 0
      %909 = vmatpush1.bf16.msra.mxu0 0
      %910 = vmatprep.subr.bf16.mxu0 0
      %911 = vmatpush1.bf16.msra.mxu0 0
      %912 = vmatprep.subr.bf16.mxu0 0
      %913 = vmatpush1.bf16.msra.mxu0 0
      %914 = vmatprep.subr.bf16.mxu0 0
      %915 = vmatpush1.bf16.msra.mxu0 0
      %916 = vmatprep.subr.bf16.mxu0 0
      %917 = vmatpush1.bf16.msra.mxu0 0
      %918 = vmatprep.subr.bf16.mxu0 0
      %919 = vmatpush1.bf16.msra.mxu0 0
      %920 = vmatprep.subr.bf16.mxu0 0
      %921 = vmatpush1.bf16.msra.mxu0 0
      %922 = vmatprep.subr.bf16.mxu0 0
      %923 = vmatpush1.bf16.msra.mxu0 0
      %924 = vmatprep.subr.bf16.mxu0 0
      %925 = vmatpush1.bf16.msra.mxu0 0
      %926 = vmatprep.subr.bf16.mxu0 0
      %927 = vmatpush1.bf16.msra.mxu0 0
      %928 = vmatprep.mubr.bf16.mxu0 0
      %929 = vmatmul.mubr.bf16.gmra.mrb[0].mxu0 %v891
      %v930 = vpop.f32.mrb[0].mxu0
      %v931 = vadd.f32 %v884, %v930
      %v932 = vpop.f32.mrb[0].mxu0
      %v933 = vpop.f32.mrb[0].mxu0
      %v934 = vadd.f32 %v887, %v933
      %v935 = vpop.f32.mrb[0].mxu0
      %936 = vdwg.mxu0
      %937 = vrot.lane.b32.xlu0 %v571, 112
      %v938 = vpop.permute.xlu0 %937
      %939 = vrot.lane.b32.xlu0 %v572, 112
      %v940 = vpop.permute.xlu0 %939
      %v942 = vsel %vm577, %v938, 0
      %v945 = vsel %vm577, %v940, 0
      %947 = vmatprep.subr.bf16.mxu0 0
      %948 = vmatpush1.bf16.xpose.msra.mxu0 %v945
      %949 = vmatprep.subr.bf16.mxu0 0
      %950 = vmatpush1.bf16.xpose.msra.mxu0 0
      %951 = vmatprep.subr.bf16.mxu0 0
      %952 = vmatpush1.bf16.xpose.msra.mxu0 0
      %953 = vmatprep.subr.bf16.mxu0 0
      %954 = vmatpush1.bf16.xpose.msra.mxu0 0
      %955 = vmatprep.subr.bf16.mxu0 0
      %956 = vmatpush1.bf16.xpose.msra.mxu0 0
      %957 = vmatprep.subr.bf16.mxu0 0
      %958 = vmatpush1.bf16.xpose.msra.mxu0 0
      %959 = vmatprep.subr.bf16.mxu0 0
      %960 = vmatpush1.bf16.xpose.msra.mxu0 0
      %961 = vmatprep.subr.bf16.mxu0 0
      %962 = vmatpush1.bf16.xpose.msra.mxu0 0
      %963 = vmatprep.subr.bf16.mxu0 0
      %964 = vmatpush1.bf16.xpose.msra.mxu0 0
      %965 = vmatprep.subr.bf16.mxu0 0
      %966 = vmatpush1.bf16.xpose.msra.mxu0 0
      %967 = vmatprep.subr.bf16.mxu0 0
      %968 = vmatpush1.bf16.xpose.msra.mxu0 0
      %969 = vmatprep.subr.bf16.mxu0 0
      %970 = vmatpush1.bf16.xpose.msra.mxu0 0
      %971 = vmatprep.subr.bf16.mxu0 0
      %972 = vmatpush1.bf16.xpose.msra.mxu0 0
      %973 = vmatprep.subr.bf16.mxu0 0
      %974 = vmatpush1.bf16.xpose.msra.mxu0 0
      %975 = vmatprep.subr.bf16.mxu0 0
      %976 = vmatpush1.bf16.xpose.msra.mxu0 0
      %977 = vmatprep.subr.bf16.mxu0 0
      %978 = vmatpush1.bf16.xpose.msra.mxu0 0
      %979 = vmatprep.mubr.bf16.mxu0 0
      %980 = vmatmul.mubr.bf16.gmra.mrb[0].mxu0 %v942
      %v981 = vpop.f32.mrb[0].mxu0
      %v982 = vadd.f32 0.0, %v981
      %v983 = vpop.f32.mrb[0].mxu0
      %v984 = vpop.f32.mrb[0].mxu0
      %v985 = vadd.f32 0.0, %v984
      %v986 = vpop.f32.mrb[0].mxu0
      %987 = vdwg.mxu0
      %v988 = vmul.f32 %v982, 0.35355338
      %v989 = vmul.f32 %v985, 0.35355338
      %v990 = vsel %vm627, %v988, -10000.0
      %v991 = vsel %vm628, %v989, -10000.0
      %v992 = vsel %vm631, %v990, -inf
      %993 = vmax.xlane.f32.xlu0 %v992
      %v994 = vpop.xlane.xlu0 %993
      %v995 = vsel %vm635, %v991, -inf
      %996 = vmax.xlane.f32.xlu0 %v995
      %v997 = vpop.xlane.xlu0 %996
      %v998 = vsub.f32 %v990, %v994
      %v999 = vsub.f32 %v991, %v997
      %v1000 = vmul.f32 %v998, 1.442695
      %v1001 = vpow.pop %v1000
      %v1002 = vmul.f32 %v999, 1.442695
      %v1003 = vpow.pop %v1002
      %v1004 = vsel %vm631, %v1001, 0.0
      %1005 = vadd.xlane.f32.xlu0 %v1004
      %v1006 = vpop.xlane.xlu0 %1005
      %v1007 = vsel %vm635, %v1003, 0.0
      %1008 = vadd.xlane.f32.xlu0 %v1007
      %v1009 = vpop.xlane.xlu0 %1008
      %v1010 = vrcp.pop %v1006
      %v1011 = vrcp.pop %v1009
      %v1012 = vmul.f32 %v1001, %v1010
      %v1013 = vmul.f32 %v1003, %v1011
      %v1014 = vpack.c.bf16 %v1013, %v1012
      %1015 = vrot.lane.b32.xlu0 %v572, 80
      %v1016 = vpop.permute.xlu0 %1015
      %v1018 = vsel %vm631, %v1014, 0
      %v1021 = vand.u32 %v1016, %v665
      %1023 = vmatprep.subr.bf16.mxu0 0
      %1024 = vmatpush1.bf16.msra.mxu0 %v1021
      %1025 = vmatprep.subr.bf16.mxu0 0
      %1026 = vmatpush1.bf16.msra.mxu0 0
      %1027 = vmatprep.subr.bf16.mxu0 0
      %1028 = vmatpush1.bf16.msra.mxu0 0
      %1029 = vmatprep.subr.bf16.mxu0 0
      %1030 = vmatpush1.bf16.msra.mxu0 0
      %1031 = vmatprep.subr.bf16.mxu0 0
      %1032 = vmatpush1.bf16.msra.mxu0 0
      %1033 = vmatprep.subr.bf16.mxu0 0
      %1034 = vmatpush1.bf16.msra.mxu0 0
      %1035 = vmatprep.subr.bf16.mxu0 0
      %1036 = vmatpush1.bf16.msra.mxu0 0
      %1037 = vmatprep.subr.bf16.mxu0 0
      %1038 = vmatpush1.bf16.msra.mxu0 0
      %1039 = vmatprep.subr.bf16.mxu0 0
      %1040 = vmatpush1.bf16.msra.mxu0 0
      %1041 = vmatprep.subr.bf16.mxu0 0
      %1042 = vmatpush1.bf16.msra.mxu0 0
      %1043 = vmatprep.subr.bf16.mxu0 0
      %1044 = vmatpush1.bf16.msra.mxu0 0
      %1045 = vmatprep.subr.bf16.mxu0 0
      %1046 = vmatpush1.bf16.msra.mxu0 0
      %1047 = vmatprep.subr.bf16.mxu0 0
      %1048 = vmatpush1.bf16.msra.mxu0 0
      %1049 = vmatprep.subr.bf16.mxu0 0
      %1050 = vmatpush1.bf16.msra.mxu0 0
      %1051 = vmatprep.subr.bf16.mxu0 0
      %1052 = vmatpush1.bf16.msra.mxu0 0
      %1053 = vmatprep.subr.bf16.mxu0 0
      %1054 = vmatpush1.bf16.msra.mxu0 0
      %1055 = vmatprep.mubr.bf16.mxu0 0
      %1056 = vmatmul.mubr.bf16.gmra.mrb[0].mxu0 %v1018
      %v1057 = vpop.f32.mrb[0].mxu0
      %v1058 = vadd.f32 0.0, %v1057
      %v1059 = vpop.f32.mrb[0].mxu0
      %v1060 = vpop.f32.mrb[0].mxu0
      %v1061 = vadd.f32 0.0, %v1060
      %v1062 = vpop.f32.mrb[0].mxu0
      %1063 = vdwg.mxu0
      %v1064 = vpack.c.bf16 %v1061, %v1058
      %v1065 = vpack.c.bf16 %v575, %v575
      %v1067 = vsel %vm577, %v1064, 0
      %v1070 = vsel %vm845, %v1065, 0
      %1072 = vmatprep.subr.bf16.mxu0 0
      %1073 = vmatpush1.bf16.msra.mxu0 %v1070
      %1074 = vmatprep.subr.bf16.mxu0 0
      %1075 = vmatpush1.bf16.msra.mxu0 0
      %1076 = vmatprep.subr.bf16.mxu0 0
      %1077 = vmatpush1.bf16.msra.mxu0 0
      %1078 = vmatprep.subr.bf16.mxu0 0
      %1079 = vmatpush1.bf16.msra.mxu0 0
      %1080 = vmatprep.subr.bf16.mxu0 0
      %1081 = vmatpush1.bf16.msra.mxu0 0
      %1082 = vmatprep.subr.bf16.mxu0 0
      %1083 = vmatpush1.bf16.msra.mxu0 0
      %1084 = vmatprep.subr.bf16.mxu0 0
      %1085 = vmatpush1.bf16.msra.mxu0 0
      %1086 = vmatprep.subr.bf16.mxu0 0
      %1087 = vmatpush1.bf16.msra.mxu0 0
      %1088 = vmatprep.subr.bf16.mxu0 0
      %1089 = vmatpush1.bf16.msra.mxu0 0
      %1090 = vmatprep.subr.bf16.mxu0 0
      %1091 = vmatpush1.bf16.msra.mxu0 0
      %1092 = vmatprep.subr.bf16.mxu0 0
      %1093 = vmatpush1.bf16.msra.mxu0 0
      %1094 = vmatprep.subr.bf16.mxu0 0
      %1095 = vmatpush1.bf16.msra.mxu0 0
      %1096 = vmatprep.subr.bf16.mxu0 0
      %1097 = vmatpush1.bf16.msra.mxu0 0
      %1098 = vmatprep.subr.bf16.mxu0 0
      %1099 = vmatpush1.bf16.msra.mxu0 0
      %1100 = vmatprep.subr.bf16.mxu0 0
      %1101 = vmatpush1.bf16.msra.mxu0 0
      %1102 = vmatprep.subr.bf16.mxu0 0
      %1103 = vmatpush1.bf16.msra.mxu0 0
      %1104 = vmatprep.mubr.bf16.mxu0 0
      %1105 = vmatmul.mubr.bf16.gmra.mrb[0].mxu0 %v1067
      %v1106 = vpop.f32.mrb[0].mxu0
      %v1107 = vadd.f32 0.0, %v1106
      %v1108 = vpop.f32.mrb[0].mxu0
      %v1109 = vpop.f32.mrb[0].mxu0
      %v1110 = vadd.f32 0.0, %v1109
      %v1111 = vpop.f32.mrb[0].mxu0
      %1112 = vdwg.mxu0
      %v1113 = vadd.f32 %v931, %v1107
      %v1114 = vadd.f32 %v934, %v1110
      %1115 = vrot.lane.b32.xlu0 %v571, 104
      %v1116 = vpop.permute.xlu0 %1115
      %1117 = vrot.lane.b32.xlu0 %v572, 104
      %v1118 = vpop.permute.xlu0 %1117
      %v1120 = vsel %vm577, %v1116, 0
      %v1123 = vsel %vm577, %v1118, 0
      %1125 = vmatprep.subr.bf16.mxu0 0
      %1126 = vmatpush1.bf16.xpose.msra.mxu0 %v1123
      %1127 = vmatprep.subr.bf16.mxu0 0
      %1128 = vmatpush1.bf16.xpose.msra.mxu0 0
      %1129 = vmatprep.subr.bf16.mxu0 0
      %1130 = vmatpush1.bf16.xpose.msra.mxu0 0
      %1131 = vmatprep.subr.bf16.mxu0 0
      %1132 = vmatpush1.bf16.xpose.msra.mxu0 0
      %1133 = vmatprep.subr.bf16.mxu0 0
      %1134 = vmatpush1.bf16.xpose.msra.mxu0 0
      %1135 = vmatprep.subr.bf16.mxu0 0
      %1136 = vmatpush1.bf16.xpose.msra.mxu0 0
      %1137 = vmatprep.subr.bf16.mxu0 0
      %1138 = vmatpush1.bf16.xpose.msra.mxu0 0
      %1139 = vmatprep.subr.bf16.mxu0 0
      %1140 = vmatpush1.bf16.xpose.msra.mxu0 0
      %1141 = vmatprep.subr.bf16.mxu0 0
      %1142 = vmatpush1.bf16.xpose.msra.mxu0 0
      %1143 = vmatprep.subr.bf16.mxu0 0
      %1144 = vmatpush1.bf16.xpose.msra.mxu0 0
      %1145 = vmatprep.subr.bf16.mxu0 0
      %1146 = vmatpush1.bf16.xpose.msra.mxu0 0
      %1147 = vmatprep.subr.bf16.mxu0 0
      %1148 = vmatpush1.bf16.xpose.msra.mxu0 0
      %1149 = vmatprep.subr.bf16.mxu0 0
      %1150 = vmatpush1.bf16.xpose.msra.mxu0 0
      %1151 = vmatprep.subr.bf16.mxu0 0
      %1152 = vmatpush1.bf16.xpose.msra.mxu0 0
      %1153 = vmatprep.subr.bf16.mxu0 0
      %1154 = vmatpush1.bf16.xpose.msra.mxu0 0
      %1155 = vmatprep.subr.bf16.mxu0 0
      %1156 = vmatpush1.bf16.xpose.msra.mxu0 0
      %1157 = vmatprep.mubr.bf16.mxu0 0
      %1158 = vmatmul.mubr.bf16.gmra.mrb[0].mxu0 %v1120
      %v1159 = vpop.f32.mrb[0].mxu0
      %v1160 = vadd.f32 0.0, %v1159
      %v1161 = vpop.f32.mrb[0].mxu0
      %v1162 = vpop.f32.mrb[0].mxu0
      %v1163 = vadd.f32 0.0, %v1162
      %v1164 = vpop.f32.mrb[0].mxu0
      %1165 = vdwg.mxu0
      %v1166 = vmul.f32 %v1160, 0.35355338
      %v1167 = vmul.f32 %v1163, 0.35355338
      %v1168 = vsel %vm627, %v1166, -10000.0
      %v1169 = vsel %vm628, %v1167, -10000.0
      %v1170 = vsel %vm631, %v1168, -inf
      %1171 = vmax.xlane.f32.xlu0 %v1170
      %v1172 = vpop.xlane.xlu0 %1171
      %v1173 = vsel %vm635, %v1169, -inf
      %1174 = vmax.xlane.f32.xlu0 %v1173
      %v1175 = vpop.xlane.xlu0 %1174
      %v1176 = vsub.f32 %v1168, %v1172
      %v1177 = vsub.f32 %v1169, %v1175
      %v1178 = vmul.f32 %v1176, 1.442695
      %v1179 = vpow.pop %v1178
      %v1180 = vmul.f32 %v1177, 1.442695
      %v1181 = vpow.pop %v1180
      %v1182 = vsel %vm631, %v1179, 0.0
      %1183 = vadd.xlane.f32.xlu0 %v1182
      %v1184 = vpop.xlane.xlu0 %1183
      %v1185 = vsel %vm635, %v1181, 0.0
      %1186 = vadd.xlane.f32.xlu0 %v1185
      %v1187 = vpop.xlane.xlu0 %1186
      %v1188 = vrcp.pop %v1184
      %v1189 = vrcp.pop %v1187
      %v1190 = vmul.f32 %v1179, %v1188
      %v1191 = vmul.f32 %v1181, %v1189
      %v1192 = vpack.c.bf16 %v1191, %v1190
      %1193 = vrot.lane.b32.xlu0 %v572, 72
      %v1194 = vpop.permute.xlu0 %1193
      %v1196 = vsel %vm631, %v1192, 0
      %v1199 = vand.u32 %v1194, %v665
      %1201 = vmatprep.subr.bf16.mxu0 0
      %1202 = vmatpush1.bf16.msra.mxu0 %v1199
      %1203 = vmatprep.subr.bf16.mxu0 0
      %1204 = vmatpush1.bf16.msra.mxu0 0
      %1205 = vmatprep.subr.bf16.mxu0 0
      %1206 = vmatpush1.bf16.msra.mxu0 0
      %1207 = vmatprep.subr.bf16.mxu0 0
      %1208 = vmatpush1.bf16.msra.mxu0 0
      %1209 = vmatprep.subr.bf16.mxu0 0
      %1210 = vmatpush1.bf16.msra.mxu0 0
      %1211 = vmatprep.subr.bf16.mxu0 0
      %1212 = vmatpush1.bf16.msra.mxu0 0
      %1213 = vmatprep.subr.bf16.mxu0 0
      %1214 = vmatpush1.bf16.msra.mxu0 0
      %1215 = vmatprep.subr.bf16.mxu0 0
      %1216 = vmatpush1.bf16.msra.mxu0 0
      %1217 = vmatprep.subr.bf16.mxu0 0
      %1218 = vmatpush1.bf16.msra.mxu0 0
      %1219 = vmatprep.subr.bf16.mxu0 0
      %1220 = vmatpush1.bf16.msra.mxu0 0
      %1221 = vmatprep.subr.bf16.mxu0 0
      %1222 = vmatpush1.bf16.msra.mxu0 0
      %1223 = vmatprep.subr.bf16.mxu0 0
      %1224 = vmatpush1.bf16.msra.mxu0 0
      %1225 = vmatprep.subr.bf16.mxu0 0
      %1226 = vmatpush1.bf16.msra.mxu0 0
      %1227 = vmatprep.subr.bf16.mxu0 0
      %1228 = vmatpush1.bf16.msra.mxu0 0
      %1229 = vmatprep.subr.bf16.mxu0 0
      %1230 = vmatpush1.bf16.msra.mxu0 0
      %1231 = vmatprep.subr.bf16.mxu0 0
      %1232 = vmatpush1.bf16.msra.mxu0 0
      %1233 = vmatprep.mubr.bf16.mxu0 0
      %1234 = vmatmul.mubr.bf16.gmra.mrb[0].mxu0 %v1196
      %v1235 = vpop.f32.mrb[0].mxu0
      %v1236 = vadd.f32 0.0, %v1235
      %v1237 = vpop.f32.mrb[0].mxu0
      %v1238 = vpop.f32.mrb[0].mxu0
      %v1239 = vadd.f32 0.0, %v1238
      %v1240 = vpop.f32.mrb[0].mxu0
      %1241 = vdwg.mxu0
      %v1242 = vpack.c.bf16 %v1239, %v1236
      %v1243 = vpack.c.bf16 %v576, %v576
      %v1245 = vsel %vm577, %v1242, 0
      %v1248 = vsel %vm845, %v1243, 0
      %1250 = vmatprep.subr.bf16.mxu0 0
      %1251 = vmatpush1.bf16.msra.mxu0 %v1248
      %1252 = vmatprep.subr.bf16.mxu0 0
      %1253 = vmatpush1.bf16.msra.mxu0 0
      %1254 = vmatprep.subr.bf16.mxu0 0
      %1255 = vmatpush1.bf16.msra.mxu0 0
      %1256 = vmatprep.subr.bf16.mxu0 0
      %1257 = vmatpush1.bf16.msra.mxu0 0
      %1258 = vmatprep.subr.bf16.mxu0 0
      %1259 = vmatpush1.bf16.msra.mxu0 0
      %1260 = vmatprep.subr.bf16.mxu0 0
      %1261 = vmatpush1.bf16.msra.mxu0 0
      %1262 = vmatprep.subr.bf16.mxu0 0
      %1263 = vmatpush1.bf16.msra.mxu0 0
      %1264 = vmatprep.subr.bf16.mxu0 0
      %1265 = vmatpush1.bf16.msra.mxu0 0
      %1266 = vmatprep.subr.bf16.mxu0 0
      %1267 = vmatpush1.bf16.msra.mxu0 0
      %1268 = vmatprep.subr.bf16.mxu0 0
      %1269 = vmatpush1.bf16.msra.mxu0 0
      %1270 = vmatprep.subr.bf16.mxu0 0
      %1271 = vmatpush1.bf16.msra.mxu0 0
      %1272 = vmatprep.subr.bf16.mxu0 0
      %1273 = vmatpush1.bf16.msra.mxu0 0
      %1274 = vmatprep.subr.bf16.mxu0 0
      %1275 = vmatpush1.bf16.msra.mxu0 0
      %1276 = vmatprep.subr.bf16.mxu0 0
      %1277 = vmatpush1.bf16.msra.mxu0 0
      %1278 = vmatprep.subr.bf16.mxu0 0
      %1279 = vmatpush1.bf16.msra.mxu0 0
      %1280 = vmatprep.subr.bf16.mxu0 0
      %1281 = vmatpush1.bf16.msra.mxu0 0
      %1282 = vmatprep.mubr.bf16.mxu0 0
      %1283 = vmatmul.mubr.bf16.gmra.mrb[0].mxu0 %v1245
      %v1284 = vpop.f32.mrb[0].mxu0
      %v1285 = vadd.f32 0.0, %v1284
      %v1286 = vpop.f32.mrb[0].mxu0
      %v1287 = vpop.f32.mrb[0].mxu0
      %v1288 = vadd.f32 0.0, %v1287
      %v1289 = vpop.f32.mrb[0].mxu0
      %1290 = vdwg.mxu0
      %v1291 = vadd.f32 %v1113, %v1285
      %v1292 = vadd.f32 %v1114, %v1288
      %v1293 = vld [vmem:[%s8] sm:$0x1]
      %v1295 = vlaneseq
      %v1296 = vshrl.u32 %v1295, 7
      %v1297 = vsub.s32 0, %v1296
      %v1298 = vrot.slane %v1293, %v1297
      %v1300 = vadd.f32 %v1291, %v1298
      %v1301 = vadd.f32 %v1292, %v1298
      %v1302 = vadd.f32 %v428, %v1300
      %v1303 = vadd.f32 %v429, %v1301
      %v1304 = vsel %vm458, %v1302, 0.0
      %1305 = vadd.xlane.f32.xlu0 %v1304
      %v1306 = vpop.xlane.xlu0 %1305
      %vm1307 = vcmask 256000
      %v1308 = vsel %vm1307, %v1303, 0.0
      %1309 = vadd.xlane.f32.xlu0 %v1308
      %v1310 = vpop.xlane.xlu0 %1309
      %v1311 = vrcp.pop 32.0
      %v1312 = vmul.f32 %v1306, %v1311
      %v1313 = vmul.f32 %v1310, %v1311
      %v1314 = vsub.f32 %v1302, %v1312
      %v1315 = vsub.f32 %v1303, %v1313
      %v1316 = vmul.f32 %v1314, %v1314
      %v1317 = vmul.f32 %v1315, %v1315
      %v1318 = vsel %vm458, %v1316, 0.0
      %1319 = vadd.xlane.f32.xlu0 %v1318
      %v1320 = vpop.xlane.xlu0 %1319
      %v1321 = vsel %vm1307, %v1317, 0.0
      %1322 = vadd.xlane.f32.xlu0 %v1321
      %v1323 = vpop.xlane.xlu0 %1322
      %v1324 = vmul.f32 %v1320, %v1311
      %v1325 = vmul.f32 %v1323, %v1311
      %v1326 = vadd.f32 %v1324, 1e-12
      %v1327 = vadd.f32 %v1325, 1e-12
      %v1328 = vrsqrt.pop %v1326
      %v1329 = vrsqrt.pop %v1327
      %v1330 = vmul.f32 %v1314, %v1328
      %v1331 = vmul.f32 %v1315, %v1329
      %v1332 = vld [vmem:[%s9] sm:$0x1]
      %v1334 = vlaneseq
      %v1335 = vshrl.u32 %v1334, 7
      %v1336 = vsub.s32 0, %v1335
      %v1337 = vrot.slane %v1332, %v1336
      %v1339 = vmul.f32 %v1330, %v1337
      %v1340 = vmul.f32 %v1331, %v1337
      %v1341 = vld [vmem:[%s10] sm:$0x1]
      %v1343 = vlaneseq
      %v1344 = vshrl.u32 %v1343, 7
      %v1345 = vsub.s32 0, %v1344
      %v1346 = vrot.slane %v1341, %v1345
      %v1348 = vadd.f32 %v1339, %v1346
      %v1349 = vadd.f32 %v1340, %v1346
      %1350 = vst.msk [vmem:[%s426] sm:$0xff] %vm458, %v1348
      %1351 = vst.msk [vmem:[%s426 + $0x8] sm:$0x7] %vm1307, %v1349
      %p1352 = scmp.lt.s32.totalorder %s22, 1
      %s1353 = scalar_select %p1352, %s22, 1
      %s1354 = smul.addr %s1353, 2
      %s1355 = smul.addr %s1354, 8
      %s1356 = scalar_lea.vmem %s11, %s1355
      // Predicated region
      $region65: #{_lambda_.8} parent=63 // pred_check
        %p1357 = pneg %p286
      $region66: #{_lambda_.8} parent=63 // pred_check_branch
        %1359 = sbr.rel (%p1357) target = $region68
      $region67: #{_lambda_.8} parent=63 // pred_region
        _
      $region68: #{_lambda_.8} parent=63 // pred_fallthru
        _
    $region64: #{_lambda_.8} parent=5 // pred_fallthru
      _
    %p1360 = scmp.le.s32.totalorder 2, %s17
    // Predicated region
    $region69: #{_lambda_.8} parent=5 // pred_check
      %p1361 = pneg %p1360
    $region70: #{_lambda_.8} parent=5 // pred_check_branch
      %1363 = sbr.rel (%p1361) target = $region72
    $region71: #{_lambda_.8} parent=5 // pred_region
      %s1364 = ssub.s32 %s17, 2
      // Predicated region
      $region73: #{_lambda_.8} parent=71 // pred_check
        %p1365 = pneg %p292
      $region74: #{_lambda_.8} parent=71 // pred_check_branch
        %1367 = sbr.rel (%p1365) target = $region76
      $region75: #{_lambda_.8} parent=71 // pred_region
        %p1368 = scmp.lt.s32.totalorder %s23, 1
        %s1369 = scalar_select %p1368, %s23, 1
        %s1370 = smul.addr %s1369, 2
        %s1371 = smul.addr %s1370, 8
        %s1372 = scalar_lea.vmem %s11, %s1371
      $region76: #{_lambda_.8} parent=71 // pred_fallthru
        _
    $region72: #{_lambda_.8} parent=5 // pred_fallthru
      _
  $region6: #{_lambda_.8} parent=0 // loop_footer
    %s21 = sadd.s32 1, %s17
  $region7: #{_lambda_.8} parent=0 // loop_footer_branch
    %16 = sbr.rel target = $region3
  $region8: #{_lambda_.8} parent=0 // loop_exit
    _

// kernel: _lambda_.6
$region0: #{_lambda_.6}
  #allocation0 [shape = 'u32[]', space=smem, size = 0x4, offset = 0x4, fixed_abs, tag = 'smem constant byte address 0x4 - core index']
  #allocation1 [shape = 'u32[144,128]{1,0:T(1,128)}', space=vmem, size = 0x12000, scoped, tag = 'internal scratch']
  %s0 = inlined_call_operand.vmem [shape: f32[2,8,32], index: 0, kind: input, shape index: {}, may-alias: {0,1}]
  %s1 = inlined_call_operand.vmem [shape: f32[2,8,32], index: 1, kind: input, shape index: {}, may-alias: {0,1}]
  %s2 = inlined_call_operand.vmem [shape: s32[2,8,8], index: 2, kind: input, shape index: {}]
  %s3 = inlined_call_operand.vmem [shape: bf16[32,32], index: 3, kind: input, shape index: {}]
  %s4 = inlined_call_operand.vmem [shape: f32[1,32], index: 4, kind: input, shape index: {}]
  %s5 = inlined_call_operand.vmem [shape: bf16[32,64], index: 5, kind: input, shape index: {}]
  %s6 = inlined_call_operand.vmem [shape: f32[1,64], index: 6, kind: input, shape index: {}]
  %s7 = inlined_call_operand.vmem [shape: f32[32,32], index: 7, kind: input, shape index: {}]
  %s8 = inlined_call_operand.vmem [shape: f32[1,32], index: 8, kind: input, shape index: {}]
  %s9 = inlined_call_operand.vmem [shape: f32[1,32], index: 9, kind: input, shape index: {}]
  %s10 = inlined_call_operand.vmem [shape: f32[1,32], index: 10, kind: input, shape index: {}]
  %s11 = inlined_call_operand.vmem [shape: f32[2,8,32], index: 11, kind: output, shape index: {}]
  %s12 = sld [smem:[#allocation0]]
  $region77: #{_lambda_.6} parent=0
    _
  %s14 = ssub.s32 1, %s12
  %s15 = scalar_select 0, %s14, %s12
  loop: start=0, step=1, limit=4
  $region2: #{_lambda_.6} parent=0 // loop_pre_header
    _
  $region3: #{_lambda_.6} parent=0 // loop_header
    %s17 = sphi 0, %s21
    %p18 = scmp.ge.s32.totalorder %s17, 4
    %s27 = sphi 0, %s29
    %s30 = sphi 0, %s27
    %s31 = sphi 0, %s30
    %s47 = sphi 0, %s31
    %s53 = sphi 0, %s55
    %s56 = sphi 0, %s53
    %s57 = sphi 0, %s56
    %s73 = sphi 0, %s57
    %s79 = sphi 0, %s81
    %s82 = sphi 0, %s79
    %s83 = sphi 0, %s82
    %s99 = sphi 0, %s83
    %s103 = sphi 0, %s103
    %s105 = sphi 0, %s103
    %s106 = sphi 0, %s105
    %s120 = sphi 0, %s106
    %s124 = sphi 0, %s124
    %s126 = sphi 0, %s124
    %s127 = sphi 0, %s126
    %s141 = sphi 0, %s127
    %s145 = sphi 0, %s145
    %s147 = sphi 0, %s145
    %s148 = sphi 0, %s147
    %s162 = sphi 0, %s148
    %s166 = sphi 0, %s166
    %s168 = sphi 0, %s166
    %s169 = sphi 0, %s168
    %s183 = sphi 0, %s169
    %s187 = sphi 0, %s187
    %s189 = sphi 0, %s187
    %s190 = sphi 0, %s189
    %s204 = sphi 0, %s190
    %s208 = sphi 0, %s208
    %s210 = sphi 0, %s208
    %s211 = sphi 0, %s210
    %s225 = sphi 0, %s211
    %s229 = sphi 0, %s229
    %s231 = sphi 0, %s229
    %s232 = sphi 0, %s231
    %s246 = sphi 0, %s232
    %s250 = sphi 0, %s250
    %s252 = sphi 0, %s250
    %s253 = sphi 0, %s252
    %s267 = sphi 0, %s253
    %s273 = sphi 0, %s275
    %s276 = sphi 0, %s273
    %s277 = sphi 0, %s276
    %s293 = sphi 0, %s277
  $region4: #{_lambda_.6} parent=0 // loop_header_branch
    %20 = sbr.rel (%p18) target = $region8
  $region5: #{_lambda_.6} parent=0 // loop_body
    %s22 = ssub.s32 %s17, 1
    %s23 = ssub.s32 %s17, 2
    %s24 = sadd.s32 %s17, 1
    %s25 = ssub.s32 %s17, %s24
    %p26 = scmp.eq.s32.totalorder %s25, 0
    %s28 = sadd.s32 %s27, 1
    %s29 = scalar_select %p26, %s27, %s28
    %p32 = pneg %p26
    %p33 = scmp.eq.s32.totalorder %s17, 1
    %p34 = por %p32, %p33
    %p35 = scmp.ne.s32.totalorder %s27, %s30
    %p36 = scmp.eq.s32.totalorder %s17, 0
    %p37 = por %p35, %p36
    %p38 = scmp.ne.s32.totalorder %s27, %s30
    %p39 = scmp.eq.s32.totalorder %s22, 1
    %p40 = por %p38, %p39
    %p41 = scmp.ne.s32.totalorder %s30, %s31
    %p42 = scmp.eq.s32.totalorder %s22, 0
    %p43 = por %p41, %p42
    %p44 = scmp.ne.s32.totalorder %s30, %s31
    %p45 = scmp.eq.s32.totalorder %s23, 1
    %p46 = por %p44, %p45
    %p48 = scmp.ne.s32.totalorder %s31, %s47
    %p49 = scmp.eq.s32.totalorder %s23, 0
    %p50 = por %p48, %p49
    %s51 = ssub.s32 %s17, %s24
    %p52 = scmp.eq.s32.totalorder %s51, 0
    %s54 = sadd.s32 %s53, 1
    %s55 = scalar_select %p52, %s53, %s54
    %p58 = pneg %p52
    %p59 = scmp.eq.s32.totalorder %s17, 1
    %p60 = por %p58, %p59
    %p61 = scmp.ne.s32.totalorder %s53, %s56
    %p62 = scmp.eq.s32.totalorder %s17, 0
    %p63 = por %p61, %p62
    %p64 = scmp.ne.s32.totalorder %s53, %s56
    %p65 = scmp.eq.s32.totalorder %s22, 1
    %p66 = por %p64, %p65
    %p67 = scmp.ne.s32.totalorder %s56, %s57
    %p68 = scmp.eq.s32.totalorder %s22, 0
    %p69 = por %p67, %p68
    %p70 = scmp.ne.s32.totalorder %s56, %s57
    %p71 = scmp.eq.s32.totalorder %s23, 1
    %p72 = por %p70, %p71
    %p74 = scmp.ne.s32.totalorder %s57, %s73
    %p75 = scmp.eq.s32.totalorder %s23, 0
    %p76 = por %p74, %p75
    %s77 = ssub.s32 %s17, %s24
    %p78 = scmp.eq.s32.totalorder %s77, 0
    %s80 = sadd.s32 %s79, 1
    %s81 = scalar_select %p78, %s79, %s80
    %p84 = pneg %p78
    %p85 = scmp.eq.s32.totalorder %s17, 1
    %p86 = por %p84, %p85
    %p87 = scmp.ne.s32.totalorder %s79, %s82
    %p88 = scmp.eq.s32.totalorder %s17, 0
    %p89 = por %p87, %p88
    %p90 = scmp.ne.s32.totalorder %s79, %s82
    %p91 = scmp.eq.s32.totalorder %s22, 1
    %p92 = por %p90, %p91
    %p93 = scmp.ne.s32.totalorder %s82, %s83
    %p94 = scmp.eq.s32.totalorder %s22, 0
    %p95 = por %p93, %p94
    %p96 = scmp.ne.s32.totalorder %s82, %s83
    %p97 = scmp.eq.s32.totalorder %s23, 1
    %p98 = por %p96, %p97
    %p100 = scmp.ne.s32.totalorder %s83, %s99
    %p101 = scmp.eq.s32.totalorder %s23, 0
    %p102 = por %p100, %p101
    %s104 = sadd.s32 %s103, 1
    %p107 = scmp.eq.s32.totalorder %s17, 1
    %p108 = scmp.ne.s32.totalorder %s103, %s105
    %p109 = scmp.eq.s32.totalorder %s17, 0
    %p110 = por %p108, %p109
    %p111 = scmp.ne.s32.totalorder %s103, %s105
    %p112 = scmp.eq.s32.totalorder %s22, 1
    %p113 = por %p111, %p112
    %p114 = scmp.ne.s32.totalorder %s105, %s106
    %p115 = scmp.eq.s32.totalorder %s22, 0
    %p116 = por %p114, %p115
    %p117 = scmp.ne.s32.totalorder %s105, %s106
    %p118 = scmp.eq.s32.totalorder %s23, 1
    %p119 = por %p117, %p118
    %p121 = scmp.ne.s32.totalorder %s106, %s120
    %p122 = scmp.eq.s32.totalorder %s23, 0
    %p123 = por %p121, %p122
    %s125 = sadd.s32 %s124, 1
    %p128 = scmp.eq.s32.totalorder %s17, 1
    %p129 = scmp.ne.s32.totalorder %s124, %s126
    %p130 = scmp.eq.s32.totalorder %s17, 0
    %p131 = por %p129, %p130
    %p132 = scmp.ne.s32.totalorder %s124, %s126
    %p133 = scmp.eq.s32.totalorder %s22, 1
    %p134 = por %p132, %p133
    %p135 = scmp.ne.s32.totalorder %s126, %s127
    %p136 = scmp.eq.s32.totalorder %s22, 0
    %p137 = por %p135, %p136
    %p138 = scmp.ne.s32.totalorder %s126, %s127
    %p139 = scmp.eq.s32.totalorder %s23, 1
    %p140 = por %p138, %p139
    %p142 = scmp.ne.s32.totalorder %s127, %s141
    %p143 = scmp.eq.s32.totalorder %s23, 0
    %p144 = por %p142, %p143
    %s146 = sadd.s32 %s145, 1
    %p149 = scmp.eq.s32.totalorder %s17, 1
    %p150 = scmp.ne.s32.totalorder %s145, %s147
    %p151 = scmp.eq.s32.totalorder %s17, 0
    %p152 = por %p150, %p151
    %p153 = scmp.ne.s32.totalorder %s145, %s147
    %p154 = scmp.eq.s32.totalorder %s22, 1
    %p155 = por %p153, %p154
    %p156 = scmp.ne.s32.totalorder %s147, %s148
    %p157 = scmp.eq.s32.totalorder %s22, 0
    %p158 = por %p156, %p157
    %p159 = scmp.ne.s32.totalorder %s147, %s148
    %p160 = scmp.eq.s32.totalorder %s23, 1
    %p161 = por %p159, %p160
    %p163 = scmp.ne.s32.totalorder %s148, %s162
    %p164 = scmp.eq.s32.totalorder %s23, 0
    %p165 = por %p163, %p164
    %s167 = sadd.s32 %s166, 1
    %p170 = scmp.eq.s32.totalorder %s17, 1
    %p171 = scmp.ne.s32.totalorder %s166, %s168
    %p172 = scmp.eq.s32.totalorder %s17, 0
    %p173 = por %p171, %p172
    %p174 = scmp.ne.s32.totalorder %s166, %s168
    %p175 = scmp.eq.s32.totalorder %s22, 1
    %p176 = por %p174, %p175
    %p177 = scmp.ne.s32.totalorder %s168, %s169
    %p178 = scmp.eq.s32.totalorder %s22, 0
    %p179 = por %p177, %p178
    %p180 = scmp.ne.s32.totalorder %s168, %s169
    %p181 = scmp.eq.s32.totalorder %s23, 1
    %p182 = por %p180, %p181
    %p184 = scmp.ne.s32.totalorder %s169, %s183
    %p185 = scmp.eq.s32.totalorder %s23, 0
    %p186 = por %p184, %p185
    %s188 = sadd.s32 %s187, 1
    %p191 = scmp.eq.s32.totalorder %s17, 1
    %p192 = scmp.ne.s32.totalorder %s187, %s189
    %p193 = scmp.eq.s32.totalorder %s17, 0
    %p194 = por %p192, %p193
    %p195 = scmp.ne.s32.totalorder %s187, %s189
    %p196 = scmp.eq.s32.totalorder %s22, 1
    %p197 = por %p195, %p196
    %p198 = scmp.ne.s32.totalorder %s189, %s190
    %p199 = scmp.eq.s32.totalorder %s22, 0
    %p200 = por %p198, %p199
    %p201 = scmp.ne.s32.totalorder %s189, %s190
    %p202 = scmp.eq.s32.totalorder %s23, 1
    %p203 = por %p201, %p202
    %p205 = scmp.ne.s32.totalorder %s190, %s204
    %p206 = scmp.eq.s32.totalorder %s23, 0
    %p207 = por %p205, %p206
    %s209 = sadd.s32 %s208, 1
    %p212 = scmp.eq.s32.totalorder %s17, 1
    %p213 = scmp.ne.s32.totalorder %s208, %s210
    %p214 = scmp.eq.s32.totalorder %s17, 0
    %p215 = por %p213, %p214
    %p216 = scmp.ne.s32.totalorder %s208, %s210
    %p217 = scmp.eq.s32.totalorder %s22, 1
    %p218 = por %p216, %p217
    %p219 = scmp.ne.s32.totalorder %s210, %s211
    %p220 = scmp.eq.s32.totalorder %s22, 0
    %p221 = por %p219, %p220
    %p222 = scmp.ne.s32.totalorder %s210, %s211
    %p223 = scmp.eq.s32.totalorder %s23, 1
    %p224 = por %p222, %p223
    %p226 = scmp.ne.s32.totalorder %s211, %s225
    %p227 = scmp.eq.s32.totalorder %s23, 0
    %p228 = por %p226, %p227
    %s230 = sadd.s32 %s229, 1
    %p233 = scmp.eq.s32.totalorder %s17, 1
    %p234 = scmp.ne.s32.totalorder %s229, %s231
    %p235 = scmp.eq.s32.totalorder %s17, 0
    %p236 = por %p234, %p235
    %p237 = scmp.ne.s32.totalorder %s229, %s231
    %p238 = scmp.eq.s32.totalorder %s22, 1
    %p239 = por %p237, %p238
    %p240 = scmp.ne.s32.totalorder %s231, %s232
    %p241 = scmp.eq.s32.totalorder %s22, 0
    %p242 = por %p240, %p241
    %p243 = scmp.ne.s32.totalorder %s231, %s232
    %p244 = scmp.eq.s32.totalorder %s23, 1
    %p245 = por %p243, %p244
    %p247 = scmp.ne.s32.totalorder %s232, %s246
    %p248 = scmp.eq.s32.totalorder %s23, 0
    %p249 = por %p247, %p248
    %s251 = sadd.s32 %s250, 1
    %p254 = scmp.eq.s32.totalorder %s17, 1
    %p255 = scmp.ne.s32.totalorder %s250, %s252
    %p256 = scmp.eq.s32.totalorder %s17, 0
    %p257 = por %p255, %p256
    %p258 = scmp.ne.s32.totalorder %s250, %s252
    %p259 = scmp.eq.s32.totalorder %s22, 1
    %p260 = por %p258, %p259
    %p261 = scmp.ne.s32.totalorder %s252, %s253
    %p262 = scmp.eq.s32.totalorder %s22, 0
    %p263 = por %p261, %p262
    %p264 = scmp.ne.s32.totalorder %s252, %s253
    %p265 = scmp.eq.s32.totalorder %s23, 1
    %p266 = por %p264, %p265
    %p268 = scmp.ne.s32.totalorder %s253, %s267
    %p269 = scmp.eq.s32.totalorder %s23, 0
    %p270 = por %p268, %p269
    %s271 = ssub.s32 %s17, %s24
    %p272 = scmp.eq.s32.totalorder %s271, 0
    %s274 = sadd.s32 %s273, 1
    %s275 = scalar_select %p272, %s273, %s274
    %p278 = pneg %p272
    %p279 = scmp.eq.s32.totalorder %s17, 1
    %p280 = por %p278, %p279
    %p281 = scmp.ne.s32.totalorder %s273, %s276
    %p282 = scmp.eq.s32.totalorder %s17, 0
    %p283 = por %p281, %p282
    %p284 = scmp.ne.s32.totalorder %s273, %s276
    %p285 = scmp.eq.s32.totalorder %s22, 1
    %p286 = por %p284, %p285
    %p287 = scmp.ne.s32.totalorder %s276, %s277
    %p288 = scmp.eq.s32.totalorder %s22, 0
    %p289 = por %p287, %p288
    %p290 = scmp.ne.s32.totalorder %s276, %s277
    %p291 = scmp.eq.s32.totalorder %s23, 1
    %p292 = por %p290, %p291
    %p294 = scmp.ne.s32.totalorder %s277, %s293
    %p295 = scmp.eq.s32.totalorder %s23, 0
    %p296 = por %p294, %p295
    %p297 = scmp.le.s32.totalorder 1, %s17
    %p298 = scmp.lt.s32.totalorder %s17, 3
    %p299 = pnand %p297, %p298
    %p300 = pneg %p299
    // Predicated region
    $region9: #{_lambda_.6} parent=5 // pred_check
      _
    $region10: #{_lambda_.6} parent=5 // pred_check_branch
      %302 = sbr.rel (%p299) target = $region12
    $region11: #{_lambda_.6} parent=5 // pred_region
      %s303 = ssub.s32 %s17, 1
      // Predicated region
      $region13: #{_lambda_.6} parent=11 // pred_check
        %p304 = pneg %p116
      $region14: #{_lambda_.6} parent=11 // pred_check_branch
        %306 = sbr.rel (%p304) target = $region16
      $region15: #{_lambda_.6} parent=11 // pred_region
        _
      $region16: #{_lambda_.6} parent=11 // pred_fallthru
        _
      // Predicated region
      $region17: #{_lambda_.6} parent=11 // pred_check
        %p307 = pneg %p137
      $region18: #{_lambda_.6} parent=11 // pred_check_branch
        %309 = sbr.rel (%p307) target = $region20
      $region19: #{_lambda_.6} parent=11 // pred_region
        _
      $region20: #{_lambda_.6} parent=11 // pred_fallthru
        _
      // Predicated region
      $region21: #{_lambda_.6} parent=11 // pred_check
        %p310 = pneg %p158
      $region22: #{_lambda_.6} parent=11 // pred_check_branch
        %312 = sbr.rel (%p310) target = $region24
      $region23: #{_lambda_.6} parent=11 // pred_region
        _
      $region24: #{_lambda_.6} parent=11 // pred_fallthru
        _
      // Predicated region
      $region25: #{_lambda_.6} parent=11 // pred_check
        %p313 = pneg %p179
      $region26: #{_lambda_.6} parent=11 // pred_check_branch
        %315 = sbr.rel (%p313) target = $region28
      $region27: #{_lambda_.6} parent=11 // pred_region
        _
      $region28: #{_lambda_.6} parent=11 // pred_fallthru
        _
      // Predicated region
      $region29: #{_lambda_.6} parent=11 // pred_check
        %p316 = pneg %p200
      $region30: #{_lambda_.6} parent=11 // pred_check_branch
        %318 = sbr.rel (%p316) target = $region32
      $region31: #{_lambda_.6} parent=11 // pred_region
        _
      $region32: #{_lambda_.6} parent=11 // pred_fallthru
        _
      // Predicated region
      $region33: #{_lambda_.6} parent=11 // pred_check
        %p319 = pneg %p221
      $region34: #{_lambda_.6} parent=11 // pred_check_branch
        %321 = sbr.rel (%p319) target = $region36
      $region35: #{_lambda_.6} parent=11 // pred_region
        _
      $region36: #{_lambda_.6} parent=11 // pred_fallthru
        _
      // Predicated region
      $region37: #{_lambda_.6} parent=11 // pred_check
        %p322 = pneg %p242
      $region38: #{_lambda_.6} parent=11 // pred_check_branch
        %324 = sbr.rel (%p322) target = $region40
      $region39: #{_lambda_.6} parent=11 // pred_region
        _
      $region40: #{_lambda_.6} parent=11 // pred_fallthru
        _
      // Predicated region
      $region41: #{_lambda_.6} parent=11 // pred_check
        %p325 = pneg %p263
      $region42: #{_lambda_.6} parent=11 // pred_check_branch
        %327 = sbr.rel (%p325) target = $region44
      $region43: #{_lambda_.6} parent=11 // pred_region
        _
      $region44: #{_lambda_.6} parent=11 // pred_fallthru
        _
    $region12: #{_lambda_.6} parent=5 // pred_fallthru
      _
    %p328 = scmp.lt.s32.totalorder %s17, 2
    // Predicated region
    $region45: #{_lambda_.6} parent=5 // pred_check
      %p329 = pneg %p328
    $region46: #{_lambda_.6} parent=5 // pred_check_branch
      %331 = sbr.rel (%p329) target = $region48
    $region47: #{_lambda_.6} parent=5 // pred_region
      // Predicated region
      $region49: #{_lambda_.6} parent=47 // pred_check
        %p332 = pneg %p37
      $region50: #{_lambda_.6} parent=47 // pred_check_branch
        %334 = sbr.rel (%p332) target = $region52
      $region51: #{_lambda_.6} parent=47 // pred_region
        %p335 = scmp.lt.s32.totalorder %s17, 1
        %s336 = scalar_select %p335, %s17, 1
        %s337 = smul.addr %s336, 8
        %s338 = scalar_lea.vmem %s0, %s337
      $region52: #{_lambda_.6} parent=47 // pred_fallthru
        _
      // Predicated region
      $region53: #{_lambda_.6} parent=47 // pred_check
        %p339 = pneg %p63
      $region54: #{_lambda_.6} parent=47 // pred_check_branch
        %341 = sbr.rel (%p339) target = $region56
      $region55: #{_lambda_.6} parent=47 // pred_region
        %p342 = scmp.lt.s32.totalorder %s17, 1
        %s343 = scalar_select %p342, %s17, 1
        %s344 = smul.addr %s343, 8
        %s345 = scalar_lea.vmem %s1, %s344
      $region56: #{_lambda_.6} parent=47 // pred_fallthru
        _
      // Predicated region
      $region57: #{_lambda_.6} parent=47 // pred_check
        %p346 = pneg %p89
      $region58: #{_lambda_.6} parent=47 // pred_check_branch
        %348 = sbr.rel (%p346) target = $region60
      $region59: #{_lambda_.6} parent=47 // pred_region
        %p349 = scmp.lt.s32.totalorder %s17, 1
        %s350 = scalar_select %p349, %s17, 1
        %s351 = smul.addr %s350, 8
        %s352 = scalar_lea.vmem %s2, %s351
      $region60: #{_lambda_.6} parent=47 // pred_fallthru
        _
    $region48: #{_lambda_.6} parent=5 // pred_fallthru
      _
    %p353 = scmp.le.s32.totalorder 1, %s17
    %p354 = scmp.lt.s32.totalorder %s17, 3
    %p355 = pnand %p353, %p354
    %p356 = pneg %p355
    // Predicated region
    $region61: #{_lambda_.6} parent=5 // pred_check
      _
    $region62: #{_lambda_.6} parent=5 // pred_check_branch
      %358 = sbr.rel (%p355) target = $region64
    $region63: #{_lambda_.6} parent=5 // pred_region
      %s359 = ssub.s32 %s17, 1
      %p360 = scmp.lt.s32.totalorder %s22, 1
      %s361 = scalar_select %p360, %s22, 1
      %s362 = smul.addr %s361, 8
      %s363 = scalar_lea.vmem %s0, %s362
      %p364 = pneg %p43
      %p365 = pneg %p40
      %p366 = scmp.lt.s32.totalorder %s22, 1
      %s367 = scalar_select %p366, %s22, 1
      %s368 = smul.addr %s367, 8
      %s369 = scalar_lea.vmem %s1, %s368
      %p370 = pneg %p69
      %p371 = pneg %p66
      %p372 = scmp.lt.s32.totalorder %s22, 1
      %s373 = scalar_select %p372, %s22, 1
      %s374 = smul.addr %s373, 8
      %s375 = scalar_lea.vmem %s2, %s374
      %p376 = pneg %p95
      %p377 = pneg %p92
      %p378 = pneg %p116
      %p379 = pneg %p113
      %p380 = pneg %p137
      %p381 = pneg %p134
      %p382 = pneg %p158
      %p383 = pneg %p155
      %p384 = pneg %p179
      %p385 = pneg %p176
      %p386 = pneg %p200
      %p387 = pneg %p197
      %p388 = pneg %p221
      %p389 = pneg %p218
      %p390 = pneg %p242
      %p391 = pneg %p239
      %p392 = pneg %p263
      %p393 = pneg %p260
      %p394 = pneg %p289
      %p395 = pneg %p286
      %p396 = scmp.lt.s32.totalorder %s22, 1
      %s397 = scalar_select %p396, %s22, 1
      %s398 = smul.addr %s397, 8
      %s399 = scalar_lea.vmem %s11, %s398
      %p400 = scmp.lt.s32.totalorder %s22, 1
      %s401 = scalar_select %p400, %s22, 1
      %s402 = smul.addr %s401, 8
      %s403 = scalar_lea.vmem %s0, %s402
      %p404 = scmp.lt.s32.totalorder %s22, 1
      %s405 = scalar_select %p404, %s22, 1
      %s406 = smul.addr %s405, 8
      %s407 = scalar_lea.vmem %s1, %s406
      %p408 = scmp.lt.s32.totalorder %s22, 1
      %s409 = scalar_select %p408, %s22, 1
      %s410 = smul.addr %s409, 8
      %s411 = scalar_lea.vmem %s2, %s410
      %p412 = scmp.lt.s32.totalorder %s22, 1
      %s413 = scalar_select %p412, %s22, 1
      %s414 = smul.addr %s413, 8
      %s415 = scalar_lea.vmem %s11, %s414
      %v417 = vld [vmem:[%s403] sm:$0xff]
      %v418 = vld [vmem:[%s407] sm:$0xff]
      %v419 = vld [vmem:[%s411] sm:$0xff]
      %v420 = vpack.c.bf16 %v417, %v417
      %v421 = vld [vmem:[%s3] sm:$0xf]
      %v422 = vld [vmem:[%s3 + $0x4] sm:$0xf]
      %v423 = vld [vmem:[%s3 + $0x8] sm:$0xf]
      %v424 = vld [vmem:[%s3 + $0xc] sm:$0xf]
      %v425 = vld [vmem:[%s4] sm:$0x1]
      %v427 = vlaneseq
      %v428 = vshrl.u32 %v427, 7
      %v429 = vsub.s32 0, %v428
      %v430 = vrot.slane %v425, %v429
      %v436 = vunpack.c.l.b16 %v421
      %v437 = vunpack.c.l.b16 %v422
      %v438 = vunpack.c.l.b16 %v423
      %v439 = vunpack.c.l.b16 %v424
      %v440 = vpack.c.b16 %v437, %v436
      %v441 = vpack.c.b16 %v439, %v438
      %vm444 = vcmask 261120
      %v446 = vsel %vm444, %v420, 0
      %448 = vmatprep.subr.bf16.mxu0 0
      %449 = vmatpush1.bf16.msra.mxu0 %v440
      %450 = vmatprep.subr.bf16.mxu0 0
      %451 = vmatpush1.bf16.msra.mxu0 %v441
      %452 = vmatprep.subr.bf16.mxu0 0
      %453 = vmatpush1.bf16.msra.mxu0 0
      %454 = vmatprep.subr.bf16.mxu0 0
      %455 = vmatpush1.bf16.msra.mxu0 0
      %456 = vmatprep.subr.bf16.mxu0 0
      %457 = vmatpush1.bf16.msra.mxu0 0
      %458 = vmatprep.subr.bf16.mxu0 0
      %459 = vmatpush1.bf16.msra.mxu0 0
      %460 = vmatprep.subr.bf16.mxu0 0
      %461 = vmatpush1.bf16.msra.mxu0 0
      %462 = vmatprep.subr.bf16.mxu0 0
      %463 = vmatpush1.bf16.msra.mxu0 0
      %464 = vmatprep.subr.bf16.mxu0 0
      %465 = vmatpush1.bf16.msra.mxu0 0
      %466 = vmatprep.subr.bf16.mxu0 0
      %467 = vmatpush1.bf16.msra.mxu0 0
      %468 = vmatprep.subr.bf16.mxu0 0
      %469 = vmatpush1.bf16.msra.mxu0 0
      %470 = vmatprep.subr.bf16.mxu0 0
      %471 = vmatpush1.bf16.msra.mxu0 0
      %472 = vmatprep.subr.bf16.mxu0 0
      %473 = vmatpush1.bf16.msra.mxu0 0
      %474 = vmatprep.subr.bf16.mxu0 0
      %475 = vmatpush1.bf16.msra.mxu0 0
      %476 = vmatprep.subr.bf16.mxu0 0
      %477 = vmatpush1.bf16.msra.mxu0 0
      %478 = vmatprep.subr.bf16.mxu0 0
      %479 = vmatpush1.bf16.msra.mxu0 0
      %480 = vmatprep.mubr.bf16.mxu0 0
      %481 = vmatmul.mubr.bf16.gmra.mrb[0].mxu0 %v446
      %v482 = vpop.f32.mrb[0].mxu0
      %v483 = vadd.f32 %v430, %v482
      %v484 = vpop.f32.mrb[0].mxu0
      %v485 = vpop.f32.mrb[0].mxu0
      %v486 = vpop.f32.mrb[0].mxu0
      %487 = vdwg.mxu0
      %v488 = vpack.c.bf16 %v418, %v418
      %v489 = vld [vmem:[%s5] sm:$0xf]
      %v490 = vld [vmem:[%s5 + $0x4] sm:$0xf]
      %v491 = vld [vmem:[%s5 + $0x8] sm:$0xf]
      %v492 = vld [vmem:[%s5 + $0xc] sm:$0xf]
      %v493 = vld [vmem:[%s6] sm:$0x1]
      %v495 = vlaneseq
      %v496 = vshrl.u32 %v495, 7
      %v497 = vsub.s32 0, %v496
      %v498 = vrot.slane %v493, %v497
      %v504 = vunpack.c.l.b16 %v489
      %v505 = vunpack.c.l.b16 %v490
      %v506 = vunpack.c.l.b16 %v491
      %v507 = vunpack.c.l.b16 %v492
      %v508 = vpack.c.b16 %v505, %v504
      %v509 = vpack.c.b16 %v507, %v506
      %v513 = vsel %vm444, %v488, 0
      %515 = vmatprep.subr.bf16.mxu0 0
      %516 = vmatpush1.bf16.msra.mxu0 %v508
      %517 = vmatprep.subr.bf16.mxu0 0
      %518 = vmatpush1.bf16.msra.mxu0 %v509
      %519 = vmatprep.subr.bf16.mxu0 0
      %520 = vmatpush1.bf16.msra.mxu0 0
      %521 = vmatprep.subr.bf16.mxu0 0
      %522 = vmatpush1.bf16.msra.mxu0 0
      %523 = vmatprep.subr.bf16.mxu0 0
      %524 = vmatpush1.bf16.msra.mxu0 0
      %525 = vmatprep.subr.bf16.mxu0 0
      %526 = vmatpush1.bf16.msra.mxu0 0
      %527 = vmatprep.subr.bf16.mxu0 0
      %528 = vmatpush1.bf16.msra.mxu0 0
      %529 = vmatprep.subr.bf16.mxu0 0
      %530 = vmatpush1.bf16.msra.mxu0 0
      %531 = vmatprep.subr.bf16.mxu0 0
      %532 = vmatpush1.bf16.msra.mxu0 0
      %533 = vmatprep.subr.bf16.mxu0 0
      %534 = vmatpush1.bf16.msra.mxu0 0
      %535 = vmatprep.subr.bf16.mxu0 0
      %536 = vmatpush1.bf16.msra.mxu0 0
      %537 = vmatprep.subr.bf16.mxu0 0
      %538 = vmatpush1.bf16.msra.mxu0 0
      %539 = vmatprep.subr.bf16.mxu0 0
      %540 = vmatpush1.bf16.msra.mxu0 0
      %541 = vmatprep.subr.bf16.mxu0 0
      %542 = vmatpush1.bf16.msra.mxu0 0
      %543 = vmatprep.subr.bf16.mxu0 0
      %544 = vmatpush1.bf16.msra.mxu0 0
      %545 = vmatprep.subr.bf16.mxu0 0
      %546 = vmatpush1.bf16.msra.mxu0 0
      %547 = vmatprep.mubr.bf16.mxu0 0
      %548 = vmatmul.mubr.bf16.gmra.mrb[0].mxu0 %v513
      %v549 = vpop.f32.mrb[0].mxu0
      %v550 = vadd.f32 %v498, %v549
      %v551 = vpop.f32.mrb[0].mxu0
      %v552 = vpop.f32.mrb[0].mxu0
      %v553 = vpop.f32.mrb[0].mxu0
      %554 = vdwg.mxu0
      %v555 = vpack.c.bf16 %v483, %v483
      %v556 = vpack.c.bf16 %v550, %v550
      %v557 = vld [vmem:[%s7] sm:$0xff]
      %v558 = vld [vmem:[%s7 + $0x8] sm:$0xff]
      %v559 = vld [vmem:[%s7 + $0x10] sm:$0xff]
      %v560 = vld [vmem:[%s7 + $0x18] sm:$0xff]
      %vm561 = vcmask 64512
      %v563 = vsel %vm561, %v555, 0
      %v566 = vsel %vm561, %v556, 0
      %568 = vmatprep.subr.bf16.mxu0 0
      %569 = vmatpush1.bf16.xpose.msra.mxu0 %v566
      %570 = vmatprep.subr.bf16.mxu0 0
      %571 = vmatpush1.bf16.xpose.msra.mxu0 0
      %572 = vmatprep.subr.bf16.mxu0 0
      %573 = vmatpush1.bf16.xpose.msra.mxu0 0
      %574 = vmatprep.subr.bf16.mxu0 0
      %575 = vmatpush1.bf16.xpose.msra.mxu0 0
      %576 = vmatprep.subr.bf16.mxu0 0
      %577 = vmatpush1.bf16.xpose.msra.mxu0 0
      %578 = vmatprep.subr.bf16.mxu0 0
      %579 = vmatpush1.bf16.xpose.msra.mxu0 0
      %580 = vmatprep.subr.bf16.mxu0 0
      %581 = vmatpush1.bf16.xpose.msra.mxu0 0
      %582 = vmatprep.subr.bf16.mxu0 0
      %583 = vmatpush1.bf16.xpose.msra.mxu0 0
      %584 = vmatprep.subr.bf16.mxu0 0
      %585 = vmatpush1.bf16.xpose.msra.mxu0 0
      %586 = vmatprep.subr.bf16.mxu0 0
      %587 = vmatpush1.bf16.xpose.msra.mxu0 0
      %588 = vmatprep.subr.bf16.mxu0 0
      %589 = vmatpush1.bf16.xpose.msra.mxu0 0
      %590 = vmatprep.subr.bf16.mxu0 0
      %591 = vmatpush1.bf16.xpose.msra.mxu0 0
      %592 = vmatprep.subr.bf16.mxu0 0
      %593 = vmatpush1.bf16.xpose.msra.mxu0 0
      %594 = vmatprep.subr.bf16.mxu0 0
      %595 = vmatpush1.bf16.xpose.msra.mxu0 0
      %596 = vmatprep.subr.bf16.mxu0 0
      %597 = vmatpush1.bf16.xpose.msra.mxu0 0
      %598 = vmatprep.subr.bf16.mxu0 0
      %599 = vmatpush1.bf16.xpose.msra.mxu0 0
      %600 = vmatprep.mubr.bf16.mxu0 0
      %601 = vmatmul.mubr.bf16.gmra.mrb[0].mxu0 %v563
      %v602 = vpop.f32.mrb[0].mxu0
      %v603 = vadd.f32 0.0, %v602
      %v604 = vpop.f32.mrb[0].mxu0
      %v605 = vpop.f32.mrb[0].mxu0
      %v606 = vpop.f32.mrb[0].mxu0
      %607 = vdwg.mxu0
      %v608 = vmul.f32 %v603, 0.35355338
      %vm609 = vcmp.ne.s32.totalorder %v419, 0
      %v610 = vsel %vm609, %v608, -10000.0
      %v611 = vsel %vm561, %v610, -inf
      %612 = vmax.xlane.f32.xlu0 %v611
      %v613 = vpop.xlane.xlu0 %612
      %v614 = vsub.f32 %v610, %v613
      %v615 = vmul.f32 %v614, 1.442695
      %v616 = vpow.pop %v615
      %v617 = vsel %vm561, %v616, 0.0
      %618 = vadd.xlane.f32.xlu0 %v617
      %v619 = vpop.xlane.xlu0 %618
      %v620 = vrcp.pop %v619
      %v621 = vmul.f32 %v616, %v620
      %v622 = vpack.c.bf16 %v621, %v621
      %624 = vrot.lane.b32.xlu0 %v556, 96
      %v625 = vpop.permute.xlu0 %624
      %v627 = vsel %vm561, %v622, 0
      %vm629 = vcmask 1043456
      %v631 = vsel %vm629, %v625, 0
      %633 = vmatprep.subr.bf16.mxu0 0
      %634 = vmatpush1.bf16.msra.mxu0 %v631
      %635 = vmatprep.subr.bf16.mxu0 0
      %636 = vmatpush1.bf16.msra.mxu0 0
      %637 = vmatprep.subr.bf16.mxu0 0
      %638 = vmatpush1.bf16.msra.mxu0 0
      %639 = vmatprep.subr.bf16.mxu0 0
      %640 = vmatpush1.bf16.msra.mxu0 0
      %641 = vmatprep.subr.bf16.mxu0 0
      %642 = vmatpush1.bf16.msra.mxu0 0
      %643 = vmatprep.subr.bf16.mxu0 0
      %644 = vmatpush1.bf16.msra.mxu0 0
      %645 = vmatprep.subr.bf16.mxu0 0
      %646 = vmatpush1.bf16.msra.mxu0 0
      %647 = vmatprep.subr.bf16.mxu0 0
      %648 = vmatpush1.bf16.msra.mxu0 0
      %649 = vmatprep.subr.bf16.mxu0 0
      %650 = vmatpush1.bf16.msra.mxu0 0
      %651 = vmatprep.subr.bf16.mxu0 0
      %652 = vmatpush1.bf16.msra.mxu0 0
      %653 = vmatprep.subr.bf16.mxu0 0
      %654 = vmatpush1.bf16.msra.mxu0 0
      %655 = vmatprep.subr.bf16.mxu0 0
      %656 = vmatpush1.bf16.msra.mxu0 0
      %657 = vmatprep.subr.bf16.mxu0 0
      %658 = vmatpush1.bf16.msra.mxu0 0
      %659 = vmatprep.subr.bf16.mxu0 0
      %660 = vmatpush1.bf16.msra.mxu0 0
      %661 = vmatprep.subr.bf16.mxu0 0
      %662 = vmatpush1.bf16.msra.mxu0 0
      %663 = vmatprep.subr.bf16.mxu0 0
      %664 = vmatpush1.bf16.msra.mxu0 0
      %665 = vmatprep.mubr.bf16.mxu0 0
      %666 = vmatmul.mubr.bf16.gmra.mrb[0].mxu0 %v627
      %v667 = vpop.f32.mrb[0].mxu0
      %v668 = vadd.f32 0.0, %v667
      %v669 = vpop.f32.mrb[0].mxu0
      %v670 = vpop.f32.mrb[0].mxu0
      %v671 = vpop.f32.mrb[0].mxu0
      %672 = vdwg.mxu0
      %v673 = vpack.c.bf16 %v668, %v668
      %v674 = vpack.c.bf16 %v557, %v557
      %676 = vrot.lane.b32.xlu0 %v555, 120
      %v677 = vpop.permute.xlu0 %676
      %678 = vrot.lane.b32.xlu0 %v556, 120
      %v679 = vpop.permute.xlu0 %678
      %v681 = vsel %vm561, %v677, 0
      %v684 = vsel %vm561, %v679, 0
      %686 = vmatprep.subr.bf16.mxu0 0
      %687 = vmatpush1.bf16.xpose.msra.mxu0 %v684
      %688 = vmatprep.subr.bf16.mxu0 0
      %689 = vmatpush1.bf16.xpose.msra.mxu0 0
      %690 = vmatprep.subr.bf16.mxu0 0
      %691 = vmatpush1.bf16.xpose.msra.mxu0 0
      %692 = vmatprep.subr.bf16.mxu0 0
      %693 = vmatpush1.bf16.xpose.msra.mxu0 0
      %694 = vmatprep.subr.bf16.mxu0 0
      %695 = vmatpush1.bf16.xpose.msra.mxu0 0
      %696 = vmatprep.subr.bf16.mxu0 0
      %697 = vmatpush1.bf16.xpose.msra.mxu0 0
      %698 = vmatprep.subr.bf16.mxu0 0
      %699 = vmatpush1.bf16.xpose.msra.mxu0 0
      %700 = vmatprep.subr.bf16.mxu0 0
      %701 = vmatpush1.bf16.xpose.msra.mxu0 0
      %702 = vmatprep.subr.bf16.mxu0 0
      %703 = vmatpush1.bf16.xpose.msra.mxu0 0
      %704 = vmatprep.subr.bf16.mxu0 0
      %705 = vmatpush1.bf16.xpose.msra.mxu0 0
      %706 = vmatprep.subr.bf16.mxu0 0
      %707 = vmatpush1.bf16.xpose.msra.mxu0 0
      %708 = vmatprep.subr.bf16.mxu0 0
      %709 = vmatpush1.bf16.xpose.msra.mxu0 0
      %710 = vmatprep.subr.bf16.mxu0 0
      %711 = vmatpush1.bf16.xpose.msra.mxu0 0
      %712 = vmatprep.subr.bf16.mxu0 0
      %713 = vmatpush1.bf16.xpose.msra.mxu0 0
      %714 = vmatprep.subr.bf16.mxu0 0
      %715 = vmatpush1.bf16.xpose.msra.mxu0 0
      %716 = vmatprep.subr.bf16.mxu0 0
      %717 = vmatpush1.bf16.xpose.msra.mxu0 0
      %718 = vmatprep.mubr.bf16.mxu0 0
      %719 = vmatmul.mubr.bf16.gmra.mrb[0].mxu0 %v681
      %v720 = vpop.f32.mrb[0].mxu0
      %v721 = vadd.f32 0.0, %v720
      %v722 = vpop.f32.mrb[0].mxu0
      %v723 = vpop.f32.mrb[0].mxu0
      %v724 = vpop.f32.mrb[0].mxu0
      %725 = vdwg.mxu0
      %v726 = vmul.f32 %v721, 0.35355338
      %v727 = vsel %vm609, %v726, -10000.0
      %v728 = vsel %vm561, %v727, -inf
      %729 = vmax.xlane.f32.xlu0 %v728
      %v730 = vpop.xlane.xlu0 %729
      %v731 = vsub.f32 %v727, %v730
      %v732 = vmul.f32 %v731, 1.442695
      %v733 = vpow.pop %v732
      %v734 = vsel %vm561, %v733, 0.0
      %735 = vadd.xlane.f32.xlu0 %v734
      %v736 = vpop.xlane.xlu0 %735
      %v737 = vrcp.pop %v736
      %v738 = vmul.f32 %v733, %v737
      %v739 = vpack.c.bf16 %v738, %v738
      %740 = vrot.lane.b32.xlu0 %v556, 88
      %v741 = vpop.permute.xlu0 %740
      %v743 = vsel %vm561, %v739, 0
      %v746 = vsel %vm629, %v741, 0
      %748 = vmatprep.subr.bf16.mxu0 0
      %749 = vmatpush1.bf16.msra.mxu0 %v746
      %750 = vmatprep.subr.bf16.mxu0 0
      %751 = vmatpush1.bf16.msra.mxu0 0
      %752 = vmatprep.subr.bf16.mxu0 0
      %753 = vmatpush1.bf16.msra.mxu0 0
      %754 = vmatprep.subr.bf16.mxu0 0
      %755 = vmatpush1.bf16.msra.mxu0 0
      %756 = vmatprep.subr.bf16.mxu0 0
      %757 = vmatpush1.bf16.msra.mxu0 0
      %758 = vmatprep.subr.bf16.mxu0 0
      %759 = vmatpush1.bf16.msra.mxu0 0
      %760 = vmatprep.subr.bf16.mxu0 0
      %761 = vmatpush1.bf16.msra.mxu0 0
      %762 = vmatprep.subr.bf16.mxu0 0
      %763 = vmatpush1.bf16.msra.mxu0 0
      %764 = vmatprep.subr.bf16.mxu0 0
      %765 = vmatpush1.bf16.msra.mxu0 0
      %766 = vmatprep.subr.bf16.mxu0 0
      %767 = vmatpush1.bf16.msra.mxu0 0
      %768 = vmatprep.subr.bf16.mxu0 0
      %769 = vmatpush1.bf16.msra.mxu0 0
      %770 = vmatprep.subr.bf16.mxu0 0
      %771 = vmatpush1.bf16.msra.mxu0 0
      %772 = vmatprep.subr.bf16.mxu0 0
      %773 = vmatpush1.bf16.msra.mxu0 0
      %774 = vmatprep.subr.bf16.mxu0 0
      %775 = vmatpush1.bf16.msra.mxu0 0
      %776 = vmatprep.subr.bf16.mxu0 0
      %777 = vmatpush1.bf16.msra.mxu0 0
      %778 = vmatprep.subr.bf16.mxu0 0
      %779 = vmatpush1.bf16.msra.mxu0 0
      %780 = vmatprep.mubr.bf16.mxu0 0
      %781 = vmatmul.mubr.bf16.gmra.mrb[0].mxu0 %v743
      %v782 = vpop.f32.mrb[0].mxu0
      %v783 = vadd.f32 0.0, %v782
      %v784 = vpop.f32.mrb[0].mxu0
      %v785 = vpop.f32.mrb[0].mxu0
      %v786 = vpop.f32.mrb[0].mxu0
      %787 = vdwg.mxu0
      %v788 = vpack.c.bf16 %v783, %v783
      %v789 = vpack.c.bf16 %v558, %v558
      %v791 = vsel %vm561, %v788, 0
      %v794 = vsel %vm629, %v789, 0
      %796 = vmatprep.subr.bf16.mxu0 0
      %797 = vmatpush1.bf16.msra.mxu0 %v794
      %798 = vmatprep.subr.bf16.mxu0 0
      %799 = vmatpush1.bf16.msra.mxu0 0
      %800 = vmatprep.subr.bf16.mxu0 0
      %801 = vmatpush1.bf16.msra.mxu0 0
      %802 = vmatprep.subr.bf16.mxu0 0
      %803 = vmatpush1.bf16.msra.mxu0 0
      %804 = vmatprep.subr.bf16.mxu0 0
      %805 = vmatpush1.bf16.msra.mxu0 0
      %806 = vmatprep.subr.bf16.mxu0 0
      %807 = vmatpush1.bf16.msra.mxu0 0
      %808 = vmatprep.subr.bf16.mxu0 0
      %809 = vmatpush1.bf16.msra.mxu0 0
      %810 = vmatprep.subr.bf16.mxu0 0
      %811 = vmatpush1.bf16.msra.mxu0 0
      %812 = vmatprep.subr.bf16.mxu0 0
      %813 = vmatpush1.bf16.msra.mxu0 0
      %814 = vmatprep.subr.bf16.mxu0 0
      %815 = vmatpush1.bf16.msra.mxu0 0
      %816 = vmatprep.subr.bf16.mxu0 0
      %817 = vmatpush1.bf16.msra.mxu0 0
      %818 = vmatprep.subr.bf16.mxu0 0
      %819 = vmatpush1.bf16.msra.mxu0 0
      %820 = vmatprep.subr.bf16.mxu0 0
      %821 = vmatpush1.bf16.msra.mxu0 0
      %822 = vmatprep.subr.bf16.mxu0 0
      %823 = vmatpush1.bf16.msra.mxu0 0
      %824 = vmatprep.subr.bf16.mxu0 0
      %825 = vmatpush1.bf16.msra.mxu0 0
      %826 = vmatprep.subr.bf16.mxu0 0
      %827 = vmatpush1.bf16.msra.mxu0 0
      %828 = vmatprep.mubr.bf16.mxu0 0
      %829 = vmatmul.mubr.bf16.gmra.mrb[0].mxu0 %v791
      %v830 = vpop.f32.mrb[0].mxu0
      %v831 = vadd.f32 0.0, %v830
      %v832 = vpop.f32.mrb[0].mxu0
      %v833 = vpop.f32.mrb[0].mxu0
      %v834 = vpop.f32.mrb[0].mxu0
      %835 = vdwg.mxu0
      %v837 = vsel %vm561, %v673, 0
      %v840 = vsel %vm629, %v674, 0
      %842 = vmatprep.subr.bf16.mxu0 0
      %843 = vmatpush1.bf16.msra.mxu0 %v840
      %844 = vmatprep.subr.bf16.mxu0 0
      %845 = vmatpush1.bf16.msra.mxu0 0
      %846 = vmatprep.subr.bf16.mxu0 0
      %847 = vmatpush1.bf16.msra.mxu0 0
      %848 = vmatprep.subr.bf16.mxu0 0
      %849 = vmatpush1.bf16.msra.mxu0 0
      %850 = vmatprep.subr.bf16.mxu0 0
      %851 = vmatpush1.bf16.msra.mxu0 0
      %852 = vmatprep.subr.bf16.mxu0 0
      %853 = vmatpush1.bf16.msra.mxu0 0
      %854 = vmatprep.subr.bf16.mxu0 0
      %855 = vmatpush1.bf16.msra.mxu0 0
      %856 = vmatprep.subr.bf16.mxu0 0
      %857 = vmatpush1.bf16.msra.mxu0 0
      %858 = vmatprep.subr.bf16.mxu0 0
      %859 = vmatpush1.bf16.msra.mxu0 0
      %860 = vmatprep.subr.bf16.mxu0 0
      %861 = vmatpush1.bf16.msra.mxu0 0
      %862 = vmatprep.subr.bf16.mxu0 0
      %863 = vmatpush1.bf16.msra.mxu0 0
      %864 = vmatprep.subr.bf16.mxu0 0
      %865 = vmatpush1.bf16.msra.mxu0 0
      %866 = vmatprep.subr.bf16.mxu0 0
      %867 = vmatpush1.bf16.msra.mxu0 0
      %868 = vmatprep.subr.bf16.mxu0 0
      %869 = vmatpush1.bf16.msra.mxu0 0
      %870 = vmatprep.subr.bf16.mxu0 0
      %871 = vmatpush1.bf16.msra.mxu0 0
      %872 = vmatprep.subr.bf16.mxu0 0
      %873 = vmatpush1.bf16.msra.mxu0 0
      %874 = vmatprep.mubr.bf16.mxu0 0
      %875 = vmatmul.mubr.bf16.gmra.mrb[0].mxu0 %v837
      %v876 = vpop.f32.mrb[0].mxu0
      %v877 = vadd.f32 %v831, %v876
      %v878 = vpop.f32.mrb[0].mxu0
      %v879 = vpop.f32.mrb[0].mxu0
      %v880 = vpop.f32.mrb[0].mxu0
      %881 = vdwg.mxu0
      %882 = vrot.lane.b32.xlu0 %v555, 112
      %v883 = vpop.permute.xlu0 %882
      %884 = vrot.lane.b32.xlu0 %v556, 112
      %v885 = vpop.permute.xlu0 %884
      %v887 = vsel %vm561, %v883, 0
      %v890 = vsel %vm561, %v885, 0
      %892 = vmatprep.subr.bf16.mxu0 0
      %893 = vmatpush1.bf16.xpose.msra.mxu0 %v890
      %894 = vmatprep.subr.bf16.mxu0 0
      %895 = vmatpush1.bf16.xpose.msra.mxu0 0
      %896 = vmatprep.subr.bf16.mxu0 0
      %897 = vmatpush1.bf16.xpose.msra.mxu0 0
      %898 = vmatprep.subr.bf16.mxu0 0
      %899 = vmatpush1.bf16.xpose.msra.mxu0 0
      %900 = vmatprep.subr.bf16.mxu0 0
      %901 = vmatpush1.bf16.xpose.msra.mxu0 0
      %902 = vmatprep.subr.bf16.mxu0 0
      %903 = vmatpush1.bf16.xpose.msra.mxu0 0
      %904 = vmatprep.subr.bf16.mxu0 0
      %905 = vmatpush1.bf16.xpose.msra.mxu0 0
      %906 = vmatprep.subr.bf16.mxu0 0
      %907 = vmatpush1.bf16.xpose.msra.mxu0 0
      %908 = vmatprep.subr.bf16.mxu0 0
      %909 = vmatpush1.bf16.xpose.msra.mxu0 0
      %910 = vmatprep.subr.bf16.mxu0 0
      %911 = vmatpush1.bf16.xpose.msra.mxu0 0
      %912 = vmatprep.subr.bf16.mxu0 0
      %913 = vmatpush1.bf16.xpose.msra.mxu0 0
      %914 = vmatprep.subr.bf16.mxu0 0
      %915 = vmatpush1.bf16.xpose.msra.mxu0 0
      %916 = vmatprep.subr.bf16.mxu0 0
      %917 = vmatpush1.bf16.xpose.msra.mxu0 0
      %918 = vmatprep.subr.bf16.mxu0 0
      %919 = vmatpush1.bf16.xpose.msra.mxu0 0
      %920 = vmatprep.subr.bf16.mxu0 0
      %921 = vmatpush1.bf16.xpose.msra.mxu0 0
      %922 = vmatprep.subr.bf16.mxu0 0
      %923 = vmatpush1.bf16.xpose.msra.mxu0 0
      %924 = vmatprep.mubr.bf16.mxu0 0
      %925 = vmatmul.mubr.bf16.gmra.mrb[0].mxu0 %v887
      %v926 = vpop.f32.mrb[0].mxu0
      %v927 = vadd.f32 0.0, %v926
      %v928 = vpop.f32.mrb[0].mxu0
      %v929 = vpop.f32.mrb[0].mxu0
      %v930 = vpop.f32.mrb[0].mxu0
      %931 = vdwg.mxu0
      %v932 = vmul.f32 %v927, 0.35355338
      %v933 = vsel %vm609, %v932, -10000.0
      %v934 = vsel %vm561, %v933, -inf
      %935 = vmax.xlane.f32.xlu0 %v934
      %v936 = vpop.xlane.xlu0 %935
      %v937 = vsub.f32 %v933, %v936
      %v938 = vmul.f32 %v937, 1.442695
      %v939 = vpow.pop %v938
      %v940 = vsel %vm561, %v939, 0.0
      %941 = vadd.xlane.f32.xlu0 %v940
      %v942 = vpop.xlane.xlu0 %941
      %v943 = vrcp.pop %v942
      %v944 = vmul.f32 %v939, %v943
      %v945 = vpack.c.bf16 %v944, %v944
      %946 = vrot.lane.b32.xlu0 %v556, 80
      %v947 = vpop.permute.xlu0 %946
      %v949 = vsel %vm561, %v945, 0
      %v952 = vsel %vm629, %v947, 0
      %954 = vmatprep.subr.bf16.mxu0 0
      %955 = vmatpush1.bf16.msra.mxu0 %v952
      %956 = vmatprep.subr.bf16.mxu0 0
      %957 = vmatpush1.bf16.msra.mxu0 0
      %958 = vmatprep.subr.bf16.mxu0 0
      %959 = vmatpush1.bf16.msra.mxu0 0
      %960 = vmatprep.subr.bf16.mxu0 0
      %961 = vmatpush1.bf16.msra.mxu0 0
      %962 = vmatprep.subr.bf16.mxu0 0
      %963 = vmatpush1.bf16.msra.mxu0 0
      %964 = vmatprep.subr.bf16.mxu0 0
      %965 = vmatpush1.bf16.msra.mxu0 0
      %966 = vmatprep.subr.bf16.mxu0 0
      %967 = vmatpush1.bf16.msra.mxu0 0
      %968 = vmatprep.subr.bf16.mxu0 0
      %969 = vmatpush1.bf16.msra.mxu0 0
      %970 = vmatprep.subr.bf16.mxu0 0
      %971 = vmatpush1.bf16.msra.mxu0 0
      %972 = vmatprep.subr.bf16.mxu0 0
      %973 = vmatpush1.bf16.msra.mxu0 0
      %974 = vmatprep.subr.bf16.mxu0 0
      %975 = vmatpush1.bf16.msra.mxu0 0
      %976 = vmatprep.subr.bf16.mxu0 0
      %977 = vmatpush1.bf16.msra.mxu0 0
      %978 = vmatprep.subr.bf16.mxu0 0
      %979 = vmatpush1.bf16.msra.mxu0 0
      %980 = vmatprep.subr.bf16.mxu0 0
      %981 = vmatpush1.bf16.msra.mxu0 0
      %982 = vmatprep.subr.bf16.mxu0 0
      %983 = vmatpush1.bf16.msra.mxu0 0
      %984 = vmatprep.subr.bf16.mxu0 0
      %985 = vmatpush1.bf16.msra.mxu0 0
      %986 = vmatprep.mubr.bf16.mxu0 0
      %987 = vmatmul.mubr.bf16.gmra.mrb[0].mxu0 %v949
      %v988 = vpop.f32.mrb[0].mxu0
      %v989 = vadd.f32 0.0, %v988
      %v990 = vpop.f32.mrb[0].mxu0
      %v991 = vpop.f32.mrb[0].mxu0
      %v992 = vpop.f32.mrb[0].mxu0
      %993 = vdwg.mxu0
      %v994 = vpack.c.bf16 %v989, %v989
      %v995 = vpack.c.bf16 %v559, %v559
      %v997 = vsel %vm561, %v994, 0
      %v1000 = vsel %vm629, %v995, 0
      %1002 = vmatprep.subr.bf16.mxu0 0
      %1003 = vmatpush1.bf16.msra.mxu0 %v1000
      %1004 = vmatprep.subr.bf16.mxu0 0
      %1005 = vmatpush1.bf16.msra.mxu0 0
      %1006 = vmatprep.subr.bf16.mxu0 0
      %1007 = vmatpush1.bf16.msra.mxu0 0
      %1008 = vmatprep.subr.bf16.mxu0 0
      %1009 = vmatpush1.bf16.msra.mxu0 0
      %1010 = vmatprep.subr.bf16.mxu0 0
      %1011 = vmatpush1.bf16.msra.mxu0 0
      %1012 = vmatprep.subr.bf16.mxu0 0
      %1013 = vmatpush1.bf16.msra.mxu0 0
      %1014 = vmatprep.subr.bf16.mxu0 0
      %1015 = vmatpush1.bf16.msra.mxu0 0
      %1016 = vmatprep.subr.bf16.mxu0 0
      %1017 = vmatpush1.bf16.msra.mxu0 0
      %1018 = vmatprep.subr.bf16.mxu0 0
      %1019 = vmatpush1.bf16.msra.mxu0 0
      %1020 = vmatprep.subr.bf16.mxu0 0
      %1021 = vmatpush1.bf16.msra.mxu0 0
      %1022 = vmatprep.subr.bf16.mxu0 0
      %1023 = vmatpush1.bf16.msra.mxu0 0
      %1024 = vmatprep.subr.bf16.mxu0 0
      %1025 = vmatpush1.bf16.msra.mxu0 0
      %1026 = vmatprep.subr.bf16.mxu0 0
      %1027 = vmatpush1.bf16.msra.mxu0 0
      %1028 = vmatprep.subr.bf16.mxu0 0
      %1029 = vmatpush1.bf16.msra.mxu0 0
      %1030 = vmatprep.subr.bf16.mxu0 0
      %1031 = vmatpush1.bf16.msra.mxu0 0
      %1032 = vmatprep.subr.bf16.mxu0 0
      %1033 = vmatpush1.bf16.msra.mxu0 0
      %1034 = vmatprep.mubr.bf16.mxu0 0
      %1035 = vmatmul.mubr.bf16.gmra.mrb[0].mxu0 %v997
      %v1036 = vpop.f32.mrb[0].mxu0
      %v1037 = vadd.f32 0.0, %v1036
      %v1038 = vpop.f32.mrb[0].mxu0
      %v1039 = vpop.f32.mrb[0].mxu0
      %v1040 = vpop.f32.mrb[0].mxu0
      %1041 = vdwg.mxu0
      %v1042 = vadd.f32 %v877, %v1037
      %1043 = vrot.lane.b32.xlu0 %v555, 104
      %v1044 = vpop.permute.xlu0 %1043
      %1045 = vrot.lane.b32.xlu0 %v556, 104
      %v1046 = vpop.permute.xlu0 %1045
      %v1048 = vsel %vm561, %v1044, 0
      %v1051 = vsel %vm561, %v1046, 0
      %1053 = vmatprep.subr.bf16.mxu0 0
      %1054 = vmatpush1.bf16.xpose.msra.mxu0 %v1051
      %1055 = vmatprep.subr.bf16.mxu0 0
      %1056 = vmatpush1.bf16.xpose.msra.mxu0 0
      %1057 = vmatprep.subr.bf16.mxu0 0
      %1058 = vmatpush1.bf16.xpose.msra.mxu0 0
      %1059 = vmatprep.subr.bf16.mxu0 0
      %1060 = vmatpush1.bf16.xpose.msra.mxu0 0
      %1061 = vmatprep.subr.bf16.mxu0 0
      %1062 = vmatpush1.bf16.xpose.msra.mxu0 0
      %1063 = vmatprep.subr.bf16.mxu0 0
      %1064 = vmatpush1.bf16.xpose.msra.mxu0 0
      %1065 = vmatprep.subr.bf16.mxu0 0
      %1066 = vmatpush1.bf16.xpose.msra.mxu0 0
      %1067 = vmatprep.subr.bf16.mxu0 0
      %1068 = vmatpush1.bf16.xpose.msra.mxu0 0
      %1069 = vmatprep.subr.bf16.mxu0 0
      %1070 = vmatpush1.bf16.xpose.msra.mxu0 0
      %1071 = vmatprep.subr.bf16.mxu0 0
      %1072 = vmatpush1.bf16.xpose.msra.mxu0 0
      %1073 = vmatprep.subr.bf16.mxu0 0
      %1074 = vmatpush1.bf16.xpose.msra.mxu0 0
      %1075 = vmatprep.subr.bf16.mxu0 0
      %1076 = vmatpush1.bf16.xpose.msra.mxu0 0
      %1077 = vmatprep.subr.bf16.mxu0 0
      %1078 = vmatpush1.bf16.xpose.msra.mxu0 0
      %1079 = vmatprep.subr.bf16.mxu0 0
      %1080 = vmatpush1.bf16.xpose.msra.mxu0 0
      %1081 = vmatprep.subr.bf16.mxu0 0
      %1082 = vmatpush1.bf16.xpose.msra.mxu0 0
      %1083 = vmatprep.subr.bf16.mxu0 0
      %1084 = vmatpush1.bf16.xpose.msra.mxu0 0
      %1085 = vmatprep.mubr.bf16.mxu0 0
      %1086 = vmatmul.mubr.bf16.gmra.mrb[0].mxu0 %v1048
      %v1087 = vpop.f32.mrb[0].mxu0
      %v1088 = vadd.f32 0.0, %v1087
      %v1089 = vpop.f32.mrb[0].mxu0
      %v1090 = vpop.f32.mrb[0].mxu0
      %v1091 = vpop.f32.mrb[0].mxu0
      %1092 = vdwg.mxu0
      %v1093 = vmul.f32 %v1088, 0.35355338
      %v1094 = vsel %vm609, %v1093, -10000.0
      %v1095 = vsel %vm561, %v1094, -inf
      %1096 = vmax.xlane.f32.xlu0 %v1095
      %v1097 = vpop.xlane.xlu0 %1096
      %v1098 = vsub.f32 %v1094, %v1097
      %v1099 = vmul.f32 %v1098, 1.442695
      %v1100 = vpow.pop %v1099
      %v1101 = vsel %vm561, %v1100, 0.0
      %1102 = vadd.xlane.f32.xlu0 %v1101
      %v1103 = vpop.xlane.xlu0 %1102
      %v1104 = vrcp.pop %v1103
      %v1105 = vmul.f32 %v1100, %v1104
      %v1106 = vpack.c.bf16 %v1105, %v1105
      %1107 = vrot.lane.b32.xlu0 %v556, 72
      %v1108 = vpop.permute.xlu0 %1107
      %v1110 = vsel %vm561, %v1106, 0
      %v1113 = vsel %vm629, %v1108, 0
      %1115 = vmatprep.subr.bf16.mxu0 0
      %1116 = vmatpush1.bf16.msra.mxu0 %v1113
      %1117 = vmatprep.subr.bf16.mxu0 0
      %1118 = vmatpush1.bf16.msra.mxu0 0
      %1119 = vmatprep.subr.bf16.mxu0 0
      %1120 = vmatpush1.bf16.msra.mxu0 0
      %1121 = vmatprep.subr.bf16.mxu0 0
      %1122 = vmatpush1.bf16.msra.mxu0 0
      %1123 = vmatprep.subr.bf16.mxu0 0
      %1124 = vmatpush1.bf16.msra.mxu0 0
      %1125 = vmatprep.subr.bf16.mxu0 0
      %1126 = vmatpush1.bf16.msra.mxu0 0
      %1127 = vmatprep.subr.bf16.mxu0 0
      %1128 = vmatpush1.bf16.msra.mxu0 0
      %1129 = vmatprep.subr.bf16.mxu0 0
      %1130 = vmatpush1.bf16.msra.mxu0 0
      %1131 = vmatprep.subr.bf16.mxu0 0
      %1132 = vmatpush1.bf16.msra.mxu0 0
      %1133 = vmatprep.subr.bf16.mxu0 0
      %1134 = vmatpush1.bf16.msra.mxu0 0
      %1135 = vmatprep.subr.bf16.mxu0 0
      %1136 = vmatpush1.bf16.msra.mxu0 0
      %1137 = vmatprep.subr.bf16.mxu0 0
      %1138 = vmatpush1.bf16.msra.mxu0 0
      %1139 = vmatprep.subr.bf16.mxu0 0
      %1140 = vmatpush1.bf16.msra.mxu0 0
      %1141 = vmatprep.subr.bf16.mxu0 0
      %1142 = vmatpush1.bf16.msra.mxu0 0
      %1143 = vmatprep.subr.bf16.mxu0 0
      %1144 = vmatpush1.bf16.msra.mxu0 0
      %1145 = vmatprep.subr.bf16.mxu0 0
      %1146 = vmatpush1.bf16.msra.mxu0 0
      %1147 = vmatprep.mubr.bf16.mxu0 0
      %1148 = vmatmul.mubr.bf16.gmra.mrb[0].mxu0 %v1110
      %v1149 = vpop.f32.mrb[0].mxu0
      %v1150 = vadd.f32 0.0, %v1149
      %v1151 = vpop.f32.mrb[0].mxu0
      %v1152 = vpop.f32.mrb[0].mxu0
      %v1153 = vpop.f32.mrb[0].mxu0
      %1154 = vdwg.mxu0
      %v1155 = vpack.c.bf16 %v1150, %v1150
      %v1156 = vpack.c.bf16 %v560, %v560
      %v1158 = vsel %vm561, %v1155, 0
      %v1161 = vsel %vm629, %v1156, 0
      %1163 = vmatprep.subr.bf16.mxu0 0
      %1164 = vmatpush1.bf16.msra.mxu0 %v1161
      %1165 = vmatprep.subr.bf16.mxu0 0
      %1166 = vmatpush1.bf16.msra.mxu0 0
      %1167 = vmatprep.subr.bf16.mxu0 0
      %1168 = vmatpush1.bf16.msra.mxu0 0
      %1169 = vmatprep.subr.bf16.mxu0 0
      %1170 = vmatpush1.bf16.msra.mxu0 0
      %1171 = vmatprep.subr.bf16.mxu0 0
      %1172 = vmatpush1.bf16.msra.mxu0 0
      %1173 = vmatprep.subr.bf16.mxu0 0
      %1174 = vmatpush1.bf16.msra.mxu0 0
      %1175 = vmatprep.subr.bf16.mxu0 0
      %1176 = vmatpush1.bf16.msra.mxu0 0
      %1177 = vmatprep.subr.bf16.mxu0 0
      %1178 = vmatpush1.bf16.msra.mxu0 0
      %1179 = vmatprep.subr.bf16.mxu0 0
      %1180 = vmatpush1.bf16.msra.mxu0 0
      %1181 = vmatprep.subr.bf16.mxu0 0
      %1182 = vmatpush1.bf16.msra.mxu0 0
      %1183 = vmatprep.subr.bf16.mxu0 0
      %1184 = vmatpush1.bf16.msra.mxu0 0
      %1185 = vmatprep.subr.bf16.mxu0 0
      %1186 = vmatpush1.bf16.msra.mxu0 0
      %1187 = vmatprep.subr.bf16.mxu0 0
      %1188 = vmatpush1.bf16.msra.mxu0 0
      %1189 = vmatprep.subr.bf16.mxu0 0
      %1190 = vmatpush1.bf16.msra.mxu0 0
      %1191 = vmatprep.subr.bf16.mxu0 0
      %1192 = vmatpush1.bf16.msra.mxu0 0
      %1193 = vmatprep.subr.bf16.mxu0 0
      %1194 = vmatpush1.bf16.msra.mxu0 0
      %1195 = vmatprep.mubr.bf16.mxu0 0
      %1196 = vmatmul.mubr.bf16.gmra.mrb[0].mxu0 %v1158
      %v1197 = vpop.f32.mrb[0].mxu0
      %v1198 = vadd.f32 0.0, %v1197
      %v1199 = vpop.f32.mrb[0].mxu0
      %v1200 = vpop.f32.mrb[0].mxu0
      %v1201 = vpop.f32.mrb[0].mxu0
      %1202 = vdwg.mxu0
      %v1203 = vadd.f32 %v1042, %v1198
      %v1204 = vld [vmem:[%s8] sm:$0x1]
      %v1206 = vlaneseq
      %v1207 = vshrl.u32 %v1206, 7
      %v1208 = vsub.s32 0, %v1207
      %v1209 = vrot.slane %v1204, %v1208
      %v1211 = vadd.f32 %v1203, %v1209
      %v1212 = vadd.f32 %v417, %v1211
      %v1213 = vsel %vm444, %v1212, 0.0
      %1214 = vadd.xlane.f32.xlu0 %v1213
      %v1215 = vpop.xlane.xlu0 %1214
      %v1216 = vrcp.pop 32.0
      %v1217 = vmul.f32 %v1215, %v1216
      %v1218 = vsub.f32 %v1212, %v1217
      %v1219 = vmul.f32 %v1218, %v1218
      %v1220 = vsel %vm444, %v1219, 0.0
      %1221 = vadd.xlane.f32.xlu0 %v1220
      %v1222 = vpop.xlane.xlu0 %1221
      %v1223 = vmul.f32 %v1222, %v1216
      %v1224 = vadd.f32 %v1223, 1e-12
      %v1225 = vrsqrt.pop %v1224
      %v1226 = vmul.f32 %v1218, %v1225
      %v1227 = vld [vmem:[%s9] sm:$0x1]
      %v1229 = vlaneseq
      %v1230 = vshrl.u32 %v1229, 7
      %v1231 = vsub.s32 0, %v1230
      %v1232 = vrot.slane %v1227, %v1231
      %v1234 = vmul.f32 %v1226, %v1232
      %v1235 = vld [vmem:[%s10] sm:$0x1]
      %v1237 = vlaneseq
      %v1238 = vshrl.u32 %v1237, 7
      %v1239 = vsub.s32 0, %v1238
      %v1240 = vrot.slane %v1235, %v1239
      %v1242 = vadd.f32 %v1234, %v1240
      %1243 = vst.msk [vmem:[%s415] sm:$0xff] %vm444, %v1242
      %p1244 = scmp.lt.s32.totalorder %s22, 1
      %s1245 = scalar_select %p1244, %s22, 1
      %s1246 = smul.addr %s1245, 8
      %s1247 = scalar_lea.vmem %s11, %s1246
      // Predicated region
      $region65: #{_lambda_.6} parent=63 // pred_check
        %p1248 = pneg %p286
      $region66: #{_lambda_.6} parent=63 // pred_check_branch
        %1250 = sbr.rel (%p1248) target = $region68
      $region67: #{_lambda_.6} parent=63 // pred_region
        _
      $region68: #{_lambda_.6} parent=63 // pred_fallthru
        _
    $region64: #{_lambda_.6} parent=5 // pred_fallthru
      _
    %p1251 = scmp.le.s32.totalorder 2, %s17
    // Predicated region
    $region69: #{_lambda_.6} parent=5 // pred_check
      %p1252 = pneg %p1251
    $region70: #{_lambda_.6} parent=5 // pred_check_branch
      %1254 = sbr.rel (%p1252) target = $region72
    $region71: #{_lambda_.6} parent=5 // pred_region
      %s1255 = ssub.s32 %s17, 2
      // Predicated region
      $region73: #{_lambda_.6} parent=71 // pred_check
        %p1256 = pneg %p292
      $region74: #{_lambda_.6} parent=71 // pred_check_branch
        %1258 = sbr.rel (%p1256) target = $region76
      $region75: #{_lambda_.6} parent=71 // pred_region
        %p1259 = scmp.lt.s32.totalorder %s23, 1
        %s1260 = scalar_select %p1259, %s23, 1
        %s1261 = smul.addr %s1260, 8
        %s1262 = scalar_lea.vmem %s11, %s1261
      $region76: #{_lambda_.6} parent=71 // pred_fallthru
        _
    $region72: #{_lambda_.6} parent=5 // pred_fallthru
      _
  $region6: #{_lambda_.6} parent=0 // loop_footer
    %s21 = sadd.s32 1, %s17
  $region7: #{_lambda_.6} parent=0 // loop_footer_branch
    %16 = sbr.rel target = $region3
  $region8: #{_lambda_.6} parent=0 // loop_exit
    _

// kernel: _lambda_.9
$region0: #{_lambda_.9}
  #allocation0 [shape = 'u32[]', space=smem, size = 0x4, offset = 0x4, fixed_abs, tag = 'smem constant byte address 0x4 - core index']
  #allocation1 [shape = 'u32[144,128]{1,0:T(1,128)}', space=vmem, size = 0x12000, scoped, tag = 'internal scratch']
  %s0 = inlined_call_operand.vmem [shape: f32[2,11,32], index: 0, kind: input, shape index: {}]
  %s1 = inlined_call_operand.vmem [shape: f32[2,8,32], index: 1, kind: input, shape index: {}]
  %s2 = inlined_call_operand.vmem [shape: s32[2,11,8], index: 2, kind: input, shape index: {}]
  %s3 = inlined_call_operand.vmem [shape: bf16[32,32], index: 3, kind: input, shape index: {}]
  %s4 = inlined_call_operand.vmem [shape: f32[1,32], index: 4, kind: input, shape index: {}]
  %s5 = inlined_call_operand.vmem [shape: bf16[32,64], index: 5, kind: input, shape index: {}]
  %s6 = inlined_call_operand.vmem [shape: f32[1,64], index: 6, kind: input, shape index: {}]
  %s7 = inlined_call_operand.vmem [shape: f32[32,32], index: 7, kind: input, shape index: {}]
  %s8 = inlined_call_operand.vmem [shape: f32[1,32], index: 8, kind: input, shape index: {}]
  %s9 = inlined_call_operand.vmem [shape: f32[1,32], index: 9, kind: input, shape index: {}]
  %s10 = inlined_call_operand.vmem [shape: f32[1,32], index: 10, kind: input, shape index: {}]
  %s11 = inlined_call_operand.vmem [shape: f32[2,11,32], index: 11, kind: output, shape index: {}]
  %s12 = sld [smem:[#allocation0]]
  $region77: #{_lambda_.9} parent=0
    _
  %s14 = ssub.s32 1, %s12
  %s15 = scalar_select 0, %s14, %s12
  loop: start=0, step=1, limit=4
  $region2: #{_lambda_.9} parent=0 // loop_pre_header
    _
  $region3: #{_lambda_.9} parent=0 // loop_header
    %s17 = sphi 0, %s21
    %p18 = scmp.ge.s32.totalorder %s17, 4
    %s27 = sphi 0, %s29
    %s30 = sphi 0, %s27
    %s31 = sphi 0, %s30
    %s47 = sphi 0, %s31
    %s53 = sphi 0, %s55
    %s56 = sphi 0, %s53
    %s57 = sphi 0, %s56
    %s73 = sphi 0, %s57
    %s79 = sphi 0, %s81
    %s82 = sphi 0, %s79
    %s83 = sphi 0, %s82
    %s99 = sphi 0, %s83
    %s103 = sphi 0, %s103
    %s105 = sphi 0, %s103
    %s106 = sphi 0, %s105
    %s120 = sphi 0, %s106
    %s124 = sphi 0, %s124
    %s126 = sphi 0, %s124
    %s127 = sphi 0, %s126
    %s141 = sphi 0, %s127
    %s145 = sphi 0, %s145
    %s147 = sphi 0, %s145
    %s148 = sphi 0, %s147
    %s162 = sphi 0, %s148
    %s166 = sphi 0, %s166
    %s168 = sphi 0, %s166
    %s169 = sphi 0, %s168
    %s183 = sphi 0, %s169
    %s187 = sphi 0, %s187
    %s189 = sphi 0, %s187
    %s190 = sphi 0, %s189
    %s204 = sphi 0, %s190
    %s208 = sphi 0, %s208
    %s210 = sphi 0, %s208
    %s211 = sphi 0, %s210
    %s225 = sphi 0, %s211
    %s229 = sphi 0, %s229
    %s231 = sphi 0, %s229
    %s232 = sphi 0, %s231
    %s246 = sphi 0, %s232
    %s250 = sphi 0, %s250
    %s252 = sphi 0, %s250
    %s253 = sphi 0, %s252
    %s267 = sphi 0, %s253
    %s273 = sphi 0, %s275
    %s276 = sphi 0, %s273
    %s277 = sphi 0, %s276
    %s293 = sphi 0, %s277
  $region4: #{_lambda_.9} parent=0 // loop_header_branch
    %20 = sbr.rel (%p18) target = $region8
  $region5: #{_lambda_.9} parent=0 // loop_body
    %s22 = ssub.s32 %s17, 1
    %s23 = ssub.s32 %s17, 2
    %s24 = sadd.s32 %s17, 1
    %s25 = ssub.s32 %s17, %s24
    %p26 = scmp.eq.s32.totalorder %s25, 0
    %s28 = sadd.s32 %s27, 1
    %s29 = scalar_select %p26, %s27, %s28
    %p32 = pneg %p26
    %p33 = scmp.eq.s32.totalorder %s17, 1
    %p34 = por %p32, %p33
    %p35 = scmp.ne.s32.totalorder %s27, %s30
    %p36 = scmp.eq.s32.totalorder %s17, 0
    %p37 = por %p35, %p36
    %p38 = scmp.ne.s32.totalorder %s27, %s30
    %p39 = scmp.eq.s32.totalorder %s22, 1
    %p40 = por %p38, %p39
    %p41 = scmp.ne.s32.totalorder %s30, %s31
    %p42 = scmp.eq.s32.totalorder %s22, 0
    %p43 = por %p41, %p42
    %p44 = scmp.ne.s32.totalorder %s30, %s31
    %p45 = scmp.eq.s32.totalorder %s23, 1
    %p46 = por %p44, %p45
    %p48 = scmp.ne.s32.totalorder %s31, %s47
    %p49 = scmp.eq.s32.totalorder %s23, 0
    %p50 = por %p48, %p49
    %s51 = ssub.s32 %s17, %s24
    %p52 = scmp.eq.s32.totalorder %s51, 0
    %s54 = sadd.s32 %s53, 1
    %s55 = scalar_select %p52, %s53, %s54
    %p58 = pneg %p52
    %p59 = scmp.eq.s32.totalorder %s17, 1
    %p60 = por %p58, %p59
    %p61 = scmp.ne.s32.totalorder %s53, %s56
    %p62 = scmp.eq.s32.totalorder %s17, 0
    %p63 = por %p61, %p62
    %p64 = scmp.ne.s32.totalorder %s53, %s56
    %p65 = scmp.eq.s32.totalorder %s22, 1
    %p66 = por %p64, %p65
    %p67 = scmp.ne.s32.totalorder %s56, %s57
    %p68 = scmp.eq.s32.totalorder %s22, 0
    %p69 = por %p67, %p68
    %p70 = scmp.ne.s32.totalorder %s56, %s57
    %p71 = scmp.eq.s32.totalorder %s23, 1
    %p72 = por %p70, %p71
    %p74 = scmp.ne.s32.totalorder %s57, %s73
    %p75 = scmp.eq.s32.totalorder %s23, 0
    %p76 = por %p74, %p75
    %s77 = ssub.s32 %s17, %s24
    %p78 = scmp.eq.s32.totalorder %s77, 0
    %s80 = sadd.s32 %s79, 1
    %s81 = scalar_select %p78, %s79, %s80
    %p84 = pneg %p78
    %p85 = scmp.eq.s32.totalorder %s17, 1
    %p86 = por %p84, %p85
    %p87 = scmp.ne.s32.totalorder %s79, %s82
    %p88 = scmp.eq.s32.totalorder %s17, 0
    %p89 = por %p87, %p88
    %p90 = scmp.ne.s32.totalorder %s79, %s82
    %p91 = scmp.eq.s32.totalorder %s22, 1
    %p92 = por %p90, %p91
    %p93 = scmp.ne.s32.totalorder %s82, %s83
    %p94 = scmp.eq.s32.totalorder %s22, 0
    %p95 = por %p93, %p94
    %p96 = scmp.ne.s32.totalorder %s82, %s83
    %p97 = scmp.eq.s32.totalorder %s23, 1
    %p98 = por %p96, %p97
    %p100 = scmp.ne.s32.totalorder %s83, %s99
    %p101 = scmp.eq.s32.totalorder %s23, 0
    %p102 = por %p100, %p101
    %s104 = sadd.s32 %s103, 1
    %p107 = scmp.eq.s32.totalorder %s17, 1
    %p108 = scmp.ne.s32.totalorder %s103, %s105
    %p109 = scmp.eq.s32.totalorder %s17, 0
    %p110 = por %p108, %p109
    %p111 = scmp.ne.s32.totalorder %s103, %s105
    %p112 = scmp.eq.s32.totalorder %s22, 1
    %p113 = por %p111, %p112
    %p114 = scmp.ne.s32.totalorder %s105, %s106
    %p115 = scmp.eq.s32.totalorder %s22, 0
    %p116 = por %p114, %p115
    %p117 = scmp.ne.s32.totalorder %s105, %s106
    %p118 = scmp.eq.s32.totalorder %s23, 1
    %p119 = por %p117, %p118
    %p121 = scmp.ne.s32.totalorder %s106, %s120
    %p122 = scmp.eq.s32.totalorder %s23, 0
    %p123 = por %p121, %p122
    %s125 = sadd.s32 %s124, 1
    %p128 = scmp.eq.s32.totalorder %s17, 1
    %p129 = scmp.ne.s32.totalorder %s124, %s126
    %p130 = scmp.eq.s32.totalorder %s17, 0
    %p131 = por %p129, %p130
    %p132 = scmp.ne.s32.totalorder %s124, %s126
    %p133 = scmp.eq.s32.totalorder %s22, 1
    %p134 = por %p132, %p133
    %p135 = scmp.ne.s32.totalorder %s126, %s127
    %p136 = scmp.eq.s32.totalorder %s22, 0
    %p137 = por %p135, %p136
    %p138 = scmp.ne.s32.totalorder %s126, %s127
    %p139 = scmp.eq.s32.totalorder %s23, 1
    %p140 = por %p138, %p139
    %p142 = scmp.ne.s32.totalorder %s127, %s141
    %p143 = scmp.eq.s32.totalorder %s23, 0
    %p144 = por %p142, %p143
    %s146 = sadd.s32 %s145, 1
    %p149 = scmp.eq.s32.totalorder %s17, 1
    %p150 = scmp.ne.s32.totalorder %s145, %s147
    %p151 = scmp.eq.s32.totalorder %s17, 0
    %p152 = por %p150, %p151
    %p153 = scmp.ne.s32.totalorder %s145, %s147
    %p154 = scmp.eq.s32.totalorder %s22, 1
    %p155 = por %p153, %p154
    %p156 = scmp.ne.s32.totalorder %s147, %s148
    %p157 = scmp.eq.s32.totalorder %s22, 0
    %p158 = por %p156, %p157
    %p159 = scmp.ne.s32.totalorder %s147, %s148
    %p160 = scmp.eq.s32.totalorder %s23, 1
    %p161 = por %p159, %p160
    %p163 = scmp.ne.s32.totalorder %s148, %s162
    %p164 = scmp.eq.s32.totalorder %s23, 0
    %p165 = por %p163, %p164
    %s167 = sadd.s32 %s166, 1
    %p170 = scmp.eq.s32.totalorder %s17, 1
    %p171 = scmp.ne.s32.totalorder %s166, %s168
    %p172 = scmp.eq.s32.totalorder %s17, 0
    %p173 = por %p171, %p172
    %p174 = scmp.ne.s32.totalorder %s166, %s168
    %p175 = scmp.eq.s32.totalorder %s22, 1
    %p176 = por %p174, %p175
    %p177 = scmp.ne.s32.totalorder %s168, %s169
    %p178 = scmp.eq.s32.totalorder %s22, 0
    %p179 = por %p177, %p178
    %p180 = scmp.ne.s32.totalorder %s168, %s169
    %p181 = scmp.eq.s32.totalorder %s23, 1
    %p182 = por %p180, %p181
    %p184 = scmp.ne.s32.totalorder %s169, %s183
    %p185 = scmp.eq.s32.totalorder %s23, 0
    %p186 = por %p184, %p185
    %s188 = sadd.s32 %s187, 1
    %p191 = scmp.eq.s32.totalorder %s17, 1
    %p192 = scmp.ne.s32.totalorder %s187, %s189
    %p193 = scmp.eq.s32.totalorder %s17, 0
    %p194 = por %p192, %p193
    %p195 = scmp.ne.s32.totalorder %s187, %s189
    %p196 = scmp.eq.s32.totalorder %s22, 1
    %p197 = por %p195, %p196
    %p198 = scmp.ne.s32.totalorder %s189, %s190
    %p199 = scmp.eq.s32.totalorder %s22, 0
    %p200 = por %p198, %p199
    %p201 = scmp.ne.s32.totalorder %s189, %s190
    %p202 = scmp.eq.s32.totalorder %s23, 1
    %p203 = por %p201, %p202
    %p205 = scmp.ne.s32.totalorder %s190, %s204
    %p206 = scmp.eq.s32.totalorder %s23, 0
    %p207 = por %p205, %p206
    %s209 = sadd.s32 %s208, 1
    %p212 = scmp.eq.s32.totalorder %s17, 1
    %p213 = scmp.ne.s32.totalorder %s208, %s210
    %p214 = scmp.eq.s32.totalorder %s17, 0
    %p215 = por %p213, %p214
    %p216 = scmp.ne.s32.totalorder %s208, %s210
    %p217 = scmp.eq.s32.totalorder %s22, 1
    %p218 = por %p216, %p217
    %p219 = scmp.ne.s32.totalorder %s210, %s211
    %p220 = scmp.eq.s32.totalorder %s22, 0
    %p221 = por %p219, %p220
    %p222 = scmp.ne.s32.totalorder %s210, %s211
    %p223 = scmp.eq.s32.totalorder %s23, 1
    %p224 = por %p222, %p223
    %p226 = scmp.ne.s32.totalorder %s211, %s225
    %p227 = scmp.eq.s32.totalorder %s23, 0
    %p228 = por %p226, %p227
    %s230 = sadd.s32 %s229, 1
    %p233 = scmp.eq.s32.totalorder %s17, 1
    %p234 = scmp.ne.s32.totalorder %s229, %s231
    %p235 = scmp.eq.s32.totalorder %s17, 0
    %p236 = por %p234, %p235
    %p237 = scmp.ne.s32.totalorder %s229, %s231
    %p238 = scmp.eq.s32.totalorder %s22, 1
    %p239 = por %p237, %p238
    %p240 = scmp.ne.s32.totalorder %s231, %s232
    %p241 = scmp.eq.s32.totalorder %s22, 0
    %p242 = por %p240, %p241
    %p243 = scmp.ne.s32.totalorder %s231, %s232
    %p244 = scmp.eq.s32.totalorder %s23, 1
    %p245 = por %p243, %p244
    %p247 = scmp.ne.s32.totalorder %s232, %s246
    %p248 = scmp.eq.s32.totalorder %s23, 0
    %p249 = por %p247, %p248
    %s251 = sadd.s32 %s250, 1
    %p254 = scmp.eq.s32.totalorder %s17, 1
    %p255 = scmp.ne.s32.totalorder %s250, %s252
    %p256 = scmp.eq.s32.totalorder %s17, 0
    %p257 = por %p255, %p256
    %p258 = scmp.ne.s32.totalorder %s250, %s252
    %p259 = scmp.eq.s32.totalorder %s22, 1
    %p260 = por %p258, %p259
    %p261 = scmp.ne.s32.totalorder %s252, %s253
    %p262 = scmp.eq.s32.totalorder %s22, 0
    %p263 = por %p261, %p262
    %p264 = scmp.ne.s32.totalorder %s252, %s253
    %p265 = scmp.eq.s32.totalorder %s23, 1
    %p266 = por %p264, %p265
    %p268 = scmp.ne.s32.totalorder %s253, %s267
    %p269 = scmp.eq.s32.totalorder %s23, 0
    %p270 = por %p268, %p269
    %s271 = ssub.s32 %s17, %s24
    %p272 = scmp.eq.s32.totalorder %s271, 0
    %s274 = sadd.s32 %s273, 1
    %s275 = scalar_select %p272, %s273, %s274
    %p278 = pneg %p272
    %p279 = scmp.eq.s32.totalorder %s17, 1
    %p280 = por %p278, %p279
    %p281 = scmp.ne.s32.totalorder %s273, %s276
    %p282 = scmp.eq.s32.totalorder %s17, 0
    %p283 = por %p281, %p282
    %p284 = scmp.ne.s32.totalorder %s273, %s276
    %p285 = scmp.eq.s32.totalorder %s22, 1
    %p286 = por %p284, %p285
    %p287 = scmp.ne.s32.totalorder %s276, %s277
    %p288 = scmp.eq.s32.totalorder %s22, 0
    %p289 = por %p287, %p288
    %p290 = scmp.ne.s32.totalorder %s276, %s277
    %p291 = scmp.eq.s32.totalorder %s23, 1
    %p292 = por %p290, %p291
    %p294 = scmp.ne.s32.totalorder %s277, %s293
    %p295 = scmp.eq.s32.totalorder %s23, 0
    %p296 = por %p294, %p295
    %p297 = scmp.le.s32.totalorder 1, %s17
    %p298 = scmp.lt.s32.totalorder %s17, 3
    %p299 = pnand %p297, %p298
    %p300 = pneg %p299
    // Predicated region
    $region9: #{_lambda_.9} parent=5 // pred_check
      _
    $region10: #{_lambda_.9} parent=5 // pred_check_branch
      %302 = sbr.rel (%p299) target = $region12
    $region11: #{_lambda_.9} parent=5 // pred_region
      %s303 = ssub.s32 %s17, 1
      // Predicated region
      $region13: #{_lambda_.9} parent=11 // pred_check
        %p304 = pneg %p116
      $region14: #{_lambda_.9} parent=11 // pred_check_branch
        %306 = sbr.rel (%p304) target = $region16
      $region15: #{_lambda_.9} parent=11 // pred_region
        _
      $region16: #{_lambda_.9} parent=11 // pred_fallthru
        _
      // Predicated region
      $region17: #{_lambda_.9} parent=11 // pred_check
        %p307 = pneg %p137
      $region18: #{_lambda_.9} parent=11 // pred_check_branch
        %309 = sbr.rel (%p307) target = $region20
      $region19: #{_lambda_.9} parent=11 // pred_region
        _
      $region20: #{_lambda_.9} parent=11 // pred_fallthru
        _
      // Predicated region
      $region21: #{_lambda_.9} parent=11 // pred_check
        %p310 = pneg %p158
      $region22: #{_lambda_.9} parent=11 // pred_check_branch
        %312 = sbr.rel (%p310) target = $region24
      $region23: #{_lambda_.9} parent=11 // pred_region
        _
      $region24: #{_lambda_.9} parent=11 // pred_fallthru
        _
      // Predicated region
      $region25: #{_lambda_.9} parent=11 // pred_check
        %p313 = pneg %p179
      $region26: #{_lambda_.9} parent=11 // pred_check_branch
        %315 = sbr.rel (%p313) target = $region28
      $region27: #{_lambda_.9} parent=11 // pred_region
        _
      $region28: #{_lambda_.9} parent=11 // pred_fallthru
        _
      // Predicated region
      $region29: #{_lambda_.9} parent=11 // pred_check
        %p316 = pneg %p200
      $region30: #{_lambda_.9} parent=11 // pred_check_branch
        %318 = sbr.rel (%p316) target = $region32
      $region31: #{_lambda_.9} parent=11 // pred_region
        _
      $region32: #{_lambda_.9} parent=11 // pred_fallthru
        _
      // Predicated region
      $region33: #{_lambda_.9} parent=11 // pred_check
        %p319 = pneg %p221
      $region34: #{_lambda_.9} parent=11 // pred_check_branch
        %321 = sbr.rel (%p319) target = $region36
      $region35: #{_lambda_.9} parent=11 // pred_region
        _
      $region36: #{_lambda_.9} parent=11 // pred_fallthru
        _
      // Predicated region
      $region37: #{_lambda_.9} parent=11 // pred_check
        %p322 = pneg %p242
      $region38: #{_lambda_.9} parent=11 // pred_check_branch
        %324 = sbr.rel (%p322) target = $region40
      $region39: #{_lambda_.9} parent=11 // pred_region
        _
      $region40: #{_lambda_.9} parent=11 // pred_fallthru
        _
      // Predicated region
      $region41: #{_lambda_.9} parent=11 // pred_check
        %p325 = pneg %p263
      $region42: #{_lambda_.9} parent=11 // pred_check_branch
        %327 = sbr.rel (%p325) target = $region44
      $region43: #{_lambda_.9} parent=11 // pred_region
        _
      $region44: #{_lambda_.9} parent=11 // pred_fallthru
        _
    $region12: #{_lambda_.9} parent=5 // pred_fallthru
      _
    %p328 = scmp.lt.s32.totalorder %s17, 2
    // Predicated region
    $region45: #{_lambda_.9} parent=5 // pred_check
      %p329 = pneg %p328
    $region46: #{_lambda_.9} parent=5 // pred_check_branch
      %331 = sbr.rel (%p329) target = $region48
    $region47: #{_lambda_.9} parent=5 // pred_region
      // Predicated region
      $region49: #{_lambda_.9} parent=47 // pred_check
        %p332 = pneg %p37
      $region50: #{_lambda_.9} parent=47 // pred_check_branch
        %334 = sbr.rel (%p332) target = $region52
      $region51: #{_lambda_.9} parent=47 // pred_region
        %p335 = scmp.lt.s32.totalorder %s17, 1
        %s336 = scalar_select %p335, %s17, 1
        %s337 = smul.addr %s336, 2
        %s338 = smul.addr %s337, 8
        %s339 = scalar_lea.vmem %s0, %s338
      $region52: #{_lambda_.9} parent=47 // pred_fallthru
        _
      // Predicated region
      $region53: #{_lambda_.9} parent=47 // pred_check
        %p340 = pneg %p63
      $region54: #{_lambda_.9} parent=47 // pred_check_branch
        %342 = sbr.rel (%p340) target = $region56
      $region55: #{_lambda_.9} parent=47 // pred_region
        %p343 = scmp.lt.s32.totalorder %s17, 1
        %s344 = scalar_select %p343, %s17, 1
        %s345 = smul.addr %s344, 8
        %s346 = scalar_lea.vmem %s1, %s345
      $region56: #{_lambda_.9} parent=47 // pred_fallthru
        _
      // Predicated region
      $region57: #{_lambda_.9} parent=47 // pred_check
        %p347 = pneg %p89
      $region58: #{_lambda_.9} parent=47 // pred_check_branch
        %349 = sbr.rel (%p347) target = $region60
      $region59: #{_lambda_.9} parent=47 // pred_region
        %p350 = scmp.lt.s32.totalorder %s17, 1
        %s351 = scalar_select %p350, %s17, 1
        %s352 = smul.addr %s351, 2
        %s353 = smul.addr %s352, 8
        %s354 = scalar_lea.vmem %s2, %s353
      $region60: #{_lambda_.9} parent=47 // pred_fallthru
        _
    $region48: #{_lambda_.9} parent=5 // pred_fallthru
      _
    %p355 = scmp.le.s32.totalorder 1, %s17
    %p356 = scmp.lt.s32.totalorder %s17, 3
    %p357 = pnand %p355, %p356
    %p358 = pneg %p357
    // Predicated region
    $region61: #{_lambda_.9} parent=5 // pred_check
      _
    $region62: #{_lambda_.9} parent=5 // pred_check_branch
      %360 = sbr.rel (%p357) target = $region64
    $region63: #{_lambda_.9} parent=5 // pred_region
      %s361 = ssub.s32 %s17, 1
      %p362 = scmp.lt.s32.totalorder %s22, 1
      %s363 = scalar_select %p362, %s22, 1
      %s364 = smul.addr %s363, 2
      %s365 = smul.addr %s364, 8
      %s366 = scalar_lea.vmem %s0, %s365
      %p367 = pneg %p43
      %p368 = pneg %p40
      %p369 = scmp.lt.s32.totalorder %s22, 1
      %s370 = scalar_select %p369, %s22, 1
      %s371 = smul.addr %s370, 8
      %s372 = scalar_lea.vmem %s1, %s371
      %p373 = pneg %p69
      %p374 = pneg %p66
      %p375 = scmp.lt.s32.totalorder %s22, 1
      %s376 = scalar_select %p375, %s22, 1
      %s377 = smul.addr %s376, 2
      %s378 = smul.addr %s377, 8
      %s379 = scalar_lea.vmem %s2, %s378
      %p380 = pneg %p95
      %p381 = pneg %p92
      %p382 = pneg %p116
      %p383 = pneg %p113
      %p384 = pneg %p137
      %p385 = pneg %p134
      %p386 = pneg %p158
      %p387 = pneg %p155
      %p388 = pneg %p179
      %p389 = pneg %p176
      %p390 = pneg %p200
      %p391 = pneg %p197
      %p392 = pneg %p221
      %p393 = pneg %p218
      %p394 = pneg %p242
      %p395 = pneg %p239
      %p396 = pneg %p263
      %p397 = pneg %p260
      %p398 = pneg %p289
      %p399 = pneg %p286
      %p400 = scmp.lt.s32.totalorder %s22, 1
      %s401 = scalar_select %p400, %s22, 1
      %s402 = smul.addr %s401, 2
      %s403 = smul.addr %s402, 8
      %s404 = scalar_lea.vmem %s11, %s403
      %p405 = scmp.lt.s32.totalorder %s22, 1
      %s406 = scalar_select %p405, %s22, 1
      %s407 = smul.addr %s406, 2
      %s408 = smul.addr %s407, 8
      %s409 = scalar_lea.vmem %s0, %s408
      %p410 = scmp.lt.s32.totalorder %s22, 1
      %s411 = scalar_select %p410, %s22, 1
      %s412 = smul.addr %s411, 8
      %s413 = scalar_lea.vmem %s1, %s412
      %p414 = scmp.lt.s32.totalorder %s22, 1
      %s415 = scalar_select %p414, %s22, 1
      %s416 = smul.addr %s415, 2
      %s417 = smul.addr %s416, 8
      %s418 = scalar_lea.vmem %s2, %s417
      %p419 = scmp.lt.s32.totalorder %s22, 1
      %s420 = scalar_select %p419, %s22, 1
      %s421 = smul.addr %s420, 2
      %s422 = smul.addr %s421, 8
      %s423 = scalar_lea.vmem %s11, %s422
      %v425 = vld [vmem:[%s409] sm:$0xff]
      %v426 = vld [vmem:[%s409 + $0x8] sm:$0x7]
      %v427 = vld [vmem:[%s413] sm:$0xff]
      %v428 = vld [vmem:[%s418] sm:$0xff]
      %v429 = vld [vmem:[%s418 + $0x8] sm:$0x7]
      %v430 = vpack.c.bf16 %v426, %v425
      %v431 = vld [vmem:[%s3] sm:$0xf]
      %v432 = vld [vmem:[%s3 + $0x4] sm:$0xf]
      %v433 = vld [vmem:[%s3 + $0x8] sm:$0xf]
      %v434 = vld [vmem:[%s3 + $0xc] sm:$0xf]
      %v435 = vld [vmem:[%s4] sm:$0x1]
      %v437 = vlaneseq
      %v438 = vshrl.u32 %v437, 7
      %v439 = vsub.s32 0, %v438
      %v440 = vrot.slane %v435, %v439
      %v446 = vunpack.c.l.b16 %v431
      %v447 = vunpack.c.l.b16 %v432
      %v448 = vunpack.c.l.b16 %v433
      %v449 = vunpack.c.l.b16 %v434
      %v450 = vpack.c.b16 %v447, %v446
      %v451 = vpack.c.b16 %v449, %v448
      %vm454 = vcmask 261120
      %v456 = vsel %vm454, %v430, 0
      %458 = vmatprep.subr.bf16.mxu0 0
      %459 = vmatpush1.bf16.msra.mxu0 %v450
      %460 = vmatprep.subr.bf16.mxu0 0
      %461 = vmatpush1.bf16.msra.mxu0 %v451
      %462 = vmatprep.subr.bf16.mxu0 0
      %463 = vmatpush1.bf16.msra.mxu0 0
      %464 = vmatprep.subr.bf16.mxu0 0
      %465 = vmatpush1.bf16.msra.mxu0 0
      %466 = vmatprep.subr.bf16.mxu0 0
      %467 = vmatpush1.bf16.msra.mxu0 0
      %468 = vmatprep.subr.bf16.mxu0 0
      %469 = vmatpush1.bf16.msra.mxu0 0
      %470 = vmatprep.subr.bf16.mxu0 0
      %471 = vmatpush1.bf16.msra.mxu0 0
      %472 = vmatprep.subr.bf16.mxu0 0
      %473 = vmatpush1.bf16.msra.mxu0 0
      %474 = vmatprep.subr.bf16.mxu0 0
      %475 = vmatpush1.bf16.msra.mxu0 0
      %476 = vmatprep.subr.bf16.mxu0 0
      %477 = vmatpush1.bf16.msra.mxu0 0
      %478 = vmatprep.subr.bf16.mxu0 0
      %479 = vmatpush1.bf16.msra.mxu0 0
      %480 = vmatprep.subr.bf16.mxu0 0
      %481 = vmatpush1.bf16.msra.mxu0 0
      %482 = vmatprep.subr.bf16.mxu0 0
      %483 = vmatpush1.bf16.msra.mxu0 0
      %484 = vmatprep.subr.bf16.mxu0 0
      %485 = vmatpush1.bf16.msra.mxu0 0
      %486 = vmatprep.subr.bf16.mxu0 0
      %487 = vmatpush1.bf16.msra.mxu0 0
      %488 = vmatprep.subr.bf16.mxu0 0
      %489 = vmatpush1.bf16.msra.mxu0 0
      %490 = vmatprep.mubr.bf16.mxu0 0
      %491 = vmatmul.mubr.bf16.gmra.mrb[0].mxu0 %v456
      %v492 = vpop.f32.mrb[0].mxu0
      %v493 = vadd.f32 %v440, %v492
      %v494 = vpop.f32.mrb[0].mxu0
      %v495 = vpop.f32.mrb[0].mxu0
      %v496 = vadd.f32 %v440, %v495
      %v497 = vpop.f32.mrb[0].mxu0
      %498 = vdwg.mxu0
      %v499 = vpack.c.bf16 %v427, %v427
      %v500 = vld [vmem:[%s5] sm:$0xf]
      %v501 = vld [vmem:[%s5 + $0x4] sm:$0xf]
      %v502 = vld [vmem:[%s5 + $0x8] sm:$0xf]
      %v503 = vld [vmem:[%s5 + $0xc] sm:$0xf]
      %v504 = vld [vmem:[%s6] sm:$0x1]
      %v506 = vlaneseq
      %v507 = vshrl.u32 %v506, 7
      %v508 = vsub.s32 0, %v507
      %v509 = vrot.slane %v504, %v508
      %v515 = vunpack.c.l.b16 %v500
      %v516 = vunpack.c.l.b16 %v501
      %v517 = vunpack.c.l.b16 %v502
      %v518 = vunpack.c.l.b16 %v503
      %v519 = vpack.c.b16 %v516, %v515
      %v520 = vpack.c.b16 %v518, %v517
      %v524 = vsel %vm454, %v499, 0
      %526 = vmatprep.subr.bf16.mxu0 0
      %527 = vmatpush1.bf16.msra.mxu0 %v519
      %528 = vmatprep.subr.bf16.mxu0 0
      %529 = vmatpush1.bf16.msra.mxu0 %v520
      %530 = vmatprep.subr.bf16.mxu0 0
      %531 = vmatpush1.bf16.msra.mxu0 0
      %532 = vmatprep.subr.bf16.mxu0 0
      %533 = vmatpush1.bf16.msra.mxu0 0
      %534 = vmatprep.subr.bf16.mxu0 0
      %535 = vmatpush1.bf16.msra.mxu0 0
      %536 = vmatprep.subr.bf16.mxu0 0
      %537 = vmatpush1.bf16.msra.mxu0 0
      %538 = vmatprep.subr.bf16.mxu0 0
      %539 = vmatpush1.bf16.msra.mxu0 0
      %540 = vmatprep.subr.bf16.mxu0 0
      %541 = vmatpush1.bf16.msra.mxu0 0
      %542 = vmatprep.subr.bf16.mxu0 0
      %543 = vmatpush1.bf16.msra.mxu0 0
      %544 = vmatprep.subr.bf16.mxu0 0
      %545 = vmatpush1.bf16.msra.mxu0 0
      %546 = vmatprep.subr.bf16.mxu0 0
      %547 = vmatpush1.bf16.msra.mxu0 0
      %548 = vmatprep.subr.bf16.mxu0 0
      %549 = vmatpush1.bf16.msra.mxu0 0
      %550 = vmatprep.subr.bf16.mxu0 0
      %551 = vmatpush1.bf16.msra.mxu0 0
      %552 = vmatprep.subr.bf16.mxu0 0
      %553 = vmatpush1.bf16.msra.mxu0 0
      %554 = vmatprep.subr.bf16.mxu0 0
      %555 = vmatpush1.bf16.msra.mxu0 0
      %556 = vmatprep.subr.bf16.mxu0 0
      %557 = vmatpush1.bf16.msra.mxu0 0
      %558 = vmatprep.mubr.bf16.mxu0 0
      %559 = vmatmul.mubr.bf16.gmra.mrb[0].mxu0 %v524
      %v560 = vpop.f32.mrb[0].mxu0
      %v561 = vadd.f32 %v509, %v560
      %v562 = vpop.f32.mrb[0].mxu0
      %v563 = vpop.f32.mrb[0].mxu0
      %v564 = vpop.f32.mrb[0].mxu0
      %565 = vdwg.mxu0
      %v566 = vpack.c.bf16 %v496, %v493
      %v567 = vpack.c.bf16 %v561, %v561
      %v568 = vld [vmem:[%s7] sm:$0xff]
      %v569 = vld [vmem:[%s7 + $0x8] sm:$0xff]
      %v570 = vld [vmem:[%s7 + $0x10] sm:$0xff]
      %v571 = vld [vmem:[%s7 + $0x18] sm:$0xff]
      %vm572 = vcmask 64512
      %v574 = vsel %vm572, %v566, 0
      %v577 = vsel %vm572, %v567, 0
      %579 = vmatprep.subr.bf16.mxu0 0
      %580 = vmatpush1.bf16.xpose.msra.mxu0 %v577
      %581 = vmatprep.subr.bf16.mxu0 0
      %582 = vmatpush1.bf16.xpose.msra.mxu0 0
      %583 = vmatprep.subr.bf16.mxu0 0
      %584 = vmatpush1.bf16.xpose.msra.mxu0 0
      %585 = vmatprep.subr.bf16.mxu0 0
      %586 = vmatpush1.bf16.xpose.msra.mxu0 0
      %587 = vmatprep.subr.bf16.mxu0 0
      %588 = vmatpush1.bf16.xpose.msra.mxu0 0
      %589 = vmatprep.subr.bf16.mxu0 0
      %590 = vmatpush1.bf16.xpose.msra.mxu0 0
      %591 = vmatprep.subr.bf16.mxu0 0
      %592 = vmatpush1.bf16.xpose.msra.mxu0 0
      %593 = vmatprep.subr.bf16.mxu0 0
      %594 = vmatpush1.bf16.xpose.msra.mxu0 0
      %595 = vmatprep.subr.bf16.mxu0 0
      %596 = vmatpush1.bf16.xpose.msra.mxu0 0
      %597 = vmatprep.subr.bf16.mxu0 0
      %598 = vmatpush1.bf16.xpose.msra.mxu0 0
      %599 = vmatprep.subr.bf16.mxu0 0
      %600 = vmatpush1.bf16.xpose.msra.mxu0 0
      %601 = vmatprep.subr.bf16.mxu0 0
      %602 = vmatpush1.bf16.xpose.msra.mxu0 0
      %603 = vmatprep.subr.bf16.mxu0 0
      %604 = vmatpush1.bf16.xpose.msra.mxu0 0
      %605 = vmatprep.subr.bf16.mxu0 0
      %606 = vmatpush1.bf16.xpose.msra.mxu0 0
      %607 = vmatprep.subr.bf16.mxu0 0
      %608 = vmatpush1.bf16.xpose.msra.mxu0 0
      %609 = vmatprep.subr.bf16.mxu0 0
      %610 = vmatpush1.bf16.xpose.msra.mxu0 0
      %611 = vmatprep.mubr.bf16.mxu0 0
      %612 = vmatmul.mubr.bf16.gmra.mrb[0].mxu0 %v574
      %v613 = vpop.f32.mrb[0].mxu0
      %v614 = vadd.f32 0.0, %v613
      %v615 = vpop.f32.mrb[0].mxu0
      %v616 = vpop.f32.mrb[0].mxu0
      %v617 = vadd.f32 0.0, %v616
      %v618 = vpop.f32.mrb[0].mxu0
      %619 = vdwg.mxu0
      %v620 = vmul.f32 %v614, 0.35355338
      %v621 = vmul.f32 %v617, 0.35355338
      %vm622 = vcmp.ne.s32.totalorder %v428, 0
      %vm623 = vcmp.ne.s32.totalorder %v429, 0
      %v624 = vsel %vm622, %v620, -10000.0
      %v625 = vsel %vm623, %v621, -10000.0
      %v626 = vsel %vm572, %v624, -inf
      %627 = vmax.xlane.f32.xlu0 %v626
      %v628 = vpop.xlane.xlu0 %627
      %vm629 = vcmask 59392
      %v630 = vsel %vm629, %v625, -inf
      %631 = vmax.xlane.f32.xlu0 %v630
      %v632 = vpop.xlane.xlu0 %631
      %v633 = vsub.f32 %v624, %v628
      %v634 = vsub.f32 %v625, %v632
      %v635 = vmul.f32 %v633, 1.442695
      %v636 = vpow.pop %v635
      %v637 = vmul.f32 %v634, 1.442695
      %v638 = vpow.pop %v637
      %v639 = vsel %vm572, %v636, 0.0
      %640 = vadd.xlane.f32.xlu0 %v639
      %v641 = vpop.xlane.xlu0 %640
      %v642 = vsel %vm629, %v638, 0.0
      %643 = vadd.xlane.f32.xlu0 %v642
      %v644 = vpop.xlane.xlu0 %643
      %v645 = vrcp.pop %v641
      %v646 = vrcp.pop %v644
      %v647 = vmul.f32 %v636, %v645
      %v648 = vmul.f32 %v638, %v646
      %v649 = vpack.c.bf16 %v648, %v647
      %651 = vrot.lane.b32.xlu0 %v567, 96
      %v652 = vpop.permute.xlu0 %651
      %v654 = vsel %vm572, %v649, 0
      %vm656 = vcmask 1043456
      %v658 = vsel %vm656, %v652, 0
      %660 = vmatprep.subr.bf16.mxu0 0
      %661 = vmatpush1.bf16.msra.mxu0 %v658
      %662 = vmatprep.subr.bf16.mxu0 0
      %663 = vmatpush1.bf16.msra.mxu0 0
      %664 = vmatprep.subr.bf16.mxu0 0
      %665 = vmatpush1.bf16.msra.mxu0 0
      %666 = vmatprep.subr.bf16.mxu0 0
      %667 = vmatpush1.bf16.msra.mxu0 0
      %668 = vmatprep.subr.bf16.mxu0 0
      %669 = vmatpush1.bf16.msra.mxu0 0
      %670 = vmatprep.subr.bf16.mxu0 0
      %671 = vmatpush1.bf16.msra.mxu0 0
      %672 = vmatprep.subr.bf16.mxu0 0
      %673 = vmatpush1.bf16.msra.mxu0 0
      %674 = vmatprep.subr.bf16.mxu0 0
      %675 = vmatpush1.bf16.msra.mxu0 0
      %676 = vmatprep.subr.bf16.mxu0 0
      %677 = vmatpush1.bf16.msra.mxu0 0
      %678 = vmatprep.subr.bf16.mxu0 0
      %679 = vmatpush1.bf16.msra.mxu0 0
      %680 = vmatprep.subr.bf16.mxu0 0
      %681 = vmatpush1.bf16.msra.mxu0 0
      %682 = vmatprep.subr.bf16.mxu0 0
      %683 = vmatpush1.bf16.msra.mxu0 0
      %684 = vmatprep.subr.bf16.mxu0 0
      %685 = vmatpush1.bf16.msra.mxu0 0
      %686 = vmatprep.subr.bf16.mxu0 0
      %687 = vmatpush1.bf16.msra.mxu0 0
      %688 = vmatprep.subr.bf16.mxu0 0
      %689 = vmatpush1.bf16.msra.mxu0 0
      %690 = vmatprep.subr.bf16.mxu0 0
      %691 = vmatpush1.bf16.msra.mxu0 0
      %692 = vmatprep.mubr.bf16.mxu0 0
      %693 = vmatmul.mubr.bf16.gmra.mrb[0].mxu0 %v654
      %v694 = vpop.f32.mrb[0].mxu0
      %v695 = vadd.f32 0.0, %v694
      %v696 = vpop.f32.mrb[0].mxu0
      %v697 = vpop.f32.mrb[0].mxu0
      %v698 = vadd.f32 0.0, %v697
      %v699 = vpop.f32.mrb[0].mxu0
      %700 = vdwg.mxu0
      %v701 = vpack.c.bf16 %v698, %v695
      %v702 = vpack.c.bf16 %v568, %v568
      %704 = vrot.lane.b32.xlu0 %v566, 120
      %v705 = vpop.permute.xlu0 %704
      %706 = vrot.lane.b32.xlu0 %v567, 120
      %v707 = vpop.permute.xlu0 %706
      %v709 = vsel %vm572, %v705, 0
      %v712 = vsel %vm572, %v707, 0
      %714 = vmatprep.subr.bf16.mxu0 0
      %715 = vmatpush1.bf16.xpose.msra.mxu0 %v712
      %716 = vmatprep.subr.bf16.mxu0 0
      %717 = vmatpush1.bf16.xpose.msra.mxu0 0
      %718 = vmatprep.subr.bf16.mxu0 0
      %719 = vmatpush1.bf16.xpose.msra.mxu0 0
      %720 = vmatprep.subr.bf16.mxu0 0
      %721 = vmatpush1.bf16.xpose.msra.mxu0 0
      %722 = vmatprep.subr.bf16.mxu0 0
      %723 = vmatpush1.bf16.xpose.msra.mxu0 0
      %724 = vmatprep.subr.bf16.mxu0 0
      %725 = vmatpush1.bf16.xpose.msra.mxu0 0
      %726 = vmatprep.subr.bf16.mxu0 0
      %727 = vmatpush1.bf16.xpose.msra.mxu0 0
      %728 = vmatprep.subr.bf16.mxu0 0
      %729 = vmatpush1.bf16.xpose.msra.mxu0 0
      %730 = vmatprep.subr.bf16.mxu0 0
      %731 = vmatpush1.bf16.xpose.msra.mxu0 0
      %732 = vmatprep.subr.bf16.mxu0 0
      %733 = vmatpush1.bf16.xpose.msra.mxu0 0
      %734 = vmatprep.subr.bf16.mxu0 0
      %735 = vmatpush1.bf16.xpose.msra.mxu0 0
      %736 = vmatprep.subr.bf16.mxu0 0
      %737 = vmatpush1.bf16.xpose.msra.mxu0 0
      %738 = vmatprep.subr.bf16.mxu0 0
      %739 = vmatpush1.bf16.xpose.msra.mxu0 0
      %740 = vmatprep.subr.bf16.mxu0 0
      %741 = vmatpush1.bf16.xpose.msra.mxu0 0
      %742 = vmatprep.subr.bf16.mxu0 0
      %743 = vmatpush1.bf16.xpose.msra.mxu0 0
      %744 = vmatprep.subr.bf16.mxu0 0
      %745 = vmatpush1.bf16.xpose.msra.mxu0 0
      %746 = vmatprep.mubr.bf16.mxu0 0
      %747 = vmatmul.mubr.bf16.gmra.mrb[0].mxu0 %v709
      %v748 = vpop.f32.mrb[0].mxu0
      %v749 = vadd.f32 0.0, %v748
      %v750 = vpop.f32.mrb[0].mxu0
      %v751 = vpop.f32.mrb[0].mxu0
      %v752 = vadd.f32 0.0, %v751
      %v753 = vpop.f32.mrb[0].mxu0
      %754 = vdwg.mxu0
      %v755 = vmul.f32 %v749, 0.35355338
      %v756 = vmul.f32 %v752, 0.35355338
      %v757 = vsel %vm622, %v755, -10000.0
      %v758 = vsel %vm623, %v756, -10000.0
      %v759 = vsel %vm572, %v757, -inf
      %760 = vmax.xlane.f32.xlu0 %v759
      %v761 = vpop.xlane.xlu0 %760
      %v762 = vsel %vm629, %v758, -inf
      %763 = vmax.xlane.f32.xlu0 %v762
      %v764 = vpop.xlane.xlu0 %763
      %v765 = vsub.f32 %v757, %v761
      %v766 = vsub.f32 %v758, %v764
      %v767 = vmul.f32 %v765, 1.442695
      %v768 = vpow.pop %v767
      %v769 = vmul.f32 %v766, 1.442695
      %v770 = vpow.pop %v769
      %v771 = vsel %vm572, %v768, 0.0
      %772 = vadd.xlane.f32.xlu0 %v771
      %v773 = vpop.xlane.xlu0 %772
      %v774 = vsel %vm629, %v770, 0.0
      %775 = vadd.xlane.f32.xlu0 %v774
      %v776 = vpop.xlane.xlu0 %775
      %v777 = vrcp.pop %v773
      %v778 = vrcp.pop %v776
      %v779 = vmul.f32 %v768, %v777
      %v780 = vmul.f32 %v770, %v778
      %v781 = vpack.c.bf16 %v780, %v779
      %782 = vrot.lane.b32.xlu0 %v567, 88
      %v783 = vpop.permute.xlu0 %782
      %v785 = vsel %vm572, %v781, 0
      %v788 = vsel %vm656, %v783, 0
      %790 = vmatprep.subr.bf16.mxu0 0
      %791 = vmatpush1.bf16.msra.mxu0 %v788
      %792 = vmatprep.subr.bf16.mxu0 0
      %793 = vmatpush1.bf16.msra.mxu0 0
      %794 = vmatprep.subr.bf16.mxu0 0
      %795 = vmatpush1.bf16.msra.mxu0 0
      %796 = vmatprep.subr.bf16.mxu0 0
      %797 = vmatpush1.bf16.msra.mxu0 0
      %798 = vmatprep.subr.bf16.mxu0 0
      %799 = vmatpush1.bf16.msra.mxu0 0
      %800 = vmatprep.subr.bf16.mxu0 0
      %801 = vmatpush1.bf16.msra.mxu0 0
      %802 = vmatprep.subr.bf16.mxu0 0
      %803 = vmatpush1.bf16.msra.mxu0 0
      %804 = vmatprep.subr.bf16.mxu0 0
      %805 = vmatpush1.bf16.msra.mxu0 0
      %806 = vmatprep.subr.bf16.mxu0 0
      %807 = vmatpush1.bf16.msra.mxu0 0
      %808 = vmatprep.subr.bf16.mxu0 0
      %809 = vmatpush1.bf16.msra.mxu0 0
      %810 = vmatprep.subr.bf16.mxu0 0
      %811 = vmatpush1.bf16.msra.mxu0 0
      %812 = vmatprep.subr.bf16.mxu0 0
      %813 = vmatpush1.bf16.msra.mxu0 0
      %814 = vmatprep.subr.bf16.mxu0 0
      %815 = vmatpush1.bf16.msra.mxu0 0
      %816 = vmatprep.subr.bf16.mxu0 0
      %817 = vmatpush1.bf16.msra.mxu0 0
      %818 = vmatprep.subr.bf16.mxu0 0
      %819 = vmatpush1.bf16.msra.mxu0 0
      %820 = vmatprep.subr.bf16.mxu0 0
      %821 = vmatpush1.bf16.msra.mxu0 0
      %822 = vmatprep.mubr.bf16.mxu0 0
      %823 = vmatmul.mubr.bf16.gmra.mrb[0].mxu0 %v785
      %v824 = vpop.f32.mrb[0].mxu0
      %v825 = vadd.f32 0.0, %v824
      %v826 = vpop.f32.mrb[0].mxu0
      %v827 = vpop.f32.mrb[0].mxu0
      %v828 = vadd.f32 0.0, %v827
      %v829 = vpop.f32.mrb[0].mxu0
      %830 = vdwg.mxu0
      %v831 = vpack.c.bf16 %v828, %v825
      %v832 = vpack.c.bf16 %v569, %v569
      %v834 = vsel %vm572, %v831, 0
      %v837 = vsel %vm656, %v832, 0
      %839 = vmatprep.subr.bf16.mxu0 0
      %840 = vmatpush1.bf16.msra.mxu0 %v837
      %841 = vmatprep.subr.bf16.mxu0 0
      %842 = vmatpush1.bf16.msra.mxu0 0
      %843 = vmatprep.subr.bf16.mxu0 0
      %844 = vmatpush1.bf16.msra.mxu0 0
      %845 = vmatprep.subr.bf16.mxu0 0
      %846 = vmatpush1.bf16.msra.mxu0 0
      %847 = vmatprep.subr.bf16.mxu0 0
      %848 = vmatpush1.bf16.msra.mxu0 0
      %849 = vmatprep.subr.bf16.mxu0 0
      %850 = vmatpush1.bf16.msra.mxu0 0
      %851 = vmatprep.subr.bf16.mxu0 0
      %852 = vmatpush1.bf16.msra.mxu0 0
      %853 = vmatprep.subr.bf16.mxu0 0
      %854 = vmatpush1.bf16.msra.mxu0 0
      %855 = vmatprep.subr.bf16.mxu0 0
      %856 = vmatpush1.bf16.msra.mxu0 0
      %857 = vmatprep.subr.bf16.mxu0 0
      %858 = vmatpush1.bf16.msra.mxu0 0
      %859 = vmatprep.subr.bf16.mxu0 0
      %860 = vmatpush1.bf16.msra.mxu0 0
      %861 = vmatprep.subr.bf16.mxu0 0
      %862 = vmatpush1.bf16.msra.mxu0 0
      %863 = vmatprep.subr.bf16.mxu0 0
      %864 = vmatpush1.bf16.msra.mxu0 0
      %865 = vmatprep.subr.bf16.mxu0 0
      %866 = vmatpush1.bf16.msra.mxu0 0
      %867 = vmatprep.subr.bf16.mxu0 0
      %868 = vmatpush1.bf16.msra.mxu0 0
      %869 = vmatprep.subr.bf16.mxu0 0
      %870 = vmatpush1.bf16.msra.mxu0 0
      %871 = vmatprep.mubr.bf16.mxu0 0
      %872 = vmatmul.mubr.bf16.gmra.mrb[0].mxu0 %v834
      %v873 = vpop.f32.mrb[0].mxu0
      %v874 = vadd.f32 0.0, %v873
      %v875 = vpop.f32.mrb[0].mxu0
      %v876 = vpop.f32.mrb[0].mxu0
      %v877 = vadd.f32 0.0, %v876
      %v878 = vpop.f32.mrb[0].mxu0
      %879 = vdwg.mxu0
      %v881 = vsel %vm572, %v701, 0
      %v884 = vsel %vm656, %v702, 0
      %886 = vmatprep.subr.bf16.mxu0 0
      %887 = vmatpush1.bf16.msra.mxu0 %v884
      %888 = vmatprep.subr.bf16.mxu0 0
      %889 = vmatpush1.bf16.msra.mxu0 0
      %890 = vmatprep.subr.bf16.mxu0 0
      %891 = vmatpush1.bf16.msra.mxu0 0
      %892 = vmatprep.subr.bf16.mxu0 0
      %893 = vmatpush1.bf16.msra.mxu0 0
      %894 = vmatprep.subr.bf16.mxu0 0
      %895 = vmatpush1.bf16.msra.mxu0 0
      %896 = vmatprep.subr.bf16.mxu0 0
      %897 = vmatpush1.bf16.msra.mxu0 0
      %898 = vmatprep.subr.bf16.mxu0 0
      %899 = vmatpush1.bf16.msra.mxu0 0
      %900 = vmatprep.subr.bf16.mxu0 0
      %901 = vmatpush1.bf16.msra.mxu0 0
      %902 = vmatprep.subr.bf16.mxu0 0
      %903 = vmatpush1.bf16.msra.mxu0 0
      %904 = vmatprep.subr.bf16.mxu0 0
      %905 = vmatpush1.bf16.msra.mxu0 0
      %906 = vmatprep.subr.bf16.mxu0 0
      %907 = vmatpush1.bf16.msra.mxu0 0
      %908 = vmatprep.subr.bf16.mxu0 0
      %909 = vmatpush1.bf16.msra.mxu0 0
      %910 = vmatprep.subr.bf16.mxu0 0
      %911 = vmatpush1.bf16.msra.mxu0 0
      %912 = vmatprep.subr.bf16.mxu0 0
      %913 = vmatpush1.bf16.msra.mxu0 0
      %914 = vmatprep.subr.bf16.mxu0 0
      %915 = vmatpush1.bf16.msra.mxu0 0
      %916 = vmatprep.subr.bf16.mxu0 0
      %917 = vmatpush1.bf16.msra.mxu0 0
      %918 = vmatprep.mubr.bf16.mxu0 0
      %919 = vmatmul.mubr.bf16.gmra.mrb[0].mxu0 %v881
      %v920 = vpop.f32.mrb[0].mxu0
      %v921 = vadd.f32 %v874, %v920
      %v922 = vpop.f32.mrb[0].mxu0
      %v923 = vpop.f32.mrb[0].mxu0
      %v924 = vadd.f32 %v877, %v923
      %v925 = vpop.f32.mrb[0].mxu0
      %926 = vdwg.mxu0
      %927 = vrot.lane.b32.xlu0 %v566, 112
      %v928 = vpop.permute.xlu0 %927
      %929 = vrot.lane.b32.xlu0 %v567, 112
      %v930 = vpop.permute.xlu0 %929
      %v932 = vsel %vm572, %v928, 0
      %v935 = vsel %vm572, %v930, 0
      %937 = vmatprep.subr.bf16.mxu0 0
      %938 = vmatpush1.bf16.xpose.msra.mxu0 %v935
      %939 = vmatprep.subr.bf16.mxu0 0
      %940 = vmatpush1.bf16.xpose.msra.mxu0 0
      %941 = vmatprep.subr.bf16.mxu0 0
      %942 = vmatpush1.bf16.xpose.msra.mxu0 0
      %943 = vmatprep.subr.bf16.mxu0 0
      %944 = vmatpush1.bf16.xpose.msra.mxu0 0
      %945 = vmatprep.subr.bf16.mxu0 0
      %946 = vmatpush1.bf16.xpose.msra.mxu0 0
      %947 = vmatprep.subr.bf16.mxu0 0
      %948 = vmatpush1.bf16.xpose.msra.mxu0 0
      %949 = vmatprep.subr.bf16.mxu0 0
      %950 = vmatpush1.bf16.xpose.msra.mxu0 0
      %951 = vmatprep.subr.bf16.mxu0 0
      %952 = vmatpush1.bf16.xpose.msra.mxu0 0
      %953 = vmatprep.subr.bf16.mxu0 0
      %954 = vmatpush1.bf16.xpose.msra.mxu0 0
      %955 = vmatprep.subr.bf16.mxu0 0
      %956 = vmatpush1.bf16.xpose.msra.mxu0 0
      %957 = vmatprep.subr.bf16.mxu0 0
      %958 = vmatpush1.bf16.xpose.msra.mxu0 0
      %959 = vmatprep.subr.bf16.mxu0 0
      %960 = vmatpush1.bf16.xpose.msra.mxu0 0
      %961 = vmatprep.subr.bf16.mxu0 0
      %962 = vmatpush1.bf16.xpose.msra.mxu0 0
      %963 = vmatprep.subr.bf16.mxu0 0
      %964 = vmatpush1.bf16.xpose.msra.mxu0 0
      %965 = vmatprep.subr.bf16.mxu0 0
      %966 = vmatpush1.bf16.xpose.msra.mxu0 0
      %967 = vmatprep.subr.bf16.mxu0 0
      %968 = vmatpush1.bf16.xpose.msra.mxu0 0
      %969 = vmatprep.mubr.bf16.mxu0 0
      %970 = vmatmul.mubr.bf16.gmra.mrb[0].mxu0 %v932
      %v971 = vpop.f32.mrb[0].mxu0
      %v972 = vadd.f32 0.0, %v971
      %v973 = vpop.f32.mrb[0].mxu0
      %v974 = vpop.f32.mrb[0].mxu0
      %v975 = vadd.f32 0.0, %v974
      %v976 = vpop.f32.mrb[0].mxu0
      %977 = vdwg.mxu0
      %v978 = vmul.f32 %v972, 0.35355338
      %v979 = vmul.f32 %v975, 0.35355338
      %v980 = vsel %vm622, %v978, -10000.0
      %v981 = vsel %vm623, %v979, -10000.0
      %v982 = vsel %vm572, %v980, -inf
      %983 = vmax.xlane.f32.xlu0 %v982
      %v984 = vpop.xlane.xlu0 %983
      %v985 = vsel %vm629, %v981, -inf
      %986 = vmax.xlane.f32.xlu0 %v985
      %v987 = vpop.xlane.xlu0 %986
      %v988 = vsub.f32 %v980, %v984
      %v989 = vsub.f32 %v981, %v987
      %v990 = vmul.f32 %v988, 1.442695
      %v991 = vpow.pop %v990
      %v992 = vmul.f32 %v989, 1.442695
      %v993 = vpow.pop %v992
      %v994 = vsel %vm572, %v991, 0.0
      %995 = vadd.xlane.f32.xlu0 %v994
      %v996 = vpop.xlane.xlu0 %995
      %v997 = vsel %vm629, %v993, 0.0
      %998 = vadd.xlane.f32.xlu0 %v997
      %v999 = vpop.xlane.xlu0 %998
      %v1000 = vrcp.pop %v996
      %v1001 = vrcp.pop %v999
      %v1002 = vmul.f32 %v991, %v1000
      %v1003 = vmul.f32 %v993, %v1001
      %v1004 = vpack.c.bf16 %v1003, %v1002
      %1005 = vrot.lane.b32.xlu0 %v567, 80
      %v1006 = vpop.permute.xlu0 %1005
      %v1008 = vsel %vm572, %v1004, 0
      %v1011 = vsel %vm656, %v1006, 0
      %1013 = vmatprep.subr.bf16.mxu0 0
      %1014 = vmatpush1.bf16.msra.mxu0 %v1011
      %1015 = vmatprep.subr.bf16.mxu0 0
      %1016 = vmatpush1.bf16.msra.mxu0 0
      %1017 = vmatprep.subr.bf16.mxu0 0
      %1018 = vmatpush1.bf16.msra.mxu0 0
      %1019 = vmatprep.subr.bf16.mxu0 0
      %1020 = vmatpush1.bf16.msra.mxu0 0
      %1021 = vmatprep.subr.bf16.mxu0 0
      %1022 = vmatpush1.bf16.msra.mxu0 0
      %1023 = vmatprep.subr.bf16.mxu0 0
      %1024 = vmatpush1.bf16.msra.mxu0 0
      %1025 = vmatprep.subr.bf16.mxu0 0
      %1026 = vmatpush1.bf16.msra.mxu0 0
      %1027 = vmatprep.subr.bf16.mxu0 0
      %1028 = vmatpush1.bf16.msra.mxu0 0
      %1029 = vmatprep.subr.bf16.mxu0 0
      %1030 = vmatpush1.bf16.msra.mxu0 0
      %1031 = vmatprep.subr.bf16.mxu0 0
      %1032 = vmatpush1.bf16.msra.mxu0 0
      %1033 = vmatprep.subr.bf16.mxu0 0
      %1034 = vmatpush1.bf16.msra.mxu0 0
      %1035 = vmatprep.subr.bf16.mxu0 0
      %1036 = vmatpush1.bf16.msra.mxu0 0
      %1037 = vmatprep.subr.bf16.mxu0 0
      %1038 = vmatpush1.bf16.msra.mxu0 0
      %1039 = vmatprep.subr.bf16.mxu0 0
      %1040 = vmatpush1.bf16.msra.mxu0 0
      %1041 = vmatprep.subr.bf16.mxu0 0
      %1042 = vmatpush1.bf16.msra.mxu0 0
      %1043 = vmatprep.subr.bf16.mxu0 0
      %1044 = vmatpush1.bf16.msra.mxu0 0
      %1045 = vmatprep.mubr.bf16.mxu0 0
      %1046 = vmatmul.mubr.bf16.gmra.mrb[0].mxu0 %v1008
      %v1047 = vpop.f32.mrb[0].mxu0
      %v1048 = vadd.f32 0.0, %v1047
      %v1049 = vpop.f32.mrb[0].mxu0
      %v1050 = vpop.f32.mrb[0].mxu0
      %v1051 = vadd.f32 0.0, %v1050
      %v1052 = vpop.f32.mrb[0].mxu0
      %1053 = vdwg.mxu0
      %v1054 = vpack.c.bf16 %v1051, %v1048
      %v1055 = vpack.c.bf16 %v570, %v570
      %v1057 = vsel %vm572, %v1054, 0
      %v1060 = vsel %vm656, %v1055, 0
      %1062 = vmatprep.subr.bf16.mxu0 0
      %1063 = vmatpush1.bf16.msra.mxu0 %v1060
      %1064 = vmatprep.subr.bf16.mxu0 0
      %1065 = vmatpush1.bf16.msra.mxu0 0
      %1066 = vmatprep.subr.bf16.mxu0 0
      %1067 = vmatpush1.bf16.msra.mxu0 0
      %1068 = vmatprep.subr.bf16.mxu0 0
      %1069 = vmatpush1.bf16.msra.mxu0 0
      %1070 = vmatprep.subr.bf16.mxu0 0
      %1071 = vmatpush1.bf16.msra.mxu0 0
      %1072 = vmatprep.subr.bf16.mxu0 0
      %1073 = vmatpush1.bf16.msra.mxu0 0
      %1074 = vmatprep.subr.bf16.mxu0 0
      %1075 = vmatpush1.bf16.msra.mxu0 0
      %1076 = vmatprep.subr.bf16.mxu0 0
      %1077 = vmatpush1.bf16.msra.mxu0 0
      %1078 = vmatprep.subr.bf16.mxu0 0
      %1079 = vmatpush1.bf16.msra.mxu0 0
      %1080 = vmatprep.subr.bf16.mxu0 0
      %1081 = vmatpush1.bf16.msra.mxu0 0
      %1082 = vmatprep.subr.bf16.mxu0 0
      %1083 = vmatpush1.bf16.msra.mxu0 0
      %1084 = vmatprep.subr.bf16.mxu0 0
      %1085 = vmatpush1.bf16.msra.mxu0 0
      %1086 = vmatprep.subr.bf16.mxu0 0
      %1087 = vmatpush1.bf16.msra.mxu0 0
      %1088 = vmatprep.subr.bf16.mxu0 0
      %1089 = vmatpush1.bf16.msra.mxu0 0
      %1090 = vmatprep.subr.bf16.mxu0 0
      %1091 = vmatpush1.bf16.msra.mxu0 0
      %1092 = vmatprep.subr.bf16.mxu0 0
      %1093 = vmatpush1.bf16.msra.mxu0 0
      %1094 = vmatprep.mubr.bf16.mxu0 0
      %1095 = vmatmul.mubr.bf16.gmra.mrb[0].mxu0 %v1057
      %v1096 = vpop.f32.mrb[0].mxu0
      %v1097 = vadd.f32 0.0, %v1096
      %v1098 = vpop.f32.mrb[0].mxu0
      %v1099 = vpop.f32.mrb[0].mxu0
      %v1100 = vadd.f32 0.0, %v1099
      %v1101 = vpop.f32.mrb[0].mxu0
      %1102 = vdwg.mxu0
      %v1103 = vadd.f32 %v921, %v1097
      %v1104 = vadd.f32 %v924, %v1100
      %1105 = vrot.lane.b32.xlu0 %v566, 104
      %v1106 = vpop.permute.xlu0 %1105
      %1107 = vrot.lane.b32.xlu0 %v567, 104
      %v1108 = vpop.permute.xlu0 %1107
      %v1110 = vsel %vm572, %v1106, 0
      %v1113 = vsel %vm572, %v1108, 0
      %1115 = vmatprep.subr.bf16.mxu0 0
      %1116 = vmatpush1.bf16.xpose.msra.mxu0 %v1113
      %1117 = vmatprep.subr.bf16.mxu0 0
      %1118 = vmatpush1.bf16.xpose.msra.mxu0 0
      %1119 = vmatprep.subr.bf16.mxu0 0
      %1120 = vmatpush1.bf16.xpose.msra.mxu0 0
      %1121 = vmatprep.subr.bf16.mxu0 0
      %1122 = vmatpush1.bf16.xpose.msra.mxu0 0
      %1123 = vmatprep.subr.bf16.mxu0 0
      %1124 = vmatpush1.bf16.xpose.msra.mxu0 0
      %1125 = vmatprep.subr.bf16.mxu0 0
      %1126 = vmatpush1.bf16.xpose.msra.mxu0 0
      %1127 = vmatprep.subr.bf16.mxu0 0
      %1128 = vmatpush1.bf16.xpose.msra.mxu0 0
      %1129 = vmatprep.subr.bf16.mxu0 0
      %1130 = vmatpush1.bf16.xpose.msra.mxu0 0
      %1131 = vmatprep.subr.bf16.mxu0 0
      %1132 = vmatpush1.bf16.xpose.msra.mxu0 0
      %1133 = vmatprep.subr.bf16.mxu0 0
      %1134 = vmatpush1.bf16.xpose.msra.mxu0 0
      %1135 = vmatprep.subr.bf16.mxu0 0
      %1136 = vmatpush1.bf16.xpose.msra.mxu0 0
      %1137 = vmatprep.subr.bf16.mxu0 0
      %1138 = vmatpush1.bf16.xpose.msra.mxu0 0
      %1139 = vmatprep.subr.bf16.mxu0 0
      %1140 = vmatpush1.bf16.xpose.msra.mxu0 0
      %1141 = vmatprep.subr.bf16.mxu0 0
      %1142 = vmatpush1.bf16.xpose.msra.mxu0 0
      %1143 = vmatprep.subr.bf16.mxu0 0
      %1144 = vmatpush1.bf16.xpose.msra.mxu0 0
      %1145 = vmatprep.subr.bf16.mxu0 0
      %1146 = vmatpush1.bf16.xpose.msra.mxu0 0
      %1147 = vmatprep.mubr.bf16.mxu0 0
      %1148 = vmatmul.mubr.bf16.gmra.mrb[0].mxu0 %v1110
      %v1149 = vpop.f32.mrb[0].mxu0
      %v1150 = vadd.f32 0.0, %v1149
      %v1151 = vpop.f32.mrb[0].mxu0
      %v1152 = vpop.f32.mrb[0].mxu0
      %v1153 = vadd.f32 0.0, %v1152
      %v1154 = vpop.f32.mrb[0].mxu0
      %1155 = vdwg.mxu0
      %v1156 = vmul.f32 %v1150, 0.35355338
      %v1157 = vmul.f32 %v1153, 0.35355338
      %v1158 = vsel %vm622, %v1156, -10000.0
      %v1159 = vsel %vm623, %v1157, -10000.0
      %v1160 = vsel %vm572, %v1158, -inf
      %1161 = vmax.xlane.f32.xlu0 %v1160
      %v1162 = vpop.xlane.xlu0 %1161
      %v1163 = vsel %vm629, %v1159, -inf
      %1164 = vmax.xlane.f32.xlu0 %v1163
      %v1165 = vpop.xlane.xlu0 %1164
      %v1166 = vsub.f32 %v1158, %v1162
      %v1167 = vsub.f32 %v1159, %v1165
      %v1168 = vmul.f32 %v1166, 1.442695
      %v1169 = vpow.pop %v1168
      %v1170 = vmul.f32 %v1167, 1.442695
      %v1171 = vpow.pop %v1170
      %v1172 = vsel %vm572, %v1169, 0.0
      %1173 = vadd.xlane.f32.xlu0 %v1172
      %v1174 = vpop.xlane.xlu0 %1173
      %v1175 = vsel %vm629, %v1171, 0.0
      %1176 = vadd.xlane.f32.xlu0 %v1175
      %v1177 = vpop.xlane.xlu0 %1176
      %v1178 = vrcp.pop %v1174
      %v1179 = vrcp.pop %v1177
      %v1180 = vmul.f32 %v1169, %v1178
      %v1181 = vmul.f32 %v1171, %v1179
      %v1182 = vpack.c.bf16 %v1181, %v1180
      %1183 = vrot.lane.b32.xlu0 %v567, 72
      %v1184 = vpop.permute.xlu0 %1183
      %v1186 = vsel %vm572, %v1182, 0
      %v1189 = vsel %vm656, %v1184, 0
      %1191 = vmatprep.subr.bf16.mxu0 0
      %1192 = vmatpush1.bf16.msra.mxu0 %v1189
      %1193 = vmatprep.subr.bf16.mxu0 0
      %1194 = vmatpush1.bf16.msra.mxu0 0
      %1195 = vmatprep.subr.bf16.mxu0 0
      %1196 = vmatpush1.bf16.msra.mxu0 0
      %1197 = vmatprep.subr.bf16.mxu0 0
      %1198 = vmatpush1.bf16.msra.mxu0 0
      %1199 = vmatprep.subr.bf16.mxu0 0
      %1200 = vmatpush1.bf16.msra.mxu0 0
      %1201 = vmatprep.subr.bf16.mxu0 0
      %1202 = vmatpush1.bf16.msra.mxu0 0
      %1203 = vmatprep.subr.bf16.mxu0 0
      %1204 = vmatpush1.bf16.msra.mxu0 0
      %1205 = vmatprep.subr.bf16.mxu0 0
      %1206 = vmatpush1.bf16.msra.mxu0 0
      %1207 = vmatprep.subr.bf16.mxu0 0
      %1208 = vmatpush1.bf16.msra.mxu0 0
      %1209 = vmatprep.subr.bf16.mxu0 0
      %1210 = vmatpush1.bf16.msra.mxu0 0
      %1211 = vmatprep.subr.bf16.mxu0 0
      %1212 = vmatpush1.bf16.msra.mxu0 0
      %1213 = vmatprep.subr.bf16.mxu0 0
      %1214 = vmatpush1.bf16.msra.mxu0 0
      %1215 = vmatprep.subr.bf16.mxu0 0
      %1216 = vmatpush1.bf16.msra.mxu0 0
      %1217 = vmatprep.subr.bf16.mxu0 0
      %1218 = vmatpush1.bf16.msra.mxu0 0
      %1219 = vmatprep.subr.bf16.mxu0 0
      %1220 = vmatpush1.bf16.msra.mxu0 0
      %1221 = vmatprep.subr.bf16.mxu0 0
      %1222 = vmatpush1.bf16.msra.mxu0 0
      %1223 = vmatprep.mubr.bf16.mxu0 0
      %1224 = vmatmul.mubr.bf16.gmra.mrb[0].mxu0 %v1186
      %v1225 = vpop.f32.mrb[0].mxu0
      %v1226 = vadd.f32 0.0, %v1225
      %v1227 = vpop.f32.mrb[0].mxu0
      %v1228 = vpop.f32.mrb[0].mxu0
      %v1229 = vadd.f32 0.0, %v1228
      %v1230 = vpop.f32.mrb[0].mxu0
      %1231 = vdwg.mxu0
      %v1232 = vpack.c.bf16 %v1229, %v1226
      %v1233 = vpack.c.bf16 %v571, %v571
      %v1235 = vsel %vm572, %v1232, 0
      %v1238 = vsel %vm656, %v1233, 0
      %1240 = vmatprep.subr.bf16.mxu0 0
      %1241 = vmatpush1.bf16.msra.mxu0 %v1238
      %1242 = vmatprep.subr.bf16.mxu0 0
      %1243 = vmatpush1.bf16.msra.mxu0 0
      %1244 = vmatprep.subr.bf16.mxu0 0
      %1245 = vmatpush1.bf16.msra.mxu0 0
      %1246 = vmatprep.subr.bf16.mxu0 0
      %1247 = vmatpush1.bf16.msra.mxu0 0
      %1248 = vmatprep.subr.bf16.mxu0 0
      %1249 = vmatpush1.bf16.msra.mxu0 0
      %1250 = vmatprep.subr.bf16.mxu0 0
      %1251 = vmatpush1.bf16.msra.mxu0 0
      %1252 = vmatprep.subr.bf16.mxu0 0
      %1253 = vmatpush1.bf16.msra.mxu0 0
      %1254 = vmatprep.subr.bf16.mxu0 0
      %1255 = vmatpush1.bf16.msra.mxu0 0
      %1256 = vmatprep.subr.bf16.mxu0 0
      %1257 = vmatpush1.bf16.msra.mxu0 0
      %1258 = vmatprep.subr.bf16.mxu0 0
      %1259 = vmatpush1.bf16.msra.mxu0 0
      %1260 = vmatprep.subr.bf16.mxu0 0
      %1261 = vmatpush1.bf16.msra.mxu0 0
      %1262 = vmatprep.subr.bf16.mxu0 0
      %1263 = vmatpush1.bf16.msra.mxu0 0
      %1264 = vmatprep.subr.bf16.mxu0 0
      %1265 = vmatpush1.bf16.msra.mxu0 0
      %1266 = vmatprep.subr.bf16.mxu0 0
      %1267 = vmatpush1.bf16.msra.mxu0 0
      %1268 = vmatprep.subr.bf16.mxu0 0
      %1269 = vmatpush1.bf16.msra.mxu0 0
      %1270 = vmatprep.subr.bf16.mxu0 0
      %1271 = vmatpush1.bf16.msra.mxu0 0
      %1272 = vmatprep.mubr.bf16.mxu0 0
      %1273 = vmatmul.mubr.bf16.gmra.mrb[0].mxu0 %v1235
      %v1274 = vpop.f32.mrb[0].mxu0
      %v1275 = vadd.f32 0.0, %v1274
      %v1276 = vpop.f32.mrb[0].mxu0
      %v1277 = vpop.f32.mrb[0].mxu0
      %v1278 = vadd.f32 0.0, %v1277
      %v1279 = vpop.f32.mrb[0].mxu0
      %1280 = vdwg.mxu0
      %v1281 = vadd.f32 %v1103, %v1275
      %v1282 = vadd.f32 %v1104, %v1278
      %v1283 = vld [vmem:[%s8] sm:$0x1]
      %v1285 = vlaneseq
      %v1286 = vshrl.u32 %v1285, 7
      %v1287 = vsub.s32 0, %v1286
      %v1288 = vrot.slane %v1283, %v1287
      %v1290 = vadd.f32 %v1281, %v1288
      %v1291 = vadd.f32 %v1282, %v1288
      %v1292 = vadd.f32 %v425, %v1290
      %v1293 = vadd.f32 %v426, %v1291
      %v1294 = vsel %vm454, %v1292, 0.0
      %1295 = vadd.xlane.f32.xlu0 %v1294
      %v1296 = vpop.xlane.xlu0 %1295
      %vm1297 = vcmask 256000
      %v1298 = vsel %vm1297, %v1293, 0.0
      %1299 = vadd.xlane.f32.xlu0 %v1298
      %v1300 = vpop.xlane.xlu0 %1299
      %v1301 = vrcp.pop 32.0
      %v1302 = vmul.f32 %v1296, %v1301
      %v1303 = vmul.f32 %v1300, %v1301
      %v1304 = vsub.f32 %v1292, %v1302
      %v1305 = vsub.f32 %v1293, %v1303
      %v1306 = vmul.f32 %v1304, %v1304
      %v1307 = vmul.f32 %v1305, %v1305
      %v1308 = vsel %vm454, %v1306, 0.0
      %1309 = vadd.xlane.f32.xlu0 %v1308
      %v1310 = vpop.xlane.xlu0 %1309
      %v1311 = vsel %vm1297, %v1307, 0.0
      %1312 = vadd.xlane.f32.xlu0 %v1311
      %v1313 = vpop.xlane.xlu0 %1312
      %v1314 = vmul.f32 %v1310, %v1301
      %v1315 = vmul.f32 %v1313, %v1301
      %v1316 = vadd.f32 %v1314, 1e-12
      %v1317 = vadd.f32 %v1315, 1e-12
      %v1318 = vrsqrt.pop %v1316
      %v1319 = vrsqrt.pop %v1317
      %v1320 = vmul.f32 %v1304, %v1318
      %v1321 = vmul.f32 %v1305, %v1319
      %v1322 = vld [vmem:[%s9] sm:$0x1]
      %v1324 = vlaneseq
      %v1325 = vshrl.u32 %v1324, 7
      %v1326 = vsub.s32 0, %v1325
      %v1327 = vrot.slane %v1322, %v1326
      %v1329 = vmul.f32 %v1320, %v1327
      %v1330 = vmul.f32 %v1321, %v1327
      %v1331 = vld [vmem:[%s10] sm:$0x1]
      %v1333 = vlaneseq
      %v1334 = vshrl.u32 %v1333, 7
      %v1335 = vsub.s32 0, %v1334
      %v1336 = vrot.slane %v1331, %v1335
      %v1338 = vadd.f32 %v1329, %v1336
      %v1339 = vadd.f32 %v1330, %v1336
      %1340 = vst.msk [vmem:[%s423] sm:$0xff] %vm454, %v1338
      %1341 = vst.msk [vmem:[%s423 + $0x8] sm:$0x7] %vm1297, %v1339
      %p1342 = scmp.lt.s32.totalorder %s22, 1
      %s1343 = scalar_select %p1342, %s22, 1
      %s1344 = smul.addr %s1343, 2
      %s1345 = smul.addr %s1344, 8
      %s1346 = scalar_lea.vmem %s11, %s1345
      // Predicated region
      $region65: #{_lambda_.9} parent=63 // pred_check
        %p1347 = pneg %p286
      $region66: #{_lambda_.9} parent=63 // pred_check_branch
        %1349 = sbr.rel (%p1347) target = $region68
      $region67: #{_lambda_.9} parent=63 // pred_region
        _
      $region68: #{_lambda_.9} parent=63 // pred_fallthru
        _
    $region64: #{_lambda_.9} parent=5 // pred_fallthru
      _
    %p1350 = scmp.le.s32.totalorder 2, %s17
    // Predicated region
    $region69: #{_lambda_.9} parent=5 // pred_check
      %p1351 = pneg %p1350
    $region70: #{_lambda_.9} parent=5 // pred_check_branch
      %1353 = sbr.rel (%p1351) target = $region72
    $region71: #{_lambda_.9} parent=5 // pred_region
      %s1354 = ssub.s32 %s17, 2
      // Predicated region
      $region73: #{_lambda_.9} parent=71 // pred_check
        %p1355 = pneg %p292
      $region74: #{_lambda_.9} parent=71 // pred_check_branch
        %1357 = sbr.rel (%p1355) target = $region76
      $region75: #{_lambda_.9} parent=71 // pred_region
        %p1358 = scmp.lt.s32.totalorder %s23, 1
        %s1359 = scalar_select %p1358, %s23, 1
        %s1360 = smul.addr %s1359, 2
        %s1361 = smul.addr %s1360, 8
        %s1362 = scalar_lea.vmem %s11, %s1361
      $region76: #{_lambda_.9} parent=71 // pred_fallthru
        _
    $region72: #{_lambda_.9} parent=5 // pred_fallthru
      _
  $region6: #{_lambda_.9} parent=0 // loop_footer
    %s21 = sadd.s32 1, %s17
  $region7: #{_lambda_.9} parent=0 // loop_footer_branch
    %16 = sbr.rel target = $region3
  $region8: #{_lambda_.9} parent=0 // loop_exit
    _

// kernel: _lambda_.10
$region0: #{_lambda_.10}
  #allocation0 [shape = 'u32[]', space=smem, size = 0x4, offset = 0x4, fixed_abs, tag = 'smem constant byte address 0x4 - core index']
  #allocation1 [shape = 'u32[144,128]{1,0:T(1,128)}', space=vmem, size = 0x12000, scoped, tag = 'internal scratch']
  %s0 = inlined_call_operand.vmem [shape: f32[2,11,32], index: 0, kind: input, shape index: {}]
  %s1 = inlined_call_operand.vmem [shape: bf16[32,64], index: 1, kind: input, shape index: {}]
  %s2 = inlined_call_operand.vmem [shape: f32[1,64], index: 2, kind: input, shape index: {}]
  %s3 = inlined_call_operand.vmem [shape: bf16[64,32], index: 3, kind: input, shape index: {}]
  %s4 = inlined_call_operand.vmem [shape: f32[1,32], index: 4, kind: input, shape index: {}]
  %s5 = inlined_call_operand.vmem [shape: f32[1,32], index: 5, kind: input, shape index: {}]
  %s6 = inlined_call_operand.vmem [shape: f32[1,32], index: 6, kind: input, shape index: {}]
  %s7 = inlined_call_operand.vmem [shape: f32[2,11,32], index: 7, kind: output, shape index: {}]
  %s8 = sld [smem:[#allocation0]]
  $region61: #{_lambda_.10} parent=0
    _
  %s10 = ssub.s32 1, %s8
  %s11 = scalar_select 0, %s10, %s8
  loop: start=0, step=1, limit=4
  $region2: #{_lambda_.10} parent=0 // loop_pre_header
    _
  $region3: #{_lambda_.10} parent=0 // loop_header
    %s13 = sphi 0, %s17
    %p14 = scmp.ge.s32.totalorder %s13, 4
    %s23 = sphi 0, %s25
    %s26 = sphi 0, %s23
    %s27 = sphi 0, %s26
    %s43 = sphi 0, %s27
    %s47 = sphi 0, %s47
    %s49 = sphi 0, %s47
    %s50 = sphi 0, %s49
    %s64 = sphi 0, %s50
    %s68 = sphi 0, %s68
    %s70 = sphi 0, %s68
    %s71 = sphi 0, %s70
    %s85 = sphi 0, %s71
    %s89 = sphi 0, %s89
    %s91 = sphi 0, %s89
    %s92 = sphi 0, %s91
    %s106 = sphi 0, %s92
    %s110 = sphi 0, %s110
    %s112 = sphi 0, %s110
    %s113 = sphi 0, %s112
    %s127 = sphi 0, %s113
    %s131 = sphi 0, %s131
    %s133 = sphi 0, %s131
    %s134 = sphi 0, %s133
    %s148 = sphi 0, %s134
    %s152 = sphi 0, %s152
    %s154 = sphi 0, %s152
    %s155 = sphi 0, %s154
    %s169 = sphi 0, %s155
    %s175 = sphi 0, %s177
    %s178 = sphi 0, %s175
    %s179 = sphi 0, %s178
    %s195 = sphi 0, %s179
  $region4: #{_lambda_.10} parent=0 // loop_header_branch
    %16 = sbr.rel (%p14) target = $region8
  $region5: #{_lambda_.10} parent=0 // loop_body
    %s18 = ssub.s32 %s13, 1
    %s19 = ssub.s32 %s13, 2
    %s20 = sadd.s32 %s13, 1
    %s21 = ssub.s32 %s13, %s20
    %p22 = scmp.eq.s32.totalorder %s21, 0
    %s24 = sadd.s32 %s23, 1
    %s25 = scalar_select %p22, %s23, %s24
    %p28 = pneg %p22
    %p29 = scmp.eq.s32.totalorder %s13, 1
    %p30 = por %p28, %p29
    %p31 = scmp.ne.s32.totalorder %s23, %s26
    %p32 = scmp.eq.s32.totalorder %s13, 0
    %p33 = por %p31, %p32
    %p34 = scmp.ne.s32.totalorder %s23, %s26
    %p35 = scmp.eq.s32.totalorder %s18, 1
    %p36 = por %p34, %p35
    %p37 = scmp.ne.s32.totalorder %s26, %s27
    %p38 = scmp.eq.s32.totalorder %s18, 0
    %p39 = por %p37, %p38
    %p40 = scmp.ne.s32.totalorder %s26, %s27
    %p41 = scmp.eq.s32.totalorder %s19, 1
    %p42 = por %p40, %p41
    %p44 = scmp.ne.s32.totalorder %s27, %s43
    %p45 = scmp.eq.s32.totalorder %s19, 0
    %p46 = por %p44, %p45
    %s48 = sadd.s32 %s47, 1
    %p51 = scmp.eq.s32.totalorder %s13, 1
    %p52 = scmp.ne.s32.totalorder %s47, %s49
    %p53 = scmp.eq.s32.totalorder %s13, 0
    %p54 = por %p52, %p53
    %p55 = scmp.ne.s32.totalorder %s47, %s49
    %p56 = scmp.eq.s32.totalorder %s18, 1
    %p57 = por %p55, %p56
    %p58 = scmp.ne.s32.totalorder %s49, %s50
    %p59 = scmp.eq.s32.totalorder %s18, 0
    %p60 = por %p58, %p59
    %p61 = scmp.ne.s32.totalorder %s49, %s50
    %p62 = scmp.eq.s32.totalorder %s19, 1
    %p63 = por %p61, %p62
    %p65 = scmp.ne.s32.totalorder %s50, %s64
    %p66 = scmp.eq.s32.totalorder %s19, 0
    %p67 = por %p65, %p66
    %s69 = sadd.s32 %s68, 1
    %p72 = scmp.eq.s32.totalorder %s13, 1
    %p73 = scmp.ne.s32.totalorder %s68, %s70
    %p74 = scmp.eq.s32.totalorder %s13, 0
    %p75 = por %p73, %p74
    %p76 = scmp.ne.s32.totalorder %s68, %s70
    %p77 = scmp.eq.s32.totalorder %s18, 1
    %p78 = por %p76, %p77
    %p79 = scmp.ne.s32.totalorder %s70, %s71
    %p80 = scmp.eq.s32.totalorder %s18, 0
    %p81 = por %p79, %p80
    %p82 = scmp.ne.s32.totalorder %s70, %s71
    %p83 = scmp.eq.s32.totalorder %s19, 1
    %p84 = por %p82, %p83
    %p86 = scmp.ne.s32.totalorder %s71, %s85
    %p87 = scmp.eq.s32.totalorder %s19, 0
    %p88 = por %p86, %p87
    %s90 = sadd.s32 %s89, 1
    %p93 = scmp.eq.s32.totalorder %s13, 1
    %p94 = scmp.ne.s32.totalorder %s89, %s91
    %p95 = scmp.eq.s32.totalorder %s13, 0
    %p96 = por %p94, %p95
    %p97 = scmp.ne.s32.totalorder %s89, %s91
    %p98 = scmp.eq.s32.totalorder %s18, 1
    %p99 = por %p97, %p98
    %p100 = scmp.ne.s32.totalorder %s91, %s92
    %p101 = scmp.eq.s32.totalorder %s18, 0
    %p102 = por %p100, %p101
    %p103 = scmp.ne.s32.totalorder %s91, %s92
    %p104 = scmp.eq.s32.totalorder %s19, 1
    %p105 = por %p103, %p104
    %p107 = scmp.ne.s32.totalorder %s92, %s106
    %p108 = scmp.eq.s32.totalorder %s19, 0
    %p109 = por %p107, %p108
    %s111 = sadd.s32 %s110, 1
    %p114 = scmp.eq.s32.totalorder %s13, 1
    %p115 = scmp.ne.s32.totalorder %s110, %s112
    %p116 = scmp.eq.s32.totalorder %s13, 0
    %p117 = por %p115, %p116
    %p118 = scmp.ne.s32.totalorder %s110, %s112
    %p119 = scmp.eq.s32.totalorder %s18, 1
    %p120 = por %p118, %p119
    %p121 = scmp.ne.s32.totalorder %s112, %s113
    %p122 = scmp.eq.s32.totalorder %s18, 0
    %p123 = por %p121, %p122
    %p124 = scmp.ne.s32.totalorder %s112, %s113
    %p125 = scmp.eq.s32.totalorder %s19, 1
    %p126 = por %p124, %p125
    %p128 = scmp.ne.s32.totalorder %s113, %s127
    %p129 = scmp.eq.s32.totalorder %s19, 0
    %p130 = por %p128, %p129
    %s132 = sadd.s32 %s131, 1
    %p135 = scmp.eq.s32.totalorder %s13, 1
    %p136 = scmp.ne.s32.totalorder %s131, %s133
    %p137 = scmp.eq.s32.totalorder %s13, 0
    %p138 = por %p136, %p137
    %p139 = scmp.ne.s32.totalorder %s131, %s133
    %p140 = scmp.eq.s32.totalorder %s18, 1
    %p141 = por %p139, %p140
    %p142 = scmp.ne.s32.totalorder %s133, %s134
    %p143 = scmp.eq.s32.totalorder %s18, 0
    %p144 = por %p142, %p143
    %p145 = scmp.ne.s32.totalorder %s133, %s134
    %p146 = scmp.eq.s32.totalorder %s19, 1
    %p147 = por %p145, %p146
    %p149 = scmp.ne.s32.totalorder %s134, %s148
    %p150 = scmp.eq.s32.totalorder %s19, 0
    %p151 = por %p149, %p150
    %s153 = sadd.s32 %s152, 1
    %p156 = scmp.eq.s32.totalorder %s13, 1
    %p157 = scmp.ne.s32.totalorder %s152, %s154
    %p158 = scmp.eq.s32.totalorder %s13, 0
    %p159 = por %p157, %p158
    %p160 = scmp.ne.s32.totalorder %s152, %s154
    %p161 = scmp.eq.s32.totalorder %s18, 1
    %p162 = por %p160, %p161
    %p163 = scmp.ne.s32.totalorder %s154, %s155
    %p164 = scmp.eq.s32.totalorder %s18, 0
    %p165 = por %p163, %p164
    %p166 = scmp.ne.s32.totalorder %s154, %s155
    %p167 = scmp.eq.s32.totalorder %s19, 1
    %p168 = por %p166, %p167
    %p170 = scmp.ne.s32.totalorder %s155, %s169
    %p171 = scmp.eq.s32.totalorder %s19, 0
    %p172 = por %p170, %p171
    %s173 = ssub.s32 %s13, %s20
    %p174 = scmp.eq.s32.totalorder %s173, 0
    %s176 = sadd.s32 %s175, 1
    %s177 = scalar_select %p174, %s175, %s176
    %p180 = pneg %p174
    %p181 = scmp.eq.s32.totalorder %s13, 1
    %p182 = por %p180, %p181
    %p183 = scmp.ne.s32.totalorder %s175, %s178
    %p184 = scmp.eq.s32.totalorder %s13, 0
    %p185 = por %p183, %p184
    %p186 = scmp.ne.s32.totalorder %s175, %s178
    %p187 = scmp.eq.s32.totalorder %s18, 1
    %p188 = por %p186, %p187
    %p189 = scmp.ne.s32.totalorder %s178, %s179
    %p190 = scmp.eq.s32.totalorder %s18, 0
    %p191 = por %p189, %p190
    %p192 = scmp.ne.s32.totalorder %s178, %s179
    %p193 = scmp.eq.s32.totalorder %s19, 1
    %p194 = por %p192, %p193
    %p196 = scmp.ne.s32.totalorder %s179, %s195
    %p197 = scmp.eq.s32.totalorder %s19, 0
    %p198 = por %p196, %p197
    %p199 = scmp.le.s32.totalorder 1, %s13
    %p200 = scmp.lt.s32.totalorder %s13, 3
    %p201 = pnand %p199, %p200
    %p202 = pneg %p201
    // Predicated region
    $region9: #{_lambda_.10} parent=5 // pred_check
      _
    $region10: #{_lambda_.10} parent=5 // pred_check_branch
      %204 = sbr.rel (%p201) target = $region12
    $region11: #{_lambda_.10} parent=5 // pred_region
      %s205 = ssub.s32 %s13, 1
      // Predicated region
      $region13: #{_lambda_.10} parent=11 // pred_check
        %p206 = pneg %p60
      $region14: #{_lambda_.10} parent=11 // pred_check_branch
        %208 = sbr.rel (%p206) target = $region16
      $region15: #{_lambda_.10} parent=11 // pred_region
        _
      $region16: #{_lambda_.10} parent=11 // pred_fallthru
        _
      // Predicated region
      $region17: #{_lambda_.10} parent=11 // pred_check
        %p209 = pneg %p81
      $region18: #{_lambda_.10} parent=11 // pred_check_branch
        %211 = sbr.rel (%p209) target = $region20
      $region19: #{_lambda_.10} parent=11 // pred_region
        _
      $region20: #{_lambda_.10} parent=11 // pred_fallthru
        _
      // Predicated region
      $region21: #{_lambda_.10} parent=11 // pred_check
        %p212 = pneg %p102
      $region22: #{_lambda_.10} parent=11 // pred_check_branch
        %214 = sbr.rel (%p212) target = $region24
      $region23: #{_lambda_.10} parent=11 // pred_region
        _
      $region24: #{_lambda_.10} parent=11 // pred_fallthru
        _
      // Predicated region
      $region25: #{_lambda_.10} parent=11 // pred_check
        %p215 = pneg %p123
      $region26: #{_lambda_.10} parent=11 // pred_check_branch
        %217 = sbr.rel (%p215) target = $region28
      $region27: #{_lambda_.10} parent=11 // pred_region
        _
      $region28: #{_lambda_.10} parent=11 // pred_fallthru
        _
      // Predicated region
      $region29: #{_lambda_.10} parent=11 // pred_check
        %p218 = pneg %p144
      $region30: #{_lambda_.10} parent=11 // pred_check_branch
        %220 = sbr.rel (%p218) target = $region32
      $region31: #{_lambda_.10} parent=11 // pred_region
        _
      $region32: #{_lambda_.10} parent=11 // pred_fallthru
        _
      // Predicated region
      $region33: #{_lambda_.10} parent=11 // pred_check
        %p221 = pneg %p165
      $region34: #{_lambda_.10} parent=11 // pred_check_branch
        %223 = sbr.rel (%p221) target = $region36
      $region35: #{_lambda_.10} parent=11 // pred_region
        _
      $region36: #{_lambda_.10} parent=11 // pred_fallthru
        _
    $region12: #{_lambda_.10} parent=5 // pred_fallthru
      _
    %p224 = scmp.lt.s32.totalorder %s13, 2
    // Predicated region
    $region37: #{_lambda_.10} parent=5 // pred_check
      %p225 = pneg %p224
    $region38: #{_lambda_.10} parent=5 // pred_check_branch
      %227 = sbr.rel (%p225) target = $region40
    $region39: #{_lambda_.10} parent=5 // pred_region
      // Predicated region
      $region41: #{_lambda_.10} parent=39 // pred_check
        %p228 = pneg %p33
      $region42: #{_lambda_.10} parent=39 // pred_check_branch
        %230 = sbr.rel (%p228) target = $region44
      $region43: #{_lambda_.10} parent=39 // pred_region
        %p231 = scmp.lt.s32.totalorder %s13, 1
        %s232 = scalar_select %p231, %s13, 1
        %s233 = smul.addr %s232, 2
        %s234 = smul.addr %s233, 8
        %s235 = scalar_lea.vmem %s0, %s234
      $region44: #{_lambda_.10} parent=39 // pred_fallthru
        _
    $region40: #{_lambda_.10} parent=5 // pred_fallthru
      _
    %p236 = scmp.le.s32.totalorder 1, %s13
    %p237 = scmp.lt.s32.totalorder %s13, 3
    %p238 = pnand %p236, %p237
    %p239 = pneg %p238
    // Predicated region
    $region45: #{_lambda_.10} parent=5 // pred_check
      _
    $region46: #{_lambda_.10} parent=5 // pred_check_branch
      %241 = sbr.rel (%p238) target = $region48
    $region47: #{_lambda_.10} parent=5 // pred_region
      %s242 = ssub.s32 %s13, 1
      %p243 = scmp.lt.s32.totalorder %s18, 1
      %s244 = scalar_select %p243, %s18, 1
      %s245 = smul.addr %s244, 2
      %s246 = smul.addr %s245, 8
      %s247 = scalar_lea.vmem %s0, %s246
      %p248 = pneg %p39
      %p249 = pneg %p36
      %p250 = pneg %p60
      %p251 = pneg %p57
      %p252 = pneg %p81
      %p253 = pneg %p78
      %p254 = pneg %p102
      %p255 = pneg %p99
      %p256 = pneg %p123
      %p257 = pneg %p120
      %p258 = pneg %p144
      %p259 = pneg %p141
      %p260 = pneg %p165
      %p261 = pneg %p162
      %p262 = pneg %p191
      %p263 = pneg %p188
      %p264 = scmp.lt.s32.totalorder %s18, 1
      %s265 = scalar_select %p264, %s18, 1
      %s266 = smul.addr %s265, 2
      %s267 = smul.addr %s266, 8
      %s268 = scalar_lea.vmem %s7, %s267
      %p269 = scmp.lt.s32.totalorder %s18, 1
      %s270 = scalar_select %p269, %s18, 1
      %s271 = smul.addr %s270, 2
      %s272 = smul.addr %s271, 8
      %s273 = scalar_lea.vmem %s0, %s272
      %p274 = scmp.lt.s32.totalorder %s18, 1
      %s275 = scalar_select %p274, %s18, 1
      %s276 = smul.addr %s275, 2
      %s277 = smul.addr %s276, 8
      %s278 = scalar_lea.vmem %s7, %s277
      %v280 = vld [vmem:[%s273] sm:$0xff]
      %v281 = vld [vmem:[%s273 + $0x8] sm:$0x7]
      %v282 = vpack.c.bf16 %v281, %v280
      %v283 = vld [vmem:[%s1] sm:$0xf]
      %v284 = vld [vmem:[%s1 + $0x4] sm:$0xf]
      %v285 = vld [vmem:[%s1 + $0x8] sm:$0xf]
      %v286 = vld [vmem:[%s1 + $0xc] sm:$0xf]
      %v287 = vld [vmem:[%s2] sm:$0x1]
      %v289 = vlaneseq
      %v290 = vshrl.u32 %v289, 7
      %v291 = vsub.s32 0, %v290
      %v292 = vrot.slane %v287, %v291
      %v298 = vunpack.c.l.b16 %v283
      %v299 = vunpack.c.l.b16 %v284
      %v300 = vunpack.c.l.b16 %v285
      %v301 = vunpack.c.l.b16 %v286
      %v302 = vpack.c.b16 %v299, %v298
      %v303 = vpack.c.b16 %v301, %v300
      %vm306 = vcmask 261120
      %v308 = vsel %vm306, %v282, 0
      %310 = vmatprep.subr.bf16.mxu0 0
      %311 = vmatpush1.bf16.msra.mxu0 %v302
      %312 = vmatprep.subr.bf16.mxu0 0
      %313 = vmatpush1.bf16.msra.mxu0 %v303
      %314 = vmatprep.subr.bf16.mxu0 0
      %315 = vmatpush1.bf16.msra.mxu0 0
      %316 = vmatprep.subr.bf16.mxu0 0
      %317 = vmatpush1.bf16.msra.mxu0 0
      %318 = vmatprep.subr.bf16.mxu0 0
      %319 = vmatpush1.bf16.msra.mxu0 0
      %320 = vmatprep.subr.bf16.mxu0 0
      %321 = vmatpush1.bf16.msra.mxu0 0
      %322 = vmatprep.subr.bf16.mxu0 0
      %323 = vmatpush1.bf16.msra.mxu0 0
      %324 = vmatprep.subr.bf16.mxu0 0
      %325 = vmatpush1.bf16.msra.mxu0 0
      %326 = vmatprep.subr.bf16.mxu0 0
      %327 = vmatpush1.bf16.msra.mxu0 0
      %328 = vmatprep.subr.bf16.mxu0 0
      %329 = vmatpush1.bf16.msra.mxu0 0
      %330 = vmatprep.subr.bf16.mxu0 0
      %331 = vmatpush1.bf16.msra.mxu0 0
      %332 = vmatprep.subr.bf16.mxu0 0
      %333 = vmatpush1.bf16.msra.mxu0 0
      %334 = vmatprep.subr.bf16.mxu0 0
      %335 = vmatpush1.bf16.msra.mxu0 0
      %336 = vmatprep.subr.bf16.mxu0 0
      %337 = vmatpush1.bf16.msra.mxu0 0
      %338 = vmatprep.subr.bf16.mxu0 0
      %339 = vmatpush1.bf16.msra.mxu0 0
      %340 = vmatprep.subr.bf16.mxu0 0
      %341 = vmatpush1.bf16.msra.mxu0 0
      %342 = vmatprep.mubr.bf16.mxu0 0
      %343 = vmatmul.mubr.bf16.gmra.mrb[0].mxu0 %v308
      %v344 = vpop.f32.mrb[0].mxu0
      %v345 = vadd.f32 %v292, %v344
      %v346 = vpop.f32.mrb[0].mxu0
      %v347 = vpop.f32.mrb[0].mxu0
      %v348 = vadd.f32 %v292, %v347
      %v349 = vpop.f32.mrb[0].mxu0
      %350 = vdwg.mxu0
      %v351 = vmax.f32 %v345, 0.0
      %v352 = vmax.f32 %v348, 0.0
      %v353 = vpack.c.bf16 %v352, %v351
      %v354 = vld [vmem:[%s3] sm:$0xf]
      %v355 = vld [vmem:[%s3 + $0x4] sm:$0xf]
      %v356 = vld [vmem:[%s3 + $0x8] sm:$0xf]
      %v357 = vld [vmem:[%s3 + $0xc] sm:$0xf]
      %v358 = vld [vmem:[%s3 + $0x10] sm:$0xf]
      %v359 = vld [vmem:[%s3 + $0x14] sm:$0xf]
      %v360 = vld [vmem:[%s3 + $0x18] sm:$0xf]
      %v361 = vld [vmem:[%s3 + $0x1c] sm:$0xf]
      %v362 = vld [vmem:[%s4] sm:$0x1]
      %v364 = vlaneseq
      %v365 = vshrl.u32 %v364, 7
      %v366 = vsub.s32 0, %v365
      %v367 = vrot.slane %v362, %v366
      %v377 = vunpack.c.l.b16 %v354
      %v378 = vunpack.c.l.b16 %v355
      %v379 = vunpack.c.l.b16 %v356
      %v380 = vunpack.c.l.b16 %v357
      %v381 = vunpack.c.l.b16 %v358
      %v382 = vunpack.c.l.b16 %v359
      %v383 = vunpack.c.l.b16 %v360
      %v384 = vunpack.c.l.b16 %v361
      %v385 = vpack.c.b16 %v378, %v377
      %v386 = vpack.c.b16 %v380, %v379
      %v387 = vpack.c.b16 %v382, %v381
      %v388 = vpack.c.b16 %v384, %v383
      %vm393 = vcmask 523264
      %v395 = vsel %vm393, %v353, 0
      %397 = vmatprep.subr.bf16.mxu0 0
      %398 = vmatpush1.bf16.msra.mxu0 %v385
      %399 = vmatprep.subr.bf16.mxu0 0
      %400 = vmatpush1.bf16.msra.mxu0 %v386
      %401 = vmatprep.subr.bf16.mxu0 0
      %402 = vmatpush1.bf16.msra.mxu0 %v387
      %403 = vmatprep.subr.bf16.mxu0 0
      %404 = vmatpush1.bf16.msra.mxu0 %v388
      %405 = vmatprep.subr.bf16.mxu0 0
      %406 = vmatpush1.bf16.msra.mxu0 0
      %407 = vmatprep.subr.bf16.mxu0 0
      %408 = vmatpush1.bf16.msra.mxu0 0
      %409 = vmatprep.subr.bf16.mxu0 0
      %410 = vmatpush1.bf16.msra.mxu0 0
      %411 = vmatprep.subr.bf16.mxu0 0
      %412 = vmatpush1.bf16.msra.mxu0 0
      %413 = vmatprep.subr.bf16.mxu0 0
      %414 = vmatpush1.bf16.msra.mxu0 0
      %415 = vmatprep.subr.bf16.mxu0 0
      %416 = vmatpush1.bf16.msra.mxu0 0
      %417 = vmatprep.subr.bf16.mxu0 0
      %418 = vmatpush1.bf16.msra.mxu0 0
      %419 = vmatprep.subr.bf16.mxu0 0
      %420 = vmatpush1.bf16.msra.mxu0 0
      %421 = vmatprep.subr.bf16.mxu0 0
      %422 = vmatpush1.bf16.msra.mxu0 0
      %423 = vmatprep.subr.bf16.mxu0 0
      %424 = vmatpush1.bf16.msra.mxu0 0
      %425 = vmatprep.subr.bf16.mxu0 0
      %426 = vmatpush1.bf16.msra.mxu0 0
      %427 = vmatprep.subr.bf16.mxu0 0
      %428 = vmatpush1.bf16.msra.mxu0 0
      %429 = vmatprep.mubr.bf16.mxu0 0
      %430 = vmatmul.mubr.bf16.gmra.mrb[0].mxu0 %v395
      %v431 = vpop.f32.mrb[0].mxu0
      %v432 = vadd.f32 %v367, %v431
      %v433 = vpop.f32.mrb[0].mxu0
      %v434 = vpop.f32.mrb[0].mxu0
      %v435 = vadd.f32 %v367, %v434
      %v436 = vpop.f32.mrb[0].mxu0
      %437 = vdwg.mxu0
      %v438 = vadd.f32 %v280, %v432
      %v439 = vadd.f32 %v281, %v435
      %v440 = vsel %vm306, %v438, 0.0
      %441 = vadd.xlane.f32.xlu0 %v440
      %v442 = vpop.xlane.xlu0 %441
      %vm443 = vcmask 256000
      %v444 = vsel %vm443, %v439, 0.0
      %445 = vadd.xlane.f32.xlu0 %v444
      %v446 = vpop.xlane.xlu0 %445
      %v447 = vrcp.pop 32.0
      %v448 = vmul.f32 %v442, %v447
      %v449 = vmul.f32 %v446, %v447
      %v450 = vsub.f32 %v438, %v448
      %v451 = vsub.f32 %v439, %v449
      %v452 = vmul.f32 %v450, %v450
      %v453 = vmul.f32 %v451, %v451
      %v454 = vsel %vm306, %v452, 0.0
      %455 = vadd.xlane.f32.xlu0 %v454
      %v456 = vpop.xlane.xlu0 %455
      %v457 = vsel %vm443, %v453, 0.0
      %458 = vadd.xlane.f32.xlu0 %v457
      %v459 = vpop.xlane.xlu0 %458
      %v460 = vmul.f32 %v456, %v447
      %v461 = vmul.f32 %v459, %v447
      %v462 = vadd.f32 %v460, 1e-12
      %v463 = vadd.f32 %v461, 1e-12
      %v464 = vrsqrt.pop %v462
      %v465 = vrsqrt.pop %v463
      %v466 = vmul.f32 %v450, %v464
      %v467 = vmul.f32 %v451, %v465
      %v468 = vld [vmem:[%s5] sm:$0x1]
      %v470 = vlaneseq
      %v471 = vshrl.u32 %v470, 7
      %v472 = vsub.s32 0, %v471
      %v473 = vrot.slane %v468, %v472
      %v475 = vmul.f32 %v466, %v473
      %v476 = vmul.f32 %v467, %v473
      %v477 = vld [vmem:[%s6] sm:$0x1]
      %v479 = vlaneseq
      %v480 = vshrl.u32 %v479, 7
      %v481 = vsub.s32 0, %v480
      %v482 = vrot.slane %v477, %v481
      %v484 = vadd.f32 %v475, %v482
      %v485 = vadd.f32 %v476, %v482
      %486 = vst.msk [vmem:[%s278] sm:$0xff] %vm306, %v484
      %487 = vst.msk [vmem:[%s278 + $0x8] sm:$0x7] %vm443, %v485
      %p488 = scmp.lt.s32.totalorder %s18, 1
      %s489 = scalar_select %p488, %s18, 1
      %s490 = smul.addr %s489, 2
      %s491 = smul.addr %s490, 8
      %s492 = scalar_lea.vmem %s7, %s491
      // Predicated region
      $region49: #{_lambda_.10} parent=47 // pred_check
        %p493 = pneg %p188
      $region50: #{_lambda_.10} parent=47 // pred_check_branch
        %495 = sbr.rel (%p493) target = $region52
      $region51: #{_lambda_.10} parent=47 // pred_region
        _
      $region52: #{_lambda_.10} parent=47 // pred_fallthru
        _
    $region48: #{_lambda_.10} parent=5 // pred_fallthru
      _
    %p496 = scmp.le.s32.totalorder 2, %s13
    // Predicated region
    $region53: #{_lambda_.10} parent=5 // pred_check
      %p497 = pneg %p496
    $region54: #{_lambda_.10} parent=5 // pred_check_branch
      %499 = sbr.rel (%p497) target = $region56
    $region55: #{_lambda_.10} parent=5 // pred_region
      %s500 = ssub.s32 %s13, 2
      // Predicated region
      $region57: #{_lambda_.10} parent=55 // pred_check
        %p501 = pneg %p194
      $region58: #{_lambda_.10} parent=55 // pred_check_branch
        %503 = sbr.rel (%p501) target = $region60
      $region59: #{_lambda_.10} parent=55 // pred_region
        %p504 = scmp.lt.s32.totalorder %s19, 1
        %s505 = scalar_select %p504, %s19, 1
        %s506 = smul.addr %s505, 2
        %s507 = smul.addr %s506, 8
        %s508 = scalar_lea.vmem %s7, %s507
      $region60: #{_lambda_.10} parent=55 // pred_fallthru
        _
    $region56: #{_lambda_.10} parent=5 // pred_fallthru
      _
  $region6: #{_lambda_.10} parent=0 // loop_footer
    %s17 = sadd.s32 1, %s13
  $region7: #{_lambda_.10} parent=0 // loop_footer_branch
    %12 = sbr.rel target = $region3
  $region8: #{_lambda_.10} parent=0 // loop_exit
    _

// kernel: _lambda_.11
$region0: #{_lambda_.11}
  #allocation0 [shape = 'u32[]', space=smem, size = 0x4, offset = 0x4, fixed_abs, tag = 'smem constant byte address 0x4 - core index']
  #allocation1 [shape = 'u32[144,128]{1,0:T(1,128)}', space=vmem, size = 0x12000, scoped, tag = 'internal scratch']
  %s0 = inlined_call_operand.vmem [shape: f32[2,11,32], index: 0, kind: input, shape index: {}]
  %s1 = inlined_call_operand.vmem [shape: bf16[32,48], index: 1, kind: input, shape index: {}]
  %s2 = inlined_call_operand.vmem [shape: f32[1,48], index: 2, kind: input, shape index: {}]
  %s3 = inlined_call_operand.vmem [shape: f32[2,11,48], index: 3, kind: output, shape index: {}]
  %s4 = sld [smem:[#allocation0]]
  $region45: #{_lambda_.11} parent=0
    _
  %s6 = ssub.s32 1, %s4
  %s7 = scalar_select 0, %s6, %s4
  loop: start=0, step=1, limit=4
  $region2: #{_lambda_.11} parent=0 // loop_pre_header
    _
  $region3: #{_lambda_.11} parent=0 // loop_header
    %s9 = sphi 0, %s13
    %p10 = scmp.ge.s32.totalorder %s9, 4
    %s19 = sphi 0, %s21
    %s22 = sphi 0, %s19
    %s23 = sphi 0, %s22
    %s39 = sphi 0, %s23
    %s43 = sphi 0, %s43
    %s45 = sphi 0, %s43
    %s46 = sphi 0, %s45
    %s60 = sphi 0, %s46
    %s64 = sphi 0, %s64
    %s66 = sphi 0, %s64
    %s67 = sphi 0, %s66
    %s81 = sphi 0, %s67
    %s87 = sphi 0, %s89
    %s90 = sphi 0, %s87
    %s91 = sphi 0, %s90
    %s107 = sphi 0, %s91
  $region4: #{_lambda_.11} parent=0 // loop_header_branch
    %12 = sbr.rel (%p10) target = $region8
  $region5: #{_lambda_.11} parent=0 // loop_body
    %s14 = ssub.s32 %s9, 1
    %s15 = ssub.s32 %s9, 2
    %s16 = sadd.s32 %s9, 1
    %s17 = ssub.s32 %s9, %s16
    %p18 = scmp.eq.s32.totalorder %s17, 0
    %s20 = sadd.s32 %s19, 1
    %s21 = scalar_select %p18, %s19, %s20
    %p24 = pneg %p18
    %p25 = scmp.eq.s32.totalorder %s9, 1
    %p26 = por %p24, %p25
    %p27 = scmp.ne.s32.totalorder %s19, %s22
    %p28 = scmp.eq.s32.totalorder %s9, 0
    %p29 = por %p27, %p28
    %p30 = scmp.ne.s32.totalorder %s19, %s22
    %p31 = scmp.eq.s32.totalorder %s14, 1
    %p32 = por %p30, %p31
    %p33 = scmp.ne.s32.totalorder %s22, %s23
    %p34 = scmp.eq.s32.totalorder %s14, 0
    %p35 = por %p33, %p34
    %p36 = scmp.ne.s32.totalorder %s22, %s23
    %p37 = scmp.eq.s32.totalorder %s15, 1
    %p38 = por %p36, %p37
    %p40 = scmp.ne.s32.totalorder %s23, %s39
    %p41 = scmp.eq.s32.totalorder %s15, 0
    %p42 = por %p40, %p41
    %s44 = sadd.s32 %s43, 1
    %p47 = scmp.eq.s32.totalorder %s9, 1
    %p48 = scmp.ne.s32.totalorder %s43, %s45
    %p49 = scmp.eq.s32.totalorder %s9, 0
    %p50 = por %p48, %p49
    %p51 = scmp.ne.s32.totalorder %s43, %s45
    %p52 = scmp.eq.s32.totalorder %s14, 1
    %p53 = por %p51, %p52
    %p54 = scmp.ne.s32.totalorder %s45, %s46
    %p55 = scmp.eq.s32.totalorder %s14, 0
    %p56 = por %p54, %p55
    %p57 = scmp.ne.s32.totalorder %s45, %s46
    %p58 = scmp.eq.s32.totalorder %s15, 1
    %p59 = por %p57, %p58
    %p61 = scmp.ne.s32.totalorder %s46, %s60
    %p62 = scmp.eq.s32.totalorder %s15, 0
    %p63 = por %p61, %p62
    %s65 = sadd.s32 %s64, 1
    %p68 = scmp.eq.s32.totalorder %s9, 1
    %p69 = scmp.ne.s32.totalorder %s64, %s66
    %p70 = scmp.eq.s32.totalorder %s9, 0
    %p71 = por %p69, %p70
    %p72 = scmp.ne.s32.totalorder %s64, %s66
    %p73 = scmp.eq.s32.totalorder %s14, 1
    %p74 = por %p72, %p73
    %p75 = scmp.ne.s32.totalorder %s66, %s67
    %p76 = scmp.eq.s32.totalorder %s14, 0
    %p77 = por %p75, %p76
    %p78 = scmp.ne.s32.totalorder %s66, %s67
    %p79 = scmp.eq.s32.totalorder %s15, 1
    %p80 = por %p78, %p79
    %p82 = scmp.ne.s32.totalorder %s67, %s81
    %p83 = scmp.eq.s32.totalorder %s15, 0
    %p84 = por %p82, %p83
    %s85 = ssub.s32 %s9, %s16
    %p86 = scmp.eq.s32.totalorder %s85, 0
    %s88 = sadd.s32 %s87, 1
    %s89 = scalar_select %p86, %s87, %s88
    %p92 = pneg %p86
    %p93 = scmp.eq.s32.totalorder %s9, 1
    %p94 = por %p92, %p93
    %p95 = scmp.ne.s32.totalorder %s87, %s90
    %p96 = scmp.eq.s32.totalorder %s9, 0
    %p97 = por %p95, %p96
    %p98 = scmp.ne.s32.totalorder %s87, %s90
    %p99 = scmp.eq.s32.totalorder %s14, 1
    %p100 = por %p98, %p99
    %p101 = scmp.ne.s32.totalorder %s90, %s91
    %p102 = scmp.eq.s32.totalorder %s14, 0
    %p103 = por %p101, %p102
    %p104 = scmp.ne.s32.totalorder %s90, %s91
    %p105 = scmp.eq.s32.totalorder %s15, 1
    %p106 = por %p104, %p105
    %p108 = scmp.ne.s32.totalorder %s91, %s107
    %p109 = scmp.eq.s32.totalorder %s15, 0
    %p110 = por %p108, %p109
    %p111 = scmp.le.s32.totalorder 1, %s9
    %p112 = scmp.lt.s32.totalorder %s9, 3
    %p113 = pnand %p111, %p112
    %p114 = pneg %p113
    // Predicated region
    $region9: #{_lambda_.11} parent=5 // pred_check
      _
    $region10: #{_lambda_.11} parent=5 // pred_check_branch
      %116 = sbr.rel (%p113) target = $region12
    $region11: #{_lambda_.11} parent=5 // pred_region
      %s117 = ssub.s32 %s9, 1
      // Predicated region
      $region13: #{_lambda_.11} parent=11 // pred_check
        %p118 = pneg %p56
      $region14: #{_lambda_.11} parent=11 // pred_check_branch
        %120 = sbr.rel (%p118) target = $region16
      $region15: #{_lambda_.11} parent=11 // pred_region
        _
      $region16: #{_lambda_.11} parent=11 // pred_fallthru
        _
      // Predicated region
      $region17: #{_lambda_.11} parent=11 // pred_check
        %p121 = pneg %p77
      $region18: #{_lambda_.11} parent=11 // pred_check_branch
        %123 = sbr.rel (%p121) target = $region20
      $region19: #{_lambda_.11} parent=11 // pred_region
        _
      $region20: #{_lambda_.11} parent=11 // pred_fallthru
        _
    $region12: #{_lambda_.11} parent=5 // pred_fallthru
      _
    %p124 = scmp.lt.s32.totalorder %s9, 2
    // Predicated region
    $region21: #{_lambda_.11} parent=5 // pred_check
      %p125 = pneg %p124
    $region22: #{_lambda_.11} parent=5 // pred_check_branch
      %127 = sbr.rel (%p125) target = $region24
    $region23: #{_lambda_.11} parent=5 // pred_region
      // Predicated region
      $region25: #{_lambda_.11} parent=23 // pred_check
        %p128 = pneg %p29
      $region26: #{_lambda_.11} parent=23 // pred_check_branch
        %130 = sbr.rel (%p128) target = $region28
      $region27: #{_lambda_.11} parent=23 // pred_region
        %p131 = scmp.lt.s32.totalorder %s9, 1
        %s132 = scalar_select %p131, %s9, 1
        %s133 = smul.addr %s132, 2
        %s134 = smul.addr %s133, 8
        %s135 = scalar_lea.vmem %s0, %s134
      $region28: #{_lambda_.11} parent=23 // pred_fallthru
        _
    $region24: #{_lambda_.11} parent=5 // pred_fallthru
      _
    %p136 = scmp.le.s32.totalorder 1, %s9
    %p137 = scmp.lt.s32.totalorder %s9, 3
    %p138 = pnand %p136, %p137
    %p139 = pneg %p138
    // Predicated region
    $region29: #{_lambda_.11} parent=5 // pred_check
      _
    $region30: #{_lambda_.11} parent=5 // pred_check_branch
      %141 = sbr.rel (%p138) target = $region32
    $region31: #{_lambda_.11} parent=5 // pred_region
      %s142 = ssub.s32 %s9, 1
      %p143 = scmp.lt.s32.totalorder %s14, 1
      %s144 = scalar_select %p143, %s14, 1
      %s145 = smul.addr %s144, 2
      %s146 = smul.addr %s145, 8
      %s147 = scalar_lea.vmem %s0, %s146
      %p148 = pneg %p35
      %p149 = pneg %p32
      %p150 = pneg %p56
      %p151 = pneg %p53
      %p152 = pneg %p77
      %p153 = pneg %p74
      %p154 = pneg %p103
      %p155 = pneg %p100
      %p156 = scmp.lt.s32.totalorder %s14, 1
      %s157 = scalar_select %p156, %s14, 1
      %s158 = smul.addr %s157, 2
      %s159 = smul.addr %s158, 8
      %s160 = scalar_lea.vmem %s3, %s159
      %p161 = scmp.lt.s32.totalorder %s14, 1
      %s162 = scalar_select %p161, %s14, 1
      %s163 = smul.addr %s162, 2
      %s164 = smul.addr %s163, 8
      %s165 = scalar_lea.vmem %s0, %s164
      %p166 = scmp.lt.s32.totalorder %s14, 1
      %s167 = scalar_select %p166, %s14, 1
      %s168 = smul.addr %s167, 2
      %s169 = smul.addr %s168, 8
      %s170 = scalar_lea.vmem %s3, %s169
      %v172 = vld [vmem:[%s165] sm:$0xff]
      %v173 = vld [vmem:[%s165 + $0x8] sm:$0x7]
      %v174 = vpack.c.bf16 %v173, %v172
      %v175 = vld [vmem:[%s1] sm:$0xf]
      %v176 = vld [vmem:[%s1 + $0x4] sm:$0xf]
      %v177 = vld [vmem:[%s1 + $0x8] sm:$0xf]
      %v178 = vld [vmem:[%s1 + $0xc] sm:$0xf]
      %v179 = vld [vmem:[%s2] sm:$0x1]
      %v181 = vlaneseq
      %v182 = vshrl.u32 %v181, 7
      %v183 = vsub.s32 0, %v182
      %v184 = vrot.slane %v179, %v183
      %v190 = vunpack.c.l.b16 %v175
      %v191 = vunpack.c.l.b16 %v176
      %v192 = vunpack.c.l.b16 %v177
      %v193 = vunpack.c.l.b16 %v178
      %v194 = vpack.c.b16 %v191, %v190
      %v195 = vpack.c.b16 %v193, %v192
      %vm198 = vcmask 261120
      %v200 = vsel %vm198, %v174, 0
      %202 = vmatprep.subr.bf16.mxu0 0
      %203 = vmatpush1.bf16.msra.mxu0 %v194
      %204 = vmatprep.subr.bf16.mxu0 0
      %205 = vmatpush1.bf16.msra.mxu0 %v195
      %206 = vmatprep.subr.bf16.mxu0 0
      %207 = vmatpush1.bf16.msra.mxu0 0
      %208 = vmatprep.subr.bf16.mxu0 0
      %209 = vmatpush1.bf16.msra.mxu0 0
      %210 = vmatprep.subr.bf16.mxu0 0
      %211 = vmatpush1.bf16.msra.mxu0 0
      %212 = vmatprep.subr.bf16.mxu0 0
      %213 = vmatpush1.bf16.msra.mxu0 0
      %214 = vmatprep.subr.bf16.mxu0 0
      %215 = vmatpush1.bf16.msra.mxu0 0
      %216 = vmatprep.subr.bf16.mxu0 0
      %217 = vmatpush1.bf16.msra.mxu0 0
      %218 = vmatprep.subr.bf16.mxu0 0
      %219 = vmatpush1.bf16.msra.mxu0 0
      %220 = vmatprep.subr.bf16.mxu0 0
      %221 = vmatpush1.bf16.msra.mxu0 0
      %222 = vmatprep.subr.bf16.mxu0 0
      %223 = vmatpush1.bf16.msra.mxu0 0
      %224 = vmatprep.subr.bf16.mxu0 0
      %225 = vmatpush1.bf16.msra.mxu0 0
      %226 = vmatprep.subr.bf16.mxu0 0
      %227 = vmatpush1.bf16.msra.mxu0 0
      %228 = vmatprep.subr.bf16.mxu0 0
      %229 = vmatpush1.bf16.msra.mxu0 0
      %230 = vmatprep.subr.bf16.mxu0 0
      %231 = vmatpush1.bf16.msra.mxu0 0
      %232 = vmatprep.subr.bf16.mxu0 0
      %233 = vmatpush1.bf16.msra.mxu0 0
      %234 = vmatprep.mubr.bf16.mxu0 0
      %235 = vmatmul.mubr.bf16.gmra.mrb[0].mxu0 %v200
      %v236 = vpop.f32.mrb[0].mxu0
      %v237 = vadd.f32 %v184, %v236
      %v238 = vpop.f32.mrb[0].mxu0
      %v239 = vpop.f32.mrb[0].mxu0
      %v240 = vadd.f32 %v184, %v239
      %v241 = vpop.f32.mrb[0].mxu0
      %242 = vdwg.mxu0
      %vm243 = vcmask 392192
      %244 = vst.msk [vmem:[%s170] sm:$0xff] %vm243, %v237
      %vm245 = vcmask 387072
      %246 = vst.msk [vmem:[%s170 + $0x8] sm:$0x7] %vm245, %v240
      %p247 = scmp.lt.s32.totalorder %s14, 1
      %s248 = scalar_select %p247, %s14, 1
      %s249 = smul.addr %s248, 2
      %s250 = smul.addr %s249, 8
      %s251 = scalar_lea.vmem %s3, %s250
      // Predicated region
      $region33: #{_lambda_.11} parent=31 // pred_check
        %p252 = pneg %p100
      $region34: #{_lambda_.11} parent=31 // pred_check_branch
        %254 = sbr.rel (%p252) target = $region36
      $region35: #{_lambda_.11} parent=31 // pred_region
        _
      $region36: #{_lambda_.11} parent=31 // pred_fallthru
        _
    $region32: #{_lambda_.11} parent=5 // pred_fallthru
      _
    %p255 = scmp.le.s32.totalorder 2, %s9
    // Predicated region
    $region37: #{_lambda_.11} parent=5 // pred_check
      %p256 = pneg %p255
    $region38: #{_lambda_.11} parent=5 // pred_check_branch
      %258 = sbr.rel (%p256) target = $region40
    $region39: #{_lambda_.11} parent=5 // pred_region
      %s259 = ssub.s32 %s9, 2
      // Predicated region
      $region41: #{_lambda_.11} parent=39 // pred_check
        %p260 = pneg %p106
      $region42: #{_lambda_.11} parent=39 // pred_check_branch
        %262 = sbr.rel (%p260) target = $region44
      $region43: #{_lambda_.11} parent=39 // pred_region
        %p263 = scmp.lt.s32.totalorder %s15, 1
        %s264 = scalar_select %p263, %s15, 1
        %s265 = smul.addr %s264, 2
        %s266 = smul.addr %s265, 8
        %s267 = scalar_lea.vmem %s3, %s266
      $region44: #{_lambda_.11} parent=39 // pred_fallthru
        _
    $region40: #{_lambda_.11} parent=5 // pred_fallthru
      _
  $region6: #{_lambda_.11} parent=0 // loop_footer
    %s13 = sadd.s32 1, %s9
  $region7: #{_lambda_.11} parent=0 // loop_footer_branch
    %8 = sbr.rel target = $region3
  $region8: #{_lambda_.11} parent=0 // loop_exit
    _

</llo_original>
